<compile_context>
chip_gen: v5e
topology: v5e:2x2
jax: 0.10.0
libtpu: 0.0.40
codegen_flags: <defaults>
</compile_context>

<pallas_src>
import functools

import jax
import jax.numpy as jnp
from jax import lax
from jax.experimental import pallas as pl
from jax.experimental.pallas import tpu as pltpu

_VMEM_LIMIT = 32 * 1024 * 1024  # safe scoped-VMEM request on v5e/v6e/v7x


# --------------------------------------------------------------------------
# Pallas kernels
# --------------------------------------------------------------------------

def _conv3x3_kernel(xb_ref, xh_ref, w_ref, b_ref, o_ref, xt_ref, *, th, width):
    """3x3 SAME conv + bias + ReLU on one (1, th, W, Cout) output row tile.

    xb_ref: (1, th, W+2, Cin)   body rows of the zero-padded input (bf16)
    xh_ref: (1, 2,  W+2, Cin)   two halo rows just below the body   (bf16)
    w_ref : (3, 3, Cin, Cout)   weights (bf16)
    b_ref : (1, Cout)           bias (f32)
    o_ref : (1, th, W, Cout)    output (bf16)
    xt_ref: (th+2, W+2, Cin)    VMEM scratch holding body+halo rows (bf16)
    """
    cin = xt_ref.shape[-1]
    cout = o_ref.shape[-1]
    m = th * width

    # Assemble the (th+2, W+2, Cin) halo tile once in VMEM scratch.
    xt_ref[pl.ds(0, th), :, :] = xb_ref[0]
    xt_ref[pl.ds(th, 2), :, :] = xh_ref[0]

    bias = b_ref[...]                                       # (1, Cout) f32
    acc = jnp.zeros((m, cout), jnp.float32)
    for dy in range(3):                                     # static unroll: 9 MXU matmuls
        for dx in range(3):
            win = xt_ref[pl.ds(dy, th), pl.ds(dx, width), :]   # (th, W, Cin) bf16
            acc = acc + jnp.dot(win.reshape(m, cin), w_ref[dy, dx],
                                preferred_element_type=jnp.float32)
    acc = jnp.maximum(acc + bias, 0.0)
    o_ref[...] = acc.astype(o_ref.dtype).reshape(1, th, width, cout)


def _gram_sse_kernel(fa_ref, fb_ref, ga_ref, gb_ref, sse_ref,
                     acc_a, acc_b, acc_s, *, scale, nk):
    """Per batch pair: gram(fa), gram(fb) (scaled 1/(C*H*W)) and sum((fa-fb)^2).

    fa_ref/fb_ref: (1, thw, C) bf16 feature tiles (HW is the reduction axis).
    """
    k = pl.program_id(1)

    @pl.when(k == 0)
    def _init():
        acc_a[...] = jnp.zeros_like(acc_a)
        acc_b[...] = jnp.zeros_like(acc_b)
        acc_s[...] = jnp.zeros_like(acc_s)

    fa = fa_ref[0]                                          # (thw, C) bf16
    fb = fb_ref[0]
    dn = (((0,), (0,)), ((), ()))                           # contract HW -> (C, C)
    acc_a[...] += lax.dot_general(fa, fa, dn, preferred_element_type=jnp.float32)
    acc_b[...] += lax.dot_general(fb, fb, dn, preferred_element_type=jnp.float32)
    d = fa.astype(jnp.float32) - fb.astype(jnp.float32)
    acc_s[...] += jnp.sum(d * d, axis=(0, 1), keepdims=True)

    @pl.when(k == nk - 1)
    def _fin():
        ga_ref[0] = acc_a[...] * scale
        gb_ref[0] = acc_b[...] * scale
        sse_ref[0] = acc_s[...]


# --------------------------------------------------------------------------
# Wrappers around pallas_call
# --------------------------------------------------------------------------

def _row_tile(h, w):
    """Largest even divisor t of h with t*w <= 128 (f32 accumulator <=16 vregs)."""
    best = None
    for t in range(2, h + 1, 2):
        if h % t == 0 and t * w <= 128:
            best = t
    if best is None:
        if h % 2 != 0:
            raise ValueError(f"feature-map height {h} must be even")
        best = 2
    return best


def conv3x3_relu(x_nhwc, w, b):
    """3x3 SAME conv + bias + ReLU.  x: (B,H,W,Cin), w: (3,3,Cin,Cout) f32."""
    B, H, W, Cin = x_nhwc.shape
    Cout = w.shape[-1]
    th = _row_tile(H, W)
    half = th // 2  # halo block-index multiplier (halo block size 2 along rows)

    xp = jnp.pad(x_nhwc.astype(jnp.bfloat16), ((0, 0), (1, 1), (1, 1), (0, 0)))
    wb = w.astype(jnp.bfloat16)
    b2 = b.reshape(1, Cout).astype(jnp.float32)

    kernel = functools.partial(_conv3x3_kernel, th=th, width=W)
    return pl.pallas_call(
        kernel,
        out_shape=jax.ShapeDtypeStruct((B, H, W, Cout), jnp.bfloat16),
        grid=(B, H // th),
        in_specs=[
            # body: padded rows [i*th, i*th+th)
            pl.BlockSpec((1, th, W + 2, Cin), lambda bi, i: (bi, i, 0, 0)),
            # halo: padded rows [(i+1)*th, (i+1)*th+2)
            pl.BlockSpec((1, 2, W + 2, Cin),
                         lambda bi, i: (bi, (i + 1) * half, 0, 0)),
            pl.BlockSpec((3, 3, Cin, Cout), lambda bi, i: (0, 0, 0, 0)),
            pl.BlockSpec((1, Cout), lambda bi, i: (0, 0)),
        ],
        out_specs=pl.BlockSpec((1, th, W, Cout), lambda bi, i: (bi, i, 0, 0)),
        scratch_shapes=[pltpu.VMEM((th + 2, W + 2, Cin), jnp.bfloat16)],
        compiler_params=pltpu.CompilerParams(
            dimension_semantics=("parallel", "parallel"),
            vmem_limit_bytes=_VMEM_LIMIT),
    )(xp, xp, wb, b2)


def _hw_tile(hw, c):
    budget = 256 * 1024  # bytes of bf16 feature block per operand
    for t in (4096, 2048, 1024, 512, 256, 128, 64, 32, 16):
        if hw % t == 0 and t * c * 2 <= budget:
            return t
    return hw


def gram_and_sse(f_nhwc, pair_batch):
    """f: (2B, H, W, C) features, rows [0,B)=input, [B,2B)=target.

    Returns (gram_in (B,C,C), gram_tgt (B,C,C), sse (B,1,1)) where gram is the
    PyTorch gram_matrix (F F^T / (C*H*W)) and sse = sum((f_in - f_tgt)^2).
    """
    B2, H, W, C = f_nhwc.shape
    B = pair_batch
    HW = H * W
    f2 = f_nhwc.reshape(B2, HW, C)
    thw = _hw_tile(HW, C)
    nk = HW // thw
    scale = 1.0 / float(C * HW)

    kernel = functools.partial(_gram_sse_kernel, scale=scale, nk=nk)
    return pl.pallas_call(
        kernel,
        out_shape=(jax.ShapeDtypeStruct((B, C, C), jnp.float32),
                   jax.ShapeDtypeStruct((B, C, C), jnp.float32),
                   jax.ShapeDtypeStruct((B, 1, 1), jnp.float32)),
        grid=(B, nk),
        in_specs=[
            pl.BlockSpec((1, thw, C), lambda b, k: (b, k, 0)),
            pl.BlockSpec((1, thw, C), lambda b, k: (b + B, k, 0)),
        ],
        out_specs=(pl.BlockSpec((1, C, C), lambda b, k: (b, 0, 0)),
                   pl.BlockSpec((1, C, C), lambda b, k: (b, 0, 0)),
                   pl.BlockSpec((1, 1, 1), lambda b, k: (b, 0, 0))),
        scratch_shapes=[pltpu.VMEM((C, C), jnp.float32),
                        pltpu.VMEM((C, C), jnp.float32),
                        pltpu.VMEM((1, 1), jnp.float32)],
        compiler_params=pltpu.CompilerParams(
            dimension_semantics=("parallel", "arbitrary"),
            vmem_limit_bytes=_VMEM_LIMIT),
    )(f2, f2)


def maxpool2x2(x_nhwc):
    B, H, W, C = x_nhwc.shape
    # TODO(synk): 2x2 max-pool kept as plain-JAX glue; could later be fused
    # into the next conv's halo load.
    return x_nhwc.reshape(B, H // 2, 2, W // 2, 2, C).max(axis=(2, 4))


# --------------------------------------------------------------------------
# VGGLoss (slice1 = conv3->64,ReLU,conv64->64,ReLU ;
#          slice2 = maxpool2, conv64->128,ReLU, conv128->128,ReLU)
# --------------------------------------------------------------------------

class VGGLossPallas:
    # TODO(synk): ImageNet-pretrained VGG19 weights cannot be loaded here (no
    # file / network access); deterministic He-init stand-ins are used.

    def __init__(self, key):
        def init_conv(k, cin, cout):
            w = jax.random.normal(k, (3, 3, cin, cout), jnp.float32)
            w = w * jnp.sqrt(2.0 / (9.0 * cin))
            return w, jnp.zeros((cout,), jnp.float32)

        k1, k2, k3, k4 = jax.random.split(key, 4)
        self.w1, self.b1 = init_conv(k1, 3, 64)      # vgg19.features[0]
        self.w2, self.b2 = init_conv(k2, 64, 64)     # vgg19.features[2]
        self.w3, self.b3 = init_conv(k3, 64, 128)    # vgg19.features[5]
        self.w4, self.b4 = init_conv(k4, 128, 128)   # vgg19.features[7]

    def __call__(self, input_nchw, target_nchw):
        def prep(x):
            if x.shape[1] == 1:
                x = jnp.repeat(x, 3, axis=1)
            return jnp.transpose(x, (0, 2, 3, 1))

        xi, xt = prep(input_nchw), prep(target_nchw)
        B = xi.shape[0]
        # run input + target through the feature extractor together
        x = jnp.concatenate([xi, xt], axis=0).astype(jnp.bfloat16)

        f1 = conv3x3_relu(x, self.w1, self.b1)
        f1 = conv3x3_relu(f1, self.w2, self.b2)
        f2 = maxpool2x2(f1)
        f2 = conv3x3_relu(f2, self.w3, self.b3)
        f2 = conv3x3_relu(f2, self.w4, self.b4)

        # one fused pass over f1 tiles: gram(input), gram(target), content SSE
        g1i, g1t, sse1 = gram_and_sse(f1, B)
        g2i, g2t, _ = gram_and_sse(f2, B)

        _, H1, W1, C1 = f1.shape
        C2 = f2.shape[-1]
        content_loss = jnp.sum(sse1) / float(B * H1 * W1 * C1)
        # Gram-MSE (style) reductions are <=128x128: plain jnp, XLA fuses them.
        style_loss = (jnp.sum((g1i - g1t) ** 2) / float(B * C1 * C1)
                      + jnp.sum((g2i - g2t) ** 2) / float(B * C2 * C2))
        return content_loss, style_loss


# --------------------------------------------------------------------------
# SSIM (pytorch_msssim-style, gaussian window 11 / sigma 1.5, 'valid')
# --------------------------------------------------------------------------

def _ssim(x, y, data_range=1.0, win_size=11, sigma=1.5, k1=0.01, k2=0.03):
    # TODO(synk): SSIM gaussian filtering kept in plain JAX (tiny, XLA-fused);
    # not worth a dedicated Pallas kernel at these sizes.
    coords = jnp.arange(win_size, dtype=jnp.float32) - (win_size - 1) / 2.0
    g = jnp.exp(-(coords ** 2) / (2.0 * sigma ** 2))
    g = g / jnp.sum(g)
    C = x.shape[1]
    kh = jnp.tile(g.reshape(1, 1, win_size, 1), (C, 1, 1, 1))
    kw = jnp.tile(g.reshape(1, 1, 1, win_size), (C, 1, 1, 1))

    def blur(img):
        out = lax.conv_general_dilated(
            img, kh, (1, 1), "VALID",
            dimension_numbers=("NCHW", "OIHW", "NCHW"), feature_group_count=C)
        out = lax.conv_general_dilated(
            out, kw, (1, 1), "VALID",
            dimension_numbers=("NCHW", "OIHW", "NCHW"), feature_group_count=C)
        return out

    c1 = (k1 * data_range) ** 2
    c2 = (k2 * data_range) ** 2
    mu_x, mu_y = blur(x), blur(y)
    mu_xx, mu_yy, mu_xy = mu_x * mu_x, mu_y * mu_y, mu_x * mu_y
    sig_x = blur(x * x) - mu_xx
    sig_y = blur(y * y) - mu_yy
    sig_xy = blur(x * y) - mu_xy
    cs = (2.0 * sig_xy + c2) / (sig_x + sig_y + c2)
    ssim_map = ((2.0 * mu_xy + c1) / (mu_xx + mu_yy + c1)) * cs
    return jnp.mean(ssim_map)


# --------------------------------------------------------------------------
# CombinedLoss
# --------------------------------------------------------------------------

class CombinedLossPallas:
    def __init__(self, key, alpha=0.84, vgg_weight=0.1, epsilon=1e-6):
        self.alpha = alpha
        self.vgg_weight = vgg_weight
        self.epsilon = epsilon
        self.vgg_loss = VGGLossPallas(key)

    def __call__(self, pred, target):
        pred = jnp.clip(pred.astype(jnp.float32), self.epsilon, 1.0 - self.epsilon)
        target = jnp.clip(target.astype(jnp.float32), self.epsilon, 1.0 - self.epsilon)

        mse_loss = jnp.mean((pred - target) ** 2)            # nn.MSELoss
        ssim_loss = 1.0 - _ssim(pred, target, data_range=1.0)
        content_loss, style_loss = self.vgg_loss(pred, target)
        vgg_l = content_loss + style_loss

        total = (self.alpha * mse_loss
                 + (1.0 - self.alpha) * ssim_loss
                 + self.vgg_weight * vgg_l)
        # TODO(synk): the PyTorch module prints and returns 0.0 on NaN/Inf; a
        # data-dependent print is not traceable, only the 0.0 fallback is kept.
        return jnp.where(jnp.isnan(total) | jnp.isinf(total),
                         jnp.float32(0.0), total)


# --------------------------------------------------------------------------

if __name__ == "__main__":
    key = jax.random.PRNGKey(0)
    kw, kp, kt = jax.random.split(key, 3)

    loss_mod = CombinedLossPallas(kw)

    # single-channel inputs exercise the repeat(1, 3, 1, 1) path
    pred = jax.random.uniform(kp, (2, 1, 16, 16), jnp.float32)
    target = jax.random.uniform(kt, (2, 1, 16, 16), jnp.float32)

    total = jax.jit(lambda p, t: loss_mod(p, t))(pred, target)
    jax.block_until_ready(total)
    assert total.shape == ()
    print("KERNEL_OK")
</pallas_src>

<mosaic_0001>
module attributes {stable_mosaic.version = 11 : i64} {
  func.func @_conv3x3_kernel(%arg0: i32, %arg1: i32, %arg2: memref<1x8x18x3xbf16, #tpu.memory_space<vmem>>, %arg3: memref<1x2x18x3xbf16, #tpu.memory_space<vmem>>, %arg4: memref<3x3x3x64xbf16, #tpu.memory_space<vmem>>, %arg5: memref<1x64xf32, #tpu.memory_space<vmem>>, %arg6: memref<1x8x16x64xbf16, #tpu.memory_space<vmem>>, %arg7: memref<10x18x3xbf16, #tpu.memory_space<vmem>>) attributes {dimension_semantics = [#tpu.dimension_semantics<parallel>, #tpu.dimension_semantics<parallel>], iteration_bounds = array<i64: 4, 2>, scalar_prefetch = 0 : i64, scratch_operands = 1 : i64, tpu.core_type = #tpu.core_type<tc>, window_params = [{transform_indices = @transform_0, window_bounds = array<i64: 1, 8, 18, 3>}, {transform_indices = @transform_1, window_bounds = array<i64: 1, 2, 18, 3>}, {pipeline_mode = #tpu.pipeline_mode<synchronous>, transform_indices = @transform_2, window_bounds = array<i64: 3, 3, 3, 64>}, {pipeline_mode = #tpu.pipeline_mode<synchronous>, transform_indices = @transform_3, window_bounds = array<i64: 1, 64>}, {transform_indices = @transform_4, window_bounds = array<i64: 1, 8, 16, 64>}]} {
    %c0 = arith.constant 0 : index
    %c0_0 = arith.constant 0 : index
    %c0_1 = arith.constant 0 : index
    %c0_2 = arith.constant 0 : index
    %0 = vector.load %arg2[%c0, %c0_0, %c0_1, %c0_2] : memref<1x8x18x3xbf16, #tpu.memory_space<vmem>>, vector<1x8x18x3xbf16>
    %1 = vector.shape_cast %0 : vector<1x8x18x3xbf16> to vector<8x18x3xbf16>
    %c0_3 = arith.constant 0 : index
    %c0_4 = arith.constant 0 : index
    %c0_5 = arith.constant 0 : index
    %2 = vector.load %arg7[%c0_3, %c0_4, %c0_5] : memref<10x18x3xbf16, #tpu.memory_space<vmem>>, vector<8x18x3xbf16>
    tpu.vector_store %arg7[%c0_3, %c0_4, %c0_5], %1 {strides = array<i32>} : memref<10x18x3xbf16, #tpu.memory_space<vmem>>, vector<8x18x3xbf16>,
    %c0_6 = arith.constant 0 : index
    %c0_7 = arith.constant 0 : index
    %c0_8 = arith.constant 0 : index
    %c0_9 = arith.constant 0 : index
    %3 = vector.load %arg3[%c0_6, %c0_7, %c0_8, %c0_9] : memref<1x2x18x3xbf16, #tpu.memory_space<vmem>>, vector<1x2x18x3xbf16>
    %4 = vector.shape_cast %3 : vector<1x2x18x3xbf16> to vector<2x18x3xbf16>
    %c8 = arith.constant 8 : index
    %c0_10 = arith.constant 0 : index
    %c0_11 = arith.constant 0 : index
    %5 = vector.load %arg7[%c8, %c0_10, %c0_11] : memref<10x18x3xbf16, #tpu.memory_space<vmem>>, vector<2x18x3xbf16>
    tpu.vector_store %arg7[%c8, %c0_10, %c0_11], %4 {strides = array<i32>} : memref<10x18x3xbf16, #tpu.memory_space<vmem>>, vector<2x18x3xbf16>,
    %c0_12 = arith.constant 0 : index
    %c0_13 = arith.constant 0 : index
    %6 = vector.load %arg5[%c0_12, %c0_13] : memref<1x64xf32, #tpu.memory_space<vmem>>, vector<1x64xf32>
    %cst = arith.constant 0.000000e+00 : f32
    %7 = vector.broadcast %cst : f32 to vector<128x64xf32>
    %c0_14 = arith.constant 0 : index
    %c0_15 = arith.constant 0 : index
    %c0_16 = arith.constant 0 : index
    %8 = vector.load %arg7[%c0_14, %c0_15, %c0_16] : memref<10x18x3xbf16, #tpu.memory_space<vmem>>, vector<8x16x3xbf16>
    %9 = vector.shape_cast %8 : vector<8x16x3xbf16> to vector<128x3xbf16>
    %c0_17 = arith.constant 0 : index
    %c0_18 = arith.constant 0 : index
    %c0_19 = arith.constant 0 : index
    %c0_20 = arith.constant 0 : index
    %10 = vector.load %arg4[%c0_17, %c0_18, %c0_19, %c0_20] : memref<3x3x3x64xbf16, #tpu.memory_space<vmem>>, vector<1x1x3x64xbf16>
    %11 = vector.shape_cast %10 : vector<1x1x3x64xbf16> to vector<3x64xbf16>
    %cst_21 = arith.constant dense<0.000000e+00> : vector<128x64xf32>
    %12 = tpu.matmul %9, %11, %cst_21 {dimension_numbers = #tpu.dot_dimension_numbers<[1], [0], [0], [1], [0, 0, 1, 1], [], []>} : vector<128x3xbf16>, vector<3x64xbf16>, vector<128x64xf32> -> vector<128x64xf32>
    %13 = arith.addf %7, %12 : vector<128x64xf32>
    %c0_22 = arith.constant 0 : index
    %c1 = arith.constant 1 : index
    %c0_23 = arith.constant 0 : index
    %14 = vector.load %arg7[%c0_22, %c1, %c0_23] : memref<10x18x3xbf16, #tpu.memory_space<vmem>>, vector<8x16x3xbf16>
    %15 = vector.shape_cast %14 : vector<8x16x3xbf16> to vector<128x3xbf16>
    %c0_24 = arith.constant 0 : index
    %c1_25 = arith.constant 1 : index
    %c0_26 = arith.constant 0 : index
    %c0_27 = arith.constant 0 : index
    %16 = vector.load %arg4[%c0_24, %c1_25, %c0_26, %c0_27] : memref<3x3x3x64xbf16, #tpu.memory_space<vmem>>, vector<1x1x3x64xbf16>
    %17 = vector.shape_cast %16 : vector<1x1x3x64xbf16> to vector<3x64xbf16>
    %cst_28 = arith.constant dense<0.000000e+00> : vector<128x64xf32>
    %18 = tpu.matmul %15, %17, %cst_28 {dimension_numbers = #tpu.dot_dimension_numbers<[1], [0], [0], [1], [0, 0, 1, 1], [], []>} : vector<128x3xbf16>, vector<3x64xbf16>, vector<128x64xf32> -> vector<128x64xf32>
    %19 = arith.addf %13, %18 : vector<128x64xf32>
    %c0_29 = arith.constant 0 : index
    %c2 = arith.constant 2 : index
    %c0_30 = arith.constant 0 : index
    %20 = vector.load %arg7[%c0_29, %c2, %c0_30] : memref<10x18x3xbf16, #tpu.memory_space<vmem>>, vector<8x16x3xbf16>
    %21 = vector.shape_cast %20 : vector<8x16x3xbf16> to vector<128x3xbf16>
    %c0_31 = arith.constant 0 : index
    %c2_32 = arith.constant 2 : index
    %c0_33 = arith.constant 0 : index
    %c0_34 = arith.constant 0 : index
    %22 = vector.load %arg4[%c0_31, %c2_32, %c0_33, %c0_34] : memref<3x3x3x64xbf16, #tpu.memory_space<vmem>>, vector<1x1x3x64xbf16>
    %23 = vector.shape_cast %22 : vector<1x1x3x64xbf16> to vector<3x64xbf16>
    %cst_35 = arith.constant dense<0.000000e+00> : vector<128x64xf32>
    %24 = tpu.matmul %21, %23, %cst_35 {dimension_numbers = #tpu.dot_dimension_numbers<[1], [0], [0], [1], [0, 0, 1, 1], [], []>} : vector<128x3xbf16>, vector<3x64xbf16>, vector<128x64xf32> -> vector<128x64xf32>
    %25 = arith.addf %19, %24 : vector<128x64xf32>
    %c1_36 = arith.constant 1 : index
    %c0_37 = arith.constant 0 : index
    %c0_38 = arith.constant 0 : index
    %26 = vector.load %arg7[%c1_36, %c0_37, %c0_38] : memref<10x18x3xbf16, #tpu.memory_space<vmem>>, vector<8x16x3xbf16>
    %27 = vector.shape_cast %26 : vector<8x16x3xbf16> to vector<128x3xbf16>
    %c1_39 = arith.constant 1 : index
    %c0_40 = arith.constant 0 : index
    %c0_41 = arith.constant 0 : index
    %c0_42 = arith.constant 0 : index
    %28 = vector.load %arg4[%c1_39, %c0_40, %c0_41, %c0_42] : memref<3x3x3x64xbf16, #tpu.memory_space<vmem>>, vector<1x1x3x64xbf16>
    %29 = vector.shape_cast %28 : vector<1x1x3x64xbf16> to vector<3x64xbf16>
    %cst_43 = arith.constant dense<0.000000e+00> : vector<128x64xf32>
    %30 = tpu.matmul %27, %29, %cst_43 {dimension_numbers = #tpu.dot_dimension_numbers<[1], [0], [0], [1], [0, 0, 1, 1], [], []>} : vector<128x3xbf16>, vector<3x64xbf16>, vector<128x64xf32> -> vector<128x64xf32>
    %31 = arith.addf %25, %30 : vector<128x64xf32>
    %c1_44 = arith.constant 1 : index
    %c1_45 = arith.constant 1 : index
    %c0_46 = arith.constant 0 : index
    %32 = vector.load %arg7[%c1_44, %c1_45, %c0_46] : memref<10x18x3xbf16, #tpu.memory_space<vmem>>, vector<8x16x3xbf16>
    %33 = vector.shape_cast %32 : vector<8x16x3xbf16> to vector<128x3xbf16>
    %c1_47 = arith.constant 1 : index
    %c1_48 = arith.constant 1 : index
    %c0_49 = arith.constant 0 : index
    %c0_50 = arith.constant 0 : index
    %34 = vector.load %arg4[%c1_47, %c1_48, %c0_49, %c0_50] : memref<3x3x3x64xbf16, #tpu.memory_space<vmem>>, vector<1x1x3x64xbf16>
    %35 = vector.shape_cast %34 : vector<1x1x3x64xbf16> to vector<3x64xbf16>
    %cst_51 = arith.constant dense<0.000000e+00> : vector<128x64xf32>
    %36 = tpu.matmul %33, %35, %cst_51 {dimension_numbers = #tpu.dot_dimension_numbers<[1], [0], [0], [1], [0, 0, 1, 1], [], []>} : vector<128x3xbf16>, vector<3x64xbf16>, vector<128x64xf32> -> vector<128x64xf32>
    %37 = arith.addf %31, %36 : vector<128x64xf32>
    %c1_52 = arith.constant 1 : index
    %c2_53 = arith.constant 2 : index
    %c0_54 = arith.constant 0 : index
    %38 = vector.load %arg7[%c1_52, %c2_53, %c0_54] : memref<10x18x3xbf16, #tpu.memory_space<vmem>>, vector<8x16x3xbf16>
    %39 = vector.shape_cast %38 : vector<8x16x3xbf16> to vector<128x3xbf16>
    %c1_55 = arith.constant 1 : index
    %c2_56 = arith.constant 2 : index
    %c0_57 = arith.constant 0 : index
    %c0_58 = arith.constant 0 : index
    %40 = vector.load %arg4[%c1_55, %c2_56, %c0_57, %c0_58] : memref<3x3x3x64xbf16, #tpu.memory_space<vmem>>, vector<1x1x3x64xbf16>
    %41 = vector.shape_cast %40 : vector<1x1x3x64xbf16> to vector<3x64xbf16>
    %cst_59 = arith.constant dense<0.000000e+00> : vector<128x64xf32>
    %42 = tpu.matmul %39, %41, %cst_59 {dimension_numbers = #tpu.dot_dimension_numbers<[1], [0], [0], [1], [0, 0, 1, 1], [], []>} : vector<128x3xbf16>, vector<3x64xbf16>, vector<128x64xf32> -> vector<128x64xf32>
    %43 = arith.addf %37, %42 : vector<128x64xf32>
    %c2_60 = arith.constant 2 : index
    %c0_61 = arith.constant 0 : index
    %c0_62 = arith.constant 0 : index
    %44 = vector.load %arg7[%c2_60, %c0_61, %c0_62] : memref<10x18x3xbf16, #tpu.memory_space<vmem>>, vector<8x16x3xbf16>
    %45 = vector.shape_cast %44 : vector<8x16x3xbf16> to vector<128x3xbf16>
    %c2_63 = arith.constant 2 : index
    %c0_64 = arith.constant 0 : index
    %c0_65 = arith.constant 0 : index
    %c0_66 = arith.constant 0 : index
    %46 = vector.load %arg4[%c2_63, %c0_64, %c0_65, %c0_66] : memref<3x3x3x64xbf16, #tpu.memory_space<vmem>>, vector<1x1x3x64xbf16>
    %47 = vector.shape_cast %46 : vector<1x1x3x64xbf16> to vector<3x64xbf16>
    %cst_67 = arith.constant dense<0.000000e+00> : vector<128x64xf32>
    %48 = tpu.matmul %45, %47, %cst_67 {dimension_numbers = #tpu.dot_dimension_numbers<[1], [0], [0], [1], [0, 0, 1, 1], [], []>} : vector<128x3xbf16>, vector<3x64xbf16>, vector<128x64xf32> -> vector<128x64xf32>
    %49 = arith.addf %43, %48 : vector<128x64xf32>
    %c2_68 = arith.constant 2 : index
    %c1_69 = arith.constant 1 : index
    %c0_70 = arith.constant 0 : index
    %50 = vector.load %arg7[%c2_68, %c1_69, %c0_70] : memref<10x18x3xbf16, #tpu.memory_space<vmem>>, vector<8x16x3xbf16>
    %51 = vector.shape_cast %50 : vector<8x16x3xbf16> to vector<128x3xbf16>
    %c2_71 = arith.constant 2 : index
    %c1_72 = arith.constant 1 : index
    %c0_73 = arith.constant 0 : index
    %c0_74 = arith.constant 0 : index
    %52 = vector.load %arg4[%c2_71, %c1_72, %c0_73, %c0_74] : memref<3x3x3x64xbf16, #tpu.memory_space<vmem>>, vector<1x1x3x64xbf16>
    %53 = vector.shape_cast %52 : vector<1x1x3x64xbf16> to vector<3x64xbf16>
    %cst_75 = arith.constant dense<0.000000e+00> : vector<128x64xf32>
    %54 = tpu.matmul %51, %53, %cst_75 {dimension_numbers = #tpu.dot_dimension_numbers<[1], [0], [0], [1], [0, 0, 1, 1], [], []>} : vector<128x3xbf16>, vector<3x64xbf16>, vector<128x64xf32> -> vector<128x64xf32>
    %55 = arith.addf %49, %54 : vector<128x64xf32>
    %c2_76 = arith.constant 2 : index
    %c2_77 = arith.constant 2 : index
    %c0_78 = arith.constant 0 : index
    %56 = vector.load %arg7[%c2_76, %c2_77, %c0_78] : memref<10x18x3xbf16, #tpu.memory_space<vmem>>, vector<8x16x3xbf16>
    %57 = vector.shape_cast %56 : vector<8x16x3xbf16> to vector<128x3xbf16>
    %c2_79 = arith.constant 2 : index
    %c2_80 = arith.constant 2 : index
    %c0_81 = arith.constant 0 : index
    %c0_82 = arith.constant 0 : index
    %58 = vector.load %arg4[%c2_79, %c2_80, %c0_81, %c0_82] : memref<3x3x3x64xbf16, #tpu.memory_space<vmem>>, vector<1x1x3x64xbf16>
    %59 = vector.shape_cast %58 : vector<1x1x3x64xbf16> to vector<3x64xbf16>
    %cst_83 = arith.constant dense<0.000000e+00> : vector<128x64xf32>
    %60 = tpu.matmul %57, %59, %cst_83 {dimension_numbers = #tpu.dot_dimension_numbers<[1], [0], [0], [1], [0, 0, 1, 1], [], []>} : vector<128x3xbf16>, vector<3x64xbf16>, vector<128x64xf32> -> vector<128x64xf32>
    %61 = arith.addf %55, %60 : vector<128x64xf32>
    %62 = vector.broadcast %6 : vector<1x64xf32> to vector<128x64xf32>
    %63 = arith.addf %61, %62 : vector<128x64xf32>
    %cst_84 = arith.constant 0.000000e+00 : f32
    %64 = vector.broadcast %cst_84 : f32 to vector<128x64xf32>
    %65 = arith.maximumf %63, %64 : vector<128x64xf32>
    %66 = arith.truncf %65 : vector<128x64xf32> to vector<128x64xbf16>
    %67 = vector.shape_cast %66 : vector<128x64xbf16> to vector<1x8x16x64xbf16>
    %c0_85 = arith.constant 0 : index
    %c0_86 = arith.constant 0 : index
    %c0_87 = arith.constant 0 : index
    %c0_88 = arith.constant 0 : index
    %68 = vector.load %arg6[%c0_85, %c0_86, %c0_87, %c0_88] : memref<1x8x16x64xbf16, #tpu.memory_space<vmem>>, vector<1x8x16x64xbf16>
    tpu.vector_store %arg6[%c0_85, %c0_86, %c0_87, %c0_88], %67 {strides = array<i32>} : memref<1x8x16x64xbf16, #tpu.memory_space<vmem>>, vector<1x8x16x64xbf16>,
    return
  }
  func.func @transform_0(%arg0: i32, %arg1: i32) -> (i32, i32, i32, i32) {
    %c0_i32 = arith.constant 0 : i32
    %c0_i32_0 = arith.constant 0 : i32
    %c0_i32_1 = arith.constant 0 : i32
    return %arg0, %arg1, %c0_i32, %c0_i32_0 : i32, i32, i32, i32
  }
  func.func @transform_1(%arg0: i32, %arg1: i32) -> (i32, i32, i32, i32) {
    %c1_i32 = arith.constant 1 : i32
    %0 = arith.addi %arg1, %c1_i32 : i32
    %c4_i32 = arith.constant 4 : i32
    %1 = arith.muli %0, %c4_i32 : i32
    %c0_i32 = arith.constant 0 : i32
    %c0_i32_0 = arith.constant 0 : i32
    %c0_i32_1 = arith.constant 0 : i32
    return %arg0, %1, %c0_i32, %c0_i32_0 : i32, i32, i32, i32
  }
  func.func @transform_2(%arg0: i32, %arg1: i32) -> (i32, i32, i32, i32) {
    %c0_i32 = arith.constant 0 : i32
    %c0_i32_0 = arith.constant 0 : i32
    %c0_i32_1 = arith.constant 0 : i32
    %c0_i32_2 = arith.constant 0 : i32
    %c0_i32_3 = arith.constant 0 : i32
    return %c0_i32, %c0_i32_0, %c0_i32_1, %c0_i32_2 : i32, i32, i32, i32
  }
  func.func @transform_3(%arg0: i32, %arg1: i32) -> (i32, i32) {
    %c0_i32 = arith.constant 0 : i32
    %c0_i32_0 = arith.constant 0 : i32
    %c0_i32_1 = arith.constant 0 : i32
    return %c0_i32, %c0_i32_0 : i32, i32
  }
  func.func @transform_4(%arg0: i32, %arg1: i32) -> (i32, i32, i32, i32) {
    %c0_i32 = arith.constant 0 : i32
    %c0_i32_0 = arith.constant 0 : i32
    %c0_i32_1 = arith.constant 0 : i32
    return %arg0, %arg1, %c0_i32, %c0_i32_0 : i32, i32, i32, i32
  }
}

module attributes {stable_mosaic.version = 11 : i64} {
  func.func @_conv3x3_kernel(%arg0: i32, %arg1: i32, %arg2: memref<1x8x18x64xbf16, #tpu.memory_space<vmem>>, %arg3: memref<1x2x18x64xbf16, #tpu.memory_space<vmem>>, %arg4: memref<3x3x64x64xbf16, #tpu.memory_space<vmem>>, %arg5: memref<1x64xf32, #tpu.memory_space<vmem>>, %arg6: memref<1x8x16x64xbf16, #tpu.memory_space<vmem>>, %arg7: memref<10x18x64xbf16, #tpu.memory_space<vmem>>) attributes {dimension_semantics = [#tpu.dimension_semantics<parallel>, #tpu.dimension_semantics<parallel>], iteration_bounds = array<i64: 4, 2>, scalar_prefetch = 0 : i64, scratch_operands = 1 : i64, tpu.core_type = #tpu.core_type<tc>, window_params = [{transform_indices = @transform_0, window_bounds = array<i64: 1, 8, 18, 64>}, {transform_indices = @transform_1, window_bounds = array<i64: 1, 2, 18, 64>}, {pipeline_mode = #tpu.pipeline_mode<synchronous>, transform_indices = @transform_2, window_bounds = array<i64: 3, 3, 64, 64>}, {pipeline_mode = #tpu.pipeline_mode<synchronous>, transform_indices = @transform_3, window_bounds = array<i64: 1, 64>}, {transform_indices = @transform_4, window_bounds = array<i64: 1, 8, 16, 64>}]} {
    %c0 = arith.constant 0 : index
    %c0_0 = arith.constant 0 : index
    %c0_1 = arith.constant 0 : index
    %c0_2 = arith.constant 0 : index
    %0 = vector.load %arg2[%c0, %c0_0, %c0_1, %c0_2] : memref<1x8x18x64xbf16, #tpu.memory_space<vmem>>, vector<1x8x18x64xbf16>
    %1 = vector.shape_cast %0 : vector<1x8x18x64xbf16> to vector<8x18x64xbf16>
    %c0_3 = arith.constant 0 : index
    %c0_4 = arith.constant 0 : index
    %c0_5 = arith.constant 0 : index
    %2 = vector.load %arg7[%c0_3, %c0_4, %c0_5] : memref<10x18x64xbf16, #tpu.memory_space<vmem>>, vector<8x18x64xbf16>
    tpu.vector_store %arg7[%c0_3, %c0_4, %c0_5], %1 {strides = array<i32>} : memref<10x18x64xbf16, #tpu.memory_space<vmem>>, vector<8x18x64xbf16>,
    %c0_6 = arith.constant 0 : index
    %c0_7 = arith.constant 0 : index
    %c0_8 = arith.constant 0 : index
    %c0_9 = arith.constant 0 : index
    %3 = vector.load %arg3[%c0_6, %c0_7, %c0_8, %c0_9] : memref<1x2x18x64xbf16, #tpu.memory_space<vmem>>, vector<1x2x18x64xbf16>
    %4 = vector.shape_cast %3 : vector<1x2x18x64xbf16> to vector<2x18x64xbf16>
    %c8 = arith.constant 8 : index
    %c0_10 = arith.constant 0 : index
    %c0_11 = arith.constant 0 : index
    %5 = vector.load %arg7[%c8, %c0_10, %c0_11] : memref<10x18x64xbf16, #tpu.memory_space<vmem>>, vector<2x18x64xbf16>
    tpu.vector_store %arg7[%c8, %c0_10, %c0_11], %4 {strides = array<i32>} : memref<10x18x64xbf16, #tpu.memory_space<vmem>>, vector<2x18x64xbf16>,
    %c0_12 = arith.constant 0 : index
    %c0_13 = arith.constant 0 : index
    %6 = vector.load %arg5[%c0_12, %c0_13] : memref<1x64xf32, #tpu.memory_space<vmem>>, vector<1x64xf32>
    %cst = arith.constant 0.000000e+00 : f32
    %7 = vector.broadcast %cst : f32 to vector<128x64xf32>
    %c0_14 = arith.constant 0 : index
    %c0_15 = arith.constant 0 : index
    %c0_16 = arith.constant 0 : index
    %8 = vector.load %arg7[%c0_14, %c0_15, %c0_16] : memref<10x18x64xbf16, #tpu.memory_space<vmem>>, vector<8x16x64xbf16>
    %9 = vector.shape_cast %8 : vector<8x16x64xbf16> to vector<128x64xbf16>
    %c0_17 = arith.constant 0 : index
    %c0_18 = arith.constant 0 : index
    %c0_19 = arith.constant 0 : index
    %c0_20 = arith.constant 0 : index
    %10 = vector.load %arg4[%c0_17, %c0_18, %c0_19, %c0_20] : memref<3x3x64x64xbf16, #tpu.memory_space<vmem>>, vector<1x1x64x64xbf16>
    %11 = vector.shape_cast %10 : vector<1x1x64x64xbf16> to vector<64x64xbf16>
    %cst_21 = arith.constant dense<0.000000e+00> : vector<128x64xf32>
    %12 = tpu.matmul %9, %11, %cst_21 {dimension_numbers = #tpu.dot_dimension_numbers<[1], [0], [0], [1], [0, 0, 1, 1], [], []>} : vector<128x64xbf16>, vector<64x64xbf16>, vector<128x64xf32> -> vector<128x64xf32>
    %13 = arith.addf %7, %12 : vector<128x64xf32>
    %c0_22 = arith.constant 0 : index
    %c1 = arith.constant 1 : index
    %c0_23 = arith.constant 0 : index
    %14 = vector.load %arg7[%c0_22, %c1, %c0_23] : memref<10x18x64xbf16, #tpu.memory_space<vmem>>, vector<8x16x64xbf16>
    %15 = vector.shape_cast %14 : vector<8x16x64xbf16> to vector<128x64xbf16>
    %c0_24 = arith.constant 0 : index
    %c1_25 = arith.constant 1 : index
    %c0_26 = arith.constant 0 : index
    %c0_27 = arith.constant 0 : index
    %16 = vector.load %arg4[%c0_24, %c1_25, %c0_26, %c0_27] : memref<3x3x64x64xbf16, #tpu.memory_space<vmem>>, vector<1x1x64x64xbf16>
    %17 = vector.shape_cast %16 : vector<1x1x64x64xbf16> to vector<64x64xbf16>
    %cst_28 = arith.constant dense<0.000000e+00> : vector<128x64xf32>
    %18 = tpu.matmul %15, %17, %cst_28 {dimension_numbers = #tpu.dot_dimension_numbers<[1], [0], [0], [1], [0, 0, 1, 1], [], []>} : vector<128x64xbf16>, vector<64x64xbf16>, vector<128x64xf32> -> vector<128x64xf32>
    %19 = arith.addf %13, %18 : vector<128x64xf32>
    %c0_29 = arith.constant 0 : index
    %c2 = arith.constant 2 : index
    %c0_30 = arith.constant 0 : index
    %20 = vector.load %arg7[%c0_29, %c2, %c0_30] : memref<10x18x64xbf16, #tpu.memory_space<vmem>>, vector<8x16x64xbf16>
    %21 = vector.shape_cast %20 : vector<8x16x64xbf16> to vector<128x64xbf16>
    %c0_31 = arith.constant 0 : index
    %c2_32 = arith.constant 2 : index
    %c0_33 = arith.constant 0 : index
    %c0_34 = arith.constant 0 : index
    %22 = vector.load %arg4[%c0_31, %c2_32, %c0_33, %c0_34] : memref<3x3x64x64xbf16, #tpu.memory_space<vmem>>, vector<1x1x64x64xbf16>
    %23 = vector.shape_cast %22 : vector<1x1x64x64xbf16> to vector<64x64xbf16>
    %cst_35 = arith.constant dense<0.000000e+00> : vector<128x64xf32>
    %24 = tpu.matmul %21, %23, %cst_35 {dimension_numbers = #tpu.dot_dimension_numbers<[1], [0], [0], [1], [0, 0, 1, 1], [], []>} : vector<128x64xbf16>, vector<64x64xbf16>, vector<128x64xf32> -> vector<128x64xf32>
    %25 = arith.addf %19, %24 : vector<128x64xf32>
    %c1_36 = arith.constant 1 : index
    %c0_37 = arith.constant 0 : index
    %c0_38 = arith.constant 0 : index
    %26 = vector.load %arg7[%c1_36, %c0_37, %c0_38] : memref<10x18x64xbf16, #tpu.memory_space<vmem>>, vector<8x16x64xbf16>
    %27 = vector.shape_cast %26 : vector<8x16x64xbf16> to vector<128x64xbf16>
    %c1_39 = arith.constant 1 : index
    %c0_40 = arith.constant 0 : index
    %c0_41 = arith.constant 0 : index
    %c0_42 = arith.constant 0 : index
    %28 = vector.load %arg4[%c1_39, %c0_40, %c0_41, %c0_42] : memref<3x3x64x64xbf16, #tpu.memory_space<vmem>>, vector<1x1x64x64xbf16>
    %29 = vector.shape_cast %28 : vector<1x1x64x64xbf16> to vector<64x64xbf16>
    %cst_43 = arith.constant dense<0.000000e+00> : vector<128x64xf32>
    %30 = tpu.matmul %27, %29, %cst_43 {dimension_numbers = #tpu.dot_dimension_numbers<[1], [0], [0], [1], [0, 0, 1, 1], [], []>} : vector<128x64xbf16>, vector<64x64xbf16>, vector<128x64xf32> -> vector<128x64xf32>
    %31 = arith.addf %25, %30 : vector<128x64xf32>
    %c1_44 = arith.constant 1 : index
    %c1_45 = arith.constant 1 : index
    %c0_46 = arith.constant 0 : index
    %32 = vector.load %arg7[%c1_44, %c1_45, %c0_46] : memref<10x18x64xbf16, #tpu.memory_space<vmem>>, vector<8x16x64xbf16>
    %33 = vector.shape_cast %32 : vector<8x16x64xbf16> to vector<128x64xbf16>
    %c1_47 = arith.constant 1 : index
    %c1_48 = arith.constant 1 : index
    %c0_49 = arith.constant 0 : index
    %c0_50 = arith.constant 0 : index
    %34 = vector.load %arg4[%c1_47, %c1_48, %c0_49, %c0_50] : memref<3x3x64x64xbf16, #tpu.memory_space<vmem>>, vector<1x1x64x64xbf16>
    %35 = vector.shape_cast %34 : vector<1x1x64x64xbf16> to vector<64x64xbf16>
    %cst_51 = arith.constant dense<0.000000e+00> : vector<128x64xf32>
    %36 = tpu.matmul %33, %35, %cst_51 {dimension_numbers = #tpu.dot_dimension_numbers<[1], [0], [0], [1], [0, 0, 1, 1], [], []>} : vector<128x64xbf16>, vector<64x64xbf16>, vector<128x64xf32> -> vector<128x64xf32>
    %37 = arith.addf %31, %36 : vector<128x64xf32>
    %c1_52 = arith.constant 1 : index
    %c2_53 = arith.constant 2 : index
    %c0_54 = arith.constant 0 : index
    %38 = vector.load %arg7[%c1_52, %c2_53, %c0_54] : memref<10x18x64xbf16, #tpu.memory_space<vmem>>, vector<8x16x64xbf16>
    %39 = vector.shape_cast %38 : vector<8x16x64xbf16> to vector<128x64xbf16>
    %c1_55 = arith.constant 1 : index
    %c2_56 = arith.constant 2 : index
    %c0_57 = arith.constant 0 : index
    %c0_58 = arith.constant 0 : index
    %40 = vector.load %arg4[%c1_55, %c2_56, %c0_57, %c0_58] : memref<3x3x64x64xbf16, #tpu.memory_space<vmem>>, vector<1x1x64x64xbf16>
    %41 = vector.shape_cast %40 : vector<1x1x64x64xbf16> to vector<64x64xbf16>
    %cst_59 = arith.constant dense<0.000000e+00> : vector<128x64xf32>
    %42 = tpu.matmul %39, %41, %cst_59 {dimension_numbers = #tpu.dot_dimension_numbers<[1], [0], [0], [1], [0, 0, 1, 1], [], []>} : vector<128x64xbf16>, vector<64x64xbf16>, vector<128x64xf32> -> vector<128x64xf32>
    %43 = arith.addf %37, %42 : vector<128x64xf32>
    %c2_60 = arith.constant 2 : index
    %c0_61 = arith.constant 0 : index
    %c0_62 = arith.constant 0 : index
    %44 = vector.load %arg7[%c2_60, %c0_61, %c0_62] : memref<10x18x64xbf16, #tpu.memory_space<vmem>>, vector<8x16x64xbf16>
    %45 = vector.shape_cast %44 : vector<8x16x64xbf16> to vector<128x64xbf16>
    %c2_63 = arith.constant 2 : index
    %c0_64 = arith.constant 0 : index
    %c0_65 = arith.constant 0 : index
    %c0_66 = arith.constant 0 : index
    %46 = vector.load %arg4[%c2_63, %c0_64, %c0_65, %c0_66] : memref<3x3x64x64xbf16, #tpu.memory_space<vmem>>, vector<1x1x64x64xbf16>
    %47 = vector.shape_cast %46 : vector<1x1x64x64xbf16> to vector<64x64xbf16>
    %cst_67 = arith.constant dense<0.000000e+00> : vector<128x64xf32>
    %48 = tpu.matmul %45, %47, %cst_67 {dimension_numbers = #tpu.dot_dimension_numbers<[1], [0], [0], [1], [0, 0, 1, 1], [], []>} : vector<128x64xbf16>, vector<64x64xbf16>, vector<128x64xf32> -> vector<128x64xf32>
    %49 = arith.addf %43, %48 : vector<128x64xf32>
    %c2_68 = arith.constant 2 : index
    %c1_69 = arith.constant 1 : index
    %c0_70 = arith.constant 0 : index
    %50 = vector.load %arg7[%c2_68, %c1_69, %c0_70] : memref<10x18x64xbf16, #tpu.memory_space<vmem>>, vector<8x16x64xbf16>
    %51 = vector.shape_cast %50 : vector<8x16x64xbf16> to vector<128x64xbf16>
    %c2_71 = arith.constant 2 : index
    %c1_72 = arith.constant 1 : index
    %c0_73 = arith.constant 0 : index
    %c0_74 = arith.constant 0 : index
    %52 = vector.load %arg4[%c2_71, %c1_72, %c0_73, %c0_74] : memref<3x3x64x64xbf16, #tpu.memory_space<vmem>>, vector<1x1x64x64xbf16>
    %53 = vector.shape_cast %52 : vector<1x1x64x64xbf16> to vector<64x64xbf16>
    %cst_75 = arith.constant dense<0.000000e+00> : vector<128x64xf32>
    %54 = tpu.matmul %51, %53, %cst_75 {dimension_numbers = #tpu.dot_dimension_numbers<[1], [0], [0], [1], [0, 0, 1, 1], [], []>} : vector<128x64xbf16>, vector<64x64xbf16>, vector<128x64xf32> -> vector<128x64xf32>
    %55 = arith.addf %49, %54 : vector<128x64xf32>
    %c2_76 = arith.constant 2 : index
    %c2_77 = arith.constant 2 : index
    %c0_78 = arith.constant 0 : index
    %56 = vector.load %arg7[%c2_76, %c2_77, %c0_78] : memref<10x18x64xbf16, #tpu.memory_space<vmem>>, vector<8x16x64xbf16>
    %57 = vector.shape_cast %56 : vector<8x16x64xbf16> to vector<128x64xbf16>
    %c2_79 = arith.constant 2 : index
    %c2_80 = arith.constant 2 : index
    %c0_81 = arith.constant 0 : index
    %c0_82 = arith.constant 0 : index
    %58 = vector.load %arg4[%c2_79, %c2_80, %c0_81, %c0_82] : memref<3x3x64x64xbf16, #tpu.memory_space<vmem>>, vector<1x1x64x64xbf16>
    %59 = vector.shape_cast %58 : vector<1x1x64x64xbf16> to vector<64x64xbf16>
    %cst_83 = arith.constant dense<0.000000e+00> : vector<128x64xf32>
    %60 = tpu.matmul %57, %59, %cst_83 {dimension_numbers = #tpu.dot_dimension_numbers<[1], [0], [0], [1], [0, 0, 1, 1], [], []>} : vector<128x64xbf16>, vector<64x64xbf16>, vector<128x64xf32> -> vector<128x64xf32>
    %61 = arith.addf %55, %60 : vector<128x64xf32>
    %62 = vector.broadcast %6 : vector<1x64xf32> to vector<128x64xf32>
    %63 = arith.addf %61, %62 : vector<128x64xf32>
    %cst_84 = arith.constant 0.000000e+00 : f32
    %64 = vector.broadcast %cst_84 : f32 to vector<128x64xf32>
    %65 = arith.maximumf %63, %64 : vector<128x64xf32>
    %66 = arith.truncf %65 : vector<128x64xf32> to vector<128x64xbf16>
    %67 = vector.shape_cast %66 : vector<128x64xbf16> to vector<1x8x16x64xbf16>
    %c0_85 = arith.constant 0 : index
    %c0_86 = arith.constant 0 : index
    %c0_87 = arith.constant 0 : index
    %c0_88 = arith.constant 0 : index
    %68 = vector.load %arg6[%c0_85, %c0_86, %c0_87, %c0_88] : memref<1x8x16x64xbf16, #tpu.memory_space<vmem>>, vector<1x8x16x64xbf16>
    tpu.vector_store %arg6[%c0_85, %c0_86, %c0_87, %c0_88], %67 {strides = array<i32>} : memref<1x8x16x64xbf16, #tpu.memory_space<vmem>>, vector<1x8x16x64xbf16>,
    return
  }
  func.func @transform_0(%arg0: i32, %arg1: i32) -> (i32, i32, i32, i32) {
    %c0_i32 = arith.constant 0 : i32
    %c0_i32_0 = arith.constant 0 : i32
    %c0_i32_1 = arith.constant 0 : i32
    return %arg0, %arg1, %c0_i32, %c0_i32_0 : i32, i32, i32, i32
  }
  func.func @transform_1(%arg0: i32, %arg1: i32) -> (i32, i32, i32, i32) {
    %c1_i32 = arith.constant 1 : i32
    %0 = arith.addi %arg1, %c1_i32 : i32
    %c4_i32 = arith.constant 4 : i32
    %1 = arith.muli %0, %c4_i32 : i32
    %c0_i32 = arith.constant 0 : i32
    %c0_i32_0 = arith.constant 0 : i32
    %c0_i32_1 = arith.constant 0 : i32
    return %arg0, %1, %c0_i32, %c0_i32_0 : i32, i32, i32, i32
  }
  func.func @transform_2(%arg0: i32, %arg1: i32) -> (i32, i32, i32, i32) {
    %c0_i32 = arith.constant 0 : i32
    %c0_i32_0 = arith.constant 0 : i32
    %c0_i32_1 = arith.constant 0 : i32
    %c0_i32_2 = arith.constant 0 : i32
    %c0_i32_3 = arith.constant 0 : i32
    return %c0_i32, %c0_i32_0, %c0_i32_1, %c0_i32_2 : i32, i32, i32, i32
  }
  func.func @transform_3(%arg0: i32, %arg1: i32) -> (i32, i32) {
    %c0_i32 = arith.constant 0 : i32
    %c0_i32_0 = arith.constant 0 : i32
    %c0_i32_1 = arith.constant 0 : i32
    return %c0_i32, %c0_i32_0 : i32, i32
  }
  func.func @transform_4(%arg0: i32, %arg1: i32) -> (i32, i32, i32, i32) {
    %c0_i32 = arith.constant 0 : i32
    %c0_i32_0 = arith.constant 0 : i32
    %c0_i32_1 = arith.constant 0 : i32
    return %arg0, %arg1, %c0_i32, %c0_i32_0 : i32, i32, i32, i32
  }
}

module attributes {stable_mosaic.version = 11 : i64} {
  func.func @_conv3x3_kernel(%arg0: i32, %arg1: i32, %arg2: memref<1x8x10x64xbf16, #tpu.memory_space<vmem>>, %arg3: memref<1x2x10x64xbf16, #tpu.memory_space<vmem>>, %arg4: memref<3x3x64x128xbf16, #tpu.memory_space<vmem>>, %arg5: memref<1x128xf32, #tpu.memory_space<vmem>>, %arg6: memref<1x8x8x128xbf16, #tpu.memory_space<vmem>>, %arg7: memref<10x10x64xbf16, #tpu.memory_space<vmem>>) attributes {dimension_semantics = [#tpu.dimension_semantics<parallel>, #tpu.dimension_semantics<parallel>], iteration_bounds = array<i64: 4, 1>, scalar_prefetch = 0 : i64, scratch_operands = 1 : i64, tpu.core_type = #tpu.core_type<tc>, window_params = [{transform_indices = @transform_0, window_bounds = array<i64: 1, 8, 10, 64>}, {transform_indices = @transform_1, window_bounds = array<i64: 1, 2, 10, 64>}, {pipeline_mode = #tpu.pipeline_mode<synchronous>, transform_indices = @transform_2, window_bounds = array<i64: 3, 3, 64, 128>}, {pipeline_mode = #tpu.pipeline_mode<synchronous>, transform_indices = @transform_3, window_bounds = array<i64: 1, 128>}, {transform_indices = @transform_4, window_bounds = array<i64: 1, 8, 8, 128>}]} {
    %c0 = arith.constant 0 : index
    %c0_0 = arith.constant 0 : index
    %c0_1 = arith.constant 0 : index
    %c0_2 = arith.constant 0 : index
    %0 = vector.load %arg2[%c0, %c0_0, %c0_1, %c0_2] : memref<1x8x10x64xbf16, #tpu.memory_space<vmem>>, vector<1x8x10x64xbf16>
    %1 = vector.shape_cast %0 : vector<1x8x10x64xbf16> to vector<8x10x64xbf16>
    %c0_3 = arith.constant 0 : index
    %c0_4 = arith.constant 0 : index
    %c0_5 = arith.constant 0 : index
    %2 = vector.load %arg7[%c0_3, %c0_4, %c0_5] : memref<10x10x64xbf16, #tpu.memory_space<vmem>>, vector<8x10x64xbf16>
    tpu.vector_store %arg7[%c0_3, %c0_4, %c0_5], %1 {strides = array<i32>} : memref<10x10x64xbf16, #tpu.memory_space<vmem>>, vector<8x10x64xbf16>,
    %c0_6 = arith.constant 0 : index
    %c0_7 = arith.constant 0 : index
    %c0_8 = arith.constant 0 : index
    %c0_9 = arith.constant 0 : index
    %3 = vector.load %arg3[%c0_6, %c0_7, %c0_8, %c0_9] : memref<1x2x10x64xbf16, #tpu.memory_space<vmem>>, vector<1x2x10x64xbf16>
    %4 = vector.shape_cast %3 : vector<1x2x10x64xbf16> to vector<2x10x64xbf16>
    %c8 = arith.constant 8 : index
    %c0_10 = arith.constant 0 : index
    %c0_11 = arith.constant 0 : index
    %5 = vector.load %arg7[%c8, %c0_10, %c0_11] : memref<10x10x64xbf16, #tpu.memory_space<vmem>>, vector<2x10x64xbf16>
    tpu.vector_store %arg7[%c8, %c0_10, %c0_11], %4 {strides = array<i32>} : memref<10x10x64xbf16, #tpu.memory_space<vmem>>, vector<2x10x64xbf16>,
    %c0_12 = arith.constant 0 : index
    %c0_13 = arith.constant 0 : index
    %6 = vector.load %arg5[%c0_12, %c0_13] : memref<1x128xf32, #tpu.memory_space<vmem>>, vector<1x128xf32>
    %cst = arith.constant 0.000000e+00 : f32
    %7 = vector.broadcast %cst : f32 to vector<64x128xf32>
    %c0_14 = arith.constant 0 : index
    %c0_15 = arith.constant 0 : index
    %c0_16 = arith.constant 0 : index
    %8 = vector.load %arg7[%c0_14, %c0_15, %c0_16] : memref<10x10x64xbf16, #tpu.memory_space<vmem>>, vector<8x8x64xbf16>
    %9 = vector.shape_cast %8 : vector<8x8x64xbf16> to vector<64x64xbf16>
    %c0_17 = arith.constant 0 : index
    %c0_18 = arith.constant 0 : index
    %c0_19 = arith.constant 0 : index
    %c0_20 = arith.constant 0 : index
    %10 = vector.load %arg4[%c0_17, %c0_18, %c0_19, %c0_20] : memref<3x3x64x128xbf16, #tpu.memory_space<vmem>>, vector<1x1x64x128xbf16>
    %11 = vector.shape_cast %10 : vector<1x1x64x128xbf16> to vector<64x128xbf16>
    %cst_21 = arith.constant dense<0.000000e+00> : vector<64x128xf32>
    %12 = tpu.matmul %9, %11, %cst_21 {dimension_numbers = #tpu.dot_dimension_numbers<[1], [0], [0], [1], [0, 0, 1, 1], [], []>} : vector<64x64xbf16>, vector<64x128xbf16>, vector<64x128xf32> -> vector<64x128xf32>
    %13 = arith.addf %7, %12 : vector<64x128xf32>
    %c0_22 = arith.constant 0 : index
    %c1 = arith.constant 1 : index
    %c0_23 = arith.constant 0 : index
    %14 = vector.load %arg7[%c0_22, %c1, %c0_23] : memref<10x10x64xbf16, #tpu.memory_space<vmem>>, vector<8x8x64xbf16>
    %15 = vector.shape_cast %14 : vector<8x8x64xbf16> to vector<64x64xbf16>
    %c0_24 = arith.constant 0 : index
    %c1_25 = arith.constant 1 : index
    %c0_26 = arith.constant 0 : index
    %c0_27 = arith.constant 0 : index
    %16 = vector.load %arg4[%c0_24, %c1_25, %c0_26, %c0_27] : memref<3x3x64x128xbf16, #tpu.memory_space<vmem>>, vector<1x1x64x128xbf16>
    %17 = vector.shape_cast %16 : vector<1x1x64x128xbf16> to vector<64x128xbf16>
    %cst_28 = arith.constant dense<0.000000e+00> : vector<64x128xf32>
    %18 = tpu.matmul %15, %17, %cst_28 {dimension_numbers = #tpu.dot_dimension_numbers<[1], [0], [0], [1], [0, 0, 1, 1], [], []>} : vector<64x64xbf16>, vector<64x128xbf16>, vector<64x128xf32> -> vector<64x128xf32>
    %19 = arith.addf %13, %18 : vector<64x128xf32>
    %c0_29 = arith.constant 0 : index
    %c2 = arith.constant 2 : index
    %c0_30 = arith.constant 0 : index
    %20 = vector.load %arg7[%c0_29, %c2, %c0_30] : memref<10x10x64xbf16, #tpu.memory_space<vmem>>, vector<8x8x64xbf16>
    %21 = vector.shape_cast %20 : vector<8x8x64xbf16> to vector<64x64xbf16>
    %c0_31 = arith.constant 0 : index
    %c2_32 = arith.constant 2 : index
    %c0_33 = arith.constant 0 : index
    %c0_34 = arith.constant 0 : index
    %22 = vector.load %arg4[%c0_31, %c2_32, %c0_33, %c0_34] : memref<3x3x64x128xbf16, #tpu.memory_space<vmem>>, vector<1x1x64x128xbf16>
    %23 = vector.shape_cast %22 : vector<1x1x64x128xbf16> to vector<64x128xbf16>
    %cst_35 = arith.constant dense<0.000000e+00> : vector<64x128xf32>
    %24 = tpu.matmul %21, %23, %cst_35 {dimension_numbers = #tpu.dot_dimension_numbers<[1], [0], [0], [1], [0, 0, 1, 1], [], []>} : vector<64x64xbf16>, vector<64x128xbf16>, vector<64x128xf32> -> vector<64x128xf32>
    %25 = arith.addf %19, %24 : vector<64x128xf32>
    %c1_36 = arith.constant 1 : index
    %c0_37 = arith.constant 0 : index
    %c0_38 = arith.constant 0 : index
    %26 = vector.load %arg7[%c1_36, %c0_37, %c0_38] : memref<10x10x64xbf16, #tpu.memory_space<vmem>>, vector<8x8x64xbf16>
    %27 = vector.shape_cast %26 : vector<8x8x64xbf16> to vector<64x64xbf16>
    %c1_39 = arith.constant 1 : index
    %c0_40 = arith.constant 0 : index
    %c0_41 = arith.constant 0 : index
    %c0_42 = arith.constant 0 : index
    %28 = vector.load %arg4[%c1_39, %c0_40, %c0_41, %c0_42] : memref<3x3x64x128xbf16, #tpu.memory_space<vmem>>, vector<1x1x64x128xbf16>
    %29 = vector.shape_cast %28 : vector<1x1x64x128xbf16> to vector<64x128xbf16>
    %cst_43 = arith.constant dense<0.000000e+00> : vector<64x128xf32>
    %30 = tpu.matmul %27, %29, %cst_43 {dimension_numbers = #tpu.dot_dimension_numbers<[1], [0], [0], [1], [0, 0, 1, 1], [], []>} : vector<64x64xbf16>, vector<64x128xbf16>, vector<64x128xf32> -> vector<64x128xf32>
    %31 = arith.addf %25, %30 : vector<64x128xf32>
    %c1_44 = arith.constant 1 : index
    %c1_45 = arith.constant 1 : index
    %c0_46 = arith.constant 0 : index
    %32 = vector.load %arg7[%c1_44, %c1_45, %c0_46] : memref<10x10x64xbf16, #tpu.memory_space<vmem>>, vector<8x8x64xbf16>
    %33 = vector.shape_cast %32 : vector<8x8x64xbf16> to vector<64x64xbf16>
    %c1_47 = arith.constant 1 : index
    %c1_48 = arith.constant 1 : index
    %c0_49 = arith.constant 0 : index
    %c0_50 = arith.constant 0 : index
    %34 = vector.load %arg4[%c1_47, %c1_48, %c0_49, %c0_50] : memref<3x3x64x128xbf16, #tpu.memory_space<vmem>>, vector<1x1x64x128xbf16>
    %35 = vector.shape_cast %34 : vector<1x1x64x128xbf16> to vector<64x128xbf16>
    %cst_51 = arith.constant dense<0.000000e+00> : vector<64x128xf32>
    %36 = tpu.matmul %33, %35, %cst_51 {dimension_numbers = #tpu.dot_dimension_numbers<[1], [0], [0], [1], [0, 0, 1, 1], [], []>} : vector<64x64xbf16>, vector<64x128xbf16>, vector<64x128xf32> -> vector<64x128xf32>
    %37 = arith.addf %31, %36 : vector<64x128xf32>
    %c1_52 = arith.constant 1 : index
    %c2_53 = arith.constant 2 : index
    %c0_54 = arith.constant 0 : index
    %38 = vector.load %arg7[%c1_52, %c2_53, %c0_54] : memref<10x10x64xbf16, #tpu.memory_space<vmem>>, vector<8x8x64xbf16>
    %39 = vector.shape_cast %38 : vector<8x8x64xbf16> to vector<64x64xbf16>
    %c1_55 = arith.constant 1 : index
    %c2_56 = arith.constant 2 : index
    %c0_57 = arith.constant 0 : index
    %c0_58 = arith.constant 0 : index
    %40 = vector.load %arg4[%c1_55, %c2_56, %c0_57, %c0_58] : memref<3x3x64x128xbf16, #tpu.memory_space<vmem>>, vector<1x1x64x128xbf16>
    %41 = vector.shape_cast %40 : vector<1x1x64x128xbf16> to vector<64x128xbf16>
    %cst_59 = arith.constant dense<0.000000e+00> : vector<64x128xf32>
    %42 = tpu.matmul %39, %41, %cst_59 {dimension_numbers = #tpu.dot_dimension_numbers<[1], [0], [0], [1], [0, 0, 1, 1], [], []>} : vector<64x64xbf16>, vector<64x128xbf16>, vector<64x128xf32> -> vector<64x128xf32>
    %43 = arith.addf %37, %42 : vector<64x128xf32>
    %c2_60 = arith.constant 2 : index
    %c0_61 = arith.constant 0 : index
    %c0_62 = arith.constant 0 : index
    %44 = vector.load %arg7[%c2_60, %c0_61, %c0_62] : memref<10x10x64xbf16, #tpu.memory_space<vmem>>, vector<8x8x64xbf16>
    %45 = vector.shape_cast %44 : vector<8x8x64xbf16> to vector<64x64xbf16>
    %c2_63 = arith.constant 2 : index
    %c0_64 = arith.constant 0 : index
    %c0_65 = arith.constant 0 : index
    %c0_66 = arith.constant 0 : index
    %46 = vector.load %arg4[%c2_63, %c0_64, %c0_65, %c0_66] : memref<3x3x64x128xbf16, #tpu.memory_space<vmem>>, vector<1x1x64x128xbf16>
    %47 = vector.shape_cast %46 : vector<1x1x64x128xbf16> to vector<64x128xbf16>
    %cst_67 = arith.constant dense<0.000000e+00> : vector<64x128xf32>
    %48 = tpu.matmul %45, %47, %cst_67 {dimension_numbers = #tpu.dot_dimension_numbers<[1], [0], [0], [1], [0, 0, 1, 1], [], []>} : vector<64x64xbf16>, vector<64x128xbf16>, vector<64x128xf32> -> vector<64x128xf32>
    %49 = arith.addf %43, %48 : vector<64x128xf32>
    %c2_68 = arith.constant 2 : index
    %c1_69 = arith.constant 1 : index
    %c0_70 = arith.constant 0 : index
    %50 = vector.load %arg7[%c2_68, %c1_69, %c0_70] : memref<10x10x64xbf16, #tpu.memory_space<vmem>>, vector<8x8x64xbf16>
    %51 = vector.shape_cast %50 : vector<8x8x64xbf16> to vector<64x64xbf16>
    %c2_71 = arith.constant 2 : index
    %c1_72 = arith.constant 1 : index
    %c0_73 = arith.constant 0 : index
    %c0_74 = arith.constant 0 : index
    %52 = vector.load %arg4[%c2_71, %c1_72, %c0_73, %c0_74] : memref<3x3x64x128xbf16, #tpu.memory_space<vmem>>, vector<1x1x64x128xbf16>
    %53 = vector.shape_cast %52 : vector<1x1x64x128xbf16> to vector<64x128xbf16>
    %cst_75 = arith.constant dense<0.000000e+00> : vector<64x128xf32>
    %54 = tpu.matmul %51, %53, %cst_75 {dimension_numbers = #tpu.dot_dimension_numbers<[1], [0], [0], [1], [0, 0, 1, 1], [], []>} : vector<64x64xbf16>, vector<64x128xbf16>, vector<64x128xf32> -> vector<64x128xf32>
    %55 = arith.addf %49, %54 : vector<64x128xf32>
    %c2_76 = arith.constant 2 : index
    %c2_77 = arith.constant 2 : index
    %c0_78 = arith.constant 0 : index
    %56 = vector.load %arg7[%c2_76, %c2_77, %c0_78] : memref<10x10x64xbf16, #tpu.memory_space<vmem>>, vector<8x8x64xbf16>
    %57 = vector.shape_cast %56 : vector<8x8x64xbf16> to vector<64x64xbf16>
    %c2_79 = arith.constant 2 : index
    %c2_80 = arith.constant 2 : index
    %c0_81 = arith.constant 0 : index
    %c0_82 = arith.constant 0 : index
    %58 = vector.load %arg4[%c2_79, %c2_80, %c0_81, %c0_82] : memref<3x3x64x128xbf16, #tpu.memory_space<vmem>>, vector<1x1x64x128xbf16>
    %59 = vector.shape_cast %58 : vector<1x1x64x128xbf16> to vector<64x128xbf16>
    %cst_83 = arith.constant dense<0.000000e+00> : vector<64x128xf32>
    %60 = tpu.matmul %57, %59, %cst_83 {dimension_numbers = #tpu.dot_dimension_numbers<[1], [0], [0], [1], [0, 0, 1, 1], [], []>} : vector<64x64xbf16>, vector<64x128xbf16>, vector<64x128xf32> -> vector<64x128xf32>
    %61 = arith.addf %55, %60 : vector<64x128xf32>
    %62 = vector.broadcast %6 : vector<1x128xf32> to vector<64x128xf32>
    %63 = arith.addf %61, %62 : vector<64x128xf32>
    %cst_84 = arith.constant 0.000000e+00 : f32
    %64 = vector.broadcast %cst_84 : f32 to vector<64x128xf32>
    %65 = arith.maximumf %63, %64 : vector<64x128xf32>
    %66 = arith.truncf %65 : vector<64x128xf32> to vector<64x128xbf16>
    %67 = vector.shape_cast %66 : vector<64x128xbf16> to vector<1x8x8x128xbf16>
    %c0_85 = arith.constant 0 : index
    %c0_86 = arith.constant 0 : index
    %c0_87 = arith.constant 0 : index
    %c0_88 = arith.constant 0 : index
    %68 = vector.load %arg6[%c0_85, %c0_86, %c0_87, %c0_88] : memref<1x8x8x128xbf16, #tpu.memory_space<vmem>>, vector<1x8x8x128xbf16>
    tpu.vector_store %arg6[%c0_85, %c0_86, %c0_87, %c0_88], %67 {strides = array<i32>} : memref<1x8x8x128xbf16, #tpu.memory_space<vmem>>, vector<1x8x8x128xbf16>,
    return
  }
  func.func @transform_0(%arg0: i32, %arg1: i32) -> (i32, i32, i32, i32) {
    %c0_i32 = arith.constant 0 : i32
    %c0_i32_0 = arith.constant 0 : i32
    %c0_i32_1 = arith.constant 0 : i32
    return %arg0, %arg1, %c0_i32, %c0_i32_0 : i32, i32, i32, i32
  }
  func.func @transform_1(%arg0: i32, %arg1: i32) -> (i32, i32, i32, i32) {
    %c1_i32 = arith.constant 1 : i32
    %0 = arith.addi %arg1, %c1_i32 : i32
    %c4_i32 = arith.constant 4 : i32
    %1 = arith.muli %0, %c4_i32 : i32
    %c0_i32 = arith.constant 0 : i32
    %c0_i32_0 = arith.constant 0 : i32
    %c0_i32_1 = arith.constant 0 : i32
    return %arg0, %1, %c0_i32, %c0_i32_0 : i32, i32, i32, i32
  }
  func.func @transform_2(%arg0: i32, %arg1: i32) -> (i32, i32, i32, i32) {
    %c0_i32 = arith.constant 0 : i32
    %c0_i32_0 = arith.constant 0 : i32
    %c0_i32_1 = arith.constant 0 : i32
    %c0_i32_2 = arith.constant 0 : i32
    %c0_i32_3 = arith.constant 0 : i32
    return %c0_i32, %c0_i32_0, %c0_i32_1, %c0_i32_2 : i32, i32, i32, i32
  }
  func.func @transform_3(%arg0: i32, %arg1: i32) -> (i32, i32) {
    %c0_i32 = arith.constant 0 : i32
    %c0_i32_0 = arith.constant 0 : i32
    %c0_i32_1 = arith.constant 0 : i32
    return %c0_i32, %c0_i32_0 : i32, i32
  }
  func.func @transform_4(%arg0: i32, %arg1: i32) -> (i32, i32, i32, i32) {
    %c0_i32 = arith.constant 0 : i32
    %c0_i32_0 = arith.constant 0 : i32
    %c0_i32_1 = arith.constant 0 : i32
    return %arg0, %arg1, %c0_i32, %c0_i32_0 : i32, i32, i32, i32
  }
}

module attributes {stable_mosaic.version = 11 : i64} {
  func.func @_conv3x3_kernel(%arg0: i32, %arg1: i32, %arg2: memref<1x8x10x128xbf16, #tpu.memory_space<vmem>>, %arg3: memref<1x2x10x128xbf16, #tpu.memory_space<vmem>>, %arg4: memref<3x3x128x128xbf16, #tpu.memory_space<vmem>>, %arg5: memref<1x128xf32, #tpu.memory_space<vmem>>, %arg6: memref<1x8x8x128xbf16, #tpu.memory_space<vmem>>, %arg7: memref<10x10x128xbf16, #tpu.memory_space<vmem>>) attributes {dimension_semantics = [#tpu.dimension_semantics<parallel>, #tpu.dimension_semantics<parallel>], iteration_bounds = array<i64: 4, 1>, scalar_prefetch = 0 : i64, scratch_operands = 1 : i64, tpu.core_type = #tpu.core_type<tc>, window_params = [{transform_indices = @transform_0, window_bounds = array<i64: 1, 8, 10, 128>}, {transform_indices = @transform_1, window_bounds = array<i64: 1, 2, 10, 128>}, {pipeline_mode = #tpu.pipeline_mode<synchronous>, transform_indices = @transform_2, window_bounds = array<i64: 3, 3, 128, 128>}, {pipeline_mode = #tpu.pipeline_mode<synchronous>, transform_indices = @transform_3, window_bounds = array<i64: 1, 128>}, {transform_indices = @transform_4, window_bounds = array<i64: 1, 8, 8, 128>}]} {
    %c0 = arith.constant 0 : index
    %c0_0 = arith.constant 0 : index
    %c0_1 = arith.constant 0 : index
    %c0_2 = arith.constant 0 : index
    %0 = vector.load %arg2[%c0, %c0_0, %c0_1, %c0_2] : memref<1x8x10x128xbf16, #tpu.memory_space<vmem>>, vector<1x8x10x128xbf16>
    %1 = vector.shape_cast %0 : vector<1x8x10x128xbf16> to vector<8x10x128xbf16>
    %c0_3 = arith.constant 0 : index
    %c0_4 = arith.constant 0 : index
    %c0_5 = arith.constant 0 : index
    %2 = vector.load %arg7[%c0_3, %c0_4, %c0_5] : memref<10x10x128xbf16, #tpu.memory_space<vmem>>, vector<8x10x128xbf16>
    tpu.vector_store %arg7[%c0_3, %c0_4, %c0_5], %1 {strides = array<i32>} : memref<10x10x128xbf16, #tpu.memory_space<vmem>>, vector<8x10x128xbf16>,
    %c0_6 = arith.constant 0 : index
    %c0_7 = arith.constant 0 : index
    %c0_8 = arith.constant 0 : index
    %c0_9 = arith.constant 0 : index
    %3 = vector.load %arg3[%c0_6, %c0_7, %c0_8, %c0_9] : memref<1x2x10x128xbf16, #tpu.memory_space<vmem>>, vector<1x2x10x128xbf16>
    %4 = vector.shape_cast %3 : vector<1x2x10x128xbf16> to vector<2x10x128xbf16>
    %c8 = arith.constant 8 : index
    %c0_10 = arith.constant 0 : index
    %c0_11 = arith.constant 0 : index
    %5 = vector.load %arg7[%c8, %c0_10, %c0_11] : memref<10x10x128xbf16, #tpu.memory_space<vmem>>, vector<2x10x128xbf16>
    tpu.vector_store %arg7[%c8, %c0_10, %c0_11], %4 {strides = array<i32>} : memref<10x10x128xbf16, #tpu.memory_space<vmem>>, vector<2x10x128xbf16>,
    %c0_12 = arith.constant 0 : index
    %c0_13 = arith.constant 0 : index
    %6 = vector.load %arg5[%c0_12, %c0_13] : memref<1x128xf32, #tpu.memory_space<vmem>>, vector<1x128xf32>
    %cst = arith.constant 0.000000e+00 : f32
    %7 = vector.broadcast %cst : f32 to vector<64x128xf32>
    %c0_14 = arith.constant 0 : index
    %c0_15 = arith.constant 0 : index
    %c0_16 = arith.constant 0 : index
    %8 = vector.load %arg7[%c0_14, %c0_15, %c0_16] : memref<10x10x128xbf16, #tpu.memory_space<vmem>>, vector<8x8x128xbf16>
    %9 = vector.shape_cast %8 : vector<8x8x128xbf16> to vector<64x128xbf16>
    %c0_17 = arith.constant 0 : index
    %c0_18 = arith.constant 0 : index
    %c0_19 = arith.constant 0 : index
    %c0_20 = arith.constant 0 : index
    %10 = vector.load %arg4[%c0_17, %c0_18, %c0_19, %c0_20] : memref<3x3x128x128xbf16, #tpu.memory_space<vmem>>, vector<1x1x128x128xbf16>
    %11 = vector.shape_cast %10 : vector<1x1x128x128xbf16> to vector<128x128xbf16>
    %cst_21 = arith.constant dense<0.000000e+00> : vector<64x128xf32>
    %12 = tpu.matmul %9, %11, %cst_21 {dimension_numbers = #tpu.dot_dimension_numbers<[1], [0], [0], [1], [0, 0, 1, 1], [], []>} : vector<64x128xbf16>, vector<128x128xbf16>, vector<64x128xf32> -> vector<64x128xf32>
    %13 = arith.addf %7, %12 : vector<64x128xf32>
    %c0_22 = arith.constant 0 : index
    %c1 = arith.constant 1 : index
    %c0_23 = arith.constant 0 : index
    %14 = vector.load %arg7[%c0_22, %c1, %c0_23] : memref<10x10x128xbf16, #tpu.memory_space<vmem>>, vector<8x8x128xbf16>
    %15 = vector.shape_cast %14 : vector<8x8x128xbf16> to vector<64x128xbf16>
    %c0_24 = arith.constant 0 : index
    %c1_25 = arith.constant 1 : index
    %c0_26 = arith.constant 0 : index
    %c0_27 = arith.constant 0 : index
    %16 = vector.load %arg4[%c0_24, %c1_25, %c0_26, %c0_27] : memref<3x3x128x128xbf16, #tpu.memory_space<vmem>>, vector<1x1x128x128xbf16>
    %17 = vector.shape_cast %16 : vector<1x1x128x128xbf16> to vector<128x128xbf16>
    %cst_28 = arith.constant dense<0.000000e+00> : vector<64x128xf32>
    %18 = tpu.matmul %15, %17, %cst_28 {dimension_numbers = #tpu.dot_dimension_numbers<[1], [0], [0], [1], [0, 0, 1, 1], [], []>} : vector<64x128xbf16>, vector<128x128xbf16>, vector<64x128xf32> -> vector<64x128xf32>
    %19 = arith.addf %13, %18 : vector<64x128xf32>
    %c0_29 = arith.constant 0 : index
    %c2 = arith.constant 2 : index
    %c0_30 = arith.constant 0 : index
    %20 = vector.load %arg7[%c0_29, %c2, %c0_30] : memref<10x10x128xbf16, #tpu.memory_space<vmem>>, vector<8x8x128xbf16>
    %21 = vector.shape_cast %20 : vector<8x8x128xbf16> to vector<64x128xbf16>
    %c0_31 = arith.constant 0 : index
    %c2_32 = arith.constant 2 : index
    %c0_33 = arith.constant 0 : index
    %c0_34 = arith.constant 0 : index
    %22 = vector.load %arg4[%c0_31, %c2_32, %c0_33, %c0_34] : memref<3x3x128x128xbf16, #tpu.memory_space<vmem>>, vector<1x1x128x128xbf16>
    %23 = vector.shape_cast %22 : vector<1x1x128x128xbf16> to vector<128x128xbf16>
    %cst_35 = arith.constant dense<0.000000e+00> : vector<64x128xf32>
    %24 = tpu.matmul %21, %23, %cst_35 {dimension_numbers = #tpu.dot_dimension_numbers<[1], [0], [0], [1], [0, 0, 1, 1], [], []>} : vector<64x128xbf16>, vector<128x128xbf16>, vector<64x128xf32> -> vector<64x128xf32>
    %25 = arith.addf %19, %24 : vector<64x128xf32>
    %c1_36 = arith.constant 1 : index
    %c0_37 = arith.constant 0 : index
    %c0_38 = arith.constant 0 : index
    %26 = vector.load %arg7[%c1_36, %c0_37, %c0_38] : memref<10x10x128xbf16, #tpu.memory_space<vmem>>, vector<8x8x128xbf16>
    %27 = vector.shape_cast %26 : vector<8x8x128xbf16> to vector<64x128xbf16>
    %c1_39 = arith.constant 1 : index
    %c0_40 = arith.constant 0 : index
    %c0_41 = arith.constant 0 : index
    %c0_42 = arith.constant 0 : index
    %28 = vector.load %arg4[%c1_39, %c0_40, %c0_41, %c0_42] : memref<3x3x128x128xbf16, #tpu.memory_space<vmem>>, vector<1x1x128x128xbf16>
    %29 = vector.shape_cast %28 : vector<1x1x128x128xbf16> to vector<128x128xbf16>
    %cst_43 = arith.constant dense<0.000000e+00> : vector<64x128xf32>
    %30 = tpu.matmul %27, %29, %cst_43 {dimension_numbers = #tpu.dot_dimension_numbers<[1], [0], [0], [1], [0, 0, 1, 1], [], []>} : vector<64x128xbf16>, vector<128x128xbf16>, vector<64x128xf32> -> vector<64x128xf32>
    %31 = arith.addf %25, %30 : vector<64x128xf32>
    %c1_44 = arith.constant 1 : index
    %c1_45 = arith.constant 1 : index
    %c0_46 = arith.constant 0 : index
    %32 = vector.load %arg7[%c1_44, %c1_45, %c0_46] : memref<10x10x128xbf16, #tpu.memory_space<vmem>>, vector<8x8x128xbf16>
    %33 = vector.shape_cast %32 : vector<8x8x128xbf16> to vector<64x128xbf16>
    %c1_47 = arith.constant 1 : index
    %c1_48 = arith.constant 1 : index
    %c0_49 = arith.constant 0 : index
    %c0_50 = arith.constant 0 : index
    %34 = vector.load %arg4[%c1_47, %c1_48, %c0_49, %c0_50] : memref<3x3x128x128xbf16, #tpu.memory_space<vmem>>, vector<1x1x128x128xbf16>
    %35 = vector.shape_cast %34 : vector<1x1x128x128xbf16> to vector<128x128xbf16>
    %cst_51 = arith.constant dense<0.000000e+00> : vector<64x128xf32>
    %36 = tpu.matmul %33, %35, %cst_51 {dimension_numbers = #tpu.dot_dimension_numbers<[1], [0], [0], [1], [0, 0, 1, 1], [], []>} : vector<64x128xbf16>, vector<128x128xbf16>, vector<64x128xf32> -> vector<64x128xf32>
    %37 = arith.addf %31, %36 : vector<64x128xf32>
    %c1_52 = arith.constant 1 : index
    %c2_53 = arith.constant 2 : index
    %c0_54 = arith.constant 0 : index
    %38 = vector.load %arg7[%c1_52, %c2_53, %c0_54] : memref<10x10x128xbf16, #tpu.memory_space<vmem>>, vector<8x8x128xbf16>
    %39 = vector.shape_cast %38 : vector<8x8x128xbf16> to vector<64x128xbf16>
    %c1_55 = arith.constant 1 : index
    %c2_56 = arith.constant 2 : index
    %c0_57 = arith.constant 0 : index
    %c0_58 = arith.constant 0 : index
    %40 = vector.load %arg4[%c1_55, %c2_56, %c0_57, %c0_58] : memref<3x3x128x128xbf16, #tpu.memory_space<vmem>>, vector<1x1x128x128xbf16>
    %41 = vector.shape_cast %40 : vector<1x1x128x128xbf16> to vector<128x128xbf16>
    %cst_59 = arith.constant dense<0.000000e+00> : vector<64x128xf32>
    %42 = tpu.matmul %39, %41, %cst_59 {dimension_numbers = #tpu.dot_dimension_numbers<[1], [0], [0], [1], [0, 0, 1, 1], [], []>} : vector<64x128xbf16>, vector<128x128xbf16>, vector<64x128xf32> -> vector<64x128xf32>
    %43 = arith.addf %37, %42 : vector<64x128xf32>
    %c2_60 = arith.constant 2 : index
    %c0_61 = arith.constant 0 : index
    %c0_62 = arith.constant 0 : index
    %44 = vector.load %arg7[%c2_60, %c0_61, %c0_62] : memref<10x10x128xbf16, #tpu.memory_space<vmem>>, vector<8x8x128xbf16>
    %45 = vector.shape_cast %44 : vector<8x8x128xbf16> to vector<64x128xbf16>
    %c2_63 = arith.constant 2 : index
    %c0_64 = arith.constant 0 : index
    %c0_65 = arith.constant 0 : index
    %c0_66 = arith.constant 0 : index
    %46 = vector.load %arg4[%c2_63, %c0_64, %c0_65, %c0_66] : memref<3x3x128x128xbf16, #tpu.memory_space<vmem>>, vector<1x1x128x128xbf16>
    %47 = vector.shape_cast %46 : vector<1x1x128x128xbf16> to vector<128x128xbf16>
    %cst_67 = arith.constant dense<0.000000e+00> : vector<64x128xf32>
    %48 = tpu.matmul %45, %47, %cst_67 {dimension_numbers = #tpu.dot_dimension_numbers<[1], [0], [0], [1], [0, 0, 1, 1], [], []>} : vector<64x128xbf16>, vector<128x128xbf16>, vector<64x128xf32> -> vector<64x128xf32>
    %49 = arith.addf %43, %48 : vector<64x128xf32>
    %c2_68 = arith.constant 2 : index
    %c1_69 = arith.constant 1 : index
    %c0_70 = arith.constant 0 : index
    %50 = vector.load %arg7[%c2_68, %c1_69, %c0_70] : memref<10x10x128xbf16, #tpu.memory_space<vmem>>, vector<8x8x128xbf16>
    %51 = vector.shape_cast %50 : vector<8x8x128xbf16> to vector<64x128xbf16>
    %c2_71 = arith.constant 2 : index
    %c1_72 = arith.constant 1 : index
    %c0_73 = arith.constant 0 : index
    %c0_74 = arith.constant 0 : index
    %52 = vector.load %arg4[%c2_71, %c1_72, %c0_73, %c0_74] : memref<3x3x128x128xbf16, #tpu.memory_space<vmem>>, vector<1x1x128x128xbf16>
    %53 = vector.shape_cast %52 : vector<1x1x128x128xbf16> to vector<128x128xbf16>
    %cst_75 = arith.constant dense<0.000000e+00> : vector<64x128xf32>
    %54 = tpu.matmul %51, %53, %cst_75 {dimension_numbers = #tpu.dot_dimension_numbers<[1], [0], [0], [1], [0, 0, 1, 1], [], []>} : vector<64x128xbf16>, vector<128x128xbf16>, vector<64x128xf32> -> vector<64x128xf32>
    %55 = arith.addf %49, %54 : vector<64x128xf32>
    %c2_76 = arith.constant 2 : index
    %c2_77 = arith.constant 2 : index
    %c0_78 = arith.constant 0 : index
    %56 = vector.load %arg7[%c2_76, %c2_77, %c0_78] : memref<10x10x128xbf16, #tpu.memory_space<vmem>>, vector<8x8x128xbf16>
    %57 = vector.shape_cast %56 : vector<8x8x128xbf16> to vector<64x128xbf16>
    %c2_79 = arith.constant 2 : index
    %c2_80 = arith.constant 2 : index
    %c0_81 = arith.constant 0 : index
    %c0_82 = arith.constant 0 : index
    %58 = vector.load %arg4[%c2_79, %c2_80, %c0_81, %c0_82] : memref<3x3x128x128xbf16, #tpu.memory_space<vmem>>, vector<1x1x128x128xbf16>
    %59 = vector.shape_cast %58 : vector<1x1x128x128xbf16> to vector<128x128xbf16>
    %cst_83 = arith.constant dense<0.000000e+00> : vector<64x128xf32>
    %60 = tpu.matmul %57, %59, %cst_83 {dimension_numbers = #tpu.dot_dimension_numbers<[1], [0], [0], [1], [0, 0, 1, 1], [], []>} : vector<64x128xbf16>, vector<128x128xbf16>, vector<64x128xf32> -> vector<64x128xf32>
    %61 = arith.addf %55, %60 : vector<64x128xf32>
    %62 = vector.broadcast %6 : vector<1x128xf32> to vector<64x128xf32>
    %63 = arith.addf %61, %62 : vector<64x128xf32>
    %cst_84 = arith.constant 0.000000e+00 : f32
    %64 = vector.broadcast %cst_84 : f32 to vector<64x128xf32>
    %65 = arith.maximumf %63, %64 : vector<64x128xf32>
    %66 = arith.truncf %65 : vector<64x128xf32> to vector<64x128xbf16>
    %67 = vector.shape_cast %66 : vector<64x128xbf16> to vector<1x8x8x128xbf16>
    %c0_85 = arith.constant 0 : index
    %c0_86 = arith.constant 0 : index
    %c0_87 = arith.constant 0 : index
    %c0_88 = arith.constant 0 : index
    %68 = vector.load %arg6[%c0_85, %c0_86, %c0_87, %c0_88] : memref<1x8x8x128xbf16, #tpu.memory_space<vmem>>, vector<1x8x8x128xbf16>
    tpu.vector_store %arg6[%c0_85, %c0_86, %c0_87, %c0_88], %67 {strides = array<i32>} : memref<1x8x8x128xbf16, #tpu.memory_space<vmem>>, vector<1x8x8x128xbf16>,
    return
  }
  func.func @transform_0(%arg0: i32, %arg1: i32) -> (i32, i32, i32, i32) {
    %c0_i32 = arith.constant 0 : i32
    %c0_i32_0 = arith.constant 0 : i32
    %c0_i32_1 = arith.constant 0 : i32
    return %arg0, %arg1, %c0_i32, %c0_i32_0 : i32, i32, i32, i32
  }
  func.func @transform_1(%arg0: i32, %arg1: i32) -> (i32, i32, i32, i32) {
    %c1_i32 = arith.constant 1 : i32
    %0 = arith.addi %arg1, %c1_i32 : i32
    %c4_i32 = arith.constant 4 : i32
    %1 = arith.muli %0, %c4_i32 : i32
    %c0_i32 = arith.constant 0 : i32
    %c0_i32_0 = arith.constant 0 : i32
    %c0_i32_1 = arith.constant 0 : i32
    return %arg0, %1, %c0_i32, %c0_i32_0 : i32, i32, i32, i32
  }
  func.func @transform_2(%arg0: i32, %arg1: i32) -> (i32, i32, i32, i32) {
    %c0_i32 = arith.constant 0 : i32
    %c0_i32_0 = arith.constant 0 : i32
    %c0_i32_1 = arith.constant 0 : i32
    %c0_i32_2 = arith.constant 0 : i32
    %c0_i32_3 = arith.constant 0 : i32
    return %c0_i32, %c0_i32_0, %c0_i32_1, %c0_i32_2 : i32, i32, i32, i32
  }
  func.func @transform_3(%arg0: i32, %arg1: i32) -> (i32, i32) {
    %c0_i32 = arith.constant 0 : i32
    %c0_i32_0 = arith.constant 0 : i32
    %c0_i32_1 = arith.constant 0 : i32
    return %c0_i32, %c0_i32_0 : i32, i32
  }
  func.func @transform_4(%arg0: i32, %arg1: i32) -> (i32, i32, i32, i32) {
    %c0_i32 = arith.constant 0 : i32
    %c0_i32_0 = arith.constant 0 : i32
    %c0_i32_1 = arith.constant 0 : i32
    return %arg0, %arg1, %c0_i32, %c0_i32_0 : i32, i32, i32, i32
  }
}

module attributes {stable_mosaic.version = 11 : i64} {
  func.func @_gram_sse_kernel(%arg0: i32, %arg1: i32, %arg2: memref<1x64x128xbf16, #tpu.memory_space<vmem>>, %arg3: memref<1x64x128xbf16, #tpu.memory_space<vmem>>, %arg4: memref<1x128x128xf32, #tpu.memory_space<vmem>>, %arg5: memref<1x128x128xf32, #tpu.memory_space<vmem>>, %arg6: memref<1x1x1xf32, #tpu.memory_space<vmem>>, %arg7: memref<128x128xf32, #tpu.memory_space<vmem>>, %arg8: memref<128x128xf32, #tpu.memory_space<vmem>>, %arg9: memref<1x1xf32, #tpu.memory_space<vmem>>) attributes {dimension_semantics = [#tpu.dimension_semantics<parallel>, #tpu.dimension_semantics<arbitrary>], iteration_bounds = array<i64: 2, 1>, scalar_prefetch = 0 : i64, scratch_operands = 3 : i64, tpu.core_type = #tpu.core_type<tc>, window_params = [{transform_indices = @transform_0, window_bounds = array<i64: 1, 64, 128>}, {transform_indices = @transform_1, window_bounds = array<i64: 1, 64, 128>}, {transform_indices = @transform_2, window_bounds = array<i64: 1, 128, 128>}, {transform_indices = @transform_3, window_bounds = array<i64: 1, 128, 128>}, {transform_indices = @transform_4, window_bounds = array<i64: 1, 1, 1>}]} {
    %c0_i32 = arith.constant 0 : i32
    %0 = arith.cmpi eq, %arg1, %c0_i32 : i32
    %1 = arith.extui %0 : i1 to i32
    %c0_i32_0 = arith.constant 0 : i32
    %2 = arith.cmpi ne, %1, %c0_i32_0 : i32
    scf.if %2 {
      %cst_22 = arith.constant 0.000000e+00 : f32
      %30 = vector.broadcast %cst_22 : f32 to vector<128x128xf32>
      %c0_23 = arith.constant 0 : index
      %c0_24 = arith.constant 0 : index
      %31 = vector.load %arg7[%c0_23, %c0_24] : memref<128x128xf32, #tpu.memory_space<vmem>>, vector<128x128xf32>
      tpu.vector_store %arg7[%c0_23, %c0_24], %30 {strides = array<i32>} : memref<128x128xf32, #tpu.memory_space<vmem>>, vector<128x128xf32>,
      %cst_25 = arith.constant 0.000000e+00 : f32
      %32 = vector.broadcast %cst_25 : f32 to vector<128x128xf32>
      %c0_26 = arith.constant 0 : index
      %c0_27 = arith.constant 0 : index
      %33 = vector.load %arg8[%c0_26, %c0_27] : memref<128x128xf32, #tpu.memory_space<vmem>>, vector<128x128xf32>
      tpu.vector_store %arg8[%c0_26, %c0_27], %32 {strides = array<i32>} : memref<128x128xf32, #tpu.memory_space<vmem>>, vector<128x128xf32>,
      %cst_28 = arith.constant 0.000000e+00 : f32
      %34 = vector.broadcast %cst_28 : f32 to vector<1x1xf32>
      %c0_29 = arith.constant 0 : index
      %c0_30 = arith.constant 0 : index
      %35 = vector.load %arg9[%c0_29, %c0_30] : memref<1x1xf32, #tpu.memory_space<vmem>>, vector<1x1xf32>
      tpu.vector_store %arg9[%c0_29, %c0_30], %34 {strides = array<i32>} : memref<1x1xf32, #tpu.memory_space<vmem>>, vector<1x1xf32>,
    } else {
    }
    %c0 = arith.constant 0 : index
    %c0_1 = arith.constant 0 : index
    %c0_2 = arith.constant 0 : index
    %3 = vector.load %arg2[%c0, %c0_1, %c0_2] : memref<1x64x128xbf16, #tpu.memory_space<vmem>>, vector<1x64x128xbf16>
    %4 = vector.shape_cast %3 : vector<1x64x128xbf16> to vector<64x128xbf16>
    %c0_3 = arith.constant 0 : index
    %c0_4 = arith.constant 0 : index
    %c0_5 = arith.constant 0 : index
    %5 = vector.load %arg3[%c0_3, %c0_4, %c0_5] : memref<1x64x128xbf16, #tpu.memory_space<vmem>>, vector<1x64x128xbf16>
    %6 = vector.shape_cast %5 : vector<1x64x128xbf16> to vector<64x128xbf16>
    %c0_6 = arith.constant 0 : index
    %c0_7 = arith.constant 0 : index
    %7 = vector.load %arg7[%c0_6, %c0_7] : memref<128x128xf32, #tpu.memory_space<vmem>>, vector<128x128xf32>
    %cst = arith.constant dense<0.000000e+00> : vector<128x128xf32>
    %8 = tpu.matmul %4, %4, %cst {dimension_numbers = #tpu.dot_dimension_numbers<[0], [0], [1], [1], [0, 1, 1, 1], [], []>} : vector<64x128xbf16>, vector<64x128xbf16>, vector<128x128xf32> -> vector<128x128xf32>
    %9 = arith.addf %7, %8 : vector<128x128xf32>
    %c0_8 = arith.constant 0 : index
    %c0_9 = arith.constant 0 : index
    %10 = vector.load %arg7[%c0_8, %c0_9] : memref<128x128xf32, #tpu.memory_space<vmem>>, vector<128x128xf32>
    tpu.vector_store %arg7[%c0_8, %c0_9], %9 {strides = array<i32>} : memref<128x128xf32, #tpu.memory_space<vmem>>, vector<128x128xf32>,
    %c0_10 = arith.constant 0 : index
    %c0_11 = arith.constant 0 : index
    %11 = vector.load %arg8[%c0_10, %c0_11] : memref<128x128xf32, #tpu.memory_space<vmem>>, vector<128x128xf32>
    %cst_12 = arith.constant dense<0.000000e+00> : vector<128x128xf32>
    %12 = tpu.matmul %6, %6, %cst_12 {dimension_numbers = #tpu.dot_dimension_numbers<[0], [0], [1], [1], [0, 1, 1, 1], [], []>} : vector<64x128xbf16>, vector<64x128xbf16>, vector<128x128xf32> -> vector<128x128xf32>
    %13 = arith.addf %11, %12 : vector<128x128xf32>
    %c0_13 = arith.constant 0 : index
    %c0_14 = arith.constant 0 : index
    %14 = vector.load %arg8[%c0_13, %c0_14] : memref<128x128xf32, #tpu.memory_space<vmem>>, vector<128x128xf32>
    tpu.vector_store %arg8[%c0_13, %c0_14], %13 {strides = array<i32>} : memref<128x128xf32, #tpu.memory_space<vmem>>, vector<128x128xf32>,
    %15 = arith.extf %4 : vector<64x128xbf16> to vector<64x128xf32>
    %16 = arith.extf %6 : vector<64x128xbf16> to vector<64x128xf32>
    %17 = arith.subf %15, %16 : vector<64x128xf32>
    %c0_15 = arith.constant 0 : index
    %c0_16 = arith.constant 0 : index
    %18 = vector.load %arg9[%c0_15, %c0_16] : memref<1x1xf32, #tpu.memory_space<vmem>>, vector<1x1xf32>
    %19 = arith.mulf %17, %17 : vector<64x128xf32>
    %20 = vector.shape_cast %19 : vector<64x128xf32> to vector<1x64x128xf32>
    %cst_17 = arith.constant dense<0.000000e+00> : vector<1xf32>
    %21 = vector.multi_reduction <add>, %20, %cst_17 [1, 2] : vector<1x64x128xf32> to vector<1xf32>
    %22 = vector.shape_cast %21 : vector<1xf32> to vector<1x1x1xf32>
    %23 = vector.extract %22[0, 0, 0] : f32 from vector<1x1x1xf32>
    %24 = vector.broadcast %23 : f32 to vector<1x1xf32>
    %25 = arith.addf %18, %24 : vector<1x1xf32>
    %c0_18 = arith.constant 0 : index
    %c0_19 = arith.constant 0 : index
    %26 = vector.load %arg9[%c0_18, %c0_19] : memref<1x1xf32, #tpu.memory_space<vmem>>, vector<1x1xf32>
    tpu.vector_store %arg9[%c0_18, %c0_19], %25 {strides = array<i32>} : memref<1x1xf32, #tpu.memory_space<vmem>>, vector<1x1xf32>,
    %c0_i32_20 = arith.constant 0 : i32
    %27 = arith.cmpi eq, %arg1, %c0_i32_20 : i32
    %28 = arith.extui %27 : i1 to i32
    %c0_i32_21 = arith.constant 0 : i32
    %29 = arith.cmpi ne, %28, %c0_i32_21 : i32
    scf.if %29 {
      %c0_22 = arith.constant 0 : index
      %c0_23 = arith.constant 0 : index
      %30 = vector.load %arg7[%c0_22, %c0_23] : memref<128x128xf32, #tpu.memory_space<vmem>>, vector<128x128xf32>
      %cst_24 = arith.constant 1.22070313E-4 : f32
      %31 = vector.broadcast %cst_24 : f32 to vector<128x128xf32>
      %32 = arith.mulf %30, %31 : vector<128x128xf32>
      %c0_25 = arith.constant 0 : index
      %c0_26 = arith.constant 0 : index
      %c0_27 = arith.constant 0 : index
      %33 = vector.load %arg4[%c0_25, %c0_26, %c0_27] : memref<1x128x128xf32, #tpu.memory_space<vmem>>, vector<1x128x128xf32>
      %34 = vector.shape_cast %33 : vector<1x128x128xf32> to vector<128x128xf32>
      %35 = vector.shape_cast %32 : vector<128x128xf32> to vector<1x128x128xf32>
      tpu.vector_store %arg4[%c0_25, %c0_26, %c0_27], %35 {strides = array<i32>} : memref<1x128x128xf32, #tpu.memory_space<vmem>>, vector<1x128x128xf32>,
      %c0_28 = arith.constant 0 : index
      %c0_29 = arith.constant 0 : index
      %36 = vector.load %arg8[%c0_28, %c0_29] : memref<128x128xf32, #tpu.memory_space<vmem>>, vector<128x128xf32>
      %cst_30 = arith.constant 1.22070313E-4 : f32
      %37 = vector.broadcast %cst_30 : f32 to vector<128x128xf32>
      %38 = arith.mulf %36, %37 : vector<128x128xf32>
      %c0_31 = arith.constant 0 : index
      %c0_32 = arith.constant 0 : index
      %c0_33 = arith.constant 0 : index
      %39 = vector.load %arg5[%c0_31, %c0_32, %c0_33] : memref<1x128x128xf32, #tpu.memory_space<vmem>>, vector<1x128x128xf32>
      %40 = vector.shape_cast %39 : vector<1x128x128xf32> to vector<128x128xf32>
      %41 = vector.shape_cast %38 : vector<128x128xf32> to vector<1x128x128xf32>
      tpu.vector_store %arg5[%c0_31, %c0_32, %c0_33], %41 {strides = array<i32>} : memref<1x128x128xf32, #tpu.memory_space<vmem>>, vector<1x128x128xf32>,
      %c0_34 = arith.constant 0 : index
      %c0_35 = arith.constant 0 : index
      %42 = vector.load %arg9[%c0_34, %c0_35] : memref<1x1xf32, #tpu.memory_space<vmem>>, vector<1x1xf32>
      %c0_36 = arith.constant 0 : index
      %c0_37 = arith.constant 0 : index
      %c0_38 = arith.constant 0 : index
      %43 = vector.load %arg6[%c0_36, %c0_37, %c0_38] : memref<1x1x1xf32, #tpu.memory_space<vmem>>, vector<1x1x1xf32>
      %44 = vector.shape_cast %43 : vector<1x1x1xf32> to vector<1x1xf32>
      %45 = vector.shape_cast %42 : vector<1x1xf32> to vector<1x1x1xf32>
      tpu.vector_store %arg6[%c0_36, %c0_37, %c0_38], %45 {strides = array<i32>} : memref<1x1x1xf32, #tpu.memory_space<vmem>>, vector<1x1x1xf32>,
    } else {
    }
    return
  }
  func.func @transform_0(%arg0: i32, %arg1: i32) -> (i32, i32, i32) {
    %c0_i32 = arith.constant 0 : i32
    %c0_i32_0 = arith.constant 0 : i32
    return %arg0, %arg1, %c0_i32 : i32, i32, i32
  }
  func.func @transform_1(%arg0: i32, %arg1: i32) -> (i32, i32, i32) {
    %c2_i32 = arith.constant 2 : i32
    %0 = arith.addi %arg0, %c2_i32 : i32
    %c0_i32 = arith.constant 0 : i32
    %c0_i32_0 = arith.constant 0 : i32
    return %0, %arg1, %c0_i32 : i32, i32, i32
  }
  func.func @transform_2(%arg0: i32, %arg1: i32) -> (i32, i32, i32) {
    %c0_i32 = arith.constant 0 : i32
    %c0_i32_0 = arith.constant 0 : i32
    %c0_i32_1 = arith.constant 0 : i32
    return %arg0, %c0_i32, %c0_i32_0 : i32, i32, i32
  }
  func.func @transform_3(%arg0: i32, %arg1: i32) -> (i32, i32, i32) {
    %c0_i32 = arith.constant 0 : i32
    %c0_i32_0 = arith.constant 0 : i32
    %c0_i32_1 = arith.constant 0 : i32
    return %arg0, %c0_i32, %c0_i32_0 : i32, i32, i32
  }
  func.func @transform_4(%arg0: i32, %arg1: i32) -> (i32, i32, i32) {
    %c0_i32 = arith.constant 0 : i32
    %c0_i32_0 = arith.constant 0 : i32
    %c0_i32_1 = arith.constant 0 : i32
    return %arg0, %c0_i32, %c0_i32_0 : i32, i32, i32
  }
}

module attributes {stable_mosaic.version = 11 : i64} {
  func.func @_gram_sse_kernel(%arg0: i32, %arg1: i32, %arg2: memref<1x256x64xbf16, #tpu.memory_space<vmem>>, %arg3: memref<1x256x64xbf16, #tpu.memory_space<vmem>>, %arg4: memref<1x64x64xf32, #tpu.memory_space<vmem>>, %arg5: memref<1x64x64xf32, #tpu.memory_space<vmem>>, %arg6: memref<1x1x1xf32, #tpu.memory_space<vmem>>, %arg7: memref<64x64xf32, #tpu.memory_space<vmem>>, %arg8: memref<64x64xf32, #tpu.memory_space<vmem>>, %arg9: memref<1x1xf32, #tpu.memory_space<vmem>>) attributes {dimension_semantics = [#tpu.dimension_semantics<parallel>, #tpu.dimension_semantics<arbitrary>], iteration_bounds = array<i64: 2, 1>, scalar_prefetch = 0 : i64, scratch_operands = 3 : i64, tpu.core_type = #tpu.core_type<tc>, window_params = [{transform_indices = @transform_0, window_bounds = array<i64: 1, 256, 64>}, {transform_indices = @transform_1, window_bounds = array<i64: 1, 256, 64>}, {transform_indices = @transform_2, window_bounds = array<i64: 1, 64, 64>}, {transform_indices = @transform_3, window_bounds = array<i64: 1, 64, 64>}, {transform_indices = @transform_4, window_bounds = array<i64: 1, 1, 1>}]} {
    %c0_i32 = arith.constant 0 : i32
    %0 = arith.cmpi eq, %arg1, %c0_i32 : i32
    %1 = arith.extui %0 : i1 to i32
    %c0_i32_0 = arith.constant 0 : i32
    %2 = arith.cmpi ne, %1, %c0_i32_0 : i32
    scf.if %2 {
      %cst_22 = arith.constant 0.000000e+00 : f32
      %30 = vector.broadcast %cst_22 : f32 to vector<64x64xf32>
      %c0_23 = arith.constant 0 : index
      %c0_24 = arith.constant 0 : index
      %31 = vector.load %arg7[%c0_23, %c0_24] : memref<64x64xf32, #tpu.memory_space<vmem>>, vector<64x64xf32>
      tpu.vector_store %arg7[%c0_23, %c0_24], %30 {strides = array<i32>} : memref<64x64xf32, #tpu.memory_space<vmem>>, vector<64x64xf32>,
      %cst_25 = arith.constant 0.000000e+00 : f32
      %32 = vector.broadcast %cst_25 : f32 to vector<64x64xf32>
      %c0_26 = arith.constant 0 : index
      %c0_27 = arith.constant 0 : index
      %33 = vector.load %arg8[%c0_26, %c0_27] : memref<64x64xf32, #tpu.memory_space<vmem>>, vector<64x64xf32>
      tpu.vector_store %arg8[%c0_26, %c0_27], %32 {strides = array<i32>} : memref<64x64xf32, #tpu.memory_space<vmem>>, vector<64x64xf32>,
      %cst_28 = arith.constant 0.000000e+00 : f32
      %34 = vector.broadcast %cst_28 : f32 to vector<1x1xf32>
      %c0_29 = arith.constant 0 : index
      %c0_30 = arith.constant 0 : index
      %35 = vector.load %arg9[%c0_29, %c0_30] : memref<1x1xf32, #tpu.memory_space<vmem>>, vector<1x1xf32>
      tpu.vector_store %arg9[%c0_29, %c0_30], %34 {strides = array<i32>} : memref<1x1xf32, #tpu.memory_space<vmem>>, vector<1x1xf32>,
    } else {
    }
    %c0 = arith.constant 0 : index
    %c0_1 = arith.constant 0 : index
    %c0_2 = arith.constant 0 : index
    %3 = vector.load %arg2[%c0, %c0_1, %c0_2] : memref<1x256x64xbf16, #tpu.memory_space<vmem>>, vector<1x256x64xbf16>
    %4 = vector.shape_cast %3 : vector<1x256x64xbf16> to vector<256x64xbf16>
    %c0_3 = arith.constant 0 : index
    %c0_4 = arith.constant 0 : index
    %c0_5 = arith.constant 0 : index
    %5 = vector.load %arg3[%c0_3, %c0_4, %c0_5] : memref<1x256x64xbf16, #tpu.memory_space<vmem>>, vector<1x256x64xbf16>
    %6 = vector.shape_cast %5 : vector<1x256x64xbf16> to vector<256x64xbf16>
    %c0_6 = arith.constant 0 : index
    %c0_7 = arith.constant 0 : index
    %7 = vector.load %arg7[%c0_6, %c0_7] : memref<64x64xf32, #tpu.memory_space<vmem>>, vector<64x64xf32>
    %cst = arith.constant dense<0.000000e+00> : vector<64x64xf32>
    %8 = tpu.matmul %4, %4, %cst {dimension_numbers = #tpu.dot_dimension_numbers<[0], [0], [1], [1], [0, 1, 1, 1], [], []>} : vector<256x64xbf16>, vector<256x64xbf16>, vector<64x64xf32> -> vector<64x64xf32>
    %9 = arith.addf %7, %8 : vector<64x64xf32>
    %c0_8 = arith.constant 0 : index
    %c0_9 = arith.constant 0 : index
    %10 = vector.load %arg7[%c0_8, %c0_9] : memref<64x64xf32, #tpu.memory_space<vmem>>, vector<64x64xf32>
    tpu.vector_store %arg7[%c0_8, %c0_9], %9 {strides = array<i32>} : memref<64x64xf32, #tpu.memory_space<vmem>>, vector<64x64xf32>,
    %c0_10 = arith.constant 0 : index
    %c0_11 = arith.constant 0 : index
    %11 = vector.load %arg8[%c0_10, %c0_11] : memref<64x64xf32, #tpu.memory_space<vmem>>, vector<64x64xf32>
    %cst_12 = arith.constant dense<0.000000e+00> : vector<64x64xf32>
    %12 = tpu.matmul %6, %6, %cst_12 {dimension_numbers = #tpu.dot_dimension_numbers<[0], [0], [1], [1], [0, 1, 1, 1], [], []>} : vector<256x64xbf16>, vector<256x64xbf16>, vector<64x64xf32> -> vector<64x64xf32>
    %13 = arith.addf %11, %12 : vector<64x64xf32>
    %c0_13 = arith.constant 0 : index
    %c0_14 = arith.constant 0 : index
    %14 = vector.load %arg8[%c0_13, %c0_14] : memref<64x64xf32, #tpu.memory_space<vmem>>, vector<64x64xf32>
    tpu.vector_store %arg8[%c0_13, %c0_14], %13 {strides = array<i32>} : memref<64x64xf32, #tpu.memory_space<vmem>>, vector<64x64xf32>,
    %15 = arith.extf %4 : vector<256x64xbf16> to vector<256x64xf32>
    %16 = arith.extf %6 : vector<256x64xbf16> to vector<256x64xf32>
    %17 = arith.subf %15, %16 : vector<256x64xf32>
    %c0_15 = arith.constant 0 : index
    %c0_16 = arith.constant 0 : index
    %18 = vector.load %arg9[%c0_15, %c0_16] : memref<1x1xf32, #tpu.memory_space<vmem>>, vector<1x1xf32>
    %19 = arith.mulf %17, %17 : vector<256x64xf32>
    %20 = vector.shape_cast %19 : vector<256x64xf32> to vector<1x256x64xf32>
    %cst_17 = arith.constant dense<0.000000e+00> : vector<1xf32>
    %21 = vector.multi_reduction <add>, %20, %cst_17 [1, 2] : vector<1x256x64xf32> to vector<1xf32>
    %22 = vector.shape_cast %21 : vector<1xf32> to vector<1x1x1xf32>
    %23 = vector.extract %22[0, 0, 0] : f32 from vector<1x1x1xf32>
    %24 = vector.broadcast %23 : f32 to vector<1x1xf32>
    %25 = arith.addf %18, %24 : vector<1x1xf32>
    %c0_18 = arith.constant 0 : index
    %c0_19 = arith.constant 0 : index
    %26 = vector.load %arg9[%c0_18, %c0_19] : memref<1x1xf32, #tpu.memory_space<vmem>>, vector<1x1xf32>
    tpu.vector_store %arg9[%c0_18, %c0_19], %25 {strides = array<i32>} : memref<1x1xf32, #tpu.memory_space<vmem>>, vector<1x1xf32>,
    %c0_i32_20 = arith.constant 0 : i32
    %27 = arith.cmpi eq, %arg1, %c0_i32_20 : i32
    %28 = arith.extui %27 : i1 to i32
    %c0_i32_21 = arith.constant 0 : i32
    %29 = arith.cmpi ne, %28, %c0_i32_21 : i32
    scf.if %29 {
      %c0_22 = arith.constant 0 : index
      %c0_23 = arith.constant 0 : index
      %30 = vector.load %arg7[%c0_22, %c0_23] : memref<64x64xf32, #tpu.memory_space<vmem>>, vector<64x64xf32>
      %cst_24 = arith.constant 6.10351563E-5 : f32
      %31 = vector.broadcast %cst_24 : f32 to vector<64x64xf32>
      %32 = arith.mulf %30, %31 : vector<64x64xf32>
      %c0_25 = arith.constant 0 : index
      %c0_26 = arith.constant 0 : index
      %c0_27 = arith.constant 0 : index
      %33 = vector.load %arg4[%c0_25, %c0_26, %c0_27] : memref<1x64x64xf32, #tpu.memory_space<vmem>>, vector<1x64x64xf32>
      %34 = vector.shape_cast %33 : vector<1x64x64xf32> to vector<64x64xf32>
      %35 = vector.shape_cast %32 : vector<64x64xf32> to vector<1x64x64xf32>
      tpu.vector_store %arg4[%c0_25, %c0_26, %c0_27], %35 {strides = array<i32>} : memref<1x64x64xf32, #tpu.memory_space<vmem>>, vector<1x64x64xf32>,
      %c0_28 = arith.constant 0 : index
      %c0_29 = arith.constant 0 : index
      %36 = vector.load %arg8[%c0_28, %c0_29] : memref<64x64xf32, #tpu.memory_space<vmem>>, vector<64x64xf32>
      %cst_30 = arith.constant 6.10351563E-5 : f32
      %37 = vector.broadcast %cst_30 : f32 to vector<64x64xf32>
      %38 = arith.mulf %36, %37 : vector<64x64xf32>
      %c0_31 = arith.constant 0 : index
      %c0_32 = arith.constant 0 : index
      %c0_33 = arith.constant 0 : index
      %39 = vector.load %arg5[%c0_31, %c0_32, %c0_33] : memref<1x64x64xf32, #tpu.memory_space<vmem>>, vector<1x64x64xf32>
      %40 = vector.shape_cast %39 : vector<1x64x64xf32> to vector<64x64xf32>
      %41 = vector.shape_cast %38 : vector<64x64xf32> to vector<1x64x64xf32>
      tpu.vector_store %arg5[%c0_31, %c0_32, %c0_33], %41 {strides = array<i32>} : memref<1x64x64xf32, #tpu.memory_space<vmem>>, vector<1x64x64xf32>,
      %c0_34 = arith.constant 0 : index
      %c0_35 = arith.constant 0 : index
      %42 = vector.load %arg9[%c0_34, %c0_35] : memref<1x1xf32, #tpu.memory_space<vmem>>, vector<1x1xf32>
      %c0_36 = arith.constant 0 : index
      %c0_37 = arith.constant 0 : index
      %c0_38 = arith.constant 0 : index
      %43 = vector.load %arg6[%c0_36, %c0_37, %c0_38] : memref<1x1x1xf32, #tpu.memory_space<vmem>>, vector<1x1x1xf32>
      %44 = vector.shape_cast %43 : vector<1x1x1xf32> to vector<1x1xf32>
      %45 = vector.shape_cast %42 : vector<1x1xf32> to vector<1x1x1xf32>
      tpu.vector_store %arg6[%c0_36, %c0_37, %c0_38], %45 {strides = array<i32>} : memref<1x1x1xf32, #tpu.memory_space<vmem>>, vector<1x1x1xf32>,
    } else {
    }
    return
  }
  func.func @transform_0(%arg0: i32, %arg1: i32) -> (i32, i32, i32) {
    %c0_i32 = arith.constant 0 : i32
    %c0_i32_0 = arith.constant 0 : i32
    return %arg0, %arg1, %c0_i32 : i32, i32, i32
  }
  func.func @transform_1(%arg0: i32, %arg1: i32) -> (i32, i32, i32) {
    %c2_i32 = arith.constant 2 : i32
    %0 = arith.addi %arg0, %c2_i32 : i32
    %c0_i32 = arith.constant 0 : i32
    %c0_i32_0 = arith.constant 0 : i32
    return %0, %arg1, %c0_i32 : i32, i32, i32
  }
  func.func @transform_2(%arg0: i32, %arg1: i32) -> (i32, i32, i32) {
    %c0_i32 = arith.constant 0 : i32
    %c0_i32_0 = arith.constant 0 : i32
    %c0_i32_1 = arith.constant 0 : i32
    return %arg0, %c0_i32, %c0_i32_0 : i32, i32, i32
  }
  func.func @transform_3(%arg0: i32, %arg1: i32) -> (i32, i32, i32) {
    %c0_i32 = arith.constant 0 : i32
    %c0_i32_0 = arith.constant 0 : i32
    %c0_i32_1 = arith.constant 0 : i32
    return %arg0, %c0_i32, %c0_i32_0 : i32, i32, i32
  }
  func.func @transform_4(%arg0: i32, %arg1: i32) -> (i32, i32, i32) {
    %c0_i32 = arith.constant 0 : i32
    %c0_i32_0 = arith.constant 0 : i32
    %c0_i32_1 = arith.constant 0 : i32
    return %arg0, %c0_i32, %c0_i32_0 : i32, i32, i32
  }
}

</mosaic_0001>

<llo_original>
// kernel: _lambda_.6
$region0: #{_lambda_.6}
  #allocation0 [shape = 'u32[]', space=smem, size = 0x4, offset = 0x4, fixed_abs, tag = 'smem constant byte address 0x4 - core index']
  #allocation1 [shape = 'u32[72,128]{1,0:T(1,128)}', space=vmem, size = 0x9000, scoped, tag = 'internal scratch']
  #allocation2 [shape = 'bf16[10,18,3]{2,1,0:T(8,128)(2,1)}', space=vmem, size = 0xf000, scoped, tag = 'scratch operand']
  %s0 = inlined_call_operand.vmem [shape: bf16[4,18,18,3], index: 0, kind: input, shape index: {}, may-alias: {0,1}]
  %s1 = inlined_call_operand.vmem [shape: bf16[4,18,18,3], index: 1, kind: input, shape index: {}, may-alias: {0,1}]
  %s2 = inlined_call_operand.vmem [shape: bf16[3,3,3,64], index: 2, kind: input, shape index: {}]
  %s3 = inlined_call_operand.vmem [shape: f32[1,64], index: 3, kind: input, shape index: {}]
  %s4 = inlined_call_operand.vmem [shape: bf16[4,16,16,64], index: 4, kind: output, shape index: {}]
  %s5 = sld [smem:[#allocation0]]
  $region49: #{_lambda_.6} parent=0
    _
  %s7 = ssub.s32 1, %s5
  %s8 = scalar_select 0, %s7, %s5
  loop: start=0, step=1, limit=10
  $region2: #{_lambda_.6} parent=0 // loop_pre_header
    _
  $region3: #{_lambda_.6} parent=0 // loop_header
    %s10 = sphi 0, %s14
    %p11 = scmp.ge.s32.totalorder %s10, 10
    %s17 = sphi 0, %s29
    %s18 = sphi 0, %s25
    %s19 = sphi 0, %s17
    %s20 = sphi 0, %s18
    %s21 = sphi 0, %s19
    %s22 = sphi 0, %s20
    %s34 = sphi 0, %s36
    %s37 = sphi 0, %s34
    %s38 = sphi 0, %s37
    %s54 = sphi 0, %s38
    %s66 = sphi 0, %s68
    %s69 = sphi 0, %s66
    %s70 = sphi 0, %s69
    %s86 = sphi 0, %s70
    %s90 = sphi 0, %s90
    %s92 = sphi 0, %s90
    %s93 = sphi 0, %s92
    %s107 = sphi 0, %s93
    %s111 = sphi 0, %s111
    %s113 = sphi 0, %s111
    %s114 = sphi 0, %s113
    %s128 = sphi 0, %s114
    %s136 = sphi 0, %s138
    %s139 = sphi 0, %s136
    %s140 = sphi 0, %s139
    %s156 = sphi 0, %s140
  $region4: #{_lambda_.6} parent=0 // loop_header_branch
    %13 = sbr.rel (%p11) target = $region8
  $region5: #{_lambda_.6} parent=0 // loop_body
    %s15 = ssub.s32 %s10, 1
    %s16 = ssub.s32 %s10, 2
    %s23 = sadd.s32 1, %s18
    %p24 = scmp.ge.s32.totalorder %s23, 2
    %s25 = scalar_select %p24, 0, %s23
    %s26 = sadd.s32 1, %s17
    %s27 = scalar_select %p24, %s26, %s17
    %p28 = scmp.ge.s32.totalorder %s27, 4
    %s29 = scalar_select %p28, 0, %s27
    %s30 = ssub.s32 %s17, %s29
    %s31 = ssub.s32 %s18, %s25
    %s32 = sor.u32 %s30, %s31
    %p33 = scmp.eq.s32.totalorder %s32, 0
    %s35 = sadd.s32 %s34, 1
    %s36 = scalar_select %p33, %s34, %s35
    %p39 = pneg %p33
    %p40 = scmp.eq.s32.totalorder %s10, 7
    %p41 = por %p39, %p40
    %p42 = scmp.ne.s32.totalorder %s34, %s37
    %p43 = scmp.eq.s32.totalorder %s10, 0
    %p44 = por %p42, %p43
    %p45 = scmp.ne.s32.totalorder %s34, %s37
    %p46 = scmp.eq.s32.totalorder %s15, 7
    %p47 = por %p45, %p46
    %p48 = scmp.ne.s32.totalorder %s37, %s38
    %p49 = scmp.eq.s32.totalorder %s15, 0
    %p50 = por %p48, %p49
    %p51 = scmp.ne.s32.totalorder %s37, %s38
    %p52 = scmp.eq.s32.totalorder %s16, 7
    %p53 = por %p51, %p52
    %p55 = scmp.ne.s32.totalorder %s38, %s54
    %p56 = scmp.eq.s32.totalorder %s16, 0
    %p57 = por %p55, %p56
    %s58 = sadd.s32 %s18, 1
    %s59 = smul.u32 %s58, 4
    %s60 = sadd.s32 %s25, 1
    %s61 = smul.u32 %s60, 4
    %s62 = ssub.s32 %s17, %s29
    %s63 = ssub.s32 %s59, %s61
    %s64 = sor.u32 %s62, %s63
    %p65 = scmp.eq.s32.totalorder %s64, 0
    %s67 = sadd.s32 %s66, 1
    %s68 = scalar_select %p65, %s66, %s67
    %p71 = pneg %p65
    %p72 = scmp.eq.s32.totalorder %s10, 7
    %p73 = por %p71, %p72
    %p74 = scmp.ne.s32.totalorder %s66, %s69
    %p75 = scmp.eq.s32.totalorder %s10, 0
    %p76 = por %p74, %p75
    %p77 = scmp.ne.s32.totalorder %s66, %s69
    %p78 = scmp.eq.s32.totalorder %s15, 7
    %p79 = por %p77, %p78
    %p80 = scmp.ne.s32.totalorder %s69, %s70
    %p81 = scmp.eq.s32.totalorder %s15, 0
    %p82 = por %p80, %p81
    %p83 = scmp.ne.s32.totalorder %s69, %s70
    %p84 = scmp.eq.s32.totalorder %s16, 7
    %p85 = por %p83, %p84
    %p87 = scmp.ne.s32.totalorder %s70, %s86
    %p88 = scmp.eq.s32.totalorder %s16, 0
    %p89 = por %p87, %p88
    %s91 = sadd.s32 %s90, 1
    %p94 = scmp.eq.s32.totalorder %s10, 7
    %p95 = scmp.ne.s32.totalorder %s90, %s92
    %p96 = scmp.eq.s32.totalorder %s10, 0
    %p97 = por %p95, %p96
    %p98 = scmp.ne.s32.totalorder %s90, %s92
    %p99 = scmp.eq.s32.totalorder %s15, 7
    %p100 = por %p98, %p99
    %p101 = scmp.ne.s32.totalorder %s92, %s93
    %p102 = scmp.eq.s32.totalorder %s15, 0
    %p103 = por %p101, %p102
    %p104 = scmp.ne.s32.totalorder %s92, %s93
    %p105 = scmp.eq.s32.totalorder %s16, 7
    %p106 = por %p104, %p105
    %p108 = scmp.ne.s32.totalorder %s93, %s107
    %p109 = scmp.eq.s32.totalorder %s16, 0
    %p110 = por %p108, %p109
    %s112 = sadd.s32 %s111, 1
    %p115 = scmp.eq.s32.totalorder %s10, 7
    %p116 = scmp.ne.s32.totalorder %s111, %s113
    %p117 = scmp.eq.s32.totalorder %s10, 0
    %p118 = por %p116, %p117
    %p119 = scmp.ne.s32.totalorder %s111, %s113
    %p120 = scmp.eq.s32.totalorder %s15, 7
    %p121 = por %p119, %p120
    %p122 = scmp.ne.s32.totalorder %s113, %s114
    %p123 = scmp.eq.s32.totalorder %s15, 0
    %p124 = por %p122, %p123
    %p125 = scmp.ne.s32.totalorder %s113, %s114
    %p126 = scmp.eq.s32.totalorder %s16, 7
    %p127 = por %p125, %p126
    %p129 = scmp.ne.s32.totalorder %s114, %s128
    %p130 = scmp.eq.s32.totalorder %s16, 0
    %p131 = por %p129, %p130
    %s132 = ssub.s32 %s17, %s29
    %s133 = ssub.s32 %s18, %s25
    %s134 = sor.u32 %s132, %s133
    %p135 = scmp.eq.s32.totalorder %s134, 0
    %s137 = sadd.s32 %s136, 1
    %s138 = scalar_select %p135, %s136, %s137
    %p141 = pneg %p135
    %p142 = scmp.eq.s32.totalorder %s10, 7
    %p143 = por %p141, %p142
    %p144 = scmp.ne.s32.totalorder %s136, %s139
    %p145 = scmp.eq.s32.totalorder %s10, 0
    %p146 = por %p144, %p145
    %p147 = scmp.ne.s32.totalorder %s136, %s139
    %p148 = scmp.eq.s32.totalorder %s15, 7
    %p149 = por %p147, %p148
    %p150 = scmp.ne.s32.totalorder %s139, %s140
    %p151 = scmp.eq.s32.totalorder %s15, 0
    %p152 = por %p150, %p151
    %p153 = scmp.ne.s32.totalorder %s139, %s140
    %p154 = scmp.eq.s32.totalorder %s16, 7
    %p155 = por %p153, %p154
    %p157 = scmp.ne.s32.totalorder %s140, %s156
    %p158 = scmp.eq.s32.totalorder %s16, 0
    %p159 = por %p157, %p158
    %p160 = scmp.le.s32.totalorder 1, %s10
    %p161 = scmp.lt.s32.totalorder %s10, 9
    %p162 = pnand %p160, %p161
    %p163 = pneg %p162
    // Predicated region
    $region9: #{_lambda_.6} parent=5 // pred_check
      _
    $region10: #{_lambda_.6} parent=5 // pred_check_branch
      %165 = sbr.rel (%p162) target = $region12
    $region11: #{_lambda_.6} parent=5 // pred_region
      %s166 = ssub.s32 %s10, 1
      // Predicated region
      $region13: #{_lambda_.6} parent=11 // pred_check
        %p167 = pneg %p103
      $region14: #{_lambda_.6} parent=11 // pred_check_branch
        %169 = sbr.rel (%p167) target = $region16
      $region15: #{_lambda_.6} parent=11 // pred_region
        _
      $region16: #{_lambda_.6} parent=11 // pred_fallthru
        _
      // Predicated region
      $region17: #{_lambda_.6} parent=11 // pred_check
        %p170 = pneg %p124
      $region18: #{_lambda_.6} parent=11 // pred_check_branch
        %172 = sbr.rel (%p170) target = $region20
      $region19: #{_lambda_.6} parent=11 // pred_region
        _
      $region20: #{_lambda_.6} parent=11 // pred_fallthru
        _
    $region12: #{_lambda_.6} parent=5 // pred_fallthru
      _
    %p173 = scmp.lt.s32.totalorder %s10, 8
    // Predicated region
    $region21: #{_lambda_.6} parent=5 // pred_check
      %p174 = pneg %p173
    $region22: #{_lambda_.6} parent=5 // pred_check_branch
      %176 = sbr.rel (%p174) target = $region24
    $region23: #{_lambda_.6} parent=5 // pred_region
      // Predicated region
      $region25: #{_lambda_.6} parent=23 // pred_check
        %p177 = pneg %p44
      $region26: #{_lambda_.6} parent=23 // pred_check_branch
        %179 = sbr.rel (%p177) target = $region28
      $region27: #{_lambda_.6} parent=23 // pred_region
        %s180 = smul.u32 8, %s18
        %s181 = ssub.s32 18, %s180
        %p182 = scmp.lt.s32.totalorder %s181, 8
        %s183 = scalar_select %p182, %s181, 8
        %s184 = smul.u32 4, %s183
        %s185 = smul.u32 %s184, 3
        %p186 = scmp.lt.s32.totalorder %s17, 3
        %s187 = scalar_select %p186, %s17, 3
        %p188 = scmp.lt.s32.totalorder %s180, 17
        %s189 = scalar_select %p188, %s180, 17
        %s190 = smul.addr %s189, 3
        %s191 = smul.addr %s187, 54
        %s192 = sadd.s32 %s190, %s191
        %s193 = smul.addr %s192, 4
        %s194 = scalar_lea.vmem %s0, %s193
        %s195 = smul.u32 8, %s18
        %s196 = ssub.s32 18, %s195
        %p197 = scmp.lt.s32.totalorder %s196, 8
        %s198 = scalar_select %p197, %s196, 8
        %s199 = smul.u32 4, %s198
        %s200 = smul.u32 %s199, 3
      $region28: #{_lambda_.6} parent=23 // pred_fallthru
        _
      // Predicated region
      $region29: #{_lambda_.6} parent=23 // pred_check
        %p201 = pneg %p76
      $region30: #{_lambda_.6} parent=23 // pred_check_branch
        %203 = sbr.rel (%p201) target = $region32
      $region31: #{_lambda_.6} parent=23 // pred_region
        %s204 = sadd.s32 %s18, 1
        %s205 = smul.u32 %s204, 4
        %s206 = smul.u32 2, %s205
        %p207 = scmp.lt.s32.totalorder %s17, 3
        %s208 = scalar_select %p207, %s17, 3
        %p209 = scmp.lt.s32.totalorder %s206, 17
        %s210 = scalar_select %p209, %s206, 17
        %s211 = smul.addr %s210, 3
        %s212 = smul.addr %s208, 54
        %s213 = sadd.s32 %s211, %s212
        %s214 = smul.addr %s213, 4
        %s215 = scalar_lea.vmem %s1, %s214
        %s216 = sadd.s32 %s18, 1
        %s217 = smul.u32 %s216, 4
        %s218 = smul.u32 2, %s217
      $region32: #{_lambda_.6} parent=23 // pred_fallthru
        _
    $region24: #{_lambda_.6} parent=5 // pred_fallthru
      _
    %p219 = scmp.le.s32.totalorder 1, %s10
    %p220 = scmp.lt.s32.totalorder %s10, 9
    %p221 = pnand %p219, %p220
    %p222 = pneg %p221
    // Predicated region
    $region33: #{_lambda_.6} parent=5 // pred_check
      _
    $region34: #{_lambda_.6} parent=5 // pred_check_branch
      %224 = sbr.rel (%p221) target = $region36
    $region35: #{_lambda_.6} parent=5 // pred_region
      %s225 = ssub.s32 %s10, 1
      %s226 = smul.u32 8, %s20
      %s227 = ssub.s32 18, %s226
      %p228 = scmp.lt.s32.totalorder %s227, 8
      %s229 = scalar_select %p228, %s227, 8
      %s230 = smul.u32 4, %s229
      %s231 = smul.u32 %s230, 3
      %p232 = scmp.lt.s32.totalorder %s19, 3
      %s233 = scalar_select %p232, %s19, 3
      %p234 = scmp.lt.s32.totalorder %s226, 17
      %s235 = scalar_select %p234, %s226, 17
      %s236 = smul.addr %s235, 3
      %s237 = smul.addr %s233, 54
      %s238 = sadd.s32 %s236, %s237
      %s239 = smul.addr %s238, 4
      %s240 = scalar_lea.vmem %s0, %s239
      %p241 = pneg %p50
      %p242 = pneg %p47
      %s243 = sadd.s32 %s20, 1
      %s244 = smul.u32 %s243, 4
      %s245 = smul.u32 2, %s244
      %p246 = scmp.lt.s32.totalorder %s19, 3
      %s247 = scalar_select %p246, %s19, 3
      %p248 = scmp.lt.s32.totalorder %s245, 17
      %s249 = scalar_select %p248, %s245, 17
      %s250 = smul.addr %s249, 3
      %s251 = smul.addr %s247, 54
      %s252 = sadd.s32 %s250, %s251
      %s253 = smul.addr %s252, 4
      %s254 = scalar_lea.vmem %s1, %s253
      %p255 = pneg %p82
      %p256 = pneg %p79
      %p257 = pneg %p103
      %p258 = pneg %p100
      %p259 = pneg %p124
      %p260 = pneg %p121
      %p261 = pneg %p152
      %p262 = pneg %p149
      %s263 = smul.u32 8, %s20
      %p264 = scmp.lt.s32.totalorder %s19, 3
      %s265 = scalar_select %p264, %s19, 3
      %p266 = scmp.lt.s32.totalorder %s263, 15
      %s267 = scalar_select %p266, %s263, 15
      %s268 = smul.addr %s267, 2
      %s269 = smul.addr %s265, 32
      %s270 = sadd.s32 %s268, %s269
      %s271 = smul.addr %s270, 4
      %s272 = scalar_lea.vmem %s4, %s271
      %s273 = smul.u32 8, %s20
      %s274 = ssub.s32 18, %s273
      %p275 = scmp.lt.s32.totalorder %s274, 8
      %s276 = scalar_select %p275, %s274, 8
      %s277 = smul.u32 4, %s276
      %s278 = smul.u32 %s277, 3
      %p279 = scmp.lt.s32.totalorder %s19, 3
      %s280 = scalar_select %p279, %s19, 3
      %p281 = scmp.lt.s32.totalorder %s273, 17
      %s282 = scalar_select %p281, %s273, 17
      %s283 = smul.addr %s282, 3
      %s284 = smul.addr %s280, 54
      %s285 = sadd.s32 %s283, %s284
      %s286 = smul.addr %s285, 4
      %s287 = scalar_lea.vmem %s0, %s286
      %s288 = smul.u32 8, %s20
      %s289 = ssub.s32 18, %s288
      %p290 = scmp.lt.s32.totalorder %s289, 8
      %s291 = scalar_select %p290, %s289, 8
      %s292 = smul.u32 4, %s291
      %s293 = smul.u32 %s292, 3
      %s294 = sadd.s32 %s20, 1
      %s295 = smul.u32 %s294, 4
      %s296 = smul.u32 2, %s295
      %p297 = scmp.lt.s32.totalorder %s19, 3
      %s298 = scalar_select %p297, %s19, 3
      %p299 = scmp.lt.s32.totalorder %s296, 17
      %s300 = scalar_select %p299, %s296, 17
      %s301 = smul.addr %s300, 3
      %s302 = smul.addr %s298, 54
      %s303 = sadd.s32 %s301, %s302
      %s304 = smul.addr %s303, 4
      %s305 = scalar_lea.vmem %s1, %s304
      %s306 = sadd.s32 %s20, 1
      %s307 = smul.u32 %s306, 4
      %s308 = smul.u32 2, %s307
      %s309 = smul.u32 8, %s20
      %p310 = scmp.lt.s32.totalorder %s19, 3
      %s311 = scalar_select %p310, %s19, 3
      %p312 = scmp.lt.s32.totalorder %s309, 15
      %s313 = scalar_select %p312, %s309, 15
      %s314 = smul.addr %s313, 2
      %s315 = smul.addr %s311, 32
      %s316 = sadd.s32 %s314, %s315
      %s317 = smul.addr %s316, 4
      %s318 = scalar_lea.vmem %s4, %s317
      %s319 = smul.u32 8, %s20
      %v321 = vld [vmem:[%s287] sm:$0xf]
      %v322 = vld [vmem:[%s287 + $0x4] sm:$0xf]
      %v323 = vld [vmem:[%s287 + $0x8] sm:$0x1]
      %v324 = vld [vmem:[%s287 + $0xc] sm:$0xf]
      %v325 = vld [vmem:[%s287 + $0x10] sm:$0xf]
      %v326 = vld [vmem:[%s287 + $0x14] sm:$0x1]
      %v327 = vld [vmem:[%s287 + $0x18] sm:$0xf]
      %v328 = vld [vmem:[%s287 + $0x1c] sm:$0xf]
      %v329 = vld [vmem:[%s287 + $0x20] sm:$0x1]
      %v330 = vld [vmem:[%s287 + $0x24] sm:$0xf]
      %v331 = vld [vmem:[%s287 + $0x28] sm:$0xf]
      %v332 = vld [vmem:[%s287 + $0x2c] sm:$0x1]
      %v333 = vld [vmem:[%s287 + $0x30] sm:$0xf]
      %v334 = vld [vmem:[%s287 + $0x34] sm:$0xf]
      %v335 = vld [vmem:[%s287 + $0x38] sm:$0x1]
      %v336 = vld [vmem:[%s287 + $0x3c] sm:$0xf]
      %v337 = vld [vmem:[%s287 + $0x40] sm:$0xf]
      %v338 = vld [vmem:[%s287 + $0x44] sm:$0x1]
      %v339 = vld [vmem:[%s287 + $0x48] sm:$0xf]
      %v340 = vld [vmem:[%s287 + $0x4c] sm:$0xf]
      %v341 = vld [vmem:[%s287 + $0x50] sm:$0x1]
      %v342 = vld [vmem:[%s287 + $0x54] sm:$0xf]
      %v343 = vld [vmem:[%s287 + $0x58] sm:$0xf]
      %v344 = vld [vmem:[%s287 + $0x5c] sm:$0x1]
      %vm345 = vcmask 19456
      %346 = vst.msk [vmem:[#allocation2] sm:$0xf] %vm345, %v321
      %347 = vst.msk [vmem:[#allocation2 + $0x4] sm:$0xf] %vm345, %v322
      %vm348 = vcmask 16384
      %349 = vst.msk [vmem:[#allocation2 + $0x8] sm:$0x1] %vm348, %v323
      %350 = vst.msk [vmem:[#allocation2 + $0xc] sm:$0xf] %vm345, %v324
      %351 = vst.msk [vmem:[#allocation2 + $0x10] sm:$0xf] %vm345, %v325
      %352 = vst.msk [vmem:[#allocation2 + $0x14] sm:$0x1] %vm348, %v326
      %353 = vst.msk [vmem:[#allocation2 + $0x18] sm:$0xf] %vm345, %v327
      %354 = vst.msk [vmem:[#allocation2 + $0x1c] sm:$0xf] %vm345, %v328
      %355 = vst.msk [vmem:[#allocation2 + $0x20] sm:$0x1] %vm348, %v329
      %356 = vst.msk [vmem:[#allocation2 + $0x24] sm:$0xf] %vm345, %v330
      %357 = vst.msk [vmem:[#allocation2 + $0x28] sm:$0xf] %vm345, %v331
      %358 = vst.msk [vmem:[#allocation2 + $0x2c] sm:$0x1] %vm348, %v332
      %359 = vst.msk [vmem:[#allocation2 + $0x30] sm:$0xf] %vm345, %v333
      %360 = vst.msk [vmem:[#allocation2 + $0x34] sm:$0xf] %vm345, %v334
      %361 = vst.msk [vmem:[#allocation2 + $0x38] sm:$0x1] %vm348, %v335
      %362 = vst.msk [vmem:[#allocation2 + $0x3c] sm:$0xf] %vm345, %v336
      %363 = vst.msk [vmem:[#allocation2 + $0x40] sm:$0xf] %vm345, %v337
      %364 = vst.msk [vmem:[#allocation2 + $0x44] sm:$0x1] %vm348, %v338
      %365 = vst.msk [vmem:[#allocation2 + $0x48] sm:$0xf] %vm345, %v339
      %366 = vst.msk [vmem:[#allocation2 + $0x4c] sm:$0xf] %vm345, %v340
      %367 = vst.msk [vmem:[#allocation2 + $0x50] sm:$0x1] %vm348, %v341
      %368 = vst.msk [vmem:[#allocation2 + $0x54] sm:$0xf] %vm345, %v342
      %369 = vst.msk [vmem:[#allocation2 + $0x58] sm:$0xf] %vm345, %v343
      %370 = vst.msk [vmem:[#allocation2 + $0x5c] sm:$0x1] %vm348, %v344
      %v371 = vld [vmem:[%s305] sm:$0xf]
      %v372 = vld [vmem:[%s305 + $0x4] sm:$0xf]
      %v373 = vld [vmem:[%s305 + $0x8] sm:$0x1]
      %v374 = vld [vmem:[%s305 + $0xc] sm:$0xf]
      %v375 = vld [vmem:[%s305 + $0x10] sm:$0xf]
      %v376 = vld [vmem:[%s305 + $0x14] sm:$0x1]
      %s377 = scalar_lea.vmem [#allocation2], 96
      %378 = vst.msk [vmem:[%s377] sm:$0xf] %vm345, %v371
      %379 = vst.msk [vmem:[%s377 + $0x4] sm:$0xf] %vm345, %v372
      %380 = vst.msk [vmem:[%s377 + $0x8] sm:$0x1] %vm348, %v373
      %381 = vst.msk [vmem:[%s377 + $0xc] sm:$0xf] %vm345, %v374
      %382 = vst.msk [vmem:[%s377 + $0x10] sm:$0xf] %vm345, %v375
      %383 = vst.msk [vmem:[%s377 + $0x14] sm:$0x1] %vm348, %v376
      %v384 = vld [vmem:[%s3] sm:$0x1]
      %v385 = vld [vmem:[#allocation2] sm:$0xf]
      %v386 = vld [vmem:[#allocation2 + $0x4] sm:$0xf]
      %v387 = vld [vmem:[#allocation2 + $0xc] sm:$0xf]
      %v388 = vld [vmem:[#allocation2 + $0x10] sm:$0xf]
      %v389 = vld [vmem:[#allocation2 + $0x18] sm:$0xf]
      %v390 = vld [vmem:[#allocation2 + $0x1c] sm:$0xf]
      %v391 = vld [vmem:[#allocation2 + $0x24] sm:$0xf]
      %v392 = vld [vmem:[#allocation2 + $0x28] sm:$0xf]
      %v393 = vld [vmem:[#allocation2 + $0x30] sm:$0xf]
      %v394 = vld [vmem:[#allocation2 + $0x34] sm:$0xf]
      %v395 = vld [vmem:[#allocation2 + $0x3c] sm:$0xf]
      %v396 = vld [vmem:[#allocation2 + $0x40] sm:$0xf]
      %v397 = vld [vmem:[#allocation2 + $0x48] sm:$0xf]
      %v398 = vld [vmem:[#allocation2 + $0x4c] sm:$0xf]
      %v399 = vld [vmem:[#allocation2 + $0x54] sm:$0xf]
      %v400 = vld [vmem:[#allocation2 + $0x58] sm:$0xf]
      %v401 = vld [vmem:[%s2] sm:$0x3]
      %v402 = vld [vmem:[#allocation2 + $0x8] sm:$0x1]
      %v403 = vld [vmem:[#allocation2 + $0x14] sm:$0x1]
      %v404 = vld [vmem:[#allocation2 + $0x20] sm:$0x1]
      %v405 = vld [vmem:[#allocation2 + $0x2c] sm:$0x1]
      %v406 = vld [vmem:[#allocation2 + $0x38] sm:$0x1]
      %v407 = vld [vmem:[#allocation2 + $0x44] sm:$0x1]
      %v408 = vld [vmem:[#allocation2 + $0x50] sm:$0x1]
      %v409 = vld [vmem:[#allocation2 + $0x5c] sm:$0x1]
      %vm410 = vsmask.f32 3328
      %vm411 = vsmask.f32 7440
      %vm412 = vmor %vm410, %vm411
      %v414 = vshrl.u32 %v385, 16
      %v416 = vrot.slane %v414, 4
      %v417 = vshll.u32 %v385, 16
      %v419 = vrot.slane %v417, 5
      %v420 = vor.u32 %v416, %v419
      %v421 = vrot.slane %v420, 4
      %v423 = vshll.u32 %v386, 16
      %v425 = vrot.slane %v423, 5
      %v426 = vsel %vm412, %v421, %v425
      %v427 = vshrl.u32 %v386, 16
      %v429 = vrot.slane %v427, 4
      %v430 = vor.u32 %v429, %v425
      %v431 = vrot.slane %v430, 4
      %v433 = vshll.u32 %v402, 16
      %v435 = vrot.slane %v433, 5
      %v436 = vsel %vm412, %v431, %v435
      %v438 = vshrl.u32 %v387, 16
      %v440 = vrot.slane %v438, 4
      %v441 = vshll.u32 %v387, 16
      %v443 = vrot.slane %v441, 5
      %v444 = vor.u32 %v440, %v443
      %v445 = vrot.slane %v444, 4
      %v447 = vshll.u32 %v388, 16
      %v449 = vrot.slane %v447, 5
      %v450 = vsel %vm412, %v445, %v449
      %v451 = vshrl.u32 %v388, 16
      %v453 = vrot.slane %v451, 4
      %v454 = vor.u32 %v453, %v449
      %v455 = vrot.slane %v454, 4
      %v457 = vshll.u32 %v403, 16
      %v459 = vrot.slane %v457, 5
      %v460 = vsel %vm412, %v455, %v459
      %v462 = vshrl.u32 %v389, 16
      %v464 = vrot.slane %v462, 4
      %v465 = vshll.u32 %v389, 16
      %v467 = vrot.slane %v465, 5
      %v468 = vor.u32 %v464, %v467
      %v469 = vrot.slane %v468, 4
      %v471 = vshll.u32 %v390, 16
      %v473 = vrot.slane %v471, 5
      %v474 = vsel %vm412, %v469, %v473
      %v475 = vshrl.u32 %v390, 16
      %v477 = vrot.slane %v475, 4
      %v478 = vor.u32 %v477, %v473
      %v479 = vrot.slane %v478, 4
      %v481 = vshll.u32 %v404, 16
      %v483 = vrot.slane %v481, 5
      %v484 = vsel %vm412, %v479, %v483
      %v486 = vshrl.u32 %v391, 16
      %v488 = vrot.slane %v486, 4
      %v489 = vshll.u32 %v391, 16
      %v491 = vrot.slane %v489, 5
      %v492 = vor.u32 %v488, %v491
      %v493 = vrot.slane %v492, 4
      %v495 = vshll.u32 %v392, 16
      %v497 = vrot.slane %v495, 5
      %v498 = vsel %vm412, %v493, %v497
      %v499 = vshrl.u32 %v392, 16
      %v501 = vrot.slane %v499, 4
      %v502 = vor.u32 %v501, %v497
      %v503 = vrot.slane %v502, 4
      %v505 = vshll.u32 %v405, 16
      %v507 = vrot.slane %v505, 5
      %v508 = vsel %vm412, %v503, %v507
      %v510 = vshrl.u32 %v393, 16
      %v512 = vrot.slane %v510, 4
      %v513 = vshll.u32 %v393, 16
      %v515 = vrot.slane %v513, 5
      %v516 = vor.u32 %v512, %v515
      %v517 = vrot.slane %v516, 4
      %v519 = vshll.u32 %v394, 16
      %v521 = vrot.slane %v519, 5
      %v522 = vsel %vm412, %v517, %v521
      %v523 = vshrl.u32 %v394, 16
      %v525 = vrot.slane %v523, 4
      %v526 = vor.u32 %v525, %v521
      %v527 = vrot.slane %v526, 4
      %v529 = vshll.u32 %v406, 16
      %v531 = vrot.slane %v529, 5
      %v532 = vsel %vm412, %v527, %v531
      %v534 = vshrl.u32 %v395, 16
      %v536 = vrot.slane %v534, 4
      %v537 = vshll.u32 %v395, 16
      %v539 = vrot.slane %v537, 5
      %v540 = vor.u32 %v536, %v539
      %v541 = vrot.slane %v540, 4
      %v543 = vshll.u32 %v396, 16
      %v545 = vrot.slane %v543, 5
      %v546 = vsel %vm412, %v541, %v545
      %v547 = vshrl.u32 %v396, 16
      %v549 = vrot.slane %v547, 4
      %v550 = vor.u32 %v549, %v545
      %v551 = vrot.slane %v550, 4
      %v553 = vshll.u32 %v407, 16
      %v555 = vrot.slane %v553, 5
      %v556 = vsel %vm412, %v551, %v555
      %v558 = vshrl.u32 %v397, 16
      %v560 = vrot.slane %v558, 4
      %v561 = vshll.u32 %v397, 16
      %v563 = vrot.slane %v561, 5
      %v564 = vor.u32 %v560, %v563
      %v565 = vrot.slane %v564, 4
      %v567 = vshll.u32 %v398, 16
      %v569 = vrot.slane %v567, 5
      %v570 = vsel %vm412, %v565, %v569
      %v571 = vshrl.u32 %v398, 16
      %v573 = vrot.slane %v571, 4
      %v574 = vor.u32 %v573, %v569
      %v575 = vrot.slane %v574, 4
      %v577 = vshll.u32 %v408, 16
      %v579 = vrot.slane %v577, 5
      %v580 = vsel %vm412, %v575, %v579
      %v582 = vshrl.u32 %v399, 16
      %v584 = vrot.slane %v582, 4
      %v585 = vshll.u32 %v399, 16
      %v587 = vrot.slane %v585, 5
      %v588 = vor.u32 %v584, %v587
      %v589 = vrot.slane %v588, 4
      %v591 = vshll.u32 %v400, 16
      %v593 = vrot.slane %v591, 5
      %v594 = vsel %vm412, %v589, %v593
      %v595 = vshrl.u32 %v400, 16
      %v597 = vrot.slane %v595, 4
      %v598 = vor.u32 %v597, %v593
      %v599 = vrot.slane %v598, 4
      %v601 = vshll.u32 %v409, 16
      %v603 = vrot.slane %v601, 5
      %v604 = vsel %vm412, %v599, %v603
      %s605 = scalar_lea.vmem %s2, 2
      %v606 = vld [vmem:[%s605] sm:$0x3]
      %v607 = vunpack.c.l.b16 %v426
      %v608 = vunpack.c.l.b16 %v436
      %v609 = vunpack.c.l.b16 %v450
      %v610 = vunpack.c.l.b16 %v460
      %v611 = vunpack.c.l.b16 %v474
      %v612 = vunpack.c.l.b16 %v484
      %v613 = vunpack.c.l.b16 %v498
      %v614 = vunpack.c.l.b16 %v508
      %v615 = vunpack.c.l.b16 %v522
      %v616 = vunpack.c.l.b16 %v532
      %v617 = vunpack.c.l.b16 %v546
      %v618 = vunpack.c.l.b16 %v556
      %v619 = vunpack.c.l.b16 %v570
      %v620 = vunpack.c.l.b16 %v580
      %v621 = vunpack.c.l.b16 %v594
      %v622 = vunpack.c.l.b16 %v604
      %v623 = vpack.c.b16 %v608, %v607
      %v624 = vpack.c.b16 %v610, %v609
      %v625 = vpack.c.b16 %v612, %v611
      %v626 = vpack.c.b16 %v614, %v613
      %v627 = vpack.c.b16 %v616, %v615
      %v628 = vpack.c.b16 %v618, %v617
      %v629 = vpack.c.b16 %v620, %v619
      %v630 = vpack.c.b16 %v622, %v621
      %vm631 = vcmask 23552
      %v633 = vsel %vm631, %v623, 0
      %v636 = vsel %vm631, %v624, 0
      %v639 = vsel %vm631, %v625, 0
      %v642 = vsel %vm631, %v626, 0
      %v645 = vsel %vm631, %v627, 0
      %v648 = vsel %vm631, %v628, 0
      %v651 = vsel %vm631, %v629, 0
      %v654 = vsel %vm631, %v630, 0
      %vm656 = vcmask 1040384
      %vm657 = vcmask 1041408
      %v658 = vsel %vm656, 4294967295, 65535
      %v659 = vsel %vm657, %v658, 0
      %v661 = vand.u32 %v606, %v659
      %663 = vmatpush.bf16.msra.mxu0 0
      %664 = vmatpush.bf16.msra.mxu0 0
      %665 = vmatpush.bf16.msra.mxu0 0
      %666 = vmatpush.bf16.msra.mxu0 0
      %667 = vmatpush.bf16.msra.mxu0 0
      %668 = vmatpush.bf16.msra.mxu0 0
      %669 = vmatpush.bf16.msra.mxu0 0
      %670 = vmatpush.bf16.msra.mxu0 %v661
      %671 = vmatmul.bf16.gmra.mxu0 %v633
      %v672 = vpop.f32.mrf.mxu0
      %v673 = vadd.f32 0.0, %v672
      %v674 = vpop.f32.mrf.mxu0
      %v675 = vadd.f32 0.0, %v674
      %676 = vmatmul.bf16.gmra.mxu0 %v636
      %v677 = vpop.f32.mrf.mxu0
      %v678 = vadd.f32 0.0, %v677
      %v679 = vpop.f32.mrf.mxu0
      %v680 = vadd.f32 0.0, %v679
      %681 = vmatmul.bf16.gmra.mxu0 %v639
      %v682 = vpop.f32.mrf.mxu0
      %v683 = vadd.f32 0.0, %v682
      %v684 = vpop.f32.mrf.mxu0
      %v685 = vadd.f32 0.0, %v684
      %686 = vmatmul.bf16.gmra.mxu0 %v642
      %v687 = vpop.f32.mrf.mxu0
      %v688 = vadd.f32 0.0, %v687
      %v689 = vpop.f32.mrf.mxu0
      %v690 = vadd.f32 0.0, %v689
      %691 = vmatmul.bf16.gmra.mxu0 %v645
      %v692 = vpop.f32.mrf.mxu0
      %v693 = vadd.f32 0.0, %v692
      %v694 = vpop.f32.mrf.mxu0
      %v695 = vadd.f32 0.0, %v694
      %696 = vmatmul.bf16.gmra.mxu0 %v648
      %v697 = vpop.f32.mrf.mxu0
      %v698 = vadd.f32 0.0, %v697
      %v699 = vpop.f32.mrf.mxu0
      %v700 = vadd.f32 0.0, %v699
      %701 = vmatmul.bf16.gmra.mxu0 %v651
      %v702 = vpop.f32.mrf.mxu0
      %v703 = vadd.f32 0.0, %v702
      %v704 = vpop.f32.mrf.mxu0
      %v705 = vadd.f32 0.0, %v704
      %706 = vmatmul.bf16.gmra.mxu0 %v654
      %v707 = vpop.f32.mrf.mxu0
      %v708 = vadd.f32 0.0, %v707
      %v709 = vpop.f32.mrf.mxu0
      %v710 = vadd.f32 0.0, %v709
      %711 = vdwg.mxu0
      %v728 = vunpack.c.l.b16 %v385
      %v729 = vunpack.c.l.b16 %v386
      %v730 = vunpack.c.l.b16 %v387
      %v731 = vunpack.c.l.b16 %v388
      %v732 = vunpack.c.l.b16 %v389
      %v733 = vunpack.c.l.b16 %v390
      %v734 = vunpack.c.l.b16 %v391
      %v735 = vunpack.c.l.b16 %v392
      %v736 = vunpack.c.l.b16 %v393
      %v737 = vunpack.c.l.b16 %v394
      %v738 = vunpack.c.l.b16 %v395
      %v739 = vunpack.c.l.b16 %v396
      %v740 = vunpack.c.l.b16 %v397
      %v741 = vunpack.c.l.b16 %v398
      %v742 = vunpack.c.l.b16 %v399
      %v743 = vunpack.c.l.b16 %v400
      %v744 = vpack.c.b16 %v729, %v728
      %v745 = vpack.c.b16 %v731, %v730
      %v746 = vpack.c.b16 %v733, %v732
      %v747 = vpack.c.b16 %v735, %v734
      %v748 = vpack.c.b16 %v737, %v736
      %v749 = vpack.c.b16 %v739, %v738
      %v750 = vpack.c.b16 %v741, %v740
      %v751 = vpack.c.b16 %v743, %v742
      %v753 = vsel %vm631, %v744, 0
      %v756 = vsel %vm631, %v745, 0
      %v759 = vsel %vm631, %v746, 0
      %v762 = vsel %vm631, %v747, 0
      %v765 = vsel %vm631, %v748, 0
      %v768 = vsel %vm631, %v749, 0
      %v771 = vsel %vm631, %v750, 0
      %v774 = vsel %vm631, %v751, 0
      %v777 = vand.u32 %v401, %v659
      %779 = vmatpush.bf16.msra.mxu0 0
      %780 = vmatpush.bf16.msra.mxu0 0
      %781 = vmatpush.bf16.msra.mxu0 0
      %782 = vmatpush.bf16.msra.mxu0 0
      %783 = vmatpush.bf16.msra.mxu0 0
      %784 = vmatpush.bf16.msra.mxu0 0
      %785 = vmatpush.bf16.msra.mxu0 0
      %786 = vmatpush.bf16.msra.mxu0 %v777
      %787 = vmatmul.bf16.gmra.mxu0 %v753
      %v788 = vpop.f32.mrf.mxu0
      %v789 = vadd.f32 %v673, %v788
      %v790 = vpop.f32.mrf.mxu0
      %v791 = vadd.f32 %v675, %v790
      %792 = vmatmul.bf16.gmra.mxu0 %v756
      %v793 = vpop.f32.mrf.mxu0
      %v794 = vadd.f32 %v678, %v793
      %v795 = vpop.f32.mrf.mxu0
      %v796 = vadd.f32 %v680, %v795
      %797 = vmatmul.bf16.gmra.mxu0 %v759
      %v798 = vpop.f32.mrf.mxu0
      %v799 = vadd.f32 %v683, %v798
      %v800 = vpop.f32.mrf.mxu0
      %v801 = vadd.f32 %v685, %v800
      %802 = vmatmul.bf16.gmra.mxu0 %v762
      %v803 = vpop.f32.mrf.mxu0
      %v804 = vadd.f32 %v688, %v803
      %v805 = vpop.f32.mrf.mxu0
      %v806 = vadd.f32 %v690, %v805
      %807 = vmatmul.bf16.gmra.mxu0 %v765
      %v808 = vpop.f32.mrf.mxu0
      %v809 = vadd.f32 %v693, %v808
      %v810 = vpop.f32.mrf.mxu0
      %v811 = vadd.f32 %v695, %v810
      %812 = vmatmul.bf16.gmra.mxu0 %v768
      %v813 = vpop.f32.mrf.mxu0
      %v814 = vadd.f32 %v698, %v813
      %v815 = vpop.f32.mrf.mxu0
      %v816 = vadd.f32 %v700, %v815
      %817 = vmatmul.bf16.gmra.mxu0 %v771
      %v818 = vpop.f32.mrf.mxu0
      %v819 = vadd.f32 %v703, %v818
      %v820 = vpop.f32.mrf.mxu0
      %v821 = vadd.f32 %v705, %v820
      %822 = vmatmul.bf16.gmra.mxu0 %v774
      %v823 = vpop.f32.mrf.mxu0
      %v824 = vadd.f32 %v708, %v823
      %v825 = vpop.f32.mrf.mxu0
      %v826 = vadd.f32 %v710, %v825
      %827 = vdwg.mxu0
      %v828 = vld [vmem:[#allocation2] sm:$0xe]
      %v829 = vld [vmem:[#allocation2 + $0xc] sm:$0xe]
      %v830 = vld [vmem:[#allocation2 + $0x18] sm:$0xe]
      %v831 = vld [vmem:[#allocation2 + $0x24] sm:$0xe]
      %v832 = vld [vmem:[#allocation2 + $0x30] sm:$0xe]
      %v833 = vld [vmem:[#allocation2 + $0x3c] sm:$0xe]
      %v834 = vld [vmem:[#allocation2 + $0x48] sm:$0xe]
      %v835 = vld [vmem:[#allocation2 + $0x54] sm:$0xe]
      %vm852 = vcmask 1042432
      %vm853 = vcmask 1046532
      %vm854 = vmor %vm852, %vm853
      %v855 = vrot.slane %v828, 5
      %v856 = vrot.slane %v855, 4
      %v857 = vrot.slane %v386, 5
      %v858 = vsel %vm854, %v856, %v857
      %v859 = vrot.slane %v857, 4
      %v860 = vrot.slane %v402, 5
      %v861 = vsel %vm854, %v859, %v860
      %v862 = vrot.slane %v829, 5
      %v863 = vrot.slane %v862, 4
      %v864 = vrot.slane %v388, 5
      %v865 = vsel %vm854, %v863, %v864
      %v866 = vrot.slane %v864, 4
      %v867 = vrot.slane %v403, 5
      %v868 = vsel %vm854, %v866, %v867
      %v869 = vrot.slane %v830, 5
      %v870 = vrot.slane %v869, 4
      %v871 = vrot.slane %v390, 5
      %v872 = vsel %vm854, %v870, %v871
      %v873 = vrot.slane %v871, 4
      %v874 = vrot.slane %v404, 5
      %v875 = vsel %vm854, %v873, %v874
      %v876 = vrot.slane %v831, 5
      %v877 = vrot.slane %v876, 4
      %v878 = vrot.slane %v392, 5
      %v879 = vsel %vm854, %v877, %v878
      %v880 = vrot.slane %v878, 4
      %v881 = vrot.slane %v405, 5
      %v882 = vsel %vm854, %v880, %v881
      %v883 = vrot.slane %v832, 5
      %v884 = vrot.slane %v883, 4
      %v885 = vrot.slane %v394, 5
      %v886 = vsel %vm854, %v884, %v885
      %v887 = vrot.slane %v885, 4
      %v888 = vrot.slane %v406, 5
      %v889 = vsel %vm854, %v887, %v888
      %v890 = vrot.slane %v833, 5
      %v891 = vrot.slane %v890, 4
      %v892 = vrot.slane %v396, 5
      %v893 = vsel %vm854, %v891, %v892
      %v894 = vrot.slane %v892, 4
      %v895 = vrot.slane %v407, 5
      %v896 = vsel %vm854, %v894, %v895
      %v897 = vrot.slane %v834, 5
      %v898 = vrot.slane %v897, 4
      %v899 = vrot.slane %v398, 5
      %v900 = vsel %vm854, %v898, %v899
      %v901 = vrot.slane %v899, 4
      %v902 = vrot.slane %v408, 5
      %v903 = vsel %vm854, %v901, %v902
      %v904 = vrot.slane %v835, 5
      %v905 = vrot.slane %v904, 4
      %v906 = vrot.slane %v400, 5
      %v907 = vsel %vm854, %v905, %v906
      %v908 = vrot.slane %v906, 4
      %v909 = vrot.slane %v409, 5
      %v910 = vsel %vm854, %v908, %v909
      %s911 = scalar_lea.vmem %s2, 4
      %v912 = vld [vmem:[%s911] sm:$0x3]
      %v913 = vunpack.c.l.b16 %v858
      %v914 = vunpack.c.l.b16 %v861
      %v915 = vunpack.c.l.b16 %v865
      %v916 = vunpack.c.l.b16 %v868
      %v917 = vunpack.c.l.b16 %v872
      %v918 = vunpack.c.l.b16 %v875
      %v919 = vunpack.c.l.b16 %v879
      %v920 = vunpack.c.l.b16 %v882
      %v921 = vunpack.c.l.b16 %v886
      %v922 = vunpack.c.l.b16 %v889
      %v923 = vunpack.c.l.b16 %v893
      %v924 = vunpack.c.l.b16 %v896
      %v925 = vunpack.c.l.b16 %v900
      %v926 = vunpack.c.l.b16 %v903
      %v927 = vunpack.c.l.b16 %v907
      %v928 = vunpack.c.l.b16 %v910
      %v929 = vpack.c.b16 %v914, %v913
      %v930 = vpack.c.b16 %v916, %v915
      %v931 = vpack.c.b16 %v918, %v917
      %v932 = vpack.c.b16 %v920, %v919
      %v933 = vpack.c.b16 %v922, %v921
      %v934 = vpack.c.b16 %v924, %v923
      %v935 = vpack.c.b16 %v926, %v925
      %v936 = vpack.c.b16 %v928, %v927
      %v938 = vsel %vm631, %v929, 0
      %v941 = vsel %vm631, %v930, 0
      %v944 = vsel %vm631, %v931, 0
      %v947 = vsel %vm631, %v932, 0
      %v950 = vsel %vm631, %v933, 0
      %v953 = vsel %vm631, %v934, 0
      %v956 = vsel %vm631, %v935, 0
      %v959 = vsel %vm631, %v936, 0
      %v962 = vand.u32 %v912, %v659
      %964 = vmatpush.bf16.msra.mxu0 0
      %965 = vmatpush.bf16.msra.mxu0 0
      %966 = vmatpush.bf16.msra.mxu0 0
      %967 = vmatpush.bf16.msra.mxu0 0
      %968 = vmatpush.bf16.msra.mxu0 0
      %969 = vmatpush.bf16.msra.mxu0 0
      %970 = vmatpush.bf16.msra.mxu0 0
      %971 = vmatpush.bf16.msra.mxu0 %v962
      %972 = vmatmul.bf16.gmra.mxu0 %v938
      %v973 = vpop.f32.mrf.mxu0
      %v974 = vadd.f32 0.0, %v973
      %v975 = vpop.f32.mrf.mxu0
      %v976 = vadd.f32 0.0, %v975
      %977 = vmatmul.bf16.gmra.mxu0 %v941
      %v978 = vpop.f32.mrf.mxu0
      %v979 = vadd.f32 0.0, %v978
      %v980 = vpop.f32.mrf.mxu0
      %v981 = vadd.f32 0.0, %v980
      %982 = vmatmul.bf16.gmra.mxu0 %v944
      %v983 = vpop.f32.mrf.mxu0
      %v984 = vadd.f32 0.0, %v983
      %v985 = vpop.f32.mrf.mxu0
      %v986 = vadd.f32 0.0, %v985
      %987 = vmatmul.bf16.gmra.mxu0 %v947
      %v988 = vpop.f32.mrf.mxu0
      %v989 = vadd.f32 0.0, %v988
      %v990 = vpop.f32.mrf.mxu0
      %v991 = vadd.f32 0.0, %v990
      %992 = vmatmul.bf16.gmra.mxu0 %v950
      %v993 = vpop.f32.mrf.mxu0
      %v994 = vadd.f32 0.0, %v993
      %v995 = vpop.f32.mrf.mxu0
      %v996 = vadd.f32 0.0, %v995
      %997 = vmatmul.bf16.gmra.mxu0 %v953
      %v998 = vpop.f32.mrf.mxu0
      %v999 = vadd.f32 0.0, %v998
      %v1000 = vpop.f32.mrf.mxu0
      %v1001 = vadd.f32 0.0, %v1000
      %1002 = vmatmul.bf16.gmra.mxu0 %v956
      %v1003 = vpop.f32.mrf.mxu0
      %v1004 = vadd.f32 0.0, %v1003
      %v1005 = vpop.f32.mrf.mxu0
      %v1006 = vadd.f32 0.0, %v1005
      %1007 = vmatmul.bf16.gmra.mxu0 %v959
      %v1008 = vpop.f32.mrf.mxu0
      %v1009 = vadd.f32 0.0, %v1008
      %v1010 = vpop.f32.mrf.mxu0
      %v1011 = vadd.f32 0.0, %v1010
      %1012 = vdwg.mxu0
      %v1013 = vadd.f32 %v789, %v974
      %v1014 = vadd.f32 %v791, %v976
      %v1015 = vadd.f32 %v794, %v979
      %v1016 = vadd.f32 %v796, %v981
      %v1017 = vadd.f32 %v799, %v984
      %v1018 = vadd.f32 %v801, %v986
      %v1019 = vadd.f32 %v804, %v989
      %v1020 = vadd.f32 %v806, %v991
      %v1021 = vadd.f32 %v809, %v994
      %v1022 = vadd.f32 %v811, %v996
      %v1023 = vadd.f32 %v814, %v999
      %v1024 = vadd.f32 %v816, %v1001
      %v1025 = vadd.f32 %v819, %v1004
      %v1026 = vadd.f32 %v821, %v1006
      %v1027 = vadd.f32 %v824, %v1009
      %v1028 = vadd.f32 %v826, %v1011
      %s1029 = scalar_lea.vmem [#allocation2], 12
      %v1030 = vld [vmem:[%s1029] sm:$0xf]
      %v1031 = vld [vmem:[%s1029 + $0x4] sm:$0xf]
      %v1032 = vld [vmem:[%s1029 + $0xc] sm:$0xf]
      %v1033 = vld [vmem:[%s1029 + $0x10] sm:$0xf]
      %v1034 = vld [vmem:[%s1029 + $0x18] sm:$0xf]
      %v1035 = vld [vmem:[%s1029 + $0x1c] sm:$0xf]
      %v1036 = vld [vmem:[%s1029 + $0x24] sm:$0xf]
      %v1037 = vld [vmem:[%s1029 + $0x28] sm:$0xf]
      %v1038 = vld [vmem:[%s1029 + $0x30] sm:$0xf]
      %v1039 = vld [vmem:[%s1029 + $0x34] sm:$0xf]
      %v1040 = vld [vmem:[%s1029 + $0x3c] sm:$0xf]
      %v1041 = vld [vmem:[%s1029 + $0x40] sm:$0xf]
      %v1042 = vld [vmem:[%s1029 + $0x48] sm:$0xf]
      %v1043 = vld [vmem:[%s1029 + $0x4c] sm:$0xf]
      %v1044 = vld [vmem:[%s1029 + $0x54] sm:$0xf]
      %v1045 = vld [vmem:[%s1029 + $0x58] sm:$0xf]
      %s1046 = scalar_lea.vmem %s2, 6
      %v1047 = vld [vmem:[%s1046] sm:$0x3]
      %v1064 = vunpack.c.l.b16 %v1030
      %v1065 = vunpack.c.l.b16 %v1031
      %v1066 = vunpack.c.l.b16 %v1032
      %v1067 = vunpack.c.l.b16 %v1033
      %v1068 = vunpack.c.l.b16 %v1034
      %v1069 = vunpack.c.l.b16 %v1035
      %v1070 = vunpack.c.l.b16 %v1036
      %v1071 = vunpack.c.l.b16 %v1037
      %v1072 = vunpack.c.l.b16 %v1038
      %v1073 = vunpack.c.l.b16 %v1039
      %v1074 = vunpack.c.l.b16 %v1040
      %v1075 = vunpack.c.l.b16 %v1041
      %v1076 = vunpack.c.l.b16 %v1042
      %v1077 = vunpack.c.l.b16 %v1043
      %v1078 = vunpack.c.l.b16 %v1044
      %v1079 = vunpack.c.l.b16 %v1045
      %v1080 = vpack.c.b16 %v1065, %v1064
      %v1081 = vpack.c.b16 %v1067, %v1066
      %v1082 = vpack.c.b16 %v1069, %v1068
      %v1083 = vpack.c.b16 %v1071, %v1070
      %v1084 = vpack.c.b16 %v1073, %v1072
      %v1085 = vpack.c.b16 %v1075, %v1074
      %v1086 = vpack.c.b16 %v1077, %v1076
      %v1087 = vpack.c.b16 %v1079, %v1078
      %v1089 = vsel %vm631, %v1080, 0
      %v1092 = vsel %vm631, %v1081, 0
      %v1095 = vsel %vm631, %v1082, 0
      %v1098 = vsel %vm631, %v1083, 0
      %v1101 = vsel %vm631, %v1084, 0
      %v1104 = vsel %vm631, %v1085, 0
      %v1107 = vsel %vm631, %v1086, 0
      %v1110 = vsel %vm631, %v1087, 0
      %v1113 = vand.u32 %v1047, %v659
      %1115 = vmatpush.bf16.msra.mxu0 0
      %1116 = vmatpush.bf16.msra.mxu0 0
      %1117 = vmatpush.bf16.msra.mxu0 0
      %1118 = vmatpush.bf16.msra.mxu0 0
      %1119 = vmatpush.bf16.msra.mxu0 0
      %1120 = vmatpush.bf16.msra.mxu0 0
      %1121 = vmatpush.bf16.msra.mxu0 0
      %1122 = vmatpush.bf16.msra.mxu0 %v1113
      %1123 = vmatmul.bf16.gmra.mxu0 %v1089
      %v1124 = vpop.f32.mrf.mxu0
      %v1125 = vadd.f32 0.0, %v1124
      %v1126 = vpop.f32.mrf.mxu0
      %v1127 = vadd.f32 0.0, %v1126
      %1128 = vmatmul.bf16.gmra.mxu0 %v1092
      %v1129 = vpop.f32.mrf.mxu0
      %v1130 = vadd.f32 0.0, %v1129
      %v1131 = vpop.f32.mrf.mxu0
      %v1132 = vadd.f32 0.0, %v1131
      %1133 = vmatmul.bf16.gmra.mxu0 %v1095
      %v1134 = vpop.f32.mrf.mxu0
      %v1135 = vadd.f32 0.0, %v1134
      %v1136 = vpop.f32.mrf.mxu0
      %v1137 = vadd.f32 0.0, %v1136
      %1138 = vmatmul.bf16.gmra.mxu0 %v1098
      %v1139 = vpop.f32.mrf.mxu0
      %v1140 = vadd.f32 0.0, %v1139
      %v1141 = vpop.f32.mrf.mxu0
      %v1142 = vadd.f32 0.0, %v1141
      %1143 = vmatmul.bf16.gmra.mxu0 %v1101
      %v1144 = vpop.f32.mrf.mxu0
      %v1145 = vadd.f32 0.0, %v1144
      %v1146 = vpop.f32.mrf.mxu0
      %v1147 = vadd.f32 0.0, %v1146
      %1148 = vmatmul.bf16.gmra.mxu0 %v1104
      %v1149 = vpop.f32.mrf.mxu0
      %v1150 = vadd.f32 0.0, %v1149
      %v1151 = vpop.f32.mrf.mxu0
      %v1152 = vadd.f32 0.0, %v1151
      %1153 = vmatmul.bf16.gmra.mxu0 %v1107
      %v1154 = vpop.f32.mrf.mxu0
      %v1155 = vadd.f32 0.0, %v1154
      %v1156 = vpop.f32.mrf.mxu0
      %v1157 = vadd.f32 0.0, %v1156
      %1158 = vmatmul.bf16.gmra.mxu0 %v1110
      %v1159 = vpop.f32.mrf.mxu0
      %v1160 = vadd.f32 0.0, %v1159
      %v1161 = vpop.f32.mrf.mxu0
      %v1162 = vadd.f32 0.0, %v1161
      %1163 = vdwg.mxu0
      %v1164 = vadd.f32 %v1013, %v1125
      %v1165 = vadd.f32 %v1014, %v1127
      %v1166 = vadd.f32 %v1015, %v1130
      %v1167 = vadd.f32 %v1016, %v1132
      %v1168 = vadd.f32 %v1017, %v1135
      %v1169 = vadd.f32 %v1018, %v1137
      %v1170 = vadd.f32 %v1019, %v1140
      %v1171 = vadd.f32 %v1020, %v1142
      %v1172 = vadd.f32 %v1021, %v1145
      %v1173 = vadd.f32 %v1022, %v1147
      %v1174 = vadd.f32 %v1023, %v1150
      %v1175 = vadd.f32 %v1024, %v1152
      %v1176 = vadd.f32 %v1025, %v1155
      %v1177 = vadd.f32 %v1026, %v1157
      %v1178 = vadd.f32 %v1027, %v1160
      %v1179 = vadd.f32 %v1028, %v1162
      %v1180 = vld [vmem:[%s1029] sm:$0xf]
      %v1181 = vld [vmem:[%s1029 + $0x4] sm:$0xf]
      %v1182 = vld [vmem:[%s1029 + $0x8] sm:$0x1]
      %v1183 = vld [vmem:[%s1029 + $0xc] sm:$0xf]
      %v1184 = vld [vmem:[%s1029 + $0x10] sm:$0xf]
      %v1185 = vld [vmem:[%s1029 + $0x14] sm:$0x1]
      %v1186 = vld [vmem:[%s1029 + $0x18] sm:$0xf]
      %v1187 = vld [vmem:[%s1029 + $0x1c] sm:$0xf]
      %v1188 = vld [vmem:[%s1029 + $0x20] sm:$0x1]
      %v1189 = vld [vmem:[%s1029 + $0x24] sm:$0xf]
      %v1190 = vld [vmem:[%s1029 + $0x28] sm:$0xf]
      %v1191 = vld [vmem:[%s1029 + $0x2c] sm:$0x1]
      %v1192 = vld [vmem:[%s1029 + $0x30] sm:$0xf]
      %v1193 = vld [vmem:[%s1029 + $0x34] sm:$0xf]
      %v1194 = vld [vmem:[%s1029 + $0x38] sm:$0x1]
      %v1195 = vld [vmem:[%s1029 + $0x3c] sm:$0xf]
      %v1196 = vld [vmem:[%s1029 + $0x40] sm:$0xf]
      %v1197 = vld [vmem:[%s1029 + $0x44] sm:$0x1]
      %v1198 = vld [vmem:[%s1029 + $0x48] sm:$0xf]
      %v1199 = vld [vmem:[%s1029 + $0x4c] sm:$0xf]
      %v1200 = vld [vmem:[%s1029 + $0x50] sm:$0x1]
      %v1201 = vld [vmem:[%s1029 + $0x54] sm:$0xf]
      %v1202 = vld [vmem:[%s1029 + $0x58] sm:$0xf]
      %v1203 = vld [vmem:[%s1029 + $0x5c] sm:$0x1]
      %v1205 = vshrl.u32 %v1180, 16
      %v1207 = vrot.slane %v1205, 4
      %v1208 = vshll.u32 %v1180, 16
      %v1210 = vrot.slane %v1208, 5
      %v1211 = vor.u32 %v1207, %v1210
      %v1212 = vrot.slane %v1211, 4
      %v1214 = vshll.u32 %v1181, 16
      %v1216 = vrot.slane %v1214, 5
      %v1217 = vsel %vm412, %v1212, %v1216
      %v1218 = vshrl.u32 %v1181, 16
      %v1220 = vrot.slane %v1218, 4
      %v1221 = vor.u32 %v1220, %v1216
      %v1222 = vrot.slane %v1221, 4
      %v1224 = vshll.u32 %v1182, 16
      %v1226 = vrot.slane %v1224, 5
      %v1227 = vsel %vm412, %v1222, %v1226
      %v1229 = vshrl.u32 %v1183, 16
      %v1231 = vrot.slane %v1229, 4
      %v1232 = vshll.u32 %v1183, 16
      %v1234 = vrot.slane %v1232, 5
      %v1235 = vor.u32 %v1231, %v1234
      %v1236 = vrot.slane %v1235, 4
      %v1238 = vshll.u32 %v1184, 16
      %v1240 = vrot.slane %v1238, 5
      %v1241 = vsel %vm412, %v1236, %v1240
      %v1242 = vshrl.u32 %v1184, 16
      %v1244 = vrot.slane %v1242, 4
      %v1245 = vor.u32 %v1244, %v1240
      %v1246 = vrot.slane %v1245, 4
      %v1248 = vshll.u32 %v1185, 16
      %v1250 = vrot.slane %v1248, 5
      %v1251 = vsel %vm412, %v1246, %v1250
      %v1253 = vshrl.u32 %v1186, 16
      %v1255 = vrot.slane %v1253, 4
      %v1256 = vshll.u32 %v1186, 16
      %v1258 = vrot.slane %v1256, 5
      %v1259 = vor.u32 %v1255, %v1258
      %v1260 = vrot.slane %v1259, 4
      %v1262 = vshll.u32 %v1187, 16
      %v1264 = vrot.slane %v1262, 5
      %v1265 = vsel %vm412, %v1260, %v1264
      %v1266 = vshrl.u32 %v1187, 16
      %v1268 = vrot.slane %v1266, 4
      %v1269 = vor.u32 %v1268, %v1264
      %v1270 = vrot.slane %v1269, 4
      %v1272 = vshll.u32 %v1188, 16
      %v1274 = vrot.slane %v1272, 5
      %v1275 = vsel %vm412, %v1270, %v1274
      %v1277 = vshrl.u32 %v1189, 16
      %v1279 = vrot.slane %v1277, 4
      %v1280 = vshll.u32 %v1189, 16
      %v1282 = vrot.slane %v1280, 5
      %v1283 = vor.u32 %v1279, %v1282
      %v1284 = vrot.slane %v1283, 4
      %v1286 = vshll.u32 %v1190, 16
      %v1288 = vrot.slane %v1286, 5
      %v1289 = vsel %vm412, %v1284, %v1288
      %v1290 = vshrl.u32 %v1190, 16
      %v1292 = vrot.slane %v1290, 4
      %v1293 = vor.u32 %v1292, %v1288
      %v1294 = vrot.slane %v1293, 4
      %v1296 = vshll.u32 %v1191, 16
      %v1298 = vrot.slane %v1296, 5
      %v1299 = vsel %vm412, %v1294, %v1298
      %v1301 = vshrl.u32 %v1192, 16
      %v1303 = vrot.slane %v1301, 4
      %v1304 = vshll.u32 %v1192, 16
      %v1306 = vrot.slane %v1304, 5
      %v1307 = vor.u32 %v1303, %v1306
      %v1308 = vrot.slane %v1307, 4
      %v1310 = vshll.u32 %v1193, 16
      %v1312 = vrot.slane %v1310, 5
      %v1313 = vsel %vm412, %v1308, %v1312
      %v1314 = vshrl.u32 %v1193, 16
      %v1316 = vrot.slane %v1314, 4
      %v1317 = vor.u32 %v1316, %v1312
      %v1318 = vrot.slane %v1317, 4
      %v1320 = vshll.u32 %v1194, 16
      %v1322 = vrot.slane %v1320, 5
      %v1323 = vsel %vm412, %v1318, %v1322
      %v1325 = vshrl.u32 %v1195, 16
      %v1327 = vrot.slane %v1325, 4
      %v1328 = vshll.u32 %v1195, 16
      %v1330 = vrot.slane %v1328, 5
      %v1331 = vor.u32 %v1327, %v1330
      %v1332 = vrot.slane %v1331, 4
      %v1334 = vshll.u32 %v1196, 16
      %v1336 = vrot.slane %v1334, 5
      %v1337 = vsel %vm412, %v1332, %v1336
      %v1338 = vshrl.u32 %v1196, 16
      %v1340 = vrot.slane %v1338, 4
      %v1341 = vor.u32 %v1340, %v1336
      %v1342 = vrot.slane %v1341, 4
      %v1344 = vshll.u32 %v1197, 16
      %v1346 = vrot.slane %v1344, 5
      %v1347 = vsel %vm412, %v1342, %v1346
      %v1349 = vshrl.u32 %v1198, 16
      %v1351 = vrot.slane %v1349, 4
      %v1352 = vshll.u32 %v1198, 16
      %v1354 = vrot.slane %v1352, 5
      %v1355 = vor.u32 %v1351, %v1354
      %v1356 = vrot.slane %v1355, 4
      %v1358 = vshll.u32 %v1199, 16
      %v1360 = vrot.slane %v1358, 5
      %v1361 = vsel %vm412, %v1356, %v1360
      %v1362 = vshrl.u32 %v1199, 16
      %v1364 = vrot.slane %v1362, 4
      %v1365 = vor.u32 %v1364, %v1360
      %v1366 = vrot.slane %v1365, 4
      %v1368 = vshll.u32 %v1200, 16
      %v1370 = vrot.slane %v1368, 5
      %v1371 = vsel %vm412, %v1366, %v1370
      %v1373 = vshrl.u32 %v1201, 16
      %v1375 = vrot.slane %v1373, 4
      %v1376 = vshll.u32 %v1201, 16
      %v1378 = vrot.slane %v1376, 5
      %v1379 = vor.u32 %v1375, %v1378
      %v1380 = vrot.slane %v1379, 4
      %v1382 = vshll.u32 %v1202, 16
      %v1384 = vrot.slane %v1382, 5
      %v1385 = vsel %vm412, %v1380, %v1384
      %v1386 = vshrl.u32 %v1202, 16
      %v1388 = vrot.slane %v1386, 4
      %v1389 = vor.u32 %v1388, %v1384
      %v1390 = vrot.slane %v1389, 4
      %v1392 = vshll.u32 %v1203, 16
      %v1394 = vrot.slane %v1392, 5
      %v1395 = vsel %vm412, %v1390, %v1394
      %s1396 = scalar_lea.vmem %s2, 8
      %v1397 = vld [vmem:[%s1396] sm:$0x3]
      %v1398 = vunpack.c.l.b16 %v1217
      %v1399 = vunpack.c.l.b16 %v1227
      %v1400 = vunpack.c.l.b16 %v1241
      %v1401 = vunpack.c.l.b16 %v1251
      %v1402 = vunpack.c.l.b16 %v1265
      %v1403 = vunpack.c.l.b16 %v1275
      %v1404 = vunpack.c.l.b16 %v1289
      %v1405 = vunpack.c.l.b16 %v1299
      %v1406 = vunpack.c.l.b16 %v1313
      %v1407 = vunpack.c.l.b16 %v1323
      %v1408 = vunpack.c.l.b16 %v1337
      %v1409 = vunpack.c.l.b16 %v1347
      %v1410 = vunpack.c.l.b16 %v1361
      %v1411 = vunpack.c.l.b16 %v1371
      %v1412 = vunpack.c.l.b16 %v1385
      %v1413 = vunpack.c.l.b16 %v1395
      %v1414 = vpack.c.b16 %v1399, %v1398
      %v1415 = vpack.c.b16 %v1401, %v1400
      %v1416 = vpack.c.b16 %v1403, %v1402
      %v1417 = vpack.c.b16 %v1405, %v1404
      %v1418 = vpack.c.b16 %v1407, %v1406
      %v1419 = vpack.c.b16 %v1409, %v1408
      %v1420 = vpack.c.b16 %v1411, %v1410
      %v1421 = vpack.c.b16 %v1413, %v1412
      %v1423 = vsel %vm631, %v1414, 0
      %v1426 = vsel %vm631, %v1415, 0
      %v1429 = vsel %vm631, %v1416, 0
      %v1432 = vsel %vm631, %v1417, 0
      %v1435 = vsel %vm631, %v1418, 0
      %v1438 = vsel %vm631, %v1419, 0
      %v1441 = vsel %vm631, %v1420, 0
      %v1444 = vsel %vm631, %v1421, 0
      %v1447 = vand.u32 %v1397, %v659
      %1449 = vmatpush.bf16.msra.mxu0 0
      %1450 = vmatpush.bf16.msra.mxu0 0
      %1451 = vmatpush.bf16.msra.mxu0 0
      %1452 = vmatpush.bf16.msra.mxu0 0
      %1453 = vmatpush.bf16.msra.mxu0 0
      %1454 = vmatpush.bf16.msra.mxu0 0
      %1455 = vmatpush.bf16.msra.mxu0 0
      %1456 = vmatpush.bf16.msra.mxu0 %v1447
      %1457 = vmatmul.bf16.gmra.mxu0 %v1423
      %v1458 = vpop.f32.mrf.mxu0
      %v1459 = vadd.f32 0.0, %v1458
      %v1460 = vpop.f32.mrf.mxu0
      %v1461 = vadd.f32 0.0, %v1460
      %1462 = vmatmul.bf16.gmra.mxu0 %v1426
      %v1463 = vpop.f32.mrf.mxu0
      %v1464 = vadd.f32 0.0, %v1463
      %v1465 = vpop.f32.mrf.mxu0
      %v1466 = vadd.f32 0.0, %v1465
      %1467 = vmatmul.bf16.gmra.mxu0 %v1429
      %v1468 = vpop.f32.mrf.mxu0
      %v1469 = vadd.f32 0.0, %v1468
      %v1470 = vpop.f32.mrf.mxu0
      %v1471 = vadd.f32 0.0, %v1470
      %1472 = vmatmul.bf16.gmra.mxu0 %v1432
      %v1473 = vpop.f32.mrf.mxu0
      %v1474 = vadd.f32 0.0, %v1473
      %v1475 = vpop.f32.mrf.mxu0
      %v1476 = vadd.f32 0.0, %v1475
      %1477 = vmatmul.bf16.gmra.mxu0 %v1435
      %v1478 = vpop.f32.mrf.mxu0
      %v1479 = vadd.f32 0.0, %v1478
      %v1480 = vpop.f32.mrf.mxu0
      %v1481 = vadd.f32 0.0, %v1480
      %1482 = vmatmul.bf16.gmra.mxu0 %v1438
      %v1483 = vpop.f32.mrf.mxu0
      %v1484 = vadd.f32 0.0, %v1483
      %v1485 = vpop.f32.mrf.mxu0
      %v1486 = vadd.f32 0.0, %v1485
      %1487 = vmatmul.bf16.gmra.mxu0 %v1441
      %v1488 = vpop.f32.mrf.mxu0
      %v1489 = vadd.f32 0.0, %v1488
      %v1490 = vpop.f32.mrf.mxu0
      %v1491 = vadd.f32 0.0, %v1490
      %1492 = vmatmul.bf16.gmra.mxu0 %v1444
      %v1493 = vpop.f32.mrf.mxu0
      %v1494 = vadd.f32 0.0, %v1493
      %v1495 = vpop.f32.mrf.mxu0
      %v1496 = vadd.f32 0.0, %v1495
      %1497 = vdwg.mxu0
      %v1498 = vadd.f32 %v1164, %v1459
      %v1499 = vadd.f32 %v1165, %v1461
      %v1500 = vadd.f32 %v1166, %v1464
      %v1501 = vadd.f32 %v1167, %v1466
      %v1502 = vadd.f32 %v1168, %v1469
      %v1503 = vadd.f32 %v1169, %v1471
      %v1504 = vadd.f32 %v1170, %v1474
      %v1505 = vadd.f32 %v1171, %v1476
      %v1506 = vadd.f32 %v1172, %v1479
      %v1507 = vadd.f32 %v1173, %v1481
      %v1508 = vadd.f32 %v1174, %v1484
      %v1509 = vadd.f32 %v1175, %v1486
      %v1510 = vadd.f32 %v1176, %v1489
      %v1511 = vadd.f32 %v1177, %v1491
      %v1512 = vadd.f32 %v1178, %v1494
      %v1513 = vadd.f32 %v1179, %v1496
      %v1514 = vld [vmem:[%s1029] sm:$0xe]
      %v1515 = vld [vmem:[%s1029 + $0xc] sm:$0xe]
      %v1516 = vld [vmem:[%s1029 + $0x18] sm:$0xe]
      %v1517 = vld [vmem:[%s1029 + $0x24] sm:$0xe]
      %v1518 = vld [vmem:[%s1029 + $0x30] sm:$0xe]
      %v1519 = vld [vmem:[%s1029 + $0x3c] sm:$0xe]
      %v1520 = vld [vmem:[%s1029 + $0x48] sm:$0xe]
      %v1521 = vld [vmem:[%s1029 + $0x54] sm:$0xe]
      %v1546 = vrot.slane %v1514, 5
      %v1547 = vrot.slane %v1546, 4
      %v1548 = vrot.slane %v1181, 5
      %v1549 = vsel %vm854, %v1547, %v1548
      %v1550 = vrot.slane %v1548, 4
      %v1551 = vrot.slane %v1182, 5
      %v1552 = vsel %vm854, %v1550, %v1551
      %v1553 = vrot.slane %v1515, 5
      %v1554 = vrot.slane %v1553, 4
      %v1555 = vrot.slane %v1184, 5
      %v1556 = vsel %vm854, %v1554, %v1555
      %v1557 = vrot.slane %v1555, 4
      %v1558 = vrot.slane %v1185, 5
      %v1559 = vsel %vm854, %v1557, %v1558
      %v1560 = vrot.slane %v1516, 5
      %v1561 = vrot.slane %v1560, 4
      %v1562 = vrot.slane %v1187, 5
      %v1563 = vsel %vm854, %v1561, %v1562
      %v1564 = vrot.slane %v1562, 4
      %v1565 = vrot.slane %v1188, 5
      %v1566 = vsel %vm854, %v1564, %v1565
      %v1567 = vrot.slane %v1517, 5
      %v1568 = vrot.slane %v1567, 4
      %v1569 = vrot.slane %v1190, 5
      %v1570 = vsel %vm854, %v1568, %v1569
      %v1571 = vrot.slane %v1569, 4
      %v1572 = vrot.slane %v1191, 5
      %v1573 = vsel %vm854, %v1571, %v1572
      %v1574 = vrot.slane %v1518, 5
      %v1575 = vrot.slane %v1574, 4
      %v1576 = vrot.slane %v1193, 5
      %v1577 = vsel %vm854, %v1575, %v1576
      %v1578 = vrot.slane %v1576, 4
      %v1579 = vrot.slane %v1194, 5
      %v1580 = vsel %vm854, %v1578, %v1579
      %v1581 = vrot.slane %v1519, 5
      %v1582 = vrot.slane %v1581, 4
      %v1583 = vrot.slane %v1196, 5
      %v1584 = vsel %vm854, %v1582, %v1583
      %v1585 = vrot.slane %v1583, 4
      %v1586 = vrot.slane %v1197, 5
      %v1587 = vsel %vm854, %v1585, %v1586
      %v1588 = vrot.slane %v1520, 5
      %v1589 = vrot.slane %v1588, 4
      %v1590 = vrot.slane %v1199, 5
      %v1591 = vsel %vm854, %v1589, %v1590
      %v1592 = vrot.slane %v1590, 4
      %v1593 = vrot.slane %v1200, 5
      %v1594 = vsel %vm854, %v1592, %v1593
      %v1595 = vrot.slane %v1521, 5
      %v1596 = vrot.slane %v1595, 4
      %v1597 = vrot.slane %v1202, 5
      %v1598 = vsel %vm854, %v1596, %v1597
      %v1599 = vrot.slane %v1597, 4
      %v1600 = vrot.slane %v1203, 5
      %v1601 = vsel %vm854, %v1599, %v1600
      %s1602 = scalar_lea.vmem %s2, 10
      %v1603 = vld [vmem:[%s1602] sm:$0x3]
      %v1604 = vunpack.c.l.b16 %v1549
      %v1605 = vunpack.c.l.b16 %v1552
      %v1606 = vunpack.c.l.b16 %v1556
      %v1607 = vunpack.c.l.b16 %v1559
      %v1608 = vunpack.c.l.b16 %v1563
      %v1609 = vunpack.c.l.b16 %v1566
      %v1610 = vunpack.c.l.b16 %v1570
      %v1611 = vunpack.c.l.b16 %v1573
      %v1612 = vunpack.c.l.b16 %v1577
      %v1613 = vunpack.c.l.b16 %v1580
      %v1614 = vunpack.c.l.b16 %v1584
      %v1615 = vunpack.c.l.b16 %v1587
      %v1616 = vunpack.c.l.b16 %v1591
      %v1617 = vunpack.c.l.b16 %v1594
      %v1618 = vunpack.c.l.b16 %v1598
      %v1619 = vunpack.c.l.b16 %v1601
      %v1620 = vpack.c.b16 %v1605, %v1604
      %v1621 = vpack.c.b16 %v1607, %v1606
      %v1622 = vpack.c.b16 %v1609, %v1608
      %v1623 = vpack.c.b16 %v1611, %v1610
      %v1624 = vpack.c.b16 %v1613, %v1612
      %v1625 = vpack.c.b16 %v1615, %v1614
      %v1626 = vpack.c.b16 %v1617, %v1616
      %v1627 = vpack.c.b16 %v1619, %v1618
      %v1629 = vsel %vm631, %v1620, 0
      %v1632 = vsel %vm631, %v1621, 0
      %v1635 = vsel %vm631, %v1622, 0
      %v1638 = vsel %vm631, %v1623, 0
      %v1641 = vsel %vm631, %v1624, 0
      %v1644 = vsel %vm631, %v1625, 0
      %v1647 = vsel %vm631, %v1626, 0
      %v1650 = vsel %vm631, %v1627, 0
      %v1653 = vand.u32 %v1603, %v659
      %1655 = vmatpush.bf16.msra.mxu0 0
      %1656 = vmatpush.bf16.msra.mxu0 0
      %1657 = vmatpush.bf16.msra.mxu0 0
      %1658 = vmatpush.bf16.msra.mxu0 0
      %1659 = vmatpush.bf16.msra.mxu0 0
      %1660 = vmatpush.bf16.msra.mxu0 0
      %1661 = vmatpush.bf16.msra.mxu0 0
      %1662 = vmatpush.bf16.msra.mxu0 %v1653
      %1663 = vmatmul.bf16.gmra.mxu0 %v1629
      %v1664 = vpop.f32.mrf.mxu0
      %v1665 = vadd.f32 0.0, %v1664
      %v1666 = vpop.f32.mrf.mxu0
      %v1667 = vadd.f32 0.0, %v1666
      %1668 = vmatmul.bf16.gmra.mxu0 %v1632
      %v1669 = vpop.f32.mrf.mxu0
      %v1670 = vadd.f32 0.0, %v1669
      %v1671 = vpop.f32.mrf.mxu0
      %v1672 = vadd.f32 0.0, %v1671
      %1673 = vmatmul.bf16.gmra.mxu0 %v1635
      %v1674 = vpop.f32.mrf.mxu0
      %v1675 = vadd.f32 0.0, %v1674
      %v1676 = vpop.f32.mrf.mxu0
      %v1677 = vadd.f32 0.0, %v1676
      %1678 = vmatmul.bf16.gmra.mxu0 %v1638
      %v1679 = vpop.f32.mrf.mxu0
      %v1680 = vadd.f32 0.0, %v1679
      %v1681 = vpop.f32.mrf.mxu0
      %v1682 = vadd.f32 0.0, %v1681
      %1683 = vmatmul.bf16.gmra.mxu0 %v1641
      %v1684 = vpop.f32.mrf.mxu0
      %v1685 = vadd.f32 0.0, %v1684
      %v1686 = vpop.f32.mrf.mxu0
      %v1687 = vadd.f32 0.0, %v1686
      %1688 = vmatmul.bf16.gmra.mxu0 %v1644
      %v1689 = vpop.f32.mrf.mxu0
      %v1690 = vadd.f32 0.0, %v1689
      %v1691 = vpop.f32.mrf.mxu0
      %v1692 = vadd.f32 0.0, %v1691
      %1693 = vmatmul.bf16.gmra.mxu0 %v1647
      %v1694 = vpop.f32.mrf.mxu0
      %v1695 = vadd.f32 0.0, %v1694
      %v1696 = vpop.f32.mrf.mxu0
      %v1697 = vadd.f32 0.0, %v1696
      %1698 = vmatmul.bf16.gmra.mxu0 %v1650
      %v1699 = vpop.f32.mrf.mxu0
      %v1700 = vadd.f32 0.0, %v1699
      %v1701 = vpop.f32.mrf.mxu0
      %v1702 = vadd.f32 0.0, %v1701
      %1703 = vdwg.mxu0
      %v1704 = vadd.f32 %v1498, %v1665
      %v1705 = vadd.f32 %v1499, %v1667
      %v1706 = vadd.f32 %v1500, %v1670
      %v1707 = vadd.f32 %v1501, %v1672
      %v1708 = vadd.f32 %v1502, %v1675
      %v1709 = vadd.f32 %v1503, %v1677
      %v1710 = vadd.f32 %v1504, %v1680
      %v1711 = vadd.f32 %v1505, %v1682
      %v1712 = vadd.f32 %v1506, %v1685
      %v1713 = vadd.f32 %v1507, %v1687
      %v1714 = vadd.f32 %v1508, %v1690
      %v1715 = vadd.f32 %v1509, %v1692
      %v1716 = vadd.f32 %v1510, %v1695
      %v1717 = vadd.f32 %v1511, %v1697
      %v1718 = vadd.f32 %v1512, %v1700
      %v1719 = vadd.f32 %v1513, %v1702
      %s1720 = scalar_lea.vmem [#allocation2], 24
      %v1721 = vld [vmem:[%s1720] sm:$0xf]
      %v1722 = vld [vmem:[%s1720 + $0x4] sm:$0xf]
      %v1723 = vld [vmem:[%s1720 + $0xc] sm:$0xf]
      %v1724 = vld [vmem:[%s1720 + $0x10] sm:$0xf]
      %v1725 = vld [vmem:[%s1720 + $0x18] sm:$0xf]
      %v1726 = vld [vmem:[%s1720 + $0x1c] sm:$0xf]
      %v1727 = vld [vmem:[%s1720 + $0x24] sm:$0xf]
      %v1728 = vld [vmem:[%s1720 + $0x28] sm:$0xf]
      %v1729 = vld [vmem:[%s1720 + $0x30] sm:$0xf]
      %v1730 = vld [vmem:[%s1720 + $0x34] sm:$0xf]
      %v1731 = vld [vmem:[%s1720 + $0x3c] sm:$0xf]
      %v1732 = vld [vmem:[%s1720 + $0x40] sm:$0xf]
      %v1733 = vld [vmem:[%s1720 + $0x48] sm:$0xf]
      %v1734 = vld [vmem:[%s1720 + $0x4c] sm:$0xf]
      %v1735 = vld [vmem:[%s1720 + $0x54] sm:$0xf]
      %v1736 = vld [vmem:[%s1720 + $0x58] sm:$0xf]
      %s1737 = scalar_lea.vmem %s2, 12
      %v1738 = vld [vmem:[%s1737] sm:$0x3]
      %v1755 = vunpack.c.l.b16 %v1721
      %v1756 = vunpack.c.l.b16 %v1722
      %v1757 = vunpack.c.l.b16 %v1723
      %v1758 = vunpack.c.l.b16 %v1724
      %v1759 = vunpack.c.l.b16 %v1725
      %v1760 = vunpack.c.l.b16 %v1726
      %v1761 = vunpack.c.l.b16 %v1727
      %v1762 = vunpack.c.l.b16 %v1728
      %v1763 = vunpack.c.l.b16 %v1729
      %v1764 = vunpack.c.l.b16 %v1730
      %v1765 = vunpack.c.l.b16 %v1731
      %v1766 = vunpack.c.l.b16 %v1732
      %v1767 = vunpack.c.l.b16 %v1733
      %v1768 = vunpack.c.l.b16 %v1734
      %v1769 = vunpack.c.l.b16 %v1735
      %v1770 = vunpack.c.l.b16 %v1736
      %v1771 = vpack.c.b16 %v1756, %v1755
      %v1772 = vpack.c.b16 %v1758, %v1757
      %v1773 = vpack.c.b16 %v1760, %v1759
      %v1774 = vpack.c.b16 %v1762, %v1761
      %v1775 = vpack.c.b16 %v1764, %v1763
      %v1776 = vpack.c.b16 %v1766, %v1765
      %v1777 = vpack.c.b16 %v1768, %v1767
      %v1778 = vpack.c.b16 %v1770, %v1769
      %v1780 = vsel %vm631, %v1771, 0
      %v1783 = vsel %vm631, %v1772, 0
      %v1786 = vsel %vm631, %v1773, 0
      %v1789 = vsel %vm631, %v1774, 0
      %v1792 = vsel %vm631, %v1775, 0
      %v1795 = vsel %vm631, %v1776, 0
      %v1798 = vsel %vm631, %v1777, 0
      %v1801 = vsel %vm631, %v1778, 0
      %v1804 = vand.u32 %v1738, %v659
      %1806 = vmatpush.bf16.msra.mxu0 0
      %1807 = vmatpush.bf16.msra.mxu0 0
      %1808 = vmatpush.bf16.msra.mxu0 0
      %1809 = vmatpush.bf16.msra.mxu0 0
      %1810 = vmatpush.bf16.msra.mxu0 0
      %1811 = vmatpush.bf16.msra.mxu0 0
      %1812 = vmatpush.bf16.msra.mxu0 0
      %1813 = vmatpush.bf16.msra.mxu0 %v1804
      %1814 = vmatmul.bf16.gmra.mxu0 %v1780
      %v1815 = vpop.f32.mrf.mxu0
      %v1816 = vadd.f32 0.0, %v1815
      %v1817 = vpop.f32.mrf.mxu0
      %v1818 = vadd.f32 0.0, %v1817
      %1819 = vmatmul.bf16.gmra.mxu0 %v1783
      %v1820 = vpop.f32.mrf.mxu0
      %v1821 = vadd.f32 0.0, %v1820
      %v1822 = vpop.f32.mrf.mxu0
      %v1823 = vadd.f32 0.0, %v1822
      %1824 = vmatmul.bf16.gmra.mxu0 %v1786
      %v1825 = vpop.f32.mrf.mxu0
      %v1826 = vadd.f32 0.0, %v1825
      %v1827 = vpop.f32.mrf.mxu0
      %v1828 = vadd.f32 0.0, %v1827
      %1829 = vmatmul.bf16.gmra.mxu0 %v1789
      %v1830 = vpop.f32.mrf.mxu0
      %v1831 = vadd.f32 0.0, %v1830
      %v1832 = vpop.f32.mrf.mxu0
      %v1833 = vadd.f32 0.0, %v1832
      %1834 = vmatmul.bf16.gmra.mxu0 %v1792
      %v1835 = vpop.f32.mrf.mxu0
      %v1836 = vadd.f32 0.0, %v1835
      %v1837 = vpop.f32.mrf.mxu0
      %v1838 = vadd.f32 0.0, %v1837
      %1839 = vmatmul.bf16.gmra.mxu0 %v1795
      %v1840 = vpop.f32.mrf.mxu0
      %v1841 = vadd.f32 0.0, %v1840
      %v1842 = vpop.f32.mrf.mxu0
      %v1843 = vadd.f32 0.0, %v1842
      %1844 = vmatmul.bf16.gmra.mxu0 %v1798
      %v1845 = vpop.f32.mrf.mxu0
      %v1846 = vadd.f32 0.0, %v1845
      %v1847 = vpop.f32.mrf.mxu0
      %v1848 = vadd.f32 0.0, %v1847
      %1849 = vmatmul.bf16.gmra.mxu0 %v1801
      %v1850 = vpop.f32.mrf.mxu0
      %v1851 = vadd.f32 0.0, %v1850
      %v1852 = vpop.f32.mrf.mxu0
      %v1853 = vadd.f32 0.0, %v1852
      %1854 = vdwg.mxu0
      %v1855 = vadd.f32 %v1704, %v1816
      %v1856 = vadd.f32 %v1705, %v1818
      %v1857 = vadd.f32 %v1706, %v1821
      %v1858 = vadd.f32 %v1707, %v1823
      %v1859 = vadd.f32 %v1708, %v1826
      %v1860 = vadd.f32 %v1709, %v1828
      %v1861 = vadd.f32 %v1710, %v1831
      %v1862 = vadd.f32 %v1711, %v1833
      %v1863 = vadd.f32 %v1712, %v1836
      %v1864 = vadd.f32 %v1713, %v1838
      %v1865 = vadd.f32 %v1714, %v1841
      %v1866 = vadd.f32 %v1715, %v1843
      %v1867 = vadd.f32 %v1716, %v1846
      %v1868 = vadd.f32 %v1717, %v1848
      %v1869 = vadd.f32 %v1718, %v1851
      %v1870 = vadd.f32 %v1719, %v1853
      %v1871 = vld [vmem:[%s1720] sm:$0xf]
      %v1872 = vld [vmem:[%s1720 + $0x4] sm:$0xf]
      %v1873 = vld [vmem:[%s1720 + $0x8] sm:$0x1]
      %v1874 = vld [vmem:[%s1720 + $0xc] sm:$0xf]
      %v1875 = vld [vmem:[%s1720 + $0x10] sm:$0xf]
      %v1876 = vld [vmem:[%s1720 + $0x14] sm:$0x1]
      %v1877 = vld [vmem:[%s1720 + $0x18] sm:$0xf]
      %v1878 = vld [vmem:[%s1720 + $0x1c] sm:$0xf]
      %v1879 = vld [vmem:[%s1720 + $0x20] sm:$0x1]
      %v1880 = vld [vmem:[%s1720 + $0x24] sm:$0xf]
      %v1881 = vld [vmem:[%s1720 + $0x28] sm:$0xf]
      %v1882 = vld [vmem:[%s1720 + $0x2c] sm:$0x1]
      %v1883 = vld [vmem:[%s1720 + $0x30] sm:$0xf]
      %v1884 = vld [vmem:[%s1720 + $0x34] sm:$0xf]
      %v1885 = vld [vmem:[%s1720 + $0x38] sm:$0x1]
      %v1886 = vld [vmem:[%s1720 + $0x3c] sm:$0xf]
      %v1887 = vld [vmem:[%s1720 + $0x40] sm:$0xf]
      %v1888 = vld [vmem:[%s1720 + $0x44] sm:$0x1]
      %v1889 = vld [vmem:[%s1720 + $0x48] sm:$0xf]
      %v1890 = vld [vmem:[%s1720 + $0x4c] sm:$0xf]
      %v1891 = vld [vmem:[%s1720 + $0x50] sm:$0x1]
      %v1892 = vld [vmem:[%s1720 + $0x54] sm:$0xf]
      %v1893 = vld [vmem:[%s1720 + $0x58] sm:$0xf]
      %v1894 = vld [vmem:[%s1720 + $0x5c] sm:$0x1]
      %v1896 = vshrl.u32 %v1871, 16
      %v1898 = vrot.slane %v1896, 4
      %v1899 = vshll.u32 %v1871, 16
      %v1901 = vrot.slane %v1899, 5
      %v1902 = vor.u32 %v1898, %v1901
      %v1903 = vrot.slane %v1902, 4
      %v1905 = vshll.u32 %v1872, 16
      %v1907 = vrot.slane %v1905, 5
      %v1908 = vsel %vm412, %v1903, %v1907
      %v1909 = vshrl.u32 %v1872, 16
      %v1911 = vrot.slane %v1909, 4
      %v1912 = vor.u32 %v1911, %v1907
      %v1913 = vrot.slane %v1912, 4
      %v1915 = vshll.u32 %v1873, 16
      %v1917 = vrot.slane %v1915, 5
      %v1918 = vsel %vm412, %v1913, %v1917
      %v1920 = vshrl.u32 %v1874, 16
      %v1922 = vrot.slane %v1920, 4
      %v1923 = vshll.u32 %v1874, 16
      %v1925 = vrot.slane %v1923, 5
      %v1926 = vor.u32 %v1922, %v1925
      %v1927 = vrot.slane %v1926, 4
      %v1929 = vshll.u32 %v1875, 16
      %v1931 = vrot.slane %v1929, 5
      %v1932 = vsel %vm412, %v1927, %v1931
      %v1933 = vshrl.u32 %v1875, 16
      %v1935 = vrot.slane %v1933, 4
      %v1936 = vor.u32 %v1935, %v1931
      %v1937 = vrot.slane %v1936, 4
      %v1939 = vshll.u32 %v1876, 16
      %v1941 = vrot.slane %v1939, 5
      %v1942 = vsel %vm412, %v1937, %v1941
      %v1944 = vshrl.u32 %v1877, 16
      %v1946 = vrot.slane %v1944, 4
      %v1947 = vshll.u32 %v1877, 16
      %v1949 = vrot.slane %v1947, 5
      %v1950 = vor.u32 %v1946, %v1949
      %v1951 = vrot.slane %v1950, 4
      %v1953 = vshll.u32 %v1878, 16
      %v1955 = vrot.slane %v1953, 5
      %v1956 = vsel %vm412, %v1951, %v1955
      %v1957 = vshrl.u32 %v1878, 16
      %v1959 = vrot.slane %v1957, 4
      %v1960 = vor.u32 %v1959, %v1955
      %v1961 = vrot.slane %v1960, 4
      %v1963 = vshll.u32 %v1879, 16
      %v1965 = vrot.slane %v1963, 5
      %v1966 = vsel %vm412, %v1961, %v1965
      %v1968 = vshrl.u32 %v1880, 16
      %v1970 = vrot.slane %v1968, 4
      %v1971 = vshll.u32 %v1880, 16
      %v1973 = vrot.slane %v1971, 5
      %v1974 = vor.u32 %v1970, %v1973
      %v1975 = vrot.slane %v1974, 4
      %v1977 = vshll.u32 %v1881, 16
      %v1979 = vrot.slane %v1977, 5
      %v1980 = vsel %vm412, %v1975, %v1979
      %v1981 = vshrl.u32 %v1881, 16
      %v1983 = vrot.slane %v1981, 4
      %v1984 = vor.u32 %v1983, %v1979
      %v1985 = vrot.slane %v1984, 4
      %v1987 = vshll.u32 %v1882, 16
      %v1989 = vrot.slane %v1987, 5
      %v1990 = vsel %vm412, %v1985, %v1989
      %v1992 = vshrl.u32 %v1883, 16
      %v1994 = vrot.slane %v1992, 4
      %v1995 = vshll.u32 %v1883, 16
      %v1997 = vrot.slane %v1995, 5
      %v1998 = vor.u32 %v1994, %v1997
      %v1999 = vrot.slane %v1998, 4
      %v2001 = vshll.u32 %v1884, 16
      %v2003 = vrot.slane %v2001, 5
      %v2004 = vsel %vm412, %v1999, %v2003
      %v2005 = vshrl.u32 %v1884, 16
      %v2007 = vrot.slane %v2005, 4
      %v2008 = vor.u32 %v2007, %v2003
      %v2009 = vrot.slane %v2008, 4
      %v2011 = vshll.u32 %v1885, 16
      %v2013 = vrot.slane %v2011, 5
      %v2014 = vsel %vm412, %v2009, %v2013
      %v2016 = vshrl.u32 %v1886, 16
      %v2018 = vrot.slane %v2016, 4
      %v2019 = vshll.u32 %v1886, 16
      %v2021 = vrot.slane %v2019, 5
      %v2022 = vor.u32 %v2018, %v2021
      %v2023 = vrot.slane %v2022, 4
      %v2025 = vshll.u32 %v1887, 16
      %v2027 = vrot.slane %v2025, 5
      %v2028 = vsel %vm412, %v2023, %v2027
      %v2029 = vshrl.u32 %v1887, 16
      %v2031 = vrot.slane %v2029, 4
      %v2032 = vor.u32 %v2031, %v2027
      %v2033 = vrot.slane %v2032, 4
      %v2035 = vshll.u32 %v1888, 16
      %v2037 = vrot.slane %v2035, 5
      %v2038 = vsel %vm412, %v2033, %v2037
      %v2040 = vshrl.u32 %v1889, 16
      %v2042 = vrot.slane %v2040, 4
      %v2043 = vshll.u32 %v1889, 16
      %v2045 = vrot.slane %v2043, 5
      %v2046 = vor.u32 %v2042, %v2045
      %v2047 = vrot.slane %v2046, 4
      %v2049 = vshll.u32 %v1890, 16
      %v2051 = vrot.slane %v2049, 5
      %v2052 = vsel %vm412, %v2047, %v2051
      %v2053 = vshrl.u32 %v1890, 16
      %v2055 = vrot.slane %v2053, 4
      %v2056 = vor.u32 %v2055, %v2051
      %v2057 = vrot.slane %v2056, 4
      %v2059 = vshll.u32 %v1891, 16
      %v2061 = vrot.slane %v2059, 5
      %v2062 = vsel %vm412, %v2057, %v2061
      %v2064 = vshrl.u32 %v1892, 16
      %v2066 = vrot.slane %v2064, 4
      %v2067 = vshll.u32 %v1892, 16
      %v2069 = vrot.slane %v2067, 5
      %v2070 = vor.u32 %v2066, %v2069
      %v2071 = vrot.slane %v2070, 4
      %v2073 = vshll.u32 %v1893, 16
      %v2075 = vrot.slane %v2073, 5
      %v2076 = vsel %vm412, %v2071, %v2075
      %v2077 = vshrl.u32 %v1893, 16
      %v2079 = vrot.slane %v2077, 4
      %v2080 = vor.u32 %v2079, %v2075
      %v2081 = vrot.slane %v2080, 4
      %v2083 = vshll.u32 %v1894, 16
      %v2085 = vrot.slane %v2083, 5
      %v2086 = vsel %vm412, %v2081, %v2085
      %s2087 = scalar_lea.vmem %s2, 14
      %v2088 = vld [vmem:[%s2087] sm:$0x3]
      %v2089 = vunpack.c.l.b16 %v1908
      %v2090 = vunpack.c.l.b16 %v1918
      %v2091 = vunpack.c.l.b16 %v1932
      %v2092 = vunpack.c.l.b16 %v1942
      %v2093 = vunpack.c.l.b16 %v1956
      %v2094 = vunpack.c.l.b16 %v1966
      %v2095 = vunpack.c.l.b16 %v1980
      %v2096 = vunpack.c.l.b16 %v1990
      %v2097 = vunpack.c.l.b16 %v2004
      %v2098 = vunpack.c.l.b16 %v2014
      %v2099 = vunpack.c.l.b16 %v2028
      %v2100 = vunpack.c.l.b16 %v2038
      %v2101 = vunpack.c.l.b16 %v2052
      %v2102 = vunpack.c.l.b16 %v2062
      %v2103 = vunpack.c.l.b16 %v2076
      %v2104 = vunpack.c.l.b16 %v2086
      %v2105 = vpack.c.b16 %v2090, %v2089
      %v2106 = vpack.c.b16 %v2092, %v2091
      %v2107 = vpack.c.b16 %v2094, %v2093
      %v2108 = vpack.c.b16 %v2096, %v2095
      %v2109 = vpack.c.b16 %v2098, %v2097
      %v2110 = vpack.c.b16 %v2100, %v2099
      %v2111 = vpack.c.b16 %v2102, %v2101
      %v2112 = vpack.c.b16 %v2104, %v2103
      %v2114 = vsel %vm631, %v2105, 0
      %v2117 = vsel %vm631, %v2106, 0
      %v2120 = vsel %vm631, %v2107, 0
      %v2123 = vsel %vm631, %v2108, 0
      %v2126 = vsel %vm631, %v2109, 0
      %v2129 = vsel %vm631, %v2110, 0
      %v2132 = vsel %vm631, %v2111, 0
      %v2135 = vsel %vm631, %v2112, 0
      %v2138 = vand.u32 %v2088, %v659
      %2140 = vmatpush.bf16.msra.mxu0 0
      %2141 = vmatpush.bf16.msra.mxu0 0
      %2142 = vmatpush.bf16.msra.mxu0 0
      %2143 = vmatpush.bf16.msra.mxu0 0
      %2144 = vmatpush.bf16.msra.mxu0 0
      %2145 = vmatpush.bf16.msra.mxu0 0
      %2146 = vmatpush.bf16.msra.mxu0 0
      %2147 = vmatpush.bf16.msra.mxu0 %v2138
      %2148 = vmatmul.bf16.gmra.mxu0 %v2114
      %v2149 = vpop.f32.mrf.mxu0
      %v2150 = vadd.f32 0.0, %v2149
      %v2151 = vpop.f32.mrf.mxu0
      %v2152 = vadd.f32 0.0, %v2151
      %2153 = vmatmul.bf16.gmra.mxu0 %v2117
      %v2154 = vpop.f32.mrf.mxu0
      %v2155 = vadd.f32 0.0, %v2154
      %v2156 = vpop.f32.mrf.mxu0
      %v2157 = vadd.f32 0.0, %v2156
      %2158 = vmatmul.bf16.gmra.mxu0 %v2120
      %v2159 = vpop.f32.mrf.mxu0
      %v2160 = vadd.f32 0.0, %v2159
      %v2161 = vpop.f32.mrf.mxu0
      %v2162 = vadd.f32 0.0, %v2161
      %2163 = vmatmul.bf16.gmra.mxu0 %v2123
      %v2164 = vpop.f32.mrf.mxu0
      %v2165 = vadd.f32 0.0, %v2164
      %v2166 = vpop.f32.mrf.mxu0
      %v2167 = vadd.f32 0.0, %v2166
      %2168 = vmatmul.bf16.gmra.mxu0 %v2126
      %v2169 = vpop.f32.mrf.mxu0
      %v2170 = vadd.f32 0.0, %v2169
      %v2171 = vpop.f32.mrf.mxu0
      %v2172 = vadd.f32 0.0, %v2171
      %2173 = vmatmul.bf16.gmra.mxu0 %v2129
      %v2174 = vpop.f32.mrf.mxu0
      %v2175 = vadd.f32 0.0, %v2174
      %v2176 = vpop.f32.mrf.mxu0
      %v2177 = vadd.f32 0.0, %v2176
      %2178 = vmatmul.bf16.gmra.mxu0 %v2132
      %v2179 = vpop.f32.mrf.mxu0
      %v2180 = vadd.f32 0.0, %v2179
      %v2181 = vpop.f32.mrf.mxu0
      %v2182 = vadd.f32 0.0, %v2181
      %2183 = vmatmul.bf16.gmra.mxu0 %v2135
      %v2184 = vpop.f32.mrf.mxu0
      %v2185 = vadd.f32 0.0, %v2184
      %v2186 = vpop.f32.mrf.mxu0
      %v2187 = vadd.f32 0.0, %v2186
      %2188 = vdwg.mxu0
      %v2189 = vadd.f32 %v1855, %v2150
      %v2190 = vadd.f32 %v1856, %v2152
      %v2191 = vadd.f32 %v1857, %v2155
      %v2192 = vadd.f32 %v1858, %v2157
      %v2193 = vadd.f32 %v1859, %v2160
      %v2194 = vadd.f32 %v1860, %v2162
      %v2195 = vadd.f32 %v1861, %v2165
      %v2196 = vadd.f32 %v1862, %v2167
      %v2197 = vadd.f32 %v1863, %v2170
      %v2198 = vadd.f32 %v1864, %v2172
      %v2199 = vadd.f32 %v1865, %v2175
      %v2200 = vadd.f32 %v1866, %v2177
      %v2201 = vadd.f32 %v1867, %v2180
      %v2202 = vadd.f32 %v1868, %v2182
      %v2203 = vadd.f32 %v1869, %v2185
      %v2204 = vadd.f32 %v1870, %v2187
      %v2205 = vld [vmem:[%s1720] sm:$0xe]
      %v2206 = vld [vmem:[%s1720 + $0xc] sm:$0xe]
      %v2207 = vld [vmem:[%s1720 + $0x18] sm:$0xe]
      %v2208 = vld [vmem:[%s1720 + $0x24] sm:$0xe]
      %v2209 = vld [vmem:[%s1720 + $0x30] sm:$0xe]
      %v2210 = vld [vmem:[%s1720 + $0x3c] sm:$0xe]
      %v2211 = vld [vmem:[%s1720 + $0x48] sm:$0xe]
      %v2212 = vld [vmem:[%s1720 + $0x54] sm:$0xe]
      %v2237 = vrot.slane %v2205, 5
      %v2238 = vrot.slane %v2237, 4
      %v2239 = vrot.slane %v1872, 5
      %v2240 = vsel %vm854, %v2238, %v2239
      %v2241 = vrot.slane %v2239, 4
      %v2242 = vrot.slane %v1873, 5
      %v2243 = vsel %vm854, %v2241, %v2242
      %v2244 = vrot.slane %v2206, 5
      %v2245 = vrot.slane %v2244, 4
      %v2246 = vrot.slane %v1875, 5
      %v2247 = vsel %vm854, %v2245, %v2246
      %v2248 = vrot.slane %v2246, 4
      %v2249 = vrot.slane %v1876, 5
      %v2250 = vsel %vm854, %v2248, %v2249
      %v2251 = vrot.slane %v2207, 5
      %v2252 = vrot.slane %v2251, 4
      %v2253 = vrot.slane %v1878, 5
      %v2254 = vsel %vm854, %v2252, %v2253
      %v2255 = vrot.slane %v2253, 4
      %v2256 = vrot.slane %v1879, 5
      %v2257 = vsel %vm854, %v2255, %v2256
      %v2258 = vrot.slane %v2208, 5
      %v2259 = vrot.slane %v2258, 4
      %v2260 = vrot.slane %v1881, 5
      %v2261 = vsel %vm854, %v2259, %v2260
      %v2262 = vrot.slane %v2260, 4
      %v2263 = vrot.slane %v1882, 5
      %v2264 = vsel %vm854, %v2262, %v2263
      %v2265 = vrot.slane %v2209, 5
      %v2266 = vrot.slane %v2265, 4
      %v2267 = vrot.slane %v1884, 5
      %v2268 = vsel %vm854, %v2266, %v2267
      %v2269 = vrot.slane %v2267, 4
      %v2270 = vrot.slane %v1885, 5
      %v2271 = vsel %vm854, %v2269, %v2270
      %v2272 = vrot.slane %v2210, 5
      %v2273 = vrot.slane %v2272, 4
      %v2274 = vrot.slane %v1887, 5
      %v2275 = vsel %vm854, %v2273, %v2274
      %v2276 = vrot.slane %v2274, 4
      %v2277 = vrot.slane %v1888, 5
      %v2278 = vsel %vm854, %v2276, %v2277
      %v2279 = vrot.slane %v2211, 5
      %v2280 = vrot.slane %v2279, 4
      %v2281 = vrot.slane %v1890, 5
      %v2282 = vsel %vm854, %v2280, %v2281
      %v2283 = vrot.slane %v2281, 4
      %v2284 = vrot.slane %v1891, 5
      %v2285 = vsel %vm854, %v2283, %v2284
      %v2286 = vrot.slane %v2212, 5
      %v2287 = vrot.slane %v2286, 4
      %v2288 = vrot.slane %v1893, 5
      %v2289 = vsel %vm854, %v2287, %v2288
      %v2290 = vrot.slane %v2288, 4
      %v2291 = vrot.slane %v1894, 5
      %v2292 = vsel %vm854, %v2290, %v2291
      %s2293 = scalar_lea.vmem %s2, 16
      %v2294 = vld [vmem:[%s2293] sm:$0x3]
      %v2295 = vunpack.c.l.b16 %v2240
      %v2296 = vunpack.c.l.b16 %v2243
      %v2297 = vunpack.c.l.b16 %v2247
      %v2298 = vunpack.c.l.b16 %v2250
      %v2299 = vunpack.c.l.b16 %v2254
      %v2300 = vunpack.c.l.b16 %v2257
      %v2301 = vunpack.c.l.b16 %v2261
      %v2302 = vunpack.c.l.b16 %v2264
      %v2303 = vunpack.c.l.b16 %v2268
      %v2304 = vunpack.c.l.b16 %v2271
      %v2305 = vunpack.c.l.b16 %v2275
      %v2306 = vunpack.c.l.b16 %v2278
      %v2307 = vunpack.c.l.b16 %v2282
      %v2308 = vunpack.c.l.b16 %v2285
      %v2309 = vunpack.c.l.b16 %v2289
      %v2310 = vunpack.c.l.b16 %v2292
      %v2311 = vpack.c.b16 %v2296, %v2295
      %v2312 = vpack.c.b16 %v2298, %v2297
      %v2313 = vpack.c.b16 %v2300, %v2299
      %v2314 = vpack.c.b16 %v2302, %v2301
      %v2315 = vpack.c.b16 %v2304, %v2303
      %v2316 = vpack.c.b16 %v2306, %v2305
      %v2317 = vpack.c.b16 %v2308, %v2307
      %v2318 = vpack.c.b16 %v2310, %v2309
      %v2320 = vsel %vm631, %v2311, 0
      %v2323 = vsel %vm631, %v2312, 0
      %v2326 = vsel %vm631, %v2313, 0
      %v2329 = vsel %vm631, %v2314, 0
      %v2332 = vsel %vm631, %v2315, 0
      %v2335 = vsel %vm631, %v2316, 0
      %v2338 = vsel %vm631, %v2317, 0
      %v2341 = vsel %vm631, %v2318, 0
      %v2344 = vand.u32 %v2294, %v659
      %2346 = vmatpush.bf16.msra.mxu0 0
      %2347 = vmatpush.bf16.msra.mxu0 0
      %2348 = vmatpush.bf16.msra.mxu0 0
      %2349 = vmatpush.bf16.msra.mxu0 0
      %2350 = vmatpush.bf16.msra.mxu0 0
      %2351 = vmatpush.bf16.msra.mxu0 0
      %2352 = vmatpush.bf16.msra.mxu0 0
      %2353 = vmatpush.bf16.msra.mxu0 %v2344
      %2354 = vmatmul.bf16.gmra.mxu0 %v2320
      %v2355 = vpop.f32.mrf.mxu0
      %v2356 = vadd.f32 0.0, %v2355
      %v2357 = vpop.f32.mrf.mxu0
      %v2358 = vadd.f32 0.0, %v2357
      %2359 = vmatmul.bf16.gmra.mxu0 %v2323
      %v2360 = vpop.f32.mrf.mxu0
      %v2361 = vadd.f32 0.0, %v2360
      %v2362 = vpop.f32.mrf.mxu0
      %v2363 = vadd.f32 0.0, %v2362
      %2364 = vmatmul.bf16.gmra.mxu0 %v2326
      %v2365 = vpop.f32.mrf.mxu0
      %v2366 = vadd.f32 0.0, %v2365
      %v2367 = vpop.f32.mrf.mxu0
      %v2368 = vadd.f32 0.0, %v2367
      %2369 = vmatmul.bf16.gmra.mxu0 %v2329
      %v2370 = vpop.f32.mrf.mxu0
      %v2371 = vadd.f32 0.0, %v2370
      %v2372 = vpop.f32.mrf.mxu0
      %v2373 = vadd.f32 0.0, %v2372
      %2374 = vmatmul.bf16.gmra.mxu0 %v2332
      %v2375 = vpop.f32.mrf.mxu0
      %v2376 = vadd.f32 0.0, %v2375
      %v2377 = vpop.f32.mrf.mxu0
      %v2378 = vadd.f32 0.0, %v2377
      %2379 = vmatmul.bf16.gmra.mxu0 %v2335
      %v2380 = vpop.f32.mrf.mxu0
      %v2381 = vadd.f32 0.0, %v2380
      %v2382 = vpop.f32.mrf.mxu0
      %v2383 = vadd.f32 0.0, %v2382
      %2384 = vmatmul.bf16.gmra.mxu0 %v2338
      %v2385 = vpop.f32.mrf.mxu0
      %v2386 = vadd.f32 0.0, %v2385
      %v2387 = vpop.f32.mrf.mxu0
      %v2388 = vadd.f32 0.0, %v2387
      %2389 = vmatmul.bf16.gmra.mxu0 %v2341
      %v2390 = vpop.f32.mrf.mxu0
      %v2391 = vadd.f32 0.0, %v2390
      %v2392 = vpop.f32.mrf.mxu0
      %v2393 = vadd.f32 0.0, %v2392
      %2394 = vdwg.mxu0
      %v2395 = vadd.f32 %v2189, %v2356
      %v2396 = vadd.f32 %v2190, %v2358
      %v2397 = vadd.f32 %v2191, %v2361
      %v2398 = vadd.f32 %v2192, %v2363
      %v2399 = vadd.f32 %v2193, %v2366
      %v2400 = vadd.f32 %v2194, %v2368
      %v2401 = vadd.f32 %v2195, %v2371
      %v2402 = vadd.f32 %v2196, %v2373
      %v2403 = vadd.f32 %v2197, %v2376
      %v2404 = vadd.f32 %v2198, %v2378
      %v2405 = vadd.f32 %v2199, %v2381
      %v2406 = vadd.f32 %v2200, %v2383
      %v2407 = vadd.f32 %v2201, %v2386
      %v2408 = vadd.f32 %v2202, %v2388
      %v2409 = vadd.f32 %v2203, %v2391
      %v2410 = vadd.f32 %v2204, %v2393
      %v2412 = vperm.slane %v384, 0
      %v2414 = vadd.f32 %v2395, %v2412
      %v2415 = vadd.f32 %v2396, %v2412
      %v2416 = vadd.f32 %v2397, %v2412
      %v2417 = vadd.f32 %v2398, %v2412
      %v2418 = vadd.f32 %v2399, %v2412
      %v2419 = vadd.f32 %v2400, %v2412
      %v2420 = vadd.f32 %v2401, %v2412
      %v2421 = vadd.f32 %v2402, %v2412
      %v2422 = vadd.f32 %v2403, %v2412
      %v2423 = vadd.f32 %v2404, %v2412
      %v2424 = vadd.f32 %v2405, %v2412
      %v2425 = vadd.f32 %v2406, %v2412
      %v2426 = vadd.f32 %v2407, %v2412
      %v2427 = vadd.f32 %v2408, %v2412
      %v2428 = vadd.f32 %v2409, %v2412
      %v2429 = vadd.f32 %v2410, %v2412
      %v2430 = vmax.f32 %v2414, 0.0
      %v2431 = vmax.f32 %v2415, 0.0
      %v2432 = vmax.f32 %v2416, 0.0
      %v2433 = vmax.f32 %v2417, 0.0
      %v2434 = vmax.f32 %v2418, 0.0
      %v2435 = vmax.f32 %v2419, 0.0
      %v2436 = vmax.f32 %v2420, 0.0
      %v2437 = vmax.f32 %v2421, 0.0
      %v2438 = vmax.f32 %v2422, 0.0
      %v2439 = vmax.f32 %v2423, 0.0
      %v2440 = vmax.f32 %v2424, 0.0
      %v2441 = vmax.f32 %v2425, 0.0
      %v2442 = vmax.f32 %v2426, 0.0
      %v2443 = vmax.f32 %v2427, 0.0
      %v2444 = vmax.f32 %v2428, 0.0
      %v2445 = vmax.f32 %v2429, 0.0
      %v2446 = vpack.c.bf16 %v2430, %v2430
      %v2447 = vpack.c.bf16 %v2431, %v2431
      %v2448 = vpack.c.bf16 %v2432, %v2432
      %v2449 = vpack.c.bf16 %v2433, %v2433
      %v2450 = vpack.c.bf16 %v2434, %v2434
      %v2451 = vpack.c.bf16 %v2435, %v2435
      %v2452 = vpack.c.bf16 %v2436, %v2436
      %v2453 = vpack.c.bf16 %v2437, %v2437
      %v2454 = vpack.c.bf16 %v2438, %v2438
      %v2455 = vpack.c.bf16 %v2439, %v2439
      %v2456 = vpack.c.bf16 %v2440, %v2440
      %v2457 = vpack.c.bf16 %v2441, %v2441
      %v2458 = vpack.c.bf16 %v2442, %v2442
      %v2459 = vpack.c.bf16 %v2443, %v2443
      %v2460 = vpack.c.bf16 %v2444, %v2444
      %v2461 = vpack.c.bf16 %v2445, %v2445
      %vm2462 = vcmask 519168
      %2463 = vst.msk [vmem:[%s318] sm:$0xf] %vm2462, %v2446
      %2464 = vst.msk [vmem:[%s318 + $0x4] sm:$0xf] %vm2462, %v2447
      %2465 = vst.msk [vmem:[%s318 + $0x8] sm:$0xf] %vm2462, %v2448
      %2466 = vst.msk [vmem:[%s318 + $0xc] sm:$0xf] %vm2462, %v2449
      %2467 = vst.msk [vmem:[%s318 + $0x10] sm:$0xf] %vm2462, %v2450
      %2468 = vst.msk [vmem:[%s318 + $0x14] sm:$0xf] %vm2462, %v2451
      %2469 = vst.msk [vmem:[%s318 + $0x18] sm:$0xf] %vm2462, %v2452
      %2470 = vst.msk [vmem:[%s318 + $0x1c] sm:$0xf] %vm2462, %v2453
      %2471 = vst.msk [vmem:[%s318 + $0x20] sm:$0xf] %vm2462, %v2454
      %2472 = vst.msk [vmem:[%s318 + $0x24] sm:$0xf] %vm2462, %v2455
      %2473 = vst.msk [vmem:[%s318 + $0x28] sm:$0xf] %vm2462, %v2456
      %2474 = vst.msk [vmem:[%s318 + $0x2c] sm:$0xf] %vm2462, %v2457
      %2475 = vst.msk [vmem:[%s318 + $0x30] sm:$0xf] %vm2462, %v2458
      %2476 = vst.msk [vmem:[%s318 + $0x34] sm:$0xf] %vm2462, %v2459
      %2477 = vst.msk [vmem:[%s318 + $0x38] sm:$0xf] %vm2462, %v2460
      %2478 = vst.msk [vmem:[%s318 + $0x3c] sm:$0xf] %vm2462, %v2461
      %s2479 = smul.u32 8, %s20
      %p2480 = scmp.lt.s32.totalorder %s19, 3
      %s2481 = scalar_select %p2480, %s19, 3
      %p2482 = scmp.lt.s32.totalorder %s2479, 15
      %s2483 = scalar_select %p2482, %s2479, 15
      %s2484 = smul.addr %s2483, 2
      %s2485 = smul.addr %s2481, 32
      %s2486 = sadd.s32 %s2484, %s2485
      %s2487 = smul.addr %s2486, 4
      %s2488 = scalar_lea.vmem %s4, %s2487
      // Predicated region
      $region37: #{_lambda_.6} parent=35 // pred_check
        %p2489 = pneg %p149
      $region38: #{_lambda_.6} parent=35 // pred_check_branch
        %2491 = sbr.rel (%p2489) target = $region40
      $region39: #{_lambda_.6} parent=35 // pred_region
        %s2492 = smul.u32 8, %s20
      $region40: #{_lambda_.6} parent=35 // pred_fallthru
        _
    $region36: #{_lambda_.6} parent=5 // pred_fallthru
      _
    %p2493 = scmp.le.s32.totalorder 2, %s10
    // Predicated region
    $region41: #{_lambda_.6} parent=5 // pred_check
      %p2494 = pneg %p2493
    $region42: #{_lambda_.6} parent=5 // pred_check_branch
      %2496 = sbr.rel (%p2494) target = $region44
    $region43: #{_lambda_.6} parent=5 // pred_region
      %s2497 = ssub.s32 %s10, 2
      // Predicated region
      $region45: #{_lambda_.6} parent=43 // pred_check
        %p2498 = pneg %p155
      $region46: #{_lambda_.6} parent=43 // pred_check_branch
        %2500 = sbr.rel (%p2498) target = $region48
      $region47: #{_lambda_.6} parent=43 // pred_region
        %s2501 = smul.u32 8, %s22
        %p2502 = scmp.lt.s32.totalorder %s21, 3
        %s2503 = scalar_select %p2502, %s21, 3
        %p2504 = scmp.lt.s32.totalorder %s2501, 15
        %s2505 = scalar_select %p2504, %s2501, 15
        %s2506 = smul.addr %s2505, 2
        %s2507 = smul.addr %s2503, 32
        %s2508 = sadd.s32 %s2506, %s2507
        %s2509 = smul.addr %s2508, 4
        %s2510 = scalar_lea.vmem %s4, %s2509
      $region48: #{_lambda_.6} parent=43 // pred_fallthru
        _
    $region44: #{_lambda_.6} parent=5 // pred_fallthru
      _
  $region6: #{_lambda_.6} parent=0 // loop_footer
    %s14 = sadd.s32 1, %s10
  $region7: #{_lambda_.6} parent=0 // loop_footer_branch
    %9 = sbr.rel target = $region3
  $region8: #{_lambda_.6} parent=0 // loop_exit
    _

// kernel: _lambda_.7
$region0: #{_lambda_.7}
  #allocation0 [shape = 'u32[]', space=smem, size = 0x4, offset = 0x4, fixed_abs, tag = 'smem constant byte address 0x4 - core index']
  #allocation1 [shape = 'u32[72,128]{1,0:T(1,128)}', space=vmem, size = 0x9000, scoped, tag = 'internal scratch']
  #allocation2 [shape = 'bf16[10,18,64]{2,1,0:T(8,128)(2,1)}', space=vmem, size = 0xf000, scoped, tag = 'scratch operand']
  %s0 = inlined_call_operand.vmem [shape: bf16[4,18,18,64], index: 0, kind: input, shape index: {}, may-alias: {0,1}]
  %s1 = inlined_call_operand.vmem [shape: bf16[4,18,18,64], index: 1, kind: input, shape index: {}, may-alias: {0,1}]
  %s2 = inlined_call_operand.vmem [shape: bf16[3,3,64,64], index: 2, kind: input, shape index: {}]
  %s3 = inlined_call_operand.vmem [shape: f32[1,64], index: 3, kind: input, shape index: {}]
  %s4 = inlined_call_operand.vmem [shape: bf16[4,16,16,64], index: 4, kind: output, shape index: {}]
  %s5 = sld [smem:[#allocation0]]
  $region49: #{_lambda_.7} parent=0
    _
  %s7 = ssub.s32 1, %s5
  %s8 = scalar_select 0, %s7, %s5
  loop: start=0, step=1, limit=10
  $region2: #{_lambda_.7} parent=0 // loop_pre_header
    _
  $region3: #{_lambda_.7} parent=0 // loop_header
    %s10 = sphi 0, %s14
    %p11 = scmp.ge.s32.totalorder %s10, 10
    %s17 = sphi 0, %s29
    %s18 = sphi 0, %s25
    %s19 = sphi 0, %s17
    %s20 = sphi 0, %s18
    %s21 = sphi 0, %s19
    %s22 = sphi 0, %s20
    %s34 = sphi 0, %s36
    %s37 = sphi 0, %s34
    %s38 = sphi 0, %s37
    %s54 = sphi 0, %s38
    %s66 = sphi 0, %s68
    %s69 = sphi 0, %s66
    %s70 = sphi 0, %s69
    %s86 = sphi 0, %s70
    %s90 = sphi 0, %s90
    %s92 = sphi 0, %s90
    %s93 = sphi 0, %s92
    %s107 = sphi 0, %s93
    %s111 = sphi 0, %s111
    %s113 = sphi 0, %s111
    %s114 = sphi 0, %s113
    %s128 = sphi 0, %s114
    %s136 = sphi 0, %s138
    %s139 = sphi 0, %s136
    %s140 = sphi 0, %s139
    %s156 = sphi 0, %s140
  $region4: #{_lambda_.7} parent=0 // loop_header_branch
    %13 = sbr.rel (%p11) target = $region8
  $region5: #{_lambda_.7} parent=0 // loop_body
    %s15 = ssub.s32 %s10, 1
    %s16 = ssub.s32 %s10, 2
    %s23 = sadd.s32 1, %s18
    %p24 = scmp.ge.s32.totalorder %s23, 2
    %s25 = scalar_select %p24, 0, %s23
    %s26 = sadd.s32 1, %s17
    %s27 = scalar_select %p24, %s26, %s17
    %p28 = scmp.ge.s32.totalorder %s27, 4
    %s29 = scalar_select %p28, 0, %s27
    %s30 = ssub.s32 %s17, %s29
    %s31 = ssub.s32 %s18, %s25
    %s32 = sor.u32 %s30, %s31
    %p33 = scmp.eq.s32.totalorder %s32, 0
    %s35 = sadd.s32 %s34, 1
    %s36 = scalar_select %p33, %s34, %s35
    %p39 = pneg %p33
    %p40 = scmp.eq.s32.totalorder %s10, 7
    %p41 = por %p39, %p40
    %p42 = scmp.ne.s32.totalorder %s34, %s37
    %p43 = scmp.eq.s32.totalorder %s10, 0
    %p44 = por %p42, %p43
    %p45 = scmp.ne.s32.totalorder %s34, %s37
    %p46 = scmp.eq.s32.totalorder %s15, 7
    %p47 = por %p45, %p46
    %p48 = scmp.ne.s32.totalorder %s37, %s38
    %p49 = scmp.eq.s32.totalorder %s15, 0
    %p50 = por %p48, %p49
    %p51 = scmp.ne.s32.totalorder %s37, %s38
    %p52 = scmp.eq.s32.totalorder %s16, 7
    %p53 = por %p51, %p52
    %p55 = scmp.ne.s32.totalorder %s38, %s54
    %p56 = scmp.eq.s32.totalorder %s16, 0
    %p57 = por %p55, %p56
    %s58 = sadd.s32 %s18, 1
    %s59 = smul.u32 %s58, 4
    %s60 = sadd.s32 %s25, 1
    %s61 = smul.u32 %s60, 4
    %s62 = ssub.s32 %s17, %s29
    %s63 = ssub.s32 %s59, %s61
    %s64 = sor.u32 %s62, %s63
    %p65 = scmp.eq.s32.totalorder %s64, 0
    %s67 = sadd.s32 %s66, 1
    %s68 = scalar_select %p65, %s66, %s67
    %p71 = pneg %p65
    %p72 = scmp.eq.s32.totalorder %s10, 7
    %p73 = por %p71, %p72
    %p74 = scmp.ne.s32.totalorder %s66, %s69
    %p75 = scmp.eq.s32.totalorder %s10, 0
    %p76 = por %p74, %p75
    %p77 = scmp.ne.s32.totalorder %s66, %s69
    %p78 = scmp.eq.s32.totalorder %s15, 7
    %p79 = por %p77, %p78
    %p80 = scmp.ne.s32.totalorder %s69, %s70
    %p81 = scmp.eq.s32.totalorder %s15, 0
    %p82 = por %p80, %p81
    %p83 = scmp.ne.s32.totalorder %s69, %s70
    %p84 = scmp.eq.s32.totalorder %s16, 7
    %p85 = por %p83, %p84
    %p87 = scmp.ne.s32.totalorder %s70, %s86
    %p88 = scmp.eq.s32.totalorder %s16, 0
    %p89 = por %p87, %p88
    %s91 = sadd.s32 %s90, 1
    %p94 = scmp.eq.s32.totalorder %s10, 7
    %p95 = scmp.ne.s32.totalorder %s90, %s92
    %p96 = scmp.eq.s32.totalorder %s10, 0
    %p97 = por %p95, %p96
    %p98 = scmp.ne.s32.totalorder %s90, %s92
    %p99 = scmp.eq.s32.totalorder %s15, 7
    %p100 = por %p98, %p99
    %p101 = scmp.ne.s32.totalorder %s92, %s93
    %p102 = scmp.eq.s32.totalorder %s15, 0
    %p103 = por %p101, %p102
    %p104 = scmp.ne.s32.totalorder %s92, %s93
    %p105 = scmp.eq.s32.totalorder %s16, 7
    %p106 = por %p104, %p105
    %p108 = scmp.ne.s32.totalorder %s93, %s107
    %p109 = scmp.eq.s32.totalorder %s16, 0
    %p110 = por %p108, %p109
    %s112 = sadd.s32 %s111, 1
    %p115 = scmp.eq.s32.totalorder %s10, 7
    %p116 = scmp.ne.s32.totalorder %s111, %s113
    %p117 = scmp.eq.s32.totalorder %s10, 0
    %p118 = por %p116, %p117
    %p119 = scmp.ne.s32.totalorder %s111, %s113
    %p120 = scmp.eq.s32.totalorder %s15, 7
    %p121 = por %p119, %p120
    %p122 = scmp.ne.s32.totalorder %s113, %s114
    %p123 = scmp.eq.s32.totalorder %s15, 0
    %p124 = por %p122, %p123
    %p125 = scmp.ne.s32.totalorder %s113, %s114
    %p126 = scmp.eq.s32.totalorder %s16, 7
    %p127 = por %p125, %p126
    %p129 = scmp.ne.s32.totalorder %s114, %s128
    %p130 = scmp.eq.s32.totalorder %s16, 0
    %p131 = por %p129, %p130
    %s132 = ssub.s32 %s17, %s29
    %s133 = ssub.s32 %s18, %s25
    %s134 = sor.u32 %s132, %s133
    %p135 = scmp.eq.s32.totalorder %s134, 0
    %s137 = sadd.s32 %s136, 1
    %s138 = scalar_select %p135, %s136, %s137
    %p141 = pneg %p135
    %p142 = scmp.eq.s32.totalorder %s10, 7
    %p143 = por %p141, %p142
    %p144 = scmp.ne.s32.totalorder %s136, %s139
    %p145 = scmp.eq.s32.totalorder %s10, 0
    %p146 = por %p144, %p145
    %p147 = scmp.ne.s32.totalorder %s136, %s139
    %p148 = scmp.eq.s32.totalorder %s15, 7
    %p149 = por %p147, %p148
    %p150 = scmp.ne.s32.totalorder %s139, %s140
    %p151 = scmp.eq.s32.totalorder %s15, 0
    %p152 = por %p150, %p151
    %p153 = scmp.ne.s32.totalorder %s139, %s140
    %p154 = scmp.eq.s32.totalorder %s16, 7
    %p155 = por %p153, %p154
    %p157 = scmp.ne.s32.totalorder %s140, %s156
    %p158 = scmp.eq.s32.totalorder %s16, 0
    %p159 = por %p157, %p158
    %p160 = scmp.le.s32.totalorder 1, %s10
    %p161 = scmp.lt.s32.totalorder %s10, 9
    %p162 = pnand %p160, %p161
    %p163 = pneg %p162
    // Predicated region
    $region9: #{_lambda_.7} parent=5 // pred_check
      _
    $region10: #{_lambda_.7} parent=5 // pred_check_branch
      %165 = sbr.rel (%p162) target = $region12
    $region11: #{_lambda_.7} parent=5 // pred_region
      %s166 = ssub.s32 %s10, 1
      // Predicated region
      $region13: #{_lambda_.7} parent=11 // pred_check
        %p167 = pneg %p103
      $region14: #{_lambda_.7} parent=11 // pred_check_branch
        %169 = sbr.rel (%p167) target = $region16
      $region15: #{_lambda_.7} parent=11 // pred_region
        _
      $region16: #{_lambda_.7} parent=11 // pred_fallthru
        _
      // Predicated region
      $region17: #{_lambda_.7} parent=11 // pred_check
        %p170 = pneg %p124
      $region18: #{_lambda_.7} parent=11 // pred_check_branch
        %172 = sbr.rel (%p170) target = $region20
      $region19: #{_lambda_.7} parent=11 // pred_region
        _
      $region20: #{_lambda_.7} parent=11 // pred_fallthru
        _
    $region12: #{_lambda_.7} parent=5 // pred_fallthru
      _
    %p173 = scmp.lt.s32.totalorder %s10, 8
    // Predicated region
    $region21: #{_lambda_.7} parent=5 // pred_check
      %p174 = pneg %p173
    $region22: #{_lambda_.7} parent=5 // pred_check_branch
      %176 = sbr.rel (%p174) target = $region24
    $region23: #{_lambda_.7} parent=5 // pred_region
      // Predicated region
      $region25: #{_lambda_.7} parent=23 // pred_check
        %p177 = pneg %p44
      $region26: #{_lambda_.7} parent=23 // pred_check_branch
        %179 = sbr.rel (%p177) target = $region28
      $region27: #{_lambda_.7} parent=23 // pred_region
        %s180 = smul.u32 8, %s18
        %s181 = ssub.s32 18, %s180
        %p182 = scmp.lt.s32.totalorder %s181, 8
        %s183 = scalar_select %p182, %s181, 8
        %s184 = smul.u32 4, %s183
        %s185 = smul.u32 %s184, 3
        %p186 = scmp.lt.s32.totalorder %s17, 3
        %s187 = scalar_select %p186, %s17, 3
        %p188 = scmp.lt.s32.totalorder %s180, 17
        %s189 = scalar_select %p188, %s180, 17
        %s190 = smul.addr %s189, 3
        %s191 = smul.addr %s187, 54
        %s192 = sadd.s32 %s190, %s191
        %s193 = smul.addr %s192, 4
        %s194 = scalar_lea.vmem %s0, %s193
        %s195 = smul.u32 8, %s18
        %s196 = ssub.s32 18, %s195
        %p197 = scmp.lt.s32.totalorder %s196, 8
        %s198 = scalar_select %p197, %s196, 8
        %s199 = smul.u32 4, %s198
        %s200 = smul.u32 %s199, 3
      $region28: #{_lambda_.7} parent=23 // pred_fallthru
        _
      // Predicated region
      $region29: #{_lambda_.7} parent=23 // pred_check
        %p201 = pneg %p76
      $region30: #{_lambda_.7} parent=23 // pred_check_branch
        %203 = sbr.rel (%p201) target = $region32
      $region31: #{_lambda_.7} parent=23 // pred_region
        %s204 = sadd.s32 %s18, 1
        %s205 = smul.u32 %s204, 4
        %s206 = smul.u32 2, %s205
        %p207 = scmp.lt.s32.totalorder %s17, 3
        %s208 = scalar_select %p207, %s17, 3
        %p209 = scmp.lt.s32.totalorder %s206, 17
        %s210 = scalar_select %p209, %s206, 17
        %s211 = smul.addr %s210, 3
        %s212 = smul.addr %s208, 54
        %s213 = sadd.s32 %s211, %s212
        %s214 = smul.addr %s213, 4
        %s215 = scalar_lea.vmem %s1, %s214
        %s216 = sadd.s32 %s18, 1
        %s217 = smul.u32 %s216, 4
        %s218 = smul.u32 2, %s217
      $region32: #{_lambda_.7} parent=23 // pred_fallthru
        _
    $region24: #{_lambda_.7} parent=5 // pred_fallthru
      _
    %p219 = scmp.le.s32.totalorder 1, %s10
    %p220 = scmp.lt.s32.totalorder %s10, 9
    %p221 = pnand %p219, %p220
    %p222 = pneg %p221
    // Predicated region
    $region33: #{_lambda_.7} parent=5 // pred_check
      _
    $region34: #{_lambda_.7} parent=5 // pred_check_branch
      %224 = sbr.rel (%p221) target = $region36
    $region35: #{_lambda_.7} parent=5 // pred_region
      %s225 = ssub.s32 %s10, 1
      %s226 = smul.u32 8, %s20
      %s227 = ssub.s32 18, %s226
      %p228 = scmp.lt.s32.totalorder %s227, 8
      %s229 = scalar_select %p228, %s227, 8
      %s230 = smul.u32 4, %s229
      %s231 = smul.u32 %s230, 3
      %p232 = scmp.lt.s32.totalorder %s19, 3
      %s233 = scalar_select %p232, %s19, 3
      %p234 = scmp.lt.s32.totalorder %s226, 17
      %s235 = scalar_select %p234, %s226, 17
      %s236 = smul.addr %s235, 3
      %s237 = smul.addr %s233, 54
      %s238 = sadd.s32 %s236, %s237
      %s239 = smul.addr %s238, 4
      %s240 = scalar_lea.vmem %s0, %s239
      %p241 = pneg %p50
      %p242 = pneg %p47
      %s243 = sadd.s32 %s20, 1
      %s244 = smul.u32 %s243, 4
      %s245 = smul.u32 2, %s244
      %p246 = scmp.lt.s32.totalorder %s19, 3
      %s247 = scalar_select %p246, %s19, 3
      %p248 = scmp.lt.s32.totalorder %s245, 17
      %s249 = scalar_select %p248, %s245, 17
      %s250 = smul.addr %s249, 3
      %s251 = smul.addr %s247, 54
      %s252 = sadd.s32 %s250, %s251
      %s253 = smul.addr %s252, 4
      %s254 = scalar_lea.vmem %s1, %s253
      %p255 = pneg %p82
      %p256 = pneg %p79
      %p257 = pneg %p103
      %p258 = pneg %p100
      %p259 = pneg %p124
      %p260 = pneg %p121
      %p261 = pneg %p152
      %p262 = pneg %p149
      %s263 = smul.u32 8, %s20
      %p264 = scmp.lt.s32.totalorder %s19, 3
      %s265 = scalar_select %p264, %s19, 3
      %p266 = scmp.lt.s32.totalorder %s263, 15
      %s267 = scalar_select %p266, %s263, 15
      %s268 = smul.addr %s267, 2
      %s269 = smul.addr %s265, 32
      %s270 = sadd.s32 %s268, %s269
      %s271 = smul.addr %s270, 4
      %s272 = scalar_lea.vmem %s4, %s271
      %s273 = smul.u32 8, %s20
      %s274 = ssub.s32 18, %s273
      %p275 = scmp.lt.s32.totalorder %s274, 8
      %s276 = scalar_select %p275, %s274, 8
      %s277 = smul.u32 4, %s276
      %s278 = smul.u32 %s277, 3
      %p279 = scmp.lt.s32.totalorder %s19, 3
      %s280 = scalar_select %p279, %s19, 3
      %p281 = scmp.lt.s32.totalorder %s273, 17
      %s282 = scalar_select %p281, %s273, 17
      %s283 = smul.addr %s282, 3
      %s284 = smul.addr %s280, 54
      %s285 = sadd.s32 %s283, %s284
      %s286 = smul.addr %s285, 4
      %s287 = scalar_lea.vmem %s0, %s286
      %s288 = smul.u32 8, %s20
      %s289 = ssub.s32 18, %s288
      %p290 = scmp.lt.s32.totalorder %s289, 8
      %s291 = scalar_select %p290, %s289, 8
      %s292 = smul.u32 4, %s291
      %s293 = smul.u32 %s292, 3
      %s294 = sadd.s32 %s20, 1
      %s295 = smul.u32 %s294, 4
      %s296 = smul.u32 2, %s295
      %p297 = scmp.lt.s32.totalorder %s19, 3
      %s298 = scalar_select %p297, %s19, 3
      %p299 = scmp.lt.s32.totalorder %s296, 17
      %s300 = scalar_select %p299, %s296, 17
      %s301 = smul.addr %s300, 3
      %s302 = smul.addr %s298, 54
      %s303 = sadd.s32 %s301, %s302
      %s304 = smul.addr %s303, 4
      %s305 = scalar_lea.vmem %s1, %s304
      %s306 = sadd.s32 %s20, 1
      %s307 = smul.u32 %s306, 4
      %s308 = smul.u32 2, %s307
      %s309 = smul.u32 8, %s20
      %p310 = scmp.lt.s32.totalorder %s19, 3
      %s311 = scalar_select %p310, %s19, 3
      %p312 = scmp.lt.s32.totalorder %s309, 15
      %s313 = scalar_select %p312, %s309, 15
      %s314 = smul.addr %s313, 2
      %s315 = smul.addr %s311, 32
      %s316 = sadd.s32 %s314, %s315
      %s317 = smul.addr %s316, 4
      %s318 = scalar_lea.vmem %s4, %s317
      %s319 = smul.u32 8, %s20
      %v321 = vld [vmem:[%s287] sm:$0xf]
      %v322 = vld [vmem:[%s287 + $0x4] sm:$0xf]
      %v323 = vld [vmem:[%s287 + $0x8] sm:$0x1]
      %v324 = vld [vmem:[%s287 + $0xc] sm:$0xf]
      %v325 = vld [vmem:[%s287 + $0x10] sm:$0xf]
      %v326 = vld [vmem:[%s287 + $0x14] sm:$0x1]
      %v327 = vld [vmem:[%s287 + $0x18] sm:$0xf]
      %v328 = vld [vmem:[%s287 + $0x1c] sm:$0xf]
      %v329 = vld [vmem:[%s287 + $0x20] sm:$0x1]
      %v330 = vld [vmem:[%s287 + $0x24] sm:$0xf]
      %v331 = vld [vmem:[%s287 + $0x28] sm:$0xf]
      %v332 = vld [vmem:[%s287 + $0x2c] sm:$0x1]
      %v333 = vld [vmem:[%s287 + $0x30] sm:$0xf]
      %v334 = vld [vmem:[%s287 + $0x34] sm:$0xf]
      %v335 = vld [vmem:[%s287 + $0x38] sm:$0x1]
      %v336 = vld [vmem:[%s287 + $0x3c] sm:$0xf]
      %v337 = vld [vmem:[%s287 + $0x40] sm:$0xf]
      %v338 = vld [vmem:[%s287 + $0x44] sm:$0x1]
      %v339 = vld [vmem:[%s287 + $0x48] sm:$0xf]
      %v340 = vld [vmem:[%s287 + $0x4c] sm:$0xf]
      %v341 = vld [vmem:[%s287 + $0x50] sm:$0x1]
      %v342 = vld [vmem:[%s287 + $0x54] sm:$0xf]
      %v343 = vld [vmem:[%s287 + $0x58] sm:$0xf]
      %v344 = vld [vmem:[%s287 + $0x5c] sm:$0x1]
      %vm345 = vcmask 519168
      %346 = vst.msk [vmem:[#allocation2] sm:$0xf] %vm345, %v321
      %347 = vst.msk [vmem:[#allocation2 + $0x4] sm:$0xf] %vm345, %v322
      %vm348 = vcmask 516096
      %349 = vst.msk [vmem:[#allocation2 + $0x8] sm:$0x1] %vm348, %v323
      %350 = vst.msk [vmem:[#allocation2 + $0xc] sm:$0xf] %vm345, %v324
      %351 = vst.msk [vmem:[#allocation2 + $0x10] sm:$0xf] %vm345, %v325
      %352 = vst.msk [vmem:[#allocation2 + $0x14] sm:$0x1] %vm348, %v326
      %353 = vst.msk [vmem:[#allocation2 + $0x18] sm:$0xf] %vm345, %v327
      %354 = vst.msk [vmem:[#allocation2 + $0x1c] sm:$0xf] %vm345, %v328
      %355 = vst.msk [vmem:[#allocation2 + $0x20] sm:$0x1] %vm348, %v329
      %356 = vst.msk [vmem:[#allocation2 + $0x24] sm:$0xf] %vm345, %v330
      %357 = vst.msk [vmem:[#allocation2 + $0x28] sm:$0xf] %vm345, %v331
      %358 = vst.msk [vmem:[#allocation2 + $0x2c] sm:$0x1] %vm348, %v332
      %359 = vst.msk [vmem:[#allocation2 + $0x30] sm:$0xf] %vm345, %v333
      %360 = vst.msk [vmem:[#allocation2 + $0x34] sm:$0xf] %vm345, %v334
      %361 = vst.msk [vmem:[#allocation2 + $0x38] sm:$0x1] %vm348, %v335
      %362 = vst.msk [vmem:[#allocation2 + $0x3c] sm:$0xf] %vm345, %v336
      %363 = vst.msk [vmem:[#allocation2 + $0x40] sm:$0xf] %vm345, %v337
      %364 = vst.msk [vmem:[#allocation2 + $0x44] sm:$0x1] %vm348, %v338
      %365 = vst.msk [vmem:[#allocation2 + $0x48] sm:$0xf] %vm345, %v339
      %366 = vst.msk [vmem:[#allocation2 + $0x4c] sm:$0xf] %vm345, %v340
      %367 = vst.msk [vmem:[#allocation2 + $0x50] sm:$0x1] %vm348, %v341
      %368 = vst.msk [vmem:[#allocation2 + $0x54] sm:$0xf] %vm345, %v342
      %369 = vst.msk [vmem:[#allocation2 + $0x58] sm:$0xf] %vm345, %v343
      %370 = vst.msk [vmem:[#allocation2 + $0x5c] sm:$0x1] %vm348, %v344
      %v371 = vld [vmem:[%s305] sm:$0xf]
      %v372 = vld [vmem:[%s305 + $0x4] sm:$0xf]
      %v373 = vld [vmem:[%s305 + $0x8] sm:$0x1]
      %v374 = vld [vmem:[%s305 + $0xc] sm:$0xf]
      %v375 = vld [vmem:[%s305 + $0x10] sm:$0xf]
      %v376 = vld [vmem:[%s305 + $0x14] sm:$0x1]
      %s377 = scalar_lea.vmem [#allocation2], 96
      %378 = vst.msk [vmem:[%s377] sm:$0xf] %vm345, %v371
      %379 = vst.msk [vmem:[%s377 + $0x4] sm:$0xf] %vm345, %v372
      %380 = vst.msk [vmem:[%s377 + $0x8] sm:$0x1] %vm348, %v373
      %381 = vst.msk [vmem:[%s377 + $0xc] sm:$0xf] %vm345, %v374
      %382 = vst.msk [vmem:[%s377 + $0x10] sm:$0xf] %vm345, %v375
      %383 = vst.msk [vmem:[%s377 + $0x14] sm:$0x1] %vm348, %v376
      %v384 = vld [vmem:[%s3] sm:$0x1]
      %v385 = vld [vmem:[#allocation2] sm:$0xf]
      %v386 = vld [vmem:[#allocation2 + $0x4] sm:$0xf]
      %v387 = vld [vmem:[#allocation2 + $0xc] sm:$0xf]
      %v388 = vld [vmem:[#allocation2 + $0x10] sm:$0xf]
      %v389 = vld [vmem:[#allocation2 + $0x18] sm:$0xf]
      %v390 = vld [vmem:[#allocation2 + $0x1c] sm:$0xf]
      %v391 = vld [vmem:[#allocation2 + $0x24] sm:$0xf]
      %v392 = vld [vmem:[#allocation2 + $0x28] sm:$0xf]
      %v393 = vld [vmem:[#allocation2 + $0x30] sm:$0xf]
      %v394 = vld [vmem:[#allocation2 + $0x34] sm:$0xf]
      %v395 = vld [vmem:[#allocation2 + $0x3c] sm:$0xf]
      %v396 = vld [vmem:[#allocation2 + $0x40] sm:$0xf]
      %v397 = vld [vmem:[#allocation2 + $0x48] sm:$0xf]
      %v398 = vld [vmem:[#allocation2 + $0x4c] sm:$0xf]
      %v399 = vld [vmem:[#allocation2 + $0x54] sm:$0xf]
      %v400 = vld [vmem:[#allocation2 + $0x58] sm:$0xf]
      %v401 = vld [vmem:[%s2] sm:$0xf]
      %v402 = vld [vmem:[%s2 + $0x4] sm:$0xf]
      %v403 = vld [vmem:[%s2 + $0x8] sm:$0xf]
      %v404 = vld [vmem:[%s2 + $0xc] sm:$0xf]
      %v405 = vld [vmem:[%s2 + $0x10] sm:$0xf]
      %v406 = vld [vmem:[%s2 + $0x14] sm:$0xf]
      %v407 = vld [vmem:[%s2 + $0x18] sm:$0xf]
      %v408 = vld [vmem:[%s2 + $0x1c] sm:$0xf]
      %v409 = vld [vmem:[#allocation2 + $0x8] sm:$0x1]
      %v410 = vld [vmem:[#allocation2 + $0x14] sm:$0x1]
      %v411 = vld [vmem:[#allocation2 + $0x20] sm:$0x1]
      %v412 = vld [vmem:[#allocation2 + $0x2c] sm:$0x1]
      %v413 = vld [vmem:[#allocation2 + $0x38] sm:$0x1]
      %v414 = vld [vmem:[#allocation2 + $0x44] sm:$0x1]
      %v415 = vld [vmem:[#allocation2 + $0x50] sm:$0x1]
      %v416 = vld [vmem:[#allocation2 + $0x5c] sm:$0x1]
      %vm417 = vsmask.f32 3328
      %vm418 = vsmask.f32 7440
      %vm419 = vmor %vm417, %vm418
      %v421 = vshrl.u32 %v385, 16
      %v423 = vrot.slane %v421, 4
      %v424 = vshll.u32 %v385, 16
      %v426 = vrot.slane %v424, 5
      %v427 = vor.u32 %v423, %v426
      %v428 = vrot.slane %v427, 4
      %v430 = vshll.u32 %v386, 16
      %v432 = vrot.slane %v430, 5
      %v433 = vsel %vm419, %v428, %v432
      %v434 = vshrl.u32 %v386, 16
      %v436 = vrot.slane %v434, 4
      %v437 = vor.u32 %v436, %v432
      %v438 = vrot.slane %v437, 4
      %v440 = vshll.u32 %v409, 16
      %v442 = vrot.slane %v440, 5
      %v443 = vsel %vm419, %v438, %v442
      %v445 = vshrl.u32 %v387, 16
      %v447 = vrot.slane %v445, 4
      %v448 = vshll.u32 %v387, 16
      %v450 = vrot.slane %v448, 5
      %v451 = vor.u32 %v447, %v450
      %v452 = vrot.slane %v451, 4
      %v454 = vshll.u32 %v388, 16
      %v456 = vrot.slane %v454, 5
      %v457 = vsel %vm419, %v452, %v456
      %v458 = vshrl.u32 %v388, 16
      %v460 = vrot.slane %v458, 4
      %v461 = vor.u32 %v460, %v456
      %v462 = vrot.slane %v461, 4
      %v464 = vshll.u32 %v410, 16
      %v466 = vrot.slane %v464, 5
      %v467 = vsel %vm419, %v462, %v466
      %v469 = vshrl.u32 %v389, 16
      %v471 = vrot.slane %v469, 4
      %v472 = vshll.u32 %v389, 16
      %v474 = vrot.slane %v472, 5
      %v475 = vor.u32 %v471, %v474
      %v476 = vrot.slane %v475, 4
      %v478 = vshll.u32 %v390, 16
      %v480 = vrot.slane %v478, 5
      %v481 = vsel %vm419, %v476, %v480
      %v482 = vshrl.u32 %v390, 16
      %v484 = vrot.slane %v482, 4
      %v485 = vor.u32 %v484, %v480
      %v486 = vrot.slane %v485, 4
      %v488 = vshll.u32 %v411, 16
      %v490 = vrot.slane %v488, 5
      %v491 = vsel %vm419, %v486, %v490
      %v493 = vshrl.u32 %v391, 16
      %v495 = vrot.slane %v493, 4
      %v496 = vshll.u32 %v391, 16
      %v498 = vrot.slane %v496, 5
      %v499 = vor.u32 %v495, %v498
      %v500 = vrot.slane %v499, 4
      %v502 = vshll.u32 %v392, 16
      %v504 = vrot.slane %v502, 5
      %v505 = vsel %vm419, %v500, %v504
      %v506 = vshrl.u32 %v392, 16
      %v508 = vrot.slane %v506, 4
      %v509 = vor.u32 %v508, %v504
      %v510 = vrot.slane %v509, 4
      %v512 = vshll.u32 %v412, 16
      %v514 = vrot.slane %v512, 5
      %v515 = vsel %vm419, %v510, %v514
      %v517 = vshrl.u32 %v393, 16
      %v519 = vrot.slane %v517, 4
      %v520 = vshll.u32 %v393, 16
      %v522 = vrot.slane %v520, 5
      %v523 = vor.u32 %v519, %v522
      %v524 = vrot.slane %v523, 4
      %v526 = vshll.u32 %v394, 16
      %v528 = vrot.slane %v526, 5
      %v529 = vsel %vm419, %v524, %v528
      %v530 = vshrl.u32 %v394, 16
      %v532 = vrot.slane %v530, 4
      %v533 = vor.u32 %v532, %v528
      %v534 = vrot.slane %v533, 4
      %v536 = vshll.u32 %v413, 16
      %v538 = vrot.slane %v536, 5
      %v539 = vsel %vm419, %v534, %v538
      %v541 = vshrl.u32 %v395, 16
      %v543 = vrot.slane %v541, 4
      %v544 = vshll.u32 %v395, 16
      %v546 = vrot.slane %v544, 5
      %v547 = vor.u32 %v543, %v546
      %v548 = vrot.slane %v547, 4
      %v550 = vshll.u32 %v396, 16
      %v552 = vrot.slane %v550, 5
      %v553 = vsel %vm419, %v548, %v552
      %v554 = vshrl.u32 %v396, 16
      %v556 = vrot.slane %v554, 4
      %v557 = vor.u32 %v556, %v552
      %v558 = vrot.slane %v557, 4
      %v560 = vshll.u32 %v414, 16
      %v562 = vrot.slane %v560, 5
      %v563 = vsel %vm419, %v558, %v562
      %v565 = vshrl.u32 %v397, 16
      %v567 = vrot.slane %v565, 4
      %v568 = vshll.u32 %v397, 16
      %v570 = vrot.slane %v568, 5
      %v571 = vor.u32 %v567, %v570
      %v572 = vrot.slane %v571, 4
      %v574 = vshll.u32 %v398, 16
      %v576 = vrot.slane %v574, 5
      %v577 = vsel %vm419, %v572, %v576
      %v578 = vshrl.u32 %v398, 16
      %v580 = vrot.slane %v578, 4
      %v581 = vor.u32 %v580, %v576
      %v582 = vrot.slane %v581, 4
      %v584 = vshll.u32 %v415, 16
      %v586 = vrot.slane %v584, 5
      %v587 = vsel %vm419, %v582, %v586
      %v589 = vshrl.u32 %v399, 16
      %v591 = vrot.slane %v589, 4
      %v592 = vshll.u32 %v399, 16
      %v594 = vrot.slane %v592, 5
      %v595 = vor.u32 %v591, %v594
      %v596 = vrot.slane %v595, 4
      %v598 = vshll.u32 %v400, 16
      %v600 = vrot.slane %v598, 5
      %v601 = vsel %vm419, %v596, %v600
      %v602 = vshrl.u32 %v400, 16
      %v604 = vrot.slane %v602, 4
      %v605 = vor.u32 %v604, %v600
      %v606 = vrot.slane %v605, 4
      %v608 = vshll.u32 %v416, 16
      %v610 = vrot.slane %v608, 5
      %v611 = vsel %vm419, %v606, %v610
      %s612 = scalar_lea.vmem %s2, 32
      %v613 = vld [vmem:[%s612] sm:$0xf]
      %v614 = vld [vmem:[%s612 + $0x4] sm:$0xf]
      %v615 = vld [vmem:[%s612 + $0x8] sm:$0xf]
      %v616 = vld [vmem:[%s612 + $0xc] sm:$0xf]
      %v617 = vld [vmem:[%s612 + $0x10] sm:$0xf]
      %v618 = vld [vmem:[%s612 + $0x14] sm:$0xf]
      %v619 = vld [vmem:[%s612 + $0x18] sm:$0xf]
      %v620 = vld [vmem:[%s612 + $0x1c] sm:$0xf]
      %v621 = vunpack.c.l.b16 %v433
      %v622 = vunpack.c.l.b16 %v443
      %v623 = vunpack.c.l.b16 %v457
      %v624 = vunpack.c.l.b16 %v467
      %v625 = vunpack.c.l.b16 %v481
      %v626 = vunpack.c.l.b16 %v491
      %v627 = vunpack.c.l.b16 %v505
      %v628 = vunpack.c.l.b16 %v515
      %v629 = vunpack.c.l.b16 %v529
      %v630 = vunpack.c.l.b16 %v539
      %v631 = vunpack.c.l.b16 %v553
      %v632 = vunpack.c.l.b16 %v563
      %v633 = vunpack.c.l.b16 %v577
      %v634 = vunpack.c.l.b16 %v587
      %v635 = vunpack.c.l.b16 %v601
      %v636 = vunpack.c.l.b16 %v611
      %v637 = vpack.c.b16 %v622, %v621
      %v638 = vpack.c.b16 %v624, %v623
      %v639 = vpack.c.b16 %v626, %v625
      %v640 = vpack.c.b16 %v628, %v627
      %v641 = vpack.c.b16 %v630, %v629
      %v642 = vpack.c.b16 %v632, %v631
      %v643 = vpack.c.b16 %v634, %v633
      %v644 = vpack.c.b16 %v636, %v635
      %v653 = vunpack.c.l.b16 %v613
      %v654 = vunpack.c.l.b16 %v614
      %v655 = vunpack.c.l.b16 %v615
      %v656 = vunpack.c.l.b16 %v616
      %v657 = vunpack.c.l.b16 %v617
      %v658 = vunpack.c.l.b16 %v618
      %v659 = vunpack.c.l.b16 %v619
      %v660 = vunpack.c.l.b16 %v620
      %v661 = vpack.c.b16 %v654, %v653
      %v662 = vpack.c.b16 %v656, %v655
      %v663 = vpack.c.b16 %v658, %v657
      %v664 = vpack.c.b16 %v660, %v659
      %vm669 = vcmask 523264
      %v671 = vsel %vm669, %v637, 0
      %v674 = vsel %vm669, %v638, 0
      %v677 = vsel %vm669, %v639, 0
      %v680 = vsel %vm669, %v640, 0
      %v683 = vsel %vm669, %v641, 0
      %v686 = vsel %vm669, %v642, 0
      %v689 = vsel %vm669, %v643, 0
      %v692 = vsel %vm669, %v644, 0
      %694 = vmatpush.bf16.msra.mxu0 0
      %695 = vmatpush.bf16.msra.mxu0 0
      %696 = vmatpush.bf16.msra.mxu0 0
      %697 = vmatpush.bf16.msra.mxu0 0
      %698 = vmatpush.bf16.msra.mxu0 %v664
      %699 = vmatpush.bf16.msra.mxu0 %v663
      %700 = vmatpush.bf16.msra.mxu0 %v662
      %701 = vmatpush.bf16.msra.mxu0 %v661
      %702 = vmatmul.bf16.gmra.mxu0 %v671
      %v703 = vpop.f32.mrf.mxu0
      %v704 = vadd.f32 0.0, %v703
      %v705 = vpop.f32.mrf.mxu0
      %v706 = vadd.f32 0.0, %v705
      %707 = vmatmul.bf16.gmra.mxu0 %v674
      %v708 = vpop.f32.mrf.mxu0
      %v709 = vadd.f32 0.0, %v708
      %v710 = vpop.f32.mrf.mxu0
      %v711 = vadd.f32 0.0, %v710
      %712 = vmatmul.bf16.gmra.mxu0 %v677
      %v713 = vpop.f32.mrf.mxu0
      %v714 = vadd.f32 0.0, %v713
      %v715 = vpop.f32.mrf.mxu0
      %v716 = vadd.f32 0.0, %v715
      %717 = vmatmul.bf16.gmra.mxu0 %v680
      %v718 = vpop.f32.mrf.mxu0
      %v719 = vadd.f32 0.0, %v718
      %v720 = vpop.f32.mrf.mxu0
      %v721 = vadd.f32 0.0, %v720
      %722 = vmatmul.bf16.gmra.mxu0 %v683
      %v723 = vpop.f32.mrf.mxu0
      %v724 = vadd.f32 0.0, %v723
      %v725 = vpop.f32.mrf.mxu0
      %v726 = vadd.f32 0.0, %v725
      %727 = vmatmul.bf16.gmra.mxu0 %v686
      %v728 = vpop.f32.mrf.mxu0
      %v729 = vadd.f32 0.0, %v728
      %v730 = vpop.f32.mrf.mxu0
      %v731 = vadd.f32 0.0, %v730
      %732 = vmatmul.bf16.gmra.mxu0 %v689
      %v733 = vpop.f32.mrf.mxu0
      %v734 = vadd.f32 0.0, %v733
      %v735 = vpop.f32.mrf.mxu0
      %v736 = vadd.f32 0.0, %v735
      %737 = vmatmul.bf16.gmra.mxu0 %v692
      %v738 = vpop.f32.mrf.mxu0
      %v739 = vadd.f32 0.0, %v738
      %v740 = vpop.f32.mrf.mxu0
      %v741 = vadd.f32 0.0, %v740
      %742 = vdwg.mxu0
      %v759 = vunpack.c.l.b16 %v385
      %v760 = vunpack.c.l.b16 %v386
      %v761 = vunpack.c.l.b16 %v387
      %v762 = vunpack.c.l.b16 %v388
      %v763 = vunpack.c.l.b16 %v389
      %v764 = vunpack.c.l.b16 %v390
      %v765 = vunpack.c.l.b16 %v391
      %v766 = vunpack.c.l.b16 %v392
      %v767 = vunpack.c.l.b16 %v393
      %v768 = vunpack.c.l.b16 %v394
      %v769 = vunpack.c.l.b16 %v395
      %v770 = vunpack.c.l.b16 %v396
      %v771 = vunpack.c.l.b16 %v397
      %v772 = vunpack.c.l.b16 %v398
      %v773 = vunpack.c.l.b16 %v399
      %v774 = vunpack.c.l.b16 %v400
      %v775 = vpack.c.b16 %v760, %v759
      %v776 = vpack.c.b16 %v762, %v761
      %v777 = vpack.c.b16 %v764, %v763
      %v778 = vpack.c.b16 %v766, %v765
      %v779 = vpack.c.b16 %v768, %v767
      %v780 = vpack.c.b16 %v770, %v769
      %v781 = vpack.c.b16 %v772, %v771
      %v782 = vpack.c.b16 %v774, %v773
      %v791 = vunpack.c.l.b16 %v401
      %v792 = vunpack.c.l.b16 %v402
      %v793 = vunpack.c.l.b16 %v403
      %v794 = vunpack.c.l.b16 %v404
      %v795 = vunpack.c.l.b16 %v405
      %v796 = vunpack.c.l.b16 %v406
      %v797 = vunpack.c.l.b16 %v407
      %v798 = vunpack.c.l.b16 %v408
      %v799 = vpack.c.b16 %v792, %v791
      %v800 = vpack.c.b16 %v794, %v793
      %v801 = vpack.c.b16 %v796, %v795
      %v802 = vpack.c.b16 %v798, %v797
      %v808 = vsel %vm669, %v775, 0
      %v811 = vsel %vm669, %v776, 0
      %v814 = vsel %vm669, %v777, 0
      %v817 = vsel %vm669, %v778, 0
      %v820 = vsel %vm669, %v779, 0
      %v823 = vsel %vm669, %v780, 0
      %v826 = vsel %vm669, %v781, 0
      %v829 = vsel %vm669, %v782, 0
      %831 = vmatpush.bf16.msra.mxu0 0
      %832 = vmatpush.bf16.msra.mxu0 0
      %833 = vmatpush.bf16.msra.mxu0 0
      %834 = vmatpush.bf16.msra.mxu0 0
      %835 = vmatpush.bf16.msra.mxu0 %v802
      %836 = vmatpush.bf16.msra.mxu0 %v801
      %837 = vmatpush.bf16.msra.mxu0 %v800
      %838 = vmatpush.bf16.msra.mxu0 %v799
      %839 = vmatmul.bf16.gmra.mxu0 %v808
      %v840 = vpop.f32.mrf.mxu0
      %v841 = vadd.f32 %v704, %v840
      %v842 = vpop.f32.mrf.mxu0
      %v843 = vadd.f32 %v706, %v842
      %844 = vmatmul.bf16.gmra.mxu0 %v811
      %v845 = vpop.f32.mrf.mxu0
      %v846 = vadd.f32 %v709, %v845
      %v847 = vpop.f32.mrf.mxu0
      %v848 = vadd.f32 %v711, %v847
      %849 = vmatmul.bf16.gmra.mxu0 %v814
      %v850 = vpop.f32.mrf.mxu0
      %v851 = vadd.f32 %v714, %v850
      %v852 = vpop.f32.mrf.mxu0
      %v853 = vadd.f32 %v716, %v852
      %854 = vmatmul.bf16.gmra.mxu0 %v817
      %v855 = vpop.f32.mrf.mxu0
      %v856 = vadd.f32 %v719, %v855
      %v857 = vpop.f32.mrf.mxu0
      %v858 = vadd.f32 %v721, %v857
      %859 = vmatmul.bf16.gmra.mxu0 %v820
      %v860 = vpop.f32.mrf.mxu0
      %v861 = vadd.f32 %v724, %v860
      %v862 = vpop.f32.mrf.mxu0
      %v863 = vadd.f32 %v726, %v862
      %864 = vmatmul.bf16.gmra.mxu0 %v823
      %v865 = vpop.f32.mrf.mxu0
      %v866 = vadd.f32 %v729, %v865
      %v867 = vpop.f32.mrf.mxu0
      %v868 = vadd.f32 %v731, %v867
      %869 = vmatmul.bf16.gmra.mxu0 %v826
      %v870 = vpop.f32.mrf.mxu0
      %v871 = vadd.f32 %v734, %v870
      %v872 = vpop.f32.mrf.mxu0
      %v873 = vadd.f32 %v736, %v872
      %874 = vmatmul.bf16.gmra.mxu0 %v829
      %v875 = vpop.f32.mrf.mxu0
      %v876 = vadd.f32 %v739, %v875
      %v877 = vpop.f32.mrf.mxu0
      %v878 = vadd.f32 %v741, %v877
      %879 = vdwg.mxu0
      %v880 = vld [vmem:[#allocation2] sm:$0xe]
      %v881 = vld [vmem:[#allocation2 + $0xc] sm:$0xe]
      %v882 = vld [vmem:[#allocation2 + $0x18] sm:$0xe]
      %v883 = vld [vmem:[#allocation2 + $0x24] sm:$0xe]
      %v884 = vld [vmem:[#allocation2 + $0x30] sm:$0xe]
      %v885 = vld [vmem:[#allocation2 + $0x3c] sm:$0xe]
      %v886 = vld [vmem:[#allocation2 + $0x48] sm:$0xe]
      %v887 = vld [vmem:[#allocation2 + $0x54] sm:$0xe]
      %vm904 = vcmask 1042432
      %vm905 = vcmask 1046532
      %vm906 = vmor %vm904, %vm905
      %v907 = vrot.slane %v880, 5
      %v908 = vrot.slane %v907, 4
      %v909 = vrot.slane %v386, 5
      %v910 = vsel %vm906, %v908, %v909
      %v911 = vrot.slane %v909, 4
      %v912 = vrot.slane %v409, 5
      %v913 = vsel %vm906, %v911, %v912
      %v914 = vrot.slane %v881, 5
      %v915 = vrot.slane %v914, 4
      %v916 = vrot.slane %v388, 5
      %v917 = vsel %vm906, %v915, %v916
      %v918 = vrot.slane %v916, 4
      %v919 = vrot.slane %v410, 5
      %v920 = vsel %vm906, %v918, %v919
      %v921 = vrot.slane %v882, 5
      %v922 = vrot.slane %v921, 4
      %v923 = vrot.slane %v390, 5
      %v924 = vsel %vm906, %v922, %v923
      %v925 = vrot.slane %v923, 4
      %v926 = vrot.slane %v411, 5
      %v927 = vsel %vm906, %v925, %v926
      %v928 = vrot.slane %v883, 5
      %v929 = vrot.slane %v928, 4
      %v930 = vrot.slane %v392, 5
      %v931 = vsel %vm906, %v929, %v930
      %v932 = vrot.slane %v930, 4
      %v933 = vrot.slane %v412, 5
      %v934 = vsel %vm906, %v932, %v933
      %v935 = vrot.slane %v884, 5
      %v936 = vrot.slane %v935, 4
      %v937 = vrot.slane %v394, 5
      %v938 = vsel %vm906, %v936, %v937
      %v939 = vrot.slane %v937, 4
      %v940 = vrot.slane %v413, 5
      %v941 = vsel %vm906, %v939, %v940
      %v942 = vrot.slane %v885, 5
      %v943 = vrot.slane %v942, 4
      %v944 = vrot.slane %v396, 5
      %v945 = vsel %vm906, %v943, %v944
      %v946 = vrot.slane %v944, 4
      %v947 = vrot.slane %v414, 5
      %v948 = vsel %vm906, %v946, %v947
      %v949 = vrot.slane %v886, 5
      %v950 = vrot.slane %v949, 4
      %v951 = vrot.slane %v398, 5
      %v952 = vsel %vm906, %v950, %v951
      %v953 = vrot.slane %v951, 4
      %v954 = vrot.slane %v415, 5
      %v955 = vsel %vm906, %v953, %v954
      %v956 = vrot.slane %v887, 5
      %v957 = vrot.slane %v956, 4
      %v958 = vrot.slane %v400, 5
      %v959 = vsel %vm906, %v957, %v958
      %v960 = vrot.slane %v958, 4
      %v961 = vrot.slane %v416, 5
      %v962 = vsel %vm906, %v960, %v961
      %s963 = scalar_lea.vmem %s2, 64
      %v964 = vld [vmem:[%s963] sm:$0xf]
      %v965 = vld [vmem:[%s963 + $0x4] sm:$0xf]
      %v966 = vld [vmem:[%s963 + $0x8] sm:$0xf]
      %v967 = vld [vmem:[%s963 + $0xc] sm:$0xf]
      %v968 = vld [vmem:[%s963 + $0x10] sm:$0xf]
      %v969 = vld [vmem:[%s963 + $0x14] sm:$0xf]
      %v970 = vld [vmem:[%s963 + $0x18] sm:$0xf]
      %v971 = vld [vmem:[%s963 + $0x1c] sm:$0xf]
      %v972 = vunpack.c.l.b16 %v910
      %v973 = vunpack.c.l.b16 %v913
      %v974 = vunpack.c.l.b16 %v917
      %v975 = vunpack.c.l.b16 %v920
      %v976 = vunpack.c.l.b16 %v924
      %v977 = vunpack.c.l.b16 %v927
      %v978 = vunpack.c.l.b16 %v931
      %v979 = vunpack.c.l.b16 %v934
      %v980 = vunpack.c.l.b16 %v938
      %v981 = vunpack.c.l.b16 %v941
      %v982 = vunpack.c.l.b16 %v945
      %v983 = vunpack.c.l.b16 %v948
      %v984 = vunpack.c.l.b16 %v952
      %v985 = vunpack.c.l.b16 %v955
      %v986 = vunpack.c.l.b16 %v959
      %v987 = vunpack.c.l.b16 %v962
      %v988 = vpack.c.b16 %v973, %v972
      %v989 = vpack.c.b16 %v975, %v974
      %v990 = vpack.c.b16 %v977, %v976
      %v991 = vpack.c.b16 %v979, %v978
      %v992 = vpack.c.b16 %v981, %v980
      %v993 = vpack.c.b16 %v983, %v982
      %v994 = vpack.c.b16 %v985, %v984
      %v995 = vpack.c.b16 %v987, %v986
      %v1004 = vunpack.c.l.b16 %v964
      %v1005 = vunpack.c.l.b16 %v965
      %v1006 = vunpack.c.l.b16 %v966
      %v1007 = vunpack.c.l.b16 %v967
      %v1008 = vunpack.c.l.b16 %v968
      %v1009 = vunpack.c.l.b16 %v969
      %v1010 = vunpack.c.l.b16 %v970
      %v1011 = vunpack.c.l.b16 %v971
      %v1012 = vpack.c.b16 %v1005, %v1004
      %v1013 = vpack.c.b16 %v1007, %v1006
      %v1014 = vpack.c.b16 %v1009, %v1008
      %v1015 = vpack.c.b16 %v1011, %v1010
      %v1021 = vsel %vm669, %v988, 0
      %v1024 = vsel %vm669, %v989, 0
      %v1027 = vsel %vm669, %v990, 0
      %v1030 = vsel %vm669, %v991, 0
      %v1033 = vsel %vm669, %v992, 0
      %v1036 = vsel %vm669, %v993, 0
      %v1039 = vsel %vm669, %v994, 0
      %v1042 = vsel %vm669, %v995, 0
      %1044 = vmatpush.bf16.msra.mxu0 0
      %1045 = vmatpush.bf16.msra.mxu0 0
      %1046 = vmatpush.bf16.msra.mxu0 0
      %1047 = vmatpush.bf16.msra.mxu0 0
      %1048 = vmatpush.bf16.msra.mxu0 %v1015
      %1049 = vmatpush.bf16.msra.mxu0 %v1014
      %1050 = vmatpush.bf16.msra.mxu0 %v1013
      %1051 = vmatpush.bf16.msra.mxu0 %v1012
      %1052 = vmatmul.bf16.gmra.mxu0 %v1021
      %v1053 = vpop.f32.mrf.mxu0
      %v1054 = vadd.f32 0.0, %v1053
      %v1055 = vpop.f32.mrf.mxu0
      %v1056 = vadd.f32 0.0, %v1055
      %1057 = vmatmul.bf16.gmra.mxu0 %v1024
      %v1058 = vpop.f32.mrf.mxu0
      %v1059 = vadd.f32 0.0, %v1058
      %v1060 = vpop.f32.mrf.mxu0
      %v1061 = vadd.f32 0.0, %v1060
      %1062 = vmatmul.bf16.gmra.mxu0 %v1027
      %v1063 = vpop.f32.mrf.mxu0
      %v1064 = vadd.f32 0.0, %v1063
      %v1065 = vpop.f32.mrf.mxu0
      %v1066 = vadd.f32 0.0, %v1065
      %1067 = vmatmul.bf16.gmra.mxu0 %v1030
      %v1068 = vpop.f32.mrf.mxu0
      %v1069 = vadd.f32 0.0, %v1068
      %v1070 = vpop.f32.mrf.mxu0
      %v1071 = vadd.f32 0.0, %v1070
      %1072 = vmatmul.bf16.gmra.mxu0 %v1033
      %v1073 = vpop.f32.mrf.mxu0
      %v1074 = vadd.f32 0.0, %v1073
      %v1075 = vpop.f32.mrf.mxu0
      %v1076 = vadd.f32 0.0, %v1075
      %1077 = vmatmul.bf16.gmra.mxu0 %v1036
      %v1078 = vpop.f32.mrf.mxu0
      %v1079 = vadd.f32 0.0, %v1078
      %v1080 = vpop.f32.mrf.mxu0
      %v1081 = vadd.f32 0.0, %v1080
      %1082 = vmatmul.bf16.gmra.mxu0 %v1039
      %v1083 = vpop.f32.mrf.mxu0
      %v1084 = vadd.f32 0.0, %v1083
      %v1085 = vpop.f32.mrf.mxu0
      %v1086 = vadd.f32 0.0, %v1085
      %1087 = vmatmul.bf16.gmra.mxu0 %v1042
      %v1088 = vpop.f32.mrf.mxu0
      %v1089 = vadd.f32 0.0, %v1088
      %v1090 = vpop.f32.mrf.mxu0
      %v1091 = vadd.f32 0.0, %v1090
      %1092 = vdwg.mxu0
      %v1093 = vadd.f32 %v841, %v1054
      %v1094 = vadd.f32 %v843, %v1056
      %v1095 = vadd.f32 %v846, %v1059
      %v1096 = vadd.f32 %v848, %v1061
      %v1097 = vadd.f32 %v851, %v1064
      %v1098 = vadd.f32 %v853, %v1066
      %v1099 = vadd.f32 %v856, %v1069
      %v1100 = vadd.f32 %v858, %v1071
      %v1101 = vadd.f32 %v861, %v1074
      %v1102 = vadd.f32 %v863, %v1076
      %v1103 = vadd.f32 %v866, %v1079
      %v1104 = vadd.f32 %v868, %v1081
      %v1105 = vadd.f32 %v871, %v1084
      %v1106 = vadd.f32 %v873, %v1086
      %v1107 = vadd.f32 %v876, %v1089
      %v1108 = vadd.f32 %v878, %v1091
      %s1109 = scalar_lea.vmem [#allocation2], 12
      %v1110 = vld [vmem:[%s1109] sm:$0xf]
      %v1111 = vld [vmem:[%s1109 + $0x4] sm:$0xf]
      %v1112 = vld [vmem:[%s1109 + $0xc] sm:$0xf]
      %v1113 = vld [vmem:[%s1109 + $0x10] sm:$0xf]
      %v1114 = vld [vmem:[%s1109 + $0x18] sm:$0xf]
      %v1115 = vld [vmem:[%s1109 + $0x1c] sm:$0xf]
      %v1116 = vld [vmem:[%s1109 + $0x24] sm:$0xf]
      %v1117 = vld [vmem:[%s1109 + $0x28] sm:$0xf]
      %v1118 = vld [vmem:[%s1109 + $0x30] sm:$0xf]
      %v1119 = vld [vmem:[%s1109 + $0x34] sm:$0xf]
      %v1120 = vld [vmem:[%s1109 + $0x3c] sm:$0xf]
      %v1121 = vld [vmem:[%s1109 + $0x40] sm:$0xf]
      %v1122 = vld [vmem:[%s1109 + $0x48] sm:$0xf]
      %v1123 = vld [vmem:[%s1109 + $0x4c] sm:$0xf]
      %v1124 = vld [vmem:[%s1109 + $0x54] sm:$0xf]
      %v1125 = vld [vmem:[%s1109 + $0x58] sm:$0xf]
      %s1126 = scalar_lea.vmem %s2, 96
      %v1127 = vld [vmem:[%s1126] sm:$0xf]
      %v1128 = vld [vmem:[%s1126 + $0x4] sm:$0xf]
      %v1129 = vld [vmem:[%s1126 + $0x8] sm:$0xf]
      %v1130 = vld [vmem:[%s1126 + $0xc] sm:$0xf]
      %v1131 = vld [vmem:[%s1126 + $0x10] sm:$0xf]
      %v1132 = vld [vmem:[%s1126 + $0x14] sm:$0xf]
      %v1133 = vld [vmem:[%s1126 + $0x18] sm:$0xf]
      %v1134 = vld [vmem:[%s1126 + $0x1c] sm:$0xf]
      %v1151 = vunpack.c.l.b16 %v1110
      %v1152 = vunpack.c.l.b16 %v1111
      %v1153 = vunpack.c.l.b16 %v1112
      %v1154 = vunpack.c.l.b16 %v1113
      %v1155 = vunpack.c.l.b16 %v1114
      %v1156 = vunpack.c.l.b16 %v1115
      %v1157 = vunpack.c.l.b16 %v1116
      %v1158 = vunpack.c.l.b16 %v1117
      %v1159 = vunpack.c.l.b16 %v1118
      %v1160 = vunpack.c.l.b16 %v1119
      %v1161 = vunpack.c.l.b16 %v1120
      %v1162 = vunpack.c.l.b16 %v1121
      %v1163 = vunpack.c.l.b16 %v1122
      %v1164 = vunpack.c.l.b16 %v1123
      %v1165 = vunpack.c.l.b16 %v1124
      %v1166 = vunpack.c.l.b16 %v1125
      %v1167 = vpack.c.b16 %v1152, %v1151
      %v1168 = vpack.c.b16 %v1154, %v1153
      %v1169 = vpack.c.b16 %v1156, %v1155
      %v1170 = vpack.c.b16 %v1158, %v1157
      %v1171 = vpack.c.b16 %v1160, %v1159
      %v1172 = vpack.c.b16 %v1162, %v1161
      %v1173 = vpack.c.b16 %v1164, %v1163
      %v1174 = vpack.c.b16 %v1166, %v1165
      %v1183 = vunpack.c.l.b16 %v1127
      %v1184 = vunpack.c.l.b16 %v1128
      %v1185 = vunpack.c.l.b16 %v1129
      %v1186 = vunpack.c.l.b16 %v1130
      %v1187 = vunpack.c.l.b16 %v1131
      %v1188 = vunpack.c.l.b16 %v1132
      %v1189 = vunpack.c.l.b16 %v1133
      %v1190 = vunpack.c.l.b16 %v1134
      %v1191 = vpack.c.b16 %v1184, %v1183
      %v1192 = vpack.c.b16 %v1186, %v1185
      %v1193 = vpack.c.b16 %v1188, %v1187
      %v1194 = vpack.c.b16 %v1190, %v1189
      %v1200 = vsel %vm669, %v1167, 0
      %v1203 = vsel %vm669, %v1168, 0
      %v1206 = vsel %vm669, %v1169, 0
      %v1209 = vsel %vm669, %v1170, 0
      %v1212 = vsel %vm669, %v1171, 0
      %v1215 = vsel %vm669, %v1172, 0
      %v1218 = vsel %vm669, %v1173, 0
      %v1221 = vsel %vm669, %v1174, 0
      %1223 = vmatpush.bf16.msra.mxu0 0
      %1224 = vmatpush.bf16.msra.mxu0 0
      %1225 = vmatpush.bf16.msra.mxu0 0
      %1226 = vmatpush.bf16.msra.mxu0 0
      %1227 = vmatpush.bf16.msra.mxu0 %v1194
      %1228 = vmatpush.bf16.msra.mxu0 %v1193
      %1229 = vmatpush.bf16.msra.mxu0 %v1192
      %1230 = vmatpush.bf16.msra.mxu0 %v1191
      %1231 = vmatmul.bf16.gmra.mxu0 %v1200
      %v1232 = vpop.f32.mrf.mxu0
      %v1233 = vadd.f32 0.0, %v1232
      %v1234 = vpop.f32.mrf.mxu0
      %v1235 = vadd.f32 0.0, %v1234
      %1236 = vmatmul.bf16.gmra.mxu0 %v1203
      %v1237 = vpop.f32.mrf.mxu0
      %v1238 = vadd.f32 0.0, %v1237
      %v1239 = vpop.f32.mrf.mxu0
      %v1240 = vadd.f32 0.0, %v1239
      %1241 = vmatmul.bf16.gmra.mxu0 %v1206
      %v1242 = vpop.f32.mrf.mxu0
      %v1243 = vadd.f32 0.0, %v1242
      %v1244 = vpop.f32.mrf.mxu0
      %v1245 = vadd.f32 0.0, %v1244
      %1246 = vmatmul.bf16.gmra.mxu0 %v1209
      %v1247 = vpop.f32.mrf.mxu0
      %v1248 = vadd.f32 0.0, %v1247
      %v1249 = vpop.f32.mrf.mxu0
      %v1250 = vadd.f32 0.0, %v1249
      %1251 = vmatmul.bf16.gmra.mxu0 %v1212
      %v1252 = vpop.f32.mrf.mxu0
      %v1253 = vadd.f32 0.0, %v1252
      %v1254 = vpop.f32.mrf.mxu0
      %v1255 = vadd.f32 0.0, %v1254
      %1256 = vmatmul.bf16.gmra.mxu0 %v1215
      %v1257 = vpop.f32.mrf.mxu0
      %v1258 = vadd.f32 0.0, %v1257
      %v1259 = vpop.f32.mrf.mxu0
      %v1260 = vadd.f32 0.0, %v1259
      %1261 = vmatmul.bf16.gmra.mxu0 %v1218
      %v1262 = vpop.f32.mrf.mxu0
      %v1263 = vadd.f32 0.0, %v1262
      %v1264 = vpop.f32.mrf.mxu0
      %v1265 = vadd.f32 0.0, %v1264
      %1266 = vmatmul.bf16.gmra.mxu0 %v1221
      %v1267 = vpop.f32.mrf.mxu0
      %v1268 = vadd.f32 0.0, %v1267
      %v1269 = vpop.f32.mrf.mxu0
      %v1270 = vadd.f32 0.0, %v1269
      %1271 = vdwg.mxu0
      %v1272 = vadd.f32 %v1093, %v1233
      %v1273 = vadd.f32 %v1094, %v1235
      %v1274 = vadd.f32 %v1095, %v1238
      %v1275 = vadd.f32 %v1096, %v1240
      %v1276 = vadd.f32 %v1097, %v1243
      %v1277 = vadd.f32 %v1098, %v1245
      %v1278 = vadd.f32 %v1099, %v1248
      %v1279 = vadd.f32 %v1100, %v1250
      %v1280 = vadd.f32 %v1101, %v1253
      %v1281 = vadd.f32 %v1102, %v1255
      %v1282 = vadd.f32 %v1103, %v1258
      %v1283 = vadd.f32 %v1104, %v1260
      %v1284 = vadd.f32 %v1105, %v1263
      %v1285 = vadd.f32 %v1106, %v1265
      %v1286 = vadd.f32 %v1107, %v1268
      %v1287 = vadd.f32 %v1108, %v1270
      %v1288 = vld [vmem:[%s1109] sm:$0xf]
      %v1289 = vld [vmem:[%s1109 + $0x4] sm:$0xf]
      %v1290 = vld [vmem:[%s1109 + $0x8] sm:$0x1]
      %v1291 = vld [vmem:[%s1109 + $0xc] sm:$0xf]
      %v1292 = vld [vmem:[%s1109 + $0x10] sm:$0xf]
      %v1293 = vld [vmem:[%s1109 + $0x14] sm:$0x1]
      %v1294 = vld [vmem:[%s1109 + $0x18] sm:$0xf]
      %v1295 = vld [vmem:[%s1109 + $0x1c] sm:$0xf]
      %v1296 = vld [vmem:[%s1109 + $0x20] sm:$0x1]
      %v1297 = vld [vmem:[%s1109 + $0x24] sm:$0xf]
      %v1298 = vld [vmem:[%s1109 + $0x28] sm:$0xf]
      %v1299 = vld [vmem:[%s1109 + $0x2c] sm:$0x1]
      %v1300 = vld [vmem:[%s1109 + $0x30] sm:$0xf]
      %v1301 = vld [vmem:[%s1109 + $0x34] sm:$0xf]
      %v1302 = vld [vmem:[%s1109 + $0x38] sm:$0x1]
      %v1303 = vld [vmem:[%s1109 + $0x3c] sm:$0xf]
      %v1304 = vld [vmem:[%s1109 + $0x40] sm:$0xf]
      %v1305 = vld [vmem:[%s1109 + $0x44] sm:$0x1]
      %v1306 = vld [vmem:[%s1109 + $0x48] sm:$0xf]
      %v1307 = vld [vmem:[%s1109 + $0x4c] sm:$0xf]
      %v1308 = vld [vmem:[%s1109 + $0x50] sm:$0x1]
      %v1309 = vld [vmem:[%s1109 + $0x54] sm:$0xf]
      %v1310 = vld [vmem:[%s1109 + $0x58] sm:$0xf]
      %v1311 = vld [vmem:[%s1109 + $0x5c] sm:$0x1]
      %v1313 = vshrl.u32 %v1288, 16
      %v1315 = vrot.slane %v1313, 4
      %v1316 = vshll.u32 %v1288, 16
      %v1318 = vrot.slane %v1316, 5
      %v1319 = vor.u32 %v1315, %v1318
      %v1320 = vrot.slane %v1319, 4
      %v1322 = vshll.u32 %v1289, 16
      %v1324 = vrot.slane %v1322, 5
      %v1325 = vsel %vm419, %v1320, %v1324
      %v1326 = vshrl.u32 %v1289, 16
      %v1328 = vrot.slane %v1326, 4
      %v1329 = vor.u32 %v1328, %v1324
      %v1330 = vrot.slane %v1329, 4
      %v1332 = vshll.u32 %v1290, 16
      %v1334 = vrot.slane %v1332, 5
      %v1335 = vsel %vm419, %v1330, %v1334
      %v1337 = vshrl.u32 %v1291, 16
      %v1339 = vrot.slane %v1337, 4
      %v1340 = vshll.u32 %v1291, 16
      %v1342 = vrot.slane %v1340, 5
      %v1343 = vor.u32 %v1339, %v1342
      %v1344 = vrot.slane %v1343, 4
      %v1346 = vshll.u32 %v1292, 16
      %v1348 = vrot.slane %v1346, 5
      %v1349 = vsel %vm419, %v1344, %v1348
      %v1350 = vshrl.u32 %v1292, 16
      %v1352 = vrot.slane %v1350, 4
      %v1353 = vor.u32 %v1352, %v1348
      %v1354 = vrot.slane %v1353, 4
      %v1356 = vshll.u32 %v1293, 16
      %v1358 = vrot.slane %v1356, 5
      %v1359 = vsel %vm419, %v1354, %v1358
      %v1361 = vshrl.u32 %v1294, 16
      %v1363 = vrot.slane %v1361, 4
      %v1364 = vshll.u32 %v1294, 16
      %v1366 = vrot.slane %v1364, 5
      %v1367 = vor.u32 %v1363, %v1366
      %v1368 = vrot.slane %v1367, 4
      %v1370 = vshll.u32 %v1295, 16
      %v1372 = vrot.slane %v1370, 5
      %v1373 = vsel %vm419, %v1368, %v1372
      %v1374 = vshrl.u32 %v1295, 16
      %v1376 = vrot.slane %v1374, 4
      %v1377 = vor.u32 %v1376, %v1372
      %v1378 = vrot.slane %v1377, 4
      %v1380 = vshll.u32 %v1296, 16
      %v1382 = vrot.slane %v1380, 5
      %v1383 = vsel %vm419, %v1378, %v1382
      %v1385 = vshrl.u32 %v1297, 16
      %v1387 = vrot.slane %v1385, 4
      %v1388 = vshll.u32 %v1297, 16
      %v1390 = vrot.slane %v1388, 5
      %v1391 = vor.u32 %v1387, %v1390
      %v1392 = vrot.slane %v1391, 4
      %v1394 = vshll.u32 %v1298, 16
      %v1396 = vrot.slane %v1394, 5
      %v1397 = vsel %vm419, %v1392, %v1396
      %v1398 = vshrl.u32 %v1298, 16
      %v1400 = vrot.slane %v1398, 4
      %v1401 = vor.u32 %v1400, %v1396
      %v1402 = vrot.slane %v1401, 4
      %v1404 = vshll.u32 %v1299, 16
      %v1406 = vrot.slane %v1404, 5
      %v1407 = vsel %vm419, %v1402, %v1406
      %v1409 = vshrl.u32 %v1300, 16
      %v1411 = vrot.slane %v1409, 4
      %v1412 = vshll.u32 %v1300, 16
      %v1414 = vrot.slane %v1412, 5
      %v1415 = vor.u32 %v1411, %v1414
      %v1416 = vrot.slane %v1415, 4
      %v1418 = vshll.u32 %v1301, 16
      %v1420 = vrot.slane %v1418, 5
      %v1421 = vsel %vm419, %v1416, %v1420
      %v1422 = vshrl.u32 %v1301, 16
      %v1424 = vrot.slane %v1422, 4
      %v1425 = vor.u32 %v1424, %v1420
      %v1426 = vrot.slane %v1425, 4
      %v1428 = vshll.u32 %v1302, 16
      %v1430 = vrot.slane %v1428, 5
      %v1431 = vsel %vm419, %v1426, %v1430
      %v1433 = vshrl.u32 %v1303, 16
      %v1435 = vrot.slane %v1433, 4
      %v1436 = vshll.u32 %v1303, 16
      %v1438 = vrot.slane %v1436, 5
      %v1439 = vor.u32 %v1435, %v1438
      %v1440 = vrot.slane %v1439, 4
      %v1442 = vshll.u32 %v1304, 16
      %v1444 = vrot.slane %v1442, 5
      %v1445 = vsel %vm419, %v1440, %v1444
      %v1446 = vshrl.u32 %v1304, 16
      %v1448 = vrot.slane %v1446, 4
      %v1449 = vor.u32 %v1448, %v1444
      %v1450 = vrot.slane %v1449, 4
      %v1452 = vshll.u32 %v1305, 16
      %v1454 = vrot.slane %v1452, 5
      %v1455 = vsel %vm419, %v1450, %v1454
      %v1457 = vshrl.u32 %v1306, 16
      %v1459 = vrot.slane %v1457, 4
      %v1460 = vshll.u32 %v1306, 16
      %v1462 = vrot.slane %v1460, 5
      %v1463 = vor.u32 %v1459, %v1462
      %v1464 = vrot.slane %v1463, 4
      %v1466 = vshll.u32 %v1307, 16
      %v1468 = vrot.slane %v1466, 5
      %v1469 = vsel %vm419, %v1464, %v1468
      %v1470 = vshrl.u32 %v1307, 16
      %v1472 = vrot.slane %v1470, 4
      %v1473 = vor.u32 %v1472, %v1468
      %v1474 = vrot.slane %v1473, 4
      %v1476 = vshll.u32 %v1308, 16
      %v1478 = vrot.slane %v1476, 5
      %v1479 = vsel %vm419, %v1474, %v1478
      %v1481 = vshrl.u32 %v1309, 16
      %v1483 = vrot.slane %v1481, 4
      %v1484 = vshll.u32 %v1309, 16
      %v1486 = vrot.slane %v1484, 5
      %v1487 = vor.u32 %v1483, %v1486
      %v1488 = vrot.slane %v1487, 4
      %v1490 = vshll.u32 %v1310, 16
      %v1492 = vrot.slane %v1490, 5
      %v1493 = vsel %vm419, %v1488, %v1492
      %v1494 = vshrl.u32 %v1310, 16
      %v1496 = vrot.slane %v1494, 4
      %v1497 = vor.u32 %v1496, %v1492
      %v1498 = vrot.slane %v1497, 4
      %v1500 = vshll.u32 %v1311, 16
      %v1502 = vrot.slane %v1500, 5
      %v1503 = vsel %vm419, %v1498, %v1502
      %s1504 = scalar_lea.vmem %s2, 128
      %v1505 = vld [vmem:[%s1504] sm:$0xf]
      %v1506 = vld [vmem:[%s1504 + $0x4] sm:$0xf]
      %v1507 = vld [vmem:[%s1504 + $0x8] sm:$0xf]
      %v1508 = vld [vmem:[%s1504 + $0xc] sm:$0xf]
      %v1509 = vld [vmem:[%s1504 + $0x10] sm:$0xf]
      %v1510 = vld [vmem:[%s1504 + $0x14] sm:$0xf]
      %v1511 = vld [vmem:[%s1504 + $0x18] sm:$0xf]
      %v1512 = vld [vmem:[%s1504 + $0x1c] sm:$0xf]
      %v1513 = vunpack.c.l.b16 %v1325
      %v1514 = vunpack.c.l.b16 %v1335
      %v1515 = vunpack.c.l.b16 %v1349
      %v1516 = vunpack.c.l.b16 %v1359
      %v1517 = vunpack.c.l.b16 %v1373
      %v1518 = vunpack.c.l.b16 %v1383
      %v1519 = vunpack.c.l.b16 %v1397
      %v1520 = vunpack.c.l.b16 %v1407
      %v1521 = vunpack.c.l.b16 %v1421
      %v1522 = vunpack.c.l.b16 %v1431
      %v1523 = vunpack.c.l.b16 %v1445
      %v1524 = vunpack.c.l.b16 %v1455
      %v1525 = vunpack.c.l.b16 %v1469
      %v1526 = vunpack.c.l.b16 %v1479
      %v1527 = vunpack.c.l.b16 %v1493
      %v1528 = vunpack.c.l.b16 %v1503
      %v1529 = vpack.c.b16 %v1514, %v1513
      %v1530 = vpack.c.b16 %v1516, %v1515
      %v1531 = vpack.c.b16 %v1518, %v1517
      %v1532 = vpack.c.b16 %v1520, %v1519
      %v1533 = vpack.c.b16 %v1522, %v1521
      %v1534 = vpack.c.b16 %v1524, %v1523
      %v1535 = vpack.c.b16 %v1526, %v1525
      %v1536 = vpack.c.b16 %v1528, %v1527
      %v1545 = vunpack.c.l.b16 %v1505
      %v1546 = vunpack.c.l.b16 %v1506
      %v1547 = vunpack.c.l.b16 %v1507
      %v1548 = vunpack.c.l.b16 %v1508
      %v1549 = vunpack.c.l.b16 %v1509
      %v1550 = vunpack.c.l.b16 %v1510
      %v1551 = vunpack.c.l.b16 %v1511
      %v1552 = vunpack.c.l.b16 %v1512
      %v1553 = vpack.c.b16 %v1546, %v1545
      %v1554 = vpack.c.b16 %v1548, %v1547
      %v1555 = vpack.c.b16 %v1550, %v1549
      %v1556 = vpack.c.b16 %v1552, %v1551
      %v1562 = vsel %vm669, %v1529, 0
      %v1565 = vsel %vm669, %v1530, 0
      %v1568 = vsel %vm669, %v1531, 0
      %v1571 = vsel %vm669, %v1532, 0
      %v1574 = vsel %vm669, %v1533, 0
      %v1577 = vsel %vm669, %v1534, 0
      %v1580 = vsel %vm669, %v1535, 0
      %v1583 = vsel %vm669, %v1536, 0
      %1585 = vmatpush.bf16.msra.mxu0 0
      %1586 = vmatpush.bf16.msra.mxu0 0
      %1587 = vmatpush.bf16.msra.mxu0 0
      %1588 = vmatpush.bf16.msra.mxu0 0
      %1589 = vmatpush.bf16.msra.mxu0 %v1556
      %1590 = vmatpush.bf16.msra.mxu0 %v1555
      %1591 = vmatpush.bf16.msra.mxu0 %v1554
      %1592 = vmatpush.bf16.msra.mxu0 %v1553
      %1593 = vmatmul.bf16.gmra.mxu0 %v1562
      %v1594 = vpop.f32.mrf.mxu0
      %v1595 = vadd.f32 0.0, %v1594
      %v1596 = vpop.f32.mrf.mxu0
      %v1597 = vadd.f32 0.0, %v1596
      %1598 = vmatmul.bf16.gmra.mxu0 %v1565
      %v1599 = vpop.f32.mrf.mxu0
      %v1600 = vadd.f32 0.0, %v1599
      %v1601 = vpop.f32.mrf.mxu0
      %v1602 = vadd.f32 0.0, %v1601
      %1603 = vmatmul.bf16.gmra.mxu0 %v1568
      %v1604 = vpop.f32.mrf.mxu0
      %v1605 = vadd.f32 0.0, %v1604
      %v1606 = vpop.f32.mrf.mxu0
      %v1607 = vadd.f32 0.0, %v1606
      %1608 = vmatmul.bf16.gmra.mxu0 %v1571
      %v1609 = vpop.f32.mrf.mxu0
      %v1610 = vadd.f32 0.0, %v1609
      %v1611 = vpop.f32.mrf.mxu0
      %v1612 = vadd.f32 0.0, %v1611
      %1613 = vmatmul.bf16.gmra.mxu0 %v1574
      %v1614 = vpop.f32.mrf.mxu0
      %v1615 = vadd.f32 0.0, %v1614
      %v1616 = vpop.f32.mrf.mxu0
      %v1617 = vadd.f32 0.0, %v1616
      %1618 = vmatmul.bf16.gmra.mxu0 %v1577
      %v1619 = vpop.f32.mrf.mxu0
      %v1620 = vadd.f32 0.0, %v1619
      %v1621 = vpop.f32.mrf.mxu0
      %v1622 = vadd.f32 0.0, %v1621
      %1623 = vmatmul.bf16.gmra.mxu0 %v1580
      %v1624 = vpop.f32.mrf.mxu0
      %v1625 = vadd.f32 0.0, %v1624
      %v1626 = vpop.f32.mrf.mxu0
      %v1627 = vadd.f32 0.0, %v1626
      %1628 = vmatmul.bf16.gmra.mxu0 %v1583
      %v1629 = vpop.f32.mrf.mxu0
      %v1630 = vadd.f32 0.0, %v1629
      %v1631 = vpop.f32.mrf.mxu0
      %v1632 = vadd.f32 0.0, %v1631
      %1633 = vdwg.mxu0
      %v1634 = vadd.f32 %v1272, %v1595
      %v1635 = vadd.f32 %v1273, %v1597
      %v1636 = vadd.f32 %v1274, %v1600
      %v1637 = vadd.f32 %v1275, %v1602
      %v1638 = vadd.f32 %v1276, %v1605
      %v1639 = vadd.f32 %v1277, %v1607
      %v1640 = vadd.f32 %v1278, %v1610
      %v1641 = vadd.f32 %v1279, %v1612
      %v1642 = vadd.f32 %v1280, %v1615
      %v1643 = vadd.f32 %v1281, %v1617
      %v1644 = vadd.f32 %v1282, %v1620
      %v1645 = vadd.f32 %v1283, %v1622
      %v1646 = vadd.f32 %v1284, %v1625
      %v1647 = vadd.f32 %v1285, %v1627
      %v1648 = vadd.f32 %v1286, %v1630
      %v1649 = vadd.f32 %v1287, %v1632
      %v1650 = vld [vmem:[%s1109] sm:$0xe]
      %v1651 = vld [vmem:[%s1109 + $0xc] sm:$0xe]
      %v1652 = vld [vmem:[%s1109 + $0x18] sm:$0xe]
      %v1653 = vld [vmem:[%s1109 + $0x24] sm:$0xe]
      %v1654 = vld [vmem:[%s1109 + $0x30] sm:$0xe]
      %v1655 = vld [vmem:[%s1109 + $0x3c] sm:$0xe]
      %v1656 = vld [vmem:[%s1109 + $0x48] sm:$0xe]
      %v1657 = vld [vmem:[%s1109 + $0x54] sm:$0xe]
      %v1682 = vrot.slane %v1650, 5
      %v1683 = vrot.slane %v1682, 4
      %v1684 = vrot.slane %v1289, 5
      %v1685 = vsel %vm906, %v1683, %v1684
      %v1686 = vrot.slane %v1684, 4
      %v1687 = vrot.slane %v1290, 5
      %v1688 = vsel %vm906, %v1686, %v1687
      %v1689 = vrot.slane %v1651, 5
      %v1690 = vrot.slane %v1689, 4
      %v1691 = vrot.slane %v1292, 5
      %v1692 = vsel %vm906, %v1690, %v1691
      %v1693 = vrot.slane %v1691, 4
      %v1694 = vrot.slane %v1293, 5
      %v1695 = vsel %vm906, %v1693, %v1694
      %v1696 = vrot.slane %v1652, 5
      %v1697 = vrot.slane %v1696, 4
      %v1698 = vrot.slane %v1295, 5
      %v1699 = vsel %vm906, %v1697, %v1698
      %v1700 = vrot.slane %v1698, 4
      %v1701 = vrot.slane %v1296, 5
      %v1702 = vsel %vm906, %v1700, %v1701
      %v1703 = vrot.slane %v1653, 5
      %v1704 = vrot.slane %v1703, 4
      %v1705 = vrot.slane %v1298, 5
      %v1706 = vsel %vm906, %v1704, %v1705
      %v1707 = vrot.slane %v1705, 4
      %v1708 = vrot.slane %v1299, 5
      %v1709 = vsel %vm906, %v1707, %v1708
      %v1710 = vrot.slane %v1654, 5
      %v1711 = vrot.slane %v1710, 4
      %v1712 = vrot.slane %v1301, 5
      %v1713 = vsel %vm906, %v1711, %v1712
      %v1714 = vrot.slane %v1712, 4
      %v1715 = vrot.slane %v1302, 5
      %v1716 = vsel %vm906, %v1714, %v1715
      %v1717 = vrot.slane %v1655, 5
      %v1718 = vrot.slane %v1717, 4
      %v1719 = vrot.slane %v1304, 5
      %v1720 = vsel %vm906, %v1718, %v1719
      %v1721 = vrot.slane %v1719, 4
      %v1722 = vrot.slane %v1305, 5
      %v1723 = vsel %vm906, %v1721, %v1722
      %v1724 = vrot.slane %v1656, 5
      %v1725 = vrot.slane %v1724, 4
      %v1726 = vrot.slane %v1307, 5
      %v1727 = vsel %vm906, %v1725, %v1726
      %v1728 = vrot.slane %v1726, 4
      %v1729 = vrot.slane %v1308, 5
      %v1730 = vsel %vm906, %v1728, %v1729
      %v1731 = vrot.slane %v1657, 5
      %v1732 = vrot.slane %v1731, 4
      %v1733 = vrot.slane %v1310, 5
      %v1734 = vsel %vm906, %v1732, %v1733
      %v1735 = vrot.slane %v1733, 4
      %v1736 = vrot.slane %v1311, 5
      %v1737 = vsel %vm906, %v1735, %v1736
      %s1738 = scalar_lea.vmem %s2, 160
      %v1739 = vld [vmem:[%s1738] sm:$0xf]
      %v1740 = vld [vmem:[%s1738 + $0x4] sm:$0xf]
      %v1741 = vld [vmem:[%s1738 + $0x8] sm:$0xf]
      %v1742 = vld [vmem:[%s1738 + $0xc] sm:$0xf]
      %v1743 = vld [vmem:[%s1738 + $0x10] sm:$0xf]
      %v1744 = vld [vmem:[%s1738 + $0x14] sm:$0xf]
      %v1745 = vld [vmem:[%s1738 + $0x18] sm:$0xf]
      %v1746 = vld [vmem:[%s1738 + $0x1c] sm:$0xf]
      %v1747 = vunpack.c.l.b16 %v1685
      %v1748 = vunpack.c.l.b16 %v1688
      %v1749 = vunpack.c.l.b16 %v1692
      %v1750 = vunpack.c.l.b16 %v1695
      %v1751 = vunpack.c.l.b16 %v1699
      %v1752 = vunpack.c.l.b16 %v1702
      %v1753 = vunpack.c.l.b16 %v1706
      %v1754 = vunpack.c.l.b16 %v1709
      %v1755 = vunpack.c.l.b16 %v1713
      %v1756 = vunpack.c.l.b16 %v1716
      %v1757 = vunpack.c.l.b16 %v1720
      %v1758 = vunpack.c.l.b16 %v1723
      %v1759 = vunpack.c.l.b16 %v1727
      %v1760 = vunpack.c.l.b16 %v1730
      %v1761 = vunpack.c.l.b16 %v1734
      %v1762 = vunpack.c.l.b16 %v1737
      %v1763 = vpack.c.b16 %v1748, %v1747
      %v1764 = vpack.c.b16 %v1750, %v1749
      %v1765 = vpack.c.b16 %v1752, %v1751
      %v1766 = vpack.c.b16 %v1754, %v1753
      %v1767 = vpack.c.b16 %v1756, %v1755
      %v1768 = vpack.c.b16 %v1758, %v1757
      %v1769 = vpack.c.b16 %v1760, %v1759
      %v1770 = vpack.c.b16 %v1762, %v1761
      %v1779 = vunpack.c.l.b16 %v1739
      %v1780 = vunpack.c.l.b16 %v1740
      %v1781 = vunpack.c.l.b16 %v1741
      %v1782 = vunpack.c.l.b16 %v1742
      %v1783 = vunpack.c.l.b16 %v1743
      %v1784 = vunpack.c.l.b16 %v1744
      %v1785 = vunpack.c.l.b16 %v1745
      %v1786 = vunpack.c.l.b16 %v1746
      %v1787 = vpack.c.b16 %v1780, %v1779
      %v1788 = vpack.c.b16 %v1782, %v1781
      %v1789 = vpack.c.b16 %v1784, %v1783
      %v1790 = vpack.c.b16 %v1786, %v1785
      %v1796 = vsel %vm669, %v1763, 0
      %v1799 = vsel %vm669, %v1764, 0
      %v1802 = vsel %vm669, %v1765, 0
      %v1805 = vsel %vm669, %v1766, 0
      %v1808 = vsel %vm669, %v1767, 0
      %v1811 = vsel %vm669, %v1768, 0
      %v1814 = vsel %vm669, %v1769, 0
      %v1817 = vsel %vm669, %v1770, 0
      %1819 = vmatpush.bf16.msra.mxu0 0
      %1820 = vmatpush.bf16.msra.mxu0 0
      %1821 = vmatpush.bf16.msra.mxu0 0
      %1822 = vmatpush.bf16.msra.mxu0 0
      %1823 = vmatpush.bf16.msra.mxu0 %v1790
      %1824 = vmatpush.bf16.msra.mxu0 %v1789
      %1825 = vmatpush.bf16.msra.mxu0 %v1788
      %1826 = vmatpush.bf16.msra.mxu0 %v1787
      %1827 = vmatmul.bf16.gmra.mxu0 %v1796
      %v1828 = vpop.f32.mrf.mxu0
      %v1829 = vadd.f32 0.0, %v1828
      %v1830 = vpop.f32.mrf.mxu0
      %v1831 = vadd.f32 0.0, %v1830
      %1832 = vmatmul.bf16.gmra.mxu0 %v1799
      %v1833 = vpop.f32.mrf.mxu0
      %v1834 = vadd.f32 0.0, %v1833
      %v1835 = vpop.f32.mrf.mxu0
      %v1836 = vadd.f32 0.0, %v1835
      %1837 = vmatmul.bf16.gmra.mxu0 %v1802
      %v1838 = vpop.f32.mrf.mxu0
      %v1839 = vadd.f32 0.0, %v1838
      %v1840 = vpop.f32.mrf.mxu0
      %v1841 = vadd.f32 0.0, %v1840
      %1842 = vmatmul.bf16.gmra.mxu0 %v1805
      %v1843 = vpop.f32.mrf.mxu0
      %v1844 = vadd.f32 0.0, %v1843
      %v1845 = vpop.f32.mrf.mxu0
      %v1846 = vadd.f32 0.0, %v1845
      %1847 = vmatmul.bf16.gmra.mxu0 %v1808
      %v1848 = vpop.f32.mrf.mxu0
      %v1849 = vadd.f32 0.0, %v1848
      %v1850 = vpop.f32.mrf.mxu0
      %v1851 = vadd.f32 0.0, %v1850
      %1852 = vmatmul.bf16.gmra.mxu0 %v1811
      %v1853 = vpop.f32.mrf.mxu0
      %v1854 = vadd.f32 0.0, %v1853
      %v1855 = vpop.f32.mrf.mxu0
      %v1856 = vadd.f32 0.0, %v1855
      %1857 = vmatmul.bf16.gmra.mxu0 %v1814
      %v1858 = vpop.f32.mrf.mxu0
      %v1859 = vadd.f32 0.0, %v1858
      %v1860 = vpop.f32.mrf.mxu0
      %v1861 = vadd.f32 0.0, %v1860
      %1862 = vmatmul.bf16.gmra.mxu0 %v1817
      %v1863 = vpop.f32.mrf.mxu0
      %v1864 = vadd.f32 0.0, %v1863
      %v1865 = vpop.f32.mrf.mxu0
      %v1866 = vadd.f32 0.0, %v1865
      %1867 = vdwg.mxu0
      %v1868 = vadd.f32 %v1634, %v1829
      %v1869 = vadd.f32 %v1635, %v1831
      %v1870 = vadd.f32 %v1636, %v1834
      %v1871 = vadd.f32 %v1637, %v1836
      %v1872 = vadd.f32 %v1638, %v1839
      %v1873 = vadd.f32 %v1639, %v1841
      %v1874 = vadd.f32 %v1640, %v1844
      %v1875 = vadd.f32 %v1641, %v1846
      %v1876 = vadd.f32 %v1642, %v1849
      %v1877 = vadd.f32 %v1643, %v1851
      %v1878 = vadd.f32 %v1644, %v1854
      %v1879 = vadd.f32 %v1645, %v1856
      %v1880 = vadd.f32 %v1646, %v1859
      %v1881 = vadd.f32 %v1647, %v1861
      %v1882 = vadd.f32 %v1648, %v1864
      %v1883 = vadd.f32 %v1649, %v1866
      %s1884 = scalar_lea.vmem [#allocation2], 24
      %v1885 = vld [vmem:[%s1884] sm:$0xf]
      %v1886 = vld [vmem:[%s1884 + $0x4] sm:$0xf]
      %v1887 = vld [vmem:[%s1884 + $0xc] sm:$0xf]
      %v1888 = vld [vmem:[%s1884 + $0x10] sm:$0xf]
      %v1889 = vld [vmem:[%s1884 + $0x18] sm:$0xf]
      %v1890 = vld [vmem:[%s1884 + $0x1c] sm:$0xf]
      %v1891 = vld [vmem:[%s1884 + $0x24] sm:$0xf]
      %v1892 = vld [vmem:[%s1884 + $0x28] sm:$0xf]
      %v1893 = vld [vmem:[%s1884 + $0x30] sm:$0xf]
      %v1894 = vld [vmem:[%s1884 + $0x34] sm:$0xf]
      %v1895 = vld [vmem:[%s1884 + $0x3c] sm:$0xf]
      %v1896 = vld [vmem:[%s1884 + $0x40] sm:$0xf]
      %v1897 = vld [vmem:[%s1884 + $0x48] sm:$0xf]
      %v1898 = vld [vmem:[%s1884 + $0x4c] sm:$0xf]
      %v1899 = vld [vmem:[%s1884 + $0x54] sm:$0xf]
      %v1900 = vld [vmem:[%s1884 + $0x58] sm:$0xf]
      %s1901 = scalar_lea.vmem %s2, 192
      %v1902 = vld [vmem:[%s1901] sm:$0xf]
      %v1903 = vld [vmem:[%s1901 + $0x4] sm:$0xf]
      %v1904 = vld [vmem:[%s1901 + $0x8] sm:$0xf]
      %v1905 = vld [vmem:[%s1901 + $0xc] sm:$0xf]
      %v1906 = vld [vmem:[%s1901 + $0x10] sm:$0xf]
      %v1907 = vld [vmem:[%s1901 + $0x14] sm:$0xf]
      %v1908 = vld [vmem:[%s1901 + $0x18] sm:$0xf]
      %v1909 = vld [vmem:[%s1901 + $0x1c] sm:$0xf]
      %v1926 = vunpack.c.l.b16 %v1885
      %v1927 = vunpack.c.l.b16 %v1886
      %v1928 = vunpack.c.l.b16 %v1887
      %v1929 = vunpack.c.l.b16 %v1888
      %v1930 = vunpack.c.l.b16 %v1889
      %v1931 = vunpack.c.l.b16 %v1890
      %v1932 = vunpack.c.l.b16 %v1891
      %v1933 = vunpack.c.l.b16 %v1892
      %v1934 = vunpack.c.l.b16 %v1893
      %v1935 = vunpack.c.l.b16 %v1894
      %v1936 = vunpack.c.l.b16 %v1895
      %v1937 = vunpack.c.l.b16 %v1896
      %v1938 = vunpack.c.l.b16 %v1897
      %v1939 = vunpack.c.l.b16 %v1898
      %v1940 = vunpack.c.l.b16 %v1899
      %v1941 = vunpack.c.l.b16 %v1900
      %v1942 = vpack.c.b16 %v1927, %v1926
      %v1943 = vpack.c.b16 %v1929, %v1928
      %v1944 = vpack.c.b16 %v1931, %v1930
      %v1945 = vpack.c.b16 %v1933, %v1932
      %v1946 = vpack.c.b16 %v1935, %v1934
      %v1947 = vpack.c.b16 %v1937, %v1936
      %v1948 = vpack.c.b16 %v1939, %v1938
      %v1949 = vpack.c.b16 %v1941, %v1940
      %v1958 = vunpack.c.l.b16 %v1902
      %v1959 = vunpack.c.l.b16 %v1903
      %v1960 = vunpack.c.l.b16 %v1904
      %v1961 = vunpack.c.l.b16 %v1905
      %v1962 = vunpack.c.l.b16 %v1906
      %v1963 = vunpack.c.l.b16 %v1907
      %v1964 = vunpack.c.l.b16 %v1908
      %v1965 = vunpack.c.l.b16 %v1909
      %v1966 = vpack.c.b16 %v1959, %v1958
      %v1967 = vpack.c.b16 %v1961, %v1960
      %v1968 = vpack.c.b16 %v1963, %v1962
      %v1969 = vpack.c.b16 %v1965, %v1964
      %v1975 = vsel %vm669, %v1942, 0
      %v1978 = vsel %vm669, %v1943, 0
      %v1981 = vsel %vm669, %v1944, 0
      %v1984 = vsel %vm669, %v1945, 0
      %v1987 = vsel %vm669, %v1946, 0
      %v1990 = vsel %vm669, %v1947, 0
      %v1993 = vsel %vm669, %v1948, 0
      %v1996 = vsel %vm669, %v1949, 0
      %1998 = vmatpush.bf16.msra.mxu0 0
      %1999 = vmatpush.bf16.msra.mxu0 0
      %2000 = vmatpush.bf16.msra.mxu0 0
      %2001 = vmatpush.bf16.msra.mxu0 0
      %2002 = vmatpush.bf16.msra.mxu0 %v1969
      %2003 = vmatpush.bf16.msra.mxu0 %v1968
      %2004 = vmatpush.bf16.msra.mxu0 %v1967
      %2005 = vmatpush.bf16.msra.mxu0 %v1966
      %2006 = vmatmul.bf16.gmra.mxu0 %v1975
      %v2007 = vpop.f32.mrf.mxu0
      %v2008 = vadd.f32 0.0, %v2007
      %v2009 = vpop.f32.mrf.mxu0
      %v2010 = vadd.f32 0.0, %v2009
      %2011 = vmatmul.bf16.gmra.mxu0 %v1978
      %v2012 = vpop.f32.mrf.mxu0
      %v2013 = vadd.f32 0.0, %v2012
      %v2014 = vpop.f32.mrf.mxu0
      %v2015 = vadd.f32 0.0, %v2014
      %2016 = vmatmul.bf16.gmra.mxu0 %v1981
      %v2017 = vpop.f32.mrf.mxu0
      %v2018 = vadd.f32 0.0, %v2017
      %v2019 = vpop.f32.mrf.mxu0
      %v2020 = vadd.f32 0.0, %v2019
      %2021 = vmatmul.bf16.gmra.mxu0 %v1984
      %v2022 = vpop.f32.mrf.mxu0
      %v2023 = vadd.f32 0.0, %v2022
      %v2024 = vpop.f32.mrf.mxu0
      %v2025 = vadd.f32 0.0, %v2024
      %2026 = vmatmul.bf16.gmra.mxu0 %v1987
      %v2027 = vpop.f32.mrf.mxu0
      %v2028 = vadd.f32 0.0, %v2027
      %v2029 = vpop.f32.mrf.mxu0
      %v2030 = vadd.f32 0.0, %v2029
      %2031 = vmatmul.bf16.gmra.mxu0 %v1990
      %v2032 = vpop.f32.mrf.mxu0
      %v2033 = vadd.f32 0.0, %v2032
      %v2034 = vpop.f32.mrf.mxu0
      %v2035 = vadd.f32 0.0, %v2034
      %2036 = vmatmul.bf16.gmra.mxu0 %v1993
      %v2037 = vpop.f32.mrf.mxu0
      %v2038 = vadd.f32 0.0, %v2037
      %v2039 = vpop.f32.mrf.mxu0
      %v2040 = vadd.f32 0.0, %v2039
      %2041 = vmatmul.bf16.gmra.mxu0 %v1996
      %v2042 = vpop.f32.mrf.mxu0
      %v2043 = vadd.f32 0.0, %v2042
      %v2044 = vpop.f32.mrf.mxu0
      %v2045 = vadd.f32 0.0, %v2044
      %2046 = vdwg.mxu0
      %v2047 = vadd.f32 %v1868, %v2008
      %v2048 = vadd.f32 %v1869, %v2010
      %v2049 = vadd.f32 %v1870, %v2013
      %v2050 = vadd.f32 %v1871, %v2015
      %v2051 = vadd.f32 %v1872, %v2018
      %v2052 = vadd.f32 %v1873, %v2020
      %v2053 = vadd.f32 %v1874, %v2023
      %v2054 = vadd.f32 %v1875, %v2025
      %v2055 = vadd.f32 %v1876, %v2028
      %v2056 = vadd.f32 %v1877, %v2030
      %v2057 = vadd.f32 %v1878, %v2033
      %v2058 = vadd.f32 %v1879, %v2035
      %v2059 = vadd.f32 %v1880, %v2038
      %v2060 = vadd.f32 %v1881, %v2040
      %v2061 = vadd.f32 %v1882, %v2043
      %v2062 = vadd.f32 %v1883, %v2045
      %v2063 = vld [vmem:[%s1884] sm:$0xf]
      %v2064 = vld [vmem:[%s1884 + $0x4] sm:$0xf]
      %v2065 = vld [vmem:[%s1884 + $0x8] sm:$0x1]
      %v2066 = vld [vmem:[%s1884 + $0xc] sm:$0xf]
      %v2067 = vld [vmem:[%s1884 + $0x10] sm:$0xf]
      %v2068 = vld [vmem:[%s1884 + $0x14] sm:$0x1]
      %v2069 = vld [vmem:[%s1884 + $0x18] sm:$0xf]
      %v2070 = vld [vmem:[%s1884 + $0x1c] sm:$0xf]
      %v2071 = vld [vmem:[%s1884 + $0x20] sm:$0x1]
      %v2072 = vld [vmem:[%s1884 + $0x24] sm:$0xf]
      %v2073 = vld [vmem:[%s1884 + $0x28] sm:$0xf]
      %v2074 = vld [vmem:[%s1884 + $0x2c] sm:$0x1]
      %v2075 = vld [vmem:[%s1884 + $0x30] sm:$0xf]
      %v2076 = vld [vmem:[%s1884 + $0x34] sm:$0xf]
      %v2077 = vld [vmem:[%s1884 + $0x38] sm:$0x1]
      %v2078 = vld [vmem:[%s1884 + $0x3c] sm:$0xf]
      %v2079 = vld [vmem:[%s1884 + $0x40] sm:$0xf]
      %v2080 = vld [vmem:[%s1884 + $0x44] sm:$0x1]
      %v2081 = vld [vmem:[%s1884 + $0x48] sm:$0xf]
      %v2082 = vld [vmem:[%s1884 + $0x4c] sm:$0xf]
      %v2083 = vld [vmem:[%s1884 + $0x50] sm:$0x1]
      %v2084 = vld [vmem:[%s1884 + $0x54] sm:$0xf]
      %v2085 = vld [vmem:[%s1884 + $0x58] sm:$0xf]
      %v2086 = vld [vmem:[%s1884 + $0x5c] sm:$0x1]
      %v2088 = vshrl.u32 %v2063, 16
      %v2090 = vrot.slane %v2088, 4
      %v2091 = vshll.u32 %v2063, 16
      %v2093 = vrot.slane %v2091, 5
      %v2094 = vor.u32 %v2090, %v2093
      %v2095 = vrot.slane %v2094, 4
      %v2097 = vshll.u32 %v2064, 16
      %v2099 = vrot.slane %v2097, 5
      %v2100 = vsel %vm419, %v2095, %v2099
      %v2101 = vshrl.u32 %v2064, 16
      %v2103 = vrot.slane %v2101, 4
      %v2104 = vor.u32 %v2103, %v2099
      %v2105 = vrot.slane %v2104, 4
      %v2107 = vshll.u32 %v2065, 16
      %v2109 = vrot.slane %v2107, 5
      %v2110 = vsel %vm419, %v2105, %v2109
      %v2112 = vshrl.u32 %v2066, 16
      %v2114 = vrot.slane %v2112, 4
      %v2115 = vshll.u32 %v2066, 16
      %v2117 = vrot.slane %v2115, 5
      %v2118 = vor.u32 %v2114, %v2117
      %v2119 = vrot.slane %v2118, 4
      %v2121 = vshll.u32 %v2067, 16
      %v2123 = vrot.slane %v2121, 5
      %v2124 = vsel %vm419, %v2119, %v2123
      %v2125 = vshrl.u32 %v2067, 16
      %v2127 = vrot.slane %v2125, 4
      %v2128 = vor.u32 %v2127, %v2123
      %v2129 = vrot.slane %v2128, 4
      %v2131 = vshll.u32 %v2068, 16
      %v2133 = vrot.slane %v2131, 5
      %v2134 = vsel %vm419, %v2129, %v2133
      %v2136 = vshrl.u32 %v2069, 16
      %v2138 = vrot.slane %v2136, 4
      %v2139 = vshll.u32 %v2069, 16
      %v2141 = vrot.slane %v2139, 5
      %v2142 = vor.u32 %v2138, %v2141
      %v2143 = vrot.slane %v2142, 4
      %v2145 = vshll.u32 %v2070, 16
      %v2147 = vrot.slane %v2145, 5
      %v2148 = vsel %vm419, %v2143, %v2147
      %v2149 = vshrl.u32 %v2070, 16
      %v2151 = vrot.slane %v2149, 4
      %v2152 = vor.u32 %v2151, %v2147
      %v2153 = vrot.slane %v2152, 4
      %v2155 = vshll.u32 %v2071, 16
      %v2157 = vrot.slane %v2155, 5
      %v2158 = vsel %vm419, %v2153, %v2157
      %v2160 = vshrl.u32 %v2072, 16
      %v2162 = vrot.slane %v2160, 4
      %v2163 = vshll.u32 %v2072, 16
      %v2165 = vrot.slane %v2163, 5
      %v2166 = vor.u32 %v2162, %v2165
      %v2167 = vrot.slane %v2166, 4
      %v2169 = vshll.u32 %v2073, 16
      %v2171 = vrot.slane %v2169, 5
      %v2172 = vsel %vm419, %v2167, %v2171
      %v2173 = vshrl.u32 %v2073, 16
      %v2175 = vrot.slane %v2173, 4
      %v2176 = vor.u32 %v2175, %v2171
      %v2177 = vrot.slane %v2176, 4
      %v2179 = vshll.u32 %v2074, 16
      %v2181 = vrot.slane %v2179, 5
      %v2182 = vsel %vm419, %v2177, %v2181
      %v2184 = vshrl.u32 %v2075, 16
      %v2186 = vrot.slane %v2184, 4
      %v2187 = vshll.u32 %v2075, 16
      %v2189 = vrot.slane %v2187, 5
      %v2190 = vor.u32 %v2186, %v2189
      %v2191 = vrot.slane %v2190, 4
      %v2193 = vshll.u32 %v2076, 16
      %v2195 = vrot.slane %v2193, 5
      %v2196 = vsel %vm419, %v2191, %v2195
      %v2197 = vshrl.u32 %v2076, 16
      %v2199 = vrot.slane %v2197, 4
      %v2200 = vor.u32 %v2199, %v2195
      %v2201 = vrot.slane %v2200, 4
      %v2203 = vshll.u32 %v2077, 16
      %v2205 = vrot.slane %v2203, 5
      %v2206 = vsel %vm419, %v2201, %v2205
      %v2208 = vshrl.u32 %v2078, 16
      %v2210 = vrot.slane %v2208, 4
      %v2211 = vshll.u32 %v2078, 16
      %v2213 = vrot.slane %v2211, 5
      %v2214 = vor.u32 %v2210, %v2213
      %v2215 = vrot.slane %v2214, 4
      %v2217 = vshll.u32 %v2079, 16
      %v2219 = vrot.slane %v2217, 5
      %v2220 = vsel %vm419, %v2215, %v2219
      %v2221 = vshrl.u32 %v2079, 16
      %v2223 = vrot.slane %v2221, 4
      %v2224 = vor.u32 %v2223, %v2219
      %v2225 = vrot.slane %v2224, 4
      %v2227 = vshll.u32 %v2080, 16
      %v2229 = vrot.slane %v2227, 5
      %v2230 = vsel %vm419, %v2225, %v2229
      %v2232 = vshrl.u32 %v2081, 16
      %v2234 = vrot.slane %v2232, 4
      %v2235 = vshll.u32 %v2081, 16
      %v2237 = vrot.slane %v2235, 5
      %v2238 = vor.u32 %v2234, %v2237
      %v2239 = vrot.slane %v2238, 4
      %v2241 = vshll.u32 %v2082, 16
      %v2243 = vrot.slane %v2241, 5
      %v2244 = vsel %vm419, %v2239, %v2243
      %v2245 = vshrl.u32 %v2082, 16
      %v2247 = vrot.slane %v2245, 4
      %v2248 = vor.u32 %v2247, %v2243
      %v2249 = vrot.slane %v2248, 4
      %v2251 = vshll.u32 %v2083, 16
      %v2253 = vrot.slane %v2251, 5
      %v2254 = vsel %vm419, %v2249, %v2253
      %v2256 = vshrl.u32 %v2084, 16
      %v2258 = vrot.slane %v2256, 4
      %v2259 = vshll.u32 %v2084, 16
      %v2261 = vrot.slane %v2259, 5
      %v2262 = vor.u32 %v2258, %v2261
      %v2263 = vrot.slane %v2262, 4
      %v2265 = vshll.u32 %v2085, 16
      %v2267 = vrot.slane %v2265, 5
      %v2268 = vsel %vm419, %v2263, %v2267
      %v2269 = vshrl.u32 %v2085, 16
      %v2271 = vrot.slane %v2269, 4
      %v2272 = vor.u32 %v2271, %v2267
      %v2273 = vrot.slane %v2272, 4
      %v2275 = vshll.u32 %v2086, 16
      %v2277 = vrot.slane %v2275, 5
      %v2278 = vsel %vm419, %v2273, %v2277
      %s2279 = scalar_lea.vmem %s2, 224
      %v2280 = vld [vmem:[%s2279] sm:$0xf]
      %v2281 = vld [vmem:[%s2279 + $0x4] sm:$0xf]
      %v2282 = vld [vmem:[%s2279 + $0x8] sm:$0xf]
      %v2283 = vld [vmem:[%s2279 + $0xc] sm:$0xf]
      %v2284 = vld [vmem:[%s2279 + $0x10] sm:$0xf]
      %v2285 = vld [vmem:[%s2279 + $0x14] sm:$0xf]
      %v2286 = vld [vmem:[%s2279 + $0x18] sm:$0xf]
      %v2287 = vld [vmem:[%s2279 + $0x1c] sm:$0xf]
      %v2288 = vunpack.c.l.b16 %v2100
      %v2289 = vunpack.c.l.b16 %v2110
      %v2290 = vunpack.c.l.b16 %v2124
      %v2291 = vunpack.c.l.b16 %v2134
      %v2292 = vunpack.c.l.b16 %v2148
      %v2293 = vunpack.c.l.b16 %v2158
      %v2294 = vunpack.c.l.b16 %v2172
      %v2295 = vunpack.c.l.b16 %v2182
      %v2296 = vunpack.c.l.b16 %v2196
      %v2297 = vunpack.c.l.b16 %v2206
      %v2298 = vunpack.c.l.b16 %v2220
      %v2299 = vunpack.c.l.b16 %v2230
      %v2300 = vunpack.c.l.b16 %v2244
      %v2301 = vunpack.c.l.b16 %v2254
      %v2302 = vunpack.c.l.b16 %v2268
      %v2303 = vunpack.c.l.b16 %v2278
      %v2304 = vpack.c.b16 %v2289, %v2288
      %v2305 = vpack.c.b16 %v2291, %v2290
      %v2306 = vpack.c.b16 %v2293, %v2292
      %v2307 = vpack.c.b16 %v2295, %v2294
      %v2308 = vpack.c.b16 %v2297, %v2296
      %v2309 = vpack.c.b16 %v2299, %v2298
      %v2310 = vpack.c.b16 %v2301, %v2300
      %v2311 = vpack.c.b16 %v2303, %v2302
      %v2320 = vunpack.c.l.b16 %v2280
      %v2321 = vunpack.c.l.b16 %v2281
      %v2322 = vunpack.c.l.b16 %v2282
      %v2323 = vunpack.c.l.b16 %v2283
      %v2324 = vunpack.c.l.b16 %v2284
      %v2325 = vunpack.c.l.b16 %v2285
      %v2326 = vunpack.c.l.b16 %v2286
      %v2327 = vunpack.c.l.b16 %v2287
      %v2328 = vpack.c.b16 %v2321, %v2320
      %v2329 = vpack.c.b16 %v2323, %v2322
      %v2330 = vpack.c.b16 %v2325, %v2324
      %v2331 = vpack.c.b16 %v2327, %v2326
      %v2337 = vsel %vm669, %v2304, 0
      %v2340 = vsel %vm669, %v2305, 0
      %v2343 = vsel %vm669, %v2306, 0
      %v2346 = vsel %vm669, %v2307, 0
      %v2349 = vsel %vm669, %v2308, 0
      %v2352 = vsel %vm669, %v2309, 0
      %v2355 = vsel %vm669, %v2310, 0
      %v2358 = vsel %vm669, %v2311, 0
      %2360 = vmatpush.bf16.msra.mxu0 0
      %2361 = vmatpush.bf16.msra.mxu0 0
      %2362 = vmatpush.bf16.msra.mxu0 0
      %2363 = vmatpush.bf16.msra.mxu0 0
      %2364 = vmatpush.bf16.msra.mxu0 %v2331
      %2365 = vmatpush.bf16.msra.mxu0 %v2330
      %2366 = vmatpush.bf16.msra.mxu0 %v2329
      %2367 = vmatpush.bf16.msra.mxu0 %v2328
      %2368 = vmatmul.bf16.gmra.mxu0 %v2337
      %v2369 = vpop.f32.mrf.mxu0
      %v2370 = vadd.f32 0.0, %v2369
      %v2371 = vpop.f32.mrf.mxu0
      %v2372 = vadd.f32 0.0, %v2371
      %2373 = vmatmul.bf16.gmra.mxu0 %v2340
      %v2374 = vpop.f32.mrf.mxu0
      %v2375 = vadd.f32 0.0, %v2374
      %v2376 = vpop.f32.mrf.mxu0
      %v2377 = vadd.f32 0.0, %v2376
      %2378 = vmatmul.bf16.gmra.mxu0 %v2343
      %v2379 = vpop.f32.mrf.mxu0
      %v2380 = vadd.f32 0.0, %v2379
      %v2381 = vpop.f32.mrf.mxu0
      %v2382 = vadd.f32 0.0, %v2381
      %2383 = vmatmul.bf16.gmra.mxu0 %v2346
      %v2384 = vpop.f32.mrf.mxu0
      %v2385 = vadd.f32 0.0, %v2384
      %v2386 = vpop.f32.mrf.mxu0
      %v2387 = vadd.f32 0.0, %v2386
      %2388 = vmatmul.bf16.gmra.mxu0 %v2349
      %v2389 = vpop.f32.mrf.mxu0
      %v2390 = vadd.f32 0.0, %v2389
      %v2391 = vpop.f32.mrf.mxu0
      %v2392 = vadd.f32 0.0, %v2391
      %2393 = vmatmul.bf16.gmra.mxu0 %v2352
      %v2394 = vpop.f32.mrf.mxu0
      %v2395 = vadd.f32 0.0, %v2394
      %v2396 = vpop.f32.mrf.mxu0
      %v2397 = vadd.f32 0.0, %v2396
      %2398 = vmatmul.bf16.gmra.mxu0 %v2355
      %v2399 = vpop.f32.mrf.mxu0
      %v2400 = vadd.f32 0.0, %v2399
      %v2401 = vpop.f32.mrf.mxu0
      %v2402 = vadd.f32 0.0, %v2401
      %2403 = vmatmul.bf16.gmra.mxu0 %v2358
      %v2404 = vpop.f32.mrf.mxu0
      %v2405 = vadd.f32 0.0, %v2404
      %v2406 = vpop.f32.mrf.mxu0
      %v2407 = vadd.f32 0.0, %v2406
      %2408 = vdwg.mxu0
      %v2409 = vadd.f32 %v2047, %v2370
      %v2410 = vadd.f32 %v2048, %v2372
      %v2411 = vadd.f32 %v2049, %v2375
      %v2412 = vadd.f32 %v2050, %v2377
      %v2413 = vadd.f32 %v2051, %v2380
      %v2414 = vadd.f32 %v2052, %v2382
      %v2415 = vadd.f32 %v2053, %v2385
      %v2416 = vadd.f32 %v2054, %v2387
      %v2417 = vadd.f32 %v2055, %v2390
      %v2418 = vadd.f32 %v2056, %v2392
      %v2419 = vadd.f32 %v2057, %v2395
      %v2420 = vadd.f32 %v2058, %v2397
      %v2421 = vadd.f32 %v2059, %v2400
      %v2422 = vadd.f32 %v2060, %v2402
      %v2423 = vadd.f32 %v2061, %v2405
      %v2424 = vadd.f32 %v2062, %v2407
      %v2425 = vld [vmem:[%s1884] sm:$0xe]
      %v2426 = vld [vmem:[%s1884 + $0xc] sm:$0xe]
      %v2427 = vld [vmem:[%s1884 + $0x18] sm:$0xe]
      %v2428 = vld [vmem:[%s1884 + $0x24] sm:$0xe]
      %v2429 = vld [vmem:[%s1884 + $0x30] sm:$0xe]
      %v2430 = vld [vmem:[%s1884 + $0x3c] sm:$0xe]
      %v2431 = vld [vmem:[%s1884 + $0x48] sm:$0xe]
      %v2432 = vld [vmem:[%s1884 + $0x54] sm:$0xe]
      %v2457 = vrot.slane %v2425, 5
      %v2458 = vrot.slane %v2457, 4
      %v2459 = vrot.slane %v2064, 5
      %v2460 = vsel %vm906, %v2458, %v2459
      %v2461 = vrot.slane %v2459, 4
      %v2462 = vrot.slane %v2065, 5
      %v2463 = vsel %vm906, %v2461, %v2462
      %v2464 = vrot.slane %v2426, 5
      %v2465 = vrot.slane %v2464, 4
      %v2466 = vrot.slane %v2067, 5
      %v2467 = vsel %vm906, %v2465, %v2466
      %v2468 = vrot.slane %v2466, 4
      %v2469 = vrot.slane %v2068, 5
      %v2470 = vsel %vm906, %v2468, %v2469
      %v2471 = vrot.slane %v2427, 5
      %v2472 = vrot.slane %v2471, 4
      %v2473 = vrot.slane %v2070, 5
      %v2474 = vsel %vm906, %v2472, %v2473
      %v2475 = vrot.slane %v2473, 4
      %v2476 = vrot.slane %v2071, 5
      %v2477 = vsel %vm906, %v2475, %v2476
      %v2478 = vrot.slane %v2428, 5
      %v2479 = vrot.slane %v2478, 4
      %v2480 = vrot.slane %v2073, 5
      %v2481 = vsel %vm906, %v2479, %v2480
      %v2482 = vrot.slane %v2480, 4
      %v2483 = vrot.slane %v2074, 5
      %v2484 = vsel %vm906, %v2482, %v2483
      %v2485 = vrot.slane %v2429, 5
      %v2486 = vrot.slane %v2485, 4
      %v2487 = vrot.slane %v2076, 5
      %v2488 = vsel %vm906, %v2486, %v2487
      %v2489 = vrot.slane %v2487, 4
      %v2490 = vrot.slane %v2077, 5
      %v2491 = vsel %vm906, %v2489, %v2490
      %v2492 = vrot.slane %v2430, 5
      %v2493 = vrot.slane %v2492, 4
      %v2494 = vrot.slane %v2079, 5
      %v2495 = vsel %vm906, %v2493, %v2494
      %v2496 = vrot.slane %v2494, 4
      %v2497 = vrot.slane %v2080, 5
      %v2498 = vsel %vm906, %v2496, %v2497
      %v2499 = vrot.slane %v2431, 5
      %v2500 = vrot.slane %v2499, 4
      %v2501 = vrot.slane %v2082, 5
      %v2502 = vsel %vm906, %v2500, %v2501
      %v2503 = vrot.slane %v2501, 4
      %v2504 = vrot.slane %v2083, 5
      %v2505 = vsel %vm906, %v2503, %v2504
      %v2506 = vrot.slane %v2432, 5
      %v2507 = vrot.slane %v2506, 4
      %v2508 = vrot.slane %v2085, 5
      %v2509 = vsel %vm906, %v2507, %v2508
      %v2510 = vrot.slane %v2508, 4
      %v2511 = vrot.slane %v2086, 5
      %v2512 = vsel %vm906, %v2510, %v2511
      %s2513 = scalar_lea.vmem %s2, 256
      %v2514 = vld [vmem:[%s2513] sm:$0xf]
      %v2515 = vld [vmem:[%s2513 + $0x4] sm:$0xf]
      %v2516 = vld [vmem:[%s2513 + $0x8] sm:$0xf]
      %v2517 = vld [vmem:[%s2513 + $0xc] sm:$0xf]
      %v2518 = vld [vmem:[%s2513 + $0x10] sm:$0xf]
      %v2519 = vld [vmem:[%s2513 + $0x14] sm:$0xf]
      %v2520 = vld [vmem:[%s2513 + $0x18] sm:$0xf]
      %v2521 = vld [vmem:[%s2513 + $0x1c] sm:$0xf]
      %v2522 = vunpack.c.l.b16 %v2460
      %v2523 = vunpack.c.l.b16 %v2463
      %v2524 = vunpack.c.l.b16 %v2467
      %v2525 = vunpack.c.l.b16 %v2470
      %v2526 = vunpack.c.l.b16 %v2474
      %v2527 = vunpack.c.l.b16 %v2477
      %v2528 = vunpack.c.l.b16 %v2481
      %v2529 = vunpack.c.l.b16 %v2484
      %v2530 = vunpack.c.l.b16 %v2488
      %v2531 = vunpack.c.l.b16 %v2491
      %v2532 = vunpack.c.l.b16 %v2495
      %v2533 = vunpack.c.l.b16 %v2498
      %v2534 = vunpack.c.l.b16 %v2502
      %v2535 = vunpack.c.l.b16 %v2505
      %v2536 = vunpack.c.l.b16 %v2509
      %v2537 = vunpack.c.l.b16 %v2512
      %v2538 = vpack.c.b16 %v2523, %v2522
      %v2539 = vpack.c.b16 %v2525, %v2524
      %v2540 = vpack.c.b16 %v2527, %v2526
      %v2541 = vpack.c.b16 %v2529, %v2528
      %v2542 = vpack.c.b16 %v2531, %v2530
      %v2543 = vpack.c.b16 %v2533, %v2532
      %v2544 = vpack.c.b16 %v2535, %v2534
      %v2545 = vpack.c.b16 %v2537, %v2536
      %v2554 = vunpack.c.l.b16 %v2514
      %v2555 = vunpack.c.l.b16 %v2515
      %v2556 = vunpack.c.l.b16 %v2516
      %v2557 = vunpack.c.l.b16 %v2517
      %v2558 = vunpack.c.l.b16 %v2518
      %v2559 = vunpack.c.l.b16 %v2519
      %v2560 = vunpack.c.l.b16 %v2520
      %v2561 = vunpack.c.l.b16 %v2521
      %v2562 = vpack.c.b16 %v2555, %v2554
      %v2563 = vpack.c.b16 %v2557, %v2556
      %v2564 = vpack.c.b16 %v2559, %v2558
      %v2565 = vpack.c.b16 %v2561, %v2560
      %v2571 = vsel %vm669, %v2538, 0
      %v2574 = vsel %vm669, %v2539, 0
      %v2577 = vsel %vm669, %v2540, 0
      %v2580 = vsel %vm669, %v2541, 0
      %v2583 = vsel %vm669, %v2542, 0
      %v2586 = vsel %vm669, %v2543, 0
      %v2589 = vsel %vm669, %v2544, 0
      %v2592 = vsel %vm669, %v2545, 0
      %2594 = vmatpush.bf16.msra.mxu0 0
      %2595 = vmatpush.bf16.msra.mxu0 0
      %2596 = vmatpush.bf16.msra.mxu0 0
      %2597 = vmatpush.bf16.msra.mxu0 0
      %2598 = vmatpush.bf16.msra.mxu0 %v2565
      %2599 = vmatpush.bf16.msra.mxu0 %v2564
      %2600 = vmatpush.bf16.msra.mxu0 %v2563
      %2601 = vmatpush.bf16.msra.mxu0 %v2562
      %2602 = vmatmul.bf16.gmra.mxu0 %v2571
      %v2603 = vpop.f32.mrf.mxu0
      %v2604 = vadd.f32 0.0, %v2603
      %v2605 = vpop.f32.mrf.mxu0
      %v2606 = vadd.f32 0.0, %v2605
      %2607 = vmatmul.bf16.gmra.mxu0 %v2574
      %v2608 = vpop.f32.mrf.mxu0
      %v2609 = vadd.f32 0.0, %v2608
      %v2610 = vpop.f32.mrf.mxu0
      %v2611 = vadd.f32 0.0, %v2610
      %2612 = vmatmul.bf16.gmra.mxu0 %v2577
      %v2613 = vpop.f32.mrf.mxu0
      %v2614 = vadd.f32 0.0, %v2613
      %v2615 = vpop.f32.mrf.mxu0
      %v2616 = vadd.f32 0.0, %v2615
      %2617 = vmatmul.bf16.gmra.mxu0 %v2580
      %v2618 = vpop.f32.mrf.mxu0
      %v2619 = vadd.f32 0.0, %v2618
      %v2620 = vpop.f32.mrf.mxu0
      %v2621 = vadd.f32 0.0, %v2620
      %2622 = vmatmul.bf16.gmra.mxu0 %v2583
      %v2623 = vpop.f32.mrf.mxu0
      %v2624 = vadd.f32 0.0, %v2623
      %v2625 = vpop.f32.mrf.mxu0
      %v2626 = vadd.f32 0.0, %v2625
      %2627 = vmatmul.bf16.gmra.mxu0 %v2586
      %v2628 = vpop.f32.mrf.mxu0
      %v2629 = vadd.f32 0.0, %v2628
      %v2630 = vpop.f32.mrf.mxu0
      %v2631 = vadd.f32 0.0, %v2630
      %2632 = vmatmul.bf16.gmra.mxu0 %v2589
      %v2633 = vpop.f32.mrf.mxu0
      %v2634 = vadd.f32 0.0, %v2633
      %v2635 = vpop.f32.mrf.mxu0
      %v2636 = vadd.f32 0.0, %v2635
      %2637 = vmatmul.bf16.gmra.mxu0 %v2592
      %v2638 = vpop.f32.mrf.mxu0
      %v2639 = vadd.f32 0.0, %v2638
      %v2640 = vpop.f32.mrf.mxu0
      %v2641 = vadd.f32 0.0, %v2640
      %2642 = vdwg.mxu0
      %v2643 = vadd.f32 %v2409, %v2604
      %v2644 = vadd.f32 %v2410, %v2606
      %v2645 = vadd.f32 %v2411, %v2609
      %v2646 = vadd.f32 %v2412, %v2611
      %v2647 = vadd.f32 %v2413, %v2614
      %v2648 = vadd.f32 %v2414, %v2616
      %v2649 = vadd.f32 %v2415, %v2619
      %v2650 = vadd.f32 %v2416, %v2621
      %v2651 = vadd.f32 %v2417, %v2624
      %v2652 = vadd.f32 %v2418, %v2626
      %v2653 = vadd.f32 %v2419, %v2629
      %v2654 = vadd.f32 %v2420, %v2631
      %v2655 = vadd.f32 %v2421, %v2634
      %v2656 = vadd.f32 %v2422, %v2636
      %v2657 = vadd.f32 %v2423, %v2639
      %v2658 = vadd.f32 %v2424, %v2641
      %v2660 = vperm.slane %v384, 0
      %v2662 = vadd.f32 %v2643, %v2660
      %v2663 = vadd.f32 %v2644, %v2660
      %v2664 = vadd.f32 %v2645, %v2660
      %v2665 = vadd.f32 %v2646, %v2660
      %v2666 = vadd.f32 %v2647, %v2660
      %v2667 = vadd.f32 %v2648, %v2660
      %v2668 = vadd.f32 %v2649, %v2660
      %v2669 = vadd.f32 %v2650, %v2660
      %v2670 = vadd.f32 %v2651, %v2660
      %v2671 = vadd.f32 %v2652, %v2660
      %v2672 = vadd.f32 %v2653, %v2660
      %v2673 = vadd.f32 %v2654, %v2660
      %v2674 = vadd.f32 %v2655, %v2660
      %v2675 = vadd.f32 %v2656, %v2660
      %v2676 = vadd.f32 %v2657, %v2660
      %v2677 = vadd.f32 %v2658, %v2660
      %v2678 = vmax.f32 %v2662, 0.0
      %v2679 = vmax.f32 %v2663, 0.0
      %v2680 = vmax.f32 %v2664, 0.0
      %v2681 = vmax.f32 %v2665, 0.0
      %v2682 = vmax.f32 %v2666, 0.0
      %v2683 = vmax.f32 %v2667, 0.0
      %v2684 = vmax.f32 %v2668, 0.0
      %v2685 = vmax.f32 %v2669, 0.0
      %v2686 = vmax.f32 %v2670, 0.0
      %v2687 = vmax.f32 %v2671, 0.0
      %v2688 = vmax.f32 %v2672, 0.0
      %v2689 = vmax.f32 %v2673, 0.0
      %v2690 = vmax.f32 %v2674, 0.0
      %v2691 = vmax.f32 %v2675, 0.0
      %v2692 = vmax.f32 %v2676, 0.0
      %v2693 = vmax.f32 %v2677, 0.0
      %v2694 = vpack.c.bf16 %v2678, %v2678
      %v2695 = vpack.c.bf16 %v2679, %v2679
      %v2696 = vpack.c.bf16 %v2680, %v2680
      %v2697 = vpack.c.bf16 %v2681, %v2681
      %v2698 = vpack.c.bf16 %v2682, %v2682
      %v2699 = vpack.c.bf16 %v2683, %v2683
      %v2700 = vpack.c.bf16 %v2684, %v2684
      %v2701 = vpack.c.bf16 %v2685, %v2685
      %v2702 = vpack.c.bf16 %v2686, %v2686
      %v2703 = vpack.c.bf16 %v2687, %v2687
      %v2704 = vpack.c.bf16 %v2688, %v2688
      %v2705 = vpack.c.bf16 %v2689, %v2689
      %v2706 = vpack.c.bf16 %v2690, %v2690
      %v2707 = vpack.c.bf16 %v2691, %v2691
      %v2708 = vpack.c.bf16 %v2692, %v2692
      %v2709 = vpack.c.bf16 %v2693, %v2693
      %2710 = vst.msk [vmem:[%s318] sm:$0xf] %vm345, %v2694
      %2711 = vst.msk [vmem:[%s318 + $0x4] sm:$0xf] %vm345, %v2695
      %2712 = vst.msk [vmem:[%s318 + $0x8] sm:$0xf] %vm345, %v2696
      %2713 = vst.msk [vmem:[%s318 + $0xc] sm:$0xf] %vm345, %v2697
      %2714 = vst.msk [vmem:[%s318 + $0x10] sm:$0xf] %vm345, %v2698
      %2715 = vst.msk [vmem:[%s318 + $0x14] sm:$0xf] %vm345, %v2699
      %2716 = vst.msk [vmem:[%s318 + $0x18] sm:$0xf] %vm345, %v2700
      %2717 = vst.msk [vmem:[%s318 + $0x1c] sm:$0xf] %vm345, %v2701
      %2718 = vst.msk [vmem:[%s318 + $0x20] sm:$0xf] %vm345, %v2702
      %2719 = vst.msk [vmem:[%s318 + $0x24] sm:$0xf] %vm345, %v2703
      %2720 = vst.msk [vmem:[%s318 + $0x28] sm:$0xf] %vm345, %v2704
      %2721 = vst.msk [vmem:[%s318 + $0x2c] sm:$0xf] %vm345, %v2705
      %2722 = vst.msk [vmem:[%s318 + $0x30] sm:$0xf] %vm345, %v2706
      %2723 = vst.msk [vmem:[%s318 + $0x34] sm:$0xf] %vm345, %v2707
      %2724 = vst.msk [vmem:[%s318 + $0x38] sm:$0xf] %vm345, %v2708
      %2725 = vst.msk [vmem:[%s318 + $0x3c] sm:$0xf] %vm345, %v2709
      %s2726 = smul.u32 8, %s20
      %p2727 = scmp.lt.s32.totalorder %s19, 3
      %s2728 = scalar_select %p2727, %s19, 3
      %p2729 = scmp.lt.s32.totalorder %s2726, 15
      %s2730 = scalar_select %p2729, %s2726, 15
      %s2731 = smul.addr %s2730, 2
      %s2732 = smul.addr %s2728, 32
      %s2733 = sadd.s32 %s2731, %s2732
      %s2734 = smul.addr %s2733, 4
      %s2735 = scalar_lea.vmem %s4, %s2734
      // Predicated region
      $region37: #{_lambda_.7} parent=35 // pred_check
        %p2736 = pneg %p149
      $region38: #{_lambda_.7} parent=35 // pred_check_branch
        %2738 = sbr.rel (%p2736) target = $region40
      $region39: #{_lambda_.7} parent=35 // pred_region
        %s2739 = smul.u32 8, %s20
      $region40: #{_lambda_.7} parent=35 // pred_fallthru
        _
    $region36: #{_lambda_.7} parent=5 // pred_fallthru
      _
    %p2740 = scmp.le.s32.totalorder 2, %s10
    // Predicated region
    $region41: #{_lambda_.7} parent=5 // pred_check
      %p2741 = pneg %p2740
    $region42: #{_lambda_.7} parent=5 // pred_check_branch
      %2743 = sbr.rel (%p2741) target = $region44
    $region43: #{_lambda_.7} parent=5 // pred_region
      %s2744 = ssub.s32 %s10, 2
      // Predicated region
      $region45: #{_lambda_.7} parent=43 // pred_check
        %p2745 = pneg %p155
      $region46: #{_lambda_.7} parent=43 // pred_check_branch
        %2747 = sbr.rel (%p2745) target = $region48
      $region47: #{_lambda_.7} parent=43 // pred_region
        %s2748 = smul.u32 8, %s22
        %p2749 = scmp.lt.s32.totalorder %s21, 3
        %s2750 = scalar_select %p2749, %s21, 3
        %p2751 = scmp.lt.s32.totalorder %s2748, 15
        %s2752 = scalar_select %p2751, %s2748, 15
        %s2753 = smul.addr %s2752, 2
        %s2754 = smul.addr %s2750, 32
        %s2755 = sadd.s32 %s2753, %s2754
        %s2756 = smul.addr %s2755, 4
        %s2757 = scalar_lea.vmem %s4, %s2756
      $region48: #{_lambda_.7} parent=43 // pred_fallthru
        _
    $region44: #{_lambda_.7} parent=5 // pred_fallthru
      _
  $region6: #{_lambda_.7} parent=0 // loop_footer
    %s14 = sadd.s32 1, %s10
  $region7: #{_lambda_.7} parent=0 // loop_footer_branch
    %9 = sbr.rel target = $region3
  $region8: #{_lambda_.7} parent=0 // loop_exit
    _

// kernel: _lambda_.8
$region0: #{_lambda_.8}
  #allocation0 [shape = 'u32[]', space=smem, size = 0x4, offset = 0x4, fixed_abs, tag = 'smem constant byte address 0x4 - core index']
  #allocation1 [shape = 'u32[72,128]{1,0:T(1,128)}', space=vmem, size = 0x9000, scoped, tag = 'internal scratch']
  #allocation2 [shape = 'bf16[10,10,64]{2,1,0:T(8,128)(2,1)}', space=vmem, size = 0xa000, scoped, tag = 'scratch operand']
  %s0 = inlined_call_operand.vmem [shape: bf16[4,10,10,64], index: 0, kind: input, shape index: {}, may-alias: {0,1}]
  %s1 = inlined_call_operand.vmem [shape: bf16[4,10,10,64], index: 1, kind: input, shape index: {}, may-alias: {0,1}]
  %s2 = inlined_call_operand.vmem [shape: bf16[3,3,64,128], index: 2, kind: input, shape index: {}]
  %s3 = inlined_call_operand.vmem [shape: f32[1,128], index: 3, kind: input, shape index: {}]
  %s4 = inlined_call_operand.vmem [shape: bf16[4,8,8,128], index: 4, kind: output, shape index: {}]
  %s5 = sld [smem:[#allocation0]]
  $region49: #{_lambda_.8} parent=0
    _
  %s7 = ssub.s32 1, %s5
  %s8 = scalar_select 0, %s7, %s5
  loop: start=0, step=1, limit=6
  $region2: #{_lambda_.8} parent=0 // loop_pre_header
    _
  $region3: #{_lambda_.8} parent=0 // loop_header
    %s10 = sphi 0, %s14
    %p11 = scmp.ge.s32.totalorder %s10, 6
    %s17 = sphi 0, %s29
    %s18 = sphi 0, %s25
    %s19 = sphi 0, %s17
    %s20 = sphi 0, %s18
    %s21 = sphi 0, %s19
    %s22 = sphi 0, %s20
    %s34 = sphi 0, %s36
    %s37 = sphi 0, %s34
    %s38 = sphi 0, %s37
    %s54 = sphi 0, %s38
    %s66 = sphi 0, %s68
    %s69 = sphi 0, %s66
    %s70 = sphi 0, %s69
    %s86 = sphi 0, %s70
    %s90 = sphi 0, %s90
    %s92 = sphi 0, %s90
    %s93 = sphi 0, %s92
    %s107 = sphi 0, %s93
    %s111 = sphi 0, %s111
    %s113 = sphi 0, %s111
    %s114 = sphi 0, %s113
    %s128 = sphi 0, %s114
    %s136 = sphi 0, %s138
    %s139 = sphi 0, %s136
    %s140 = sphi 0, %s139
    %s156 = sphi 0, %s140
  $region4: #{_lambda_.8} parent=0 // loop_header_branch
    %13 = sbr.rel (%p11) target = $region8
  $region5: #{_lambda_.8} parent=0 // loop_body
    %s15 = ssub.s32 %s10, 1
    %s16 = ssub.s32 %s10, 2
    %s23 = sadd.s32 1, %s18
    %p24 = scmp.ge.s32.totalorder %s23, 1
    %s25 = scalar_select %p24, 0, %s23
    %s26 = sadd.s32 1, %s17
    %s27 = scalar_select %p24, %s26, %s17
    %p28 = scmp.ge.s32.totalorder %s27, 4
    %s29 = scalar_select %p28, 0, %s27
    %s30 = ssub.s32 %s17, %s29
    %s31 = ssub.s32 %s18, %s25
    %s32 = sor.u32 %s30, %s31
    %p33 = scmp.eq.s32.totalorder %s32, 0
    %s35 = sadd.s32 %s34, 1
    %s36 = scalar_select %p33, %s34, %s35
    %p39 = pneg %p33
    %p40 = scmp.eq.s32.totalorder %s10, 3
    %p41 = por %p39, %p40
    %p42 = scmp.ne.s32.totalorder %s34, %s37
    %p43 = scmp.eq.s32.totalorder %s10, 0
    %p44 = por %p42, %p43
    %p45 = scmp.ne.s32.totalorder %s34, %s37
    %p46 = scmp.eq.s32.totalorder %s15, 3
    %p47 = por %p45, %p46
    %p48 = scmp.ne.s32.totalorder %s37, %s38
    %p49 = scmp.eq.s32.totalorder %s15, 0
    %p50 = por %p48, %p49
    %p51 = scmp.ne.s32.totalorder %s37, %s38
    %p52 = scmp.eq.s32.totalorder %s16, 3
    %p53 = por %p51, %p52
    %p55 = scmp.ne.s32.totalorder %s38, %s54
    %p56 = scmp.eq.s32.totalorder %s16, 0
    %p57 = por %p55, %p56
    %s58 = sadd.s32 %s18, 1
    %s59 = smul.u32 %s58, 4
    %s60 = sadd.s32 %s25, 1
    %s61 = smul.u32 %s60, 4
    %s62 = ssub.s32 %s17, %s29
    %s63 = ssub.s32 %s59, %s61
    %s64 = sor.u32 %s62, %s63
    %p65 = scmp.eq.s32.totalorder %s64, 0
    %s67 = sadd.s32 %s66, 1
    %s68 = scalar_select %p65, %s66, %s67
    %p71 = pneg %p65
    %p72 = scmp.eq.s32.totalorder %s10, 3
    %p73 = por %p71, %p72
    %p74 = scmp.ne.s32.totalorder %s66, %s69
    %p75 = scmp.eq.s32.totalorder %s10, 0
    %p76 = por %p74, %p75
    %p77 = scmp.ne.s32.totalorder %s66, %s69
    %p78 = scmp.eq.s32.totalorder %s15, 3
    %p79 = por %p77, %p78
    %p80 = scmp.ne.s32.totalorder %s69, %s70
    %p81 = scmp.eq.s32.totalorder %s15, 0
    %p82 = por %p80, %p81
    %p83 = scmp.ne.s32.totalorder %s69, %s70
    %p84 = scmp.eq.s32.totalorder %s16, 3
    %p85 = por %p83, %p84
    %p87 = scmp.ne.s32.totalorder %s70, %s86
    %p88 = scmp.eq.s32.totalorder %s16, 0
    %p89 = por %p87, %p88
    %s91 = sadd.s32 %s90, 1
    %p94 = scmp.eq.s32.totalorder %s10, 3
    %p95 = scmp.ne.s32.totalorder %s90, %s92
    %p96 = scmp.eq.s32.totalorder %s10, 0
    %p97 = por %p95, %p96
    %p98 = scmp.ne.s32.totalorder %s90, %s92
    %p99 = scmp.eq.s32.totalorder %s15, 3
    %p100 = por %p98, %p99
    %p101 = scmp.ne.s32.totalorder %s92, %s93
    %p102 = scmp.eq.s32.totalorder %s15, 0
    %p103 = por %p101, %p102
    %p104 = scmp.ne.s32.totalorder %s92, %s93
    %p105 = scmp.eq.s32.totalorder %s16, 3
    %p106 = por %p104, %p105
    %p108 = scmp.ne.s32.totalorder %s93, %s107
    %p109 = scmp.eq.s32.totalorder %s16, 0
    %p110 = por %p108, %p109
    %s112 = sadd.s32 %s111, 1
    %p115 = scmp.eq.s32.totalorder %s10, 3
    %p116 = scmp.ne.s32.totalorder %s111, %s113
    %p117 = scmp.eq.s32.totalorder %s10, 0
    %p118 = por %p116, %p117
    %p119 = scmp.ne.s32.totalorder %s111, %s113
    %p120 = scmp.eq.s32.totalorder %s15, 3
    %p121 = por %p119, %p120
    %p122 = scmp.ne.s32.totalorder %s113, %s114
    %p123 = scmp.eq.s32.totalorder %s15, 0
    %p124 = por %p122, %p123
    %p125 = scmp.ne.s32.totalorder %s113, %s114
    %p126 = scmp.eq.s32.totalorder %s16, 3
    %p127 = por %p125, %p126
    %p129 = scmp.ne.s32.totalorder %s114, %s128
    %p130 = scmp.eq.s32.totalorder %s16, 0
    %p131 = por %p129, %p130
    %s132 = ssub.s32 %s17, %s29
    %s133 = ssub.s32 %s18, %s25
    %s134 = sor.u32 %s132, %s133
    %p135 = scmp.eq.s32.totalorder %s134, 0
    %s137 = sadd.s32 %s136, 1
    %s138 = scalar_select %p135, %s136, %s137
    %p141 = pneg %p135
    %p142 = scmp.eq.s32.totalorder %s10, 3
    %p143 = por %p141, %p142
    %p144 = scmp.ne.s32.totalorder %s136, %s139
    %p145 = scmp.eq.s32.totalorder %s10, 0
    %p146 = por %p144, %p145
    %p147 = scmp.ne.s32.totalorder %s136, %s139
    %p148 = scmp.eq.s32.totalorder %s15, 3
    %p149 = por %p147, %p148
    %p150 = scmp.ne.s32.totalorder %s139, %s140
    %p151 = scmp.eq.s32.totalorder %s15, 0
    %p152 = por %p150, %p151
    %p153 = scmp.ne.s32.totalorder %s139, %s140
    %p154 = scmp.eq.s32.totalorder %s16, 3
    %p155 = por %p153, %p154
    %p157 = scmp.ne.s32.totalorder %s140, %s156
    %p158 = scmp.eq.s32.totalorder %s16, 0
    %p159 = por %p157, %p158
    %p160 = scmp.le.s32.totalorder 1, %s10
    %p161 = scmp.lt.s32.totalorder %s10, 5
    %p162 = pnand %p160, %p161
    %p163 = pneg %p162
    // Predicated region
    $region9: #{_lambda_.8} parent=5 // pred_check
      _
    $region10: #{_lambda_.8} parent=5 // pred_check_branch
      %165 = sbr.rel (%p162) target = $region12
    $region11: #{_lambda_.8} parent=5 // pred_region
      %s166 = ssub.s32 %s10, 1
      // Predicated region
      $region13: #{_lambda_.8} parent=11 // pred_check
        %p167 = pneg %p103
      $region14: #{_lambda_.8} parent=11 // pred_check_branch
        %169 = sbr.rel (%p167) target = $region16
      $region15: #{_lambda_.8} parent=11 // pred_region
        _
      $region16: #{_lambda_.8} parent=11 // pred_fallthru
        _
      // Predicated region
      $region17: #{_lambda_.8} parent=11 // pred_check
        %p170 = pneg %p124
      $region18: #{_lambda_.8} parent=11 // pred_check_branch
        %172 = sbr.rel (%p170) target = $region20
      $region19: #{_lambda_.8} parent=11 // pred_region
        _
      $region20: #{_lambda_.8} parent=11 // pred_fallthru
        _
    $region12: #{_lambda_.8} parent=5 // pred_fallthru
      _
    %p173 = scmp.lt.s32.totalorder %s10, 4
    // Predicated region
    $region21: #{_lambda_.8} parent=5 // pred_check
      %p174 = pneg %p173
    $region22: #{_lambda_.8} parent=5 // pred_check_branch
      %176 = sbr.rel (%p174) target = $region24
    $region23: #{_lambda_.8} parent=5 // pred_region
      // Predicated region
      $region25: #{_lambda_.8} parent=23 // pred_check
        %p177 = pneg %p44
      $region26: #{_lambda_.8} parent=23 // pred_check_branch
        %179 = sbr.rel (%p177) target = $region28
      $region27: #{_lambda_.8} parent=23 // pred_region
        %s180 = smul.u32 8, %s18
        %s181 = ssub.s32 10, %s180
        %p182 = scmp.lt.s32.totalorder %s181, 8
        %s183 = scalar_select %p182, %s181, 8
        %s184 = smul.u32 4, %s183
        %s185 = smul.u32 %s184, 2
        %p186 = scmp.lt.s32.totalorder %s17, 3
        %s187 = scalar_select %p186, %s17, 3
        %p188 = scmp.lt.s32.totalorder %s180, 9
        %s189 = scalar_select %p188, %s180, 9
        %s190 = smul.addr %s189, 2
        %s191 = smul.addr %s187, 20
        %s192 = sadd.s32 %s190, %s191
        %s193 = smul.addr %s192, 4
        %s194 = scalar_lea.vmem %s0, %s193
        %s195 = smul.u32 8, %s18
        %s196 = ssub.s32 10, %s195
        %p197 = scmp.lt.s32.totalorder %s196, 8
        %s198 = scalar_select %p197, %s196, 8
        %s199 = smul.u32 4, %s198
        %s200 = smul.u32 %s199, 2
      $region28: #{_lambda_.8} parent=23 // pred_fallthru
        _
      // Predicated region
      $region29: #{_lambda_.8} parent=23 // pred_check
        %p201 = pneg %p76
      $region30: #{_lambda_.8} parent=23 // pred_check_branch
        %203 = sbr.rel (%p201) target = $region32
      $region31: #{_lambda_.8} parent=23 // pred_region
        %s204 = sadd.s32 %s18, 1
        %s205 = smul.u32 %s204, 4
        %s206 = smul.u32 2, %s205
        %p207 = scmp.lt.s32.totalorder %s17, 3
        %s208 = scalar_select %p207, %s17, 3
        %p209 = scmp.lt.s32.totalorder %s206, 9
        %s210 = scalar_select %p209, %s206, 9
        %s211 = smul.addr %s210, 2
        %s212 = smul.addr %s208, 20
        %s213 = sadd.s32 %s211, %s212
        %s214 = smul.addr %s213, 4
        %s215 = scalar_lea.vmem %s1, %s214
        %s216 = sadd.s32 %s18, 1
        %s217 = smul.u32 %s216, 4
        %s218 = smul.u32 2, %s217
      $region32: #{_lambda_.8} parent=23 // pred_fallthru
        _
    $region24: #{_lambda_.8} parent=5 // pred_fallthru
      _
    %p219 = scmp.le.s32.totalorder 1, %s10
    %p220 = scmp.lt.s32.totalorder %s10, 5
    %p221 = pnand %p219, %p220
    %p222 = pneg %p221
    // Predicated region
    $region33: #{_lambda_.8} parent=5 // pred_check
      _
    $region34: #{_lambda_.8} parent=5 // pred_check_branch
      %224 = sbr.rel (%p221) target = $region36
    $region35: #{_lambda_.8} parent=5 // pred_region
      %s225 = ssub.s32 %s10, 1
      %s226 = smul.u32 8, %s20
      %s227 = ssub.s32 10, %s226
      %p228 = scmp.lt.s32.totalorder %s227, 8
      %s229 = scalar_select %p228, %s227, 8
      %s230 = smul.u32 4, %s229
      %s231 = smul.u32 %s230, 2
      %p232 = scmp.lt.s32.totalorder %s19, 3
      %s233 = scalar_select %p232, %s19, 3
      %p234 = scmp.lt.s32.totalorder %s226, 9
      %s235 = scalar_select %p234, %s226, 9
      %s236 = smul.addr %s235, 2
      %s237 = smul.addr %s233, 20
      %s238 = sadd.s32 %s236, %s237
      %s239 = smul.addr %s238, 4
      %s240 = scalar_lea.vmem %s0, %s239
      %p241 = pneg %p50
      %p242 = pneg %p47
      %s243 = sadd.s32 %s20, 1
      %s244 = smul.u32 %s243, 4
      %s245 = smul.u32 2, %s244
      %p246 = scmp.lt.s32.totalorder %s19, 3
      %s247 = scalar_select %p246, %s19, 3
      %p248 = scmp.lt.s32.totalorder %s245, 9
      %s249 = scalar_select %p248, %s245, 9
      %s250 = smul.addr %s249, 2
      %s251 = smul.addr %s247, 20
      %s252 = sadd.s32 %s250, %s251
      %s253 = smul.addr %s252, 4
      %s254 = scalar_lea.vmem %s1, %s253
      %p255 = pneg %p82
      %p256 = pneg %p79
      %p257 = pneg %p103
      %p258 = pneg %p100
      %p259 = pneg %p124
      %p260 = pneg %p121
      %p261 = pneg %p152
      %p262 = pneg %p149
      %s263 = smul.u32 8, %s20
      %p264 = scmp.lt.s32.totalorder %s19, 3
      %s265 = scalar_select %p264, %s19, 3
      %p266 = scmp.lt.s32.totalorder %s263, 7
      %s267 = scalar_select %p266, %s263, 7
      %s268 = smul.addr %s265, 8
      %s269 = sadd.s32 %s267, %s268
      %s270 = smul.addr %s269, 4
      %s271 = scalar_lea.vmem %s4, %s270
      %s272 = smul.u32 8, %s20
      %s273 = ssub.s32 10, %s272
      %p274 = scmp.lt.s32.totalorder %s273, 8
      %s275 = scalar_select %p274, %s273, 8
      %s276 = smul.u32 4, %s275
      %s277 = smul.u32 %s276, 2
      %p278 = scmp.lt.s32.totalorder %s19, 3
      %s279 = scalar_select %p278, %s19, 3
      %p280 = scmp.lt.s32.totalorder %s272, 9
      %s281 = scalar_select %p280, %s272, 9
      %s282 = smul.addr %s281, 2
      %s283 = smul.addr %s279, 20
      %s284 = sadd.s32 %s282, %s283
      %s285 = smul.addr %s284, 4
      %s286 = scalar_lea.vmem %s0, %s285
      %s287 = smul.u32 8, %s20
      %s288 = ssub.s32 10, %s287
      %p289 = scmp.lt.s32.totalorder %s288, 8
      %s290 = scalar_select %p289, %s288, 8
      %s291 = smul.u32 4, %s290
      %s292 = smul.u32 %s291, 2
      %s293 = sadd.s32 %s20, 1
      %s294 = smul.u32 %s293, 4
      %s295 = smul.u32 2, %s294
      %p296 = scmp.lt.s32.totalorder %s19, 3
      %s297 = scalar_select %p296, %s19, 3
      %p298 = scmp.lt.s32.totalorder %s295, 9
      %s299 = scalar_select %p298, %s295, 9
      %s300 = smul.addr %s299, 2
      %s301 = smul.addr %s297, 20
      %s302 = sadd.s32 %s300, %s301
      %s303 = smul.addr %s302, 4
      %s304 = scalar_lea.vmem %s1, %s303
      %s305 = sadd.s32 %s20, 1
      %s306 = smul.u32 %s305, 4
      %s307 = smul.u32 2, %s306
      %s308 = smul.u32 8, %s20
      %p309 = scmp.lt.s32.totalorder %s19, 3
      %s310 = scalar_select %p309, %s19, 3
      %p311 = scmp.lt.s32.totalorder %s308, 7
      %s312 = scalar_select %p311, %s308, 7
      %s313 = smul.addr %s310, 8
      %s314 = sadd.s32 %s312, %s313
      %s315 = smul.addr %s314, 4
      %s316 = scalar_lea.vmem %s4, %s315
      %s317 = smul.u32 8, %s20
      %v319 = vld [vmem:[%s286] sm:$0xf]
      %v320 = vld [vmem:[%s286 + $0x4] sm:$0x1]
      %v321 = vld [vmem:[%s286 + $0x8] sm:$0xf]
      %v322 = vld [vmem:[%s286 + $0xc] sm:$0x1]
      %v323 = vld [vmem:[%s286 + $0x10] sm:$0xf]
      %v324 = vld [vmem:[%s286 + $0x14] sm:$0x1]
      %v325 = vld [vmem:[%s286 + $0x18] sm:$0xf]
      %v326 = vld [vmem:[%s286 + $0x1c] sm:$0x1]
      %v327 = vld [vmem:[%s286 + $0x20] sm:$0xf]
      %v328 = vld [vmem:[%s286 + $0x24] sm:$0x1]
      %v329 = vld [vmem:[%s286 + $0x28] sm:$0xf]
      %v330 = vld [vmem:[%s286 + $0x2c] sm:$0x1]
      %v331 = vld [vmem:[%s286 + $0x30] sm:$0xf]
      %v332 = vld [vmem:[%s286 + $0x34] sm:$0x1]
      %v333 = vld [vmem:[%s286 + $0x38] sm:$0xf]
      %v334 = vld [vmem:[%s286 + $0x3c] sm:$0x1]
      %vm335 = vcmask 519168
      %336 = vst.msk [vmem:[#allocation2] sm:$0xf] %vm335, %v319
      %vm337 = vcmask 516096
      %338 = vst.msk [vmem:[#allocation2 + $0x4] sm:$0x1] %vm337, %v320
      %339 = vst.msk [vmem:[#allocation2 + $0x8] sm:$0xf] %vm335, %v321
      %340 = vst.msk [vmem:[#allocation2 + $0xc] sm:$0x1] %vm337, %v322
      %341 = vst.msk [vmem:[#allocation2 + $0x10] sm:$0xf] %vm335, %v323
      %342 = vst.msk [vmem:[#allocation2 + $0x14] sm:$0x1] %vm337, %v324
      %343 = vst.msk [vmem:[#allocation2 + $0x18] sm:$0xf] %vm335, %v325
      %344 = vst.msk [vmem:[#allocation2 + $0x1c] sm:$0x1] %vm337, %v326
      %345 = vst.msk [vmem:[#allocation2 + $0x20] sm:$0xf] %vm335, %v327
      %346 = vst.msk [vmem:[#allocation2 + $0x24] sm:$0x1] %vm337, %v328
      %347 = vst.msk [vmem:[#allocation2 + $0x28] sm:$0xf] %vm335, %v329
      %348 = vst.msk [vmem:[#allocation2 + $0x2c] sm:$0x1] %vm337, %v330
      %349 = vst.msk [vmem:[#allocation2 + $0x30] sm:$0xf] %vm335, %v331
      %350 = vst.msk [vmem:[#allocation2 + $0x34] sm:$0x1] %vm337, %v332
      %351 = vst.msk [vmem:[#allocation2 + $0x38] sm:$0xf] %vm335, %v333
      %352 = vst.msk [vmem:[#allocation2 + $0x3c] sm:$0x1] %vm337, %v334
      %v353 = vld [vmem:[%s304] sm:$0xf]
      %v354 = vld [vmem:[%s304 + $0x4] sm:$0x1]
      %v355 = vld [vmem:[%s304 + $0x8] sm:$0xf]
      %v356 = vld [vmem:[%s304 + $0xc] sm:$0x1]
      %s357 = scalar_lea.vmem [#allocation2], 64
      %358 = vst.msk [vmem:[%s357] sm:$0xf] %vm335, %v353
      %359 = vst.msk [vmem:[%s357 + $0x4] sm:$0x1] %vm337, %v354
      %360 = vst.msk [vmem:[%s357 + $0x8] sm:$0xf] %vm335, %v355
      %361 = vst.msk [vmem:[%s357 + $0xc] sm:$0x1] %vm337, %v356
      %v362 = vld [vmem:[%s3] sm:$0x1]
      %v363 = vld [vmem:[#allocation2] sm:$0xf]
      %v364 = vld [vmem:[#allocation2 + $0x8] sm:$0xf]
      %v365 = vld [vmem:[#allocation2 + $0x10] sm:$0xf]
      %v366 = vld [vmem:[#allocation2 + $0x18] sm:$0xf]
      %v367 = vld [vmem:[#allocation2 + $0x20] sm:$0xf]
      %v368 = vld [vmem:[#allocation2 + $0x28] sm:$0xf]
      %v369 = vld [vmem:[#allocation2 + $0x30] sm:$0xf]
      %v370 = vld [vmem:[#allocation2 + $0x38] sm:$0xf]
      %v371 = vld [vmem:[%s2] sm:$0xf]
      %v372 = vld [vmem:[%s2 + $0x4] sm:$0xf]
      %v373 = vld [vmem:[%s2 + $0x8] sm:$0xf]
      %v374 = vld [vmem:[%s2 + $0xc] sm:$0xf]
      %v375 = vld [vmem:[%s2 + $0x10] sm:$0xf]
      %v376 = vld [vmem:[%s2 + $0x14] sm:$0xf]
      %v377 = vld [vmem:[%s2 + $0x18] sm:$0xf]
      %v378 = vld [vmem:[%s2 + $0x1c] sm:$0xf]
      %v379 = vld [vmem:[#allocation2 + $0x4] sm:$0x1]
      %v380 = vld [vmem:[#allocation2 + $0xc] sm:$0x1]
      %v381 = vld [vmem:[#allocation2 + $0x14] sm:$0x1]
      %v382 = vld [vmem:[#allocation2 + $0x1c] sm:$0x1]
      %v383 = vld [vmem:[#allocation2 + $0x24] sm:$0x1]
      %v384 = vld [vmem:[#allocation2 + $0x2c] sm:$0x1]
      %v385 = vld [vmem:[#allocation2 + $0x34] sm:$0x1]
      %v386 = vld [vmem:[#allocation2 + $0x3c] sm:$0x1]
      %vm387 = vsmask.f32 3328
      %vm388 = vsmask.f32 7440
      %vm389 = vmor %vm387, %vm388
      %v391 = vshrl.u32 %v363, 16
      %v393 = vrot.slane %v391, 4
      %v394 = vshll.u32 %v363, 16
      %v396 = vrot.slane %v394, 5
      %v397 = vor.u32 %v393, %v396
      %v398 = vrot.slane %v397, 4
      %v400 = vshll.u32 %v379, 16
      %v402 = vrot.slane %v400, 5
      %v403 = vsel %vm389, %v398, %v402
      %v405 = vshrl.u32 %v364, 16
      %v407 = vrot.slane %v405, 4
      %v408 = vshll.u32 %v364, 16
      %v410 = vrot.slane %v408, 5
      %v411 = vor.u32 %v407, %v410
      %v412 = vrot.slane %v411, 4
      %v414 = vshll.u32 %v380, 16
      %v416 = vrot.slane %v414, 5
      %v417 = vsel %vm389, %v412, %v416
      %v419 = vshrl.u32 %v365, 16
      %v421 = vrot.slane %v419, 4
      %v422 = vshll.u32 %v365, 16
      %v424 = vrot.slane %v422, 5
      %v425 = vor.u32 %v421, %v424
      %v426 = vrot.slane %v425, 4
      %v428 = vshll.u32 %v381, 16
      %v430 = vrot.slane %v428, 5
      %v431 = vsel %vm389, %v426, %v430
      %v433 = vshrl.u32 %v366, 16
      %v435 = vrot.slane %v433, 4
      %v436 = vshll.u32 %v366, 16
      %v438 = vrot.slane %v436, 5
      %v439 = vor.u32 %v435, %v438
      %v440 = vrot.slane %v439, 4
      %v442 = vshll.u32 %v382, 16
      %v444 = vrot.slane %v442, 5
      %v445 = vsel %vm389, %v440, %v444
      %v447 = vshrl.u32 %v367, 16
      %v449 = vrot.slane %v447, 4
      %v450 = vshll.u32 %v367, 16
      %v452 = vrot.slane %v450, 5
      %v453 = vor.u32 %v449, %v452
      %v454 = vrot.slane %v453, 4
      %v456 = vshll.u32 %v383, 16
      %v458 = vrot.slane %v456, 5
      %v459 = vsel %vm389, %v454, %v458
      %v461 = vshrl.u32 %v368, 16
      %v463 = vrot.slane %v461, 4
      %v464 = vshll.u32 %v368, 16
      %v466 = vrot.slane %v464, 5
      %v467 = vor.u32 %v463, %v466
      %v468 = vrot.slane %v467, 4
      %v470 = vshll.u32 %v384, 16
      %v472 = vrot.slane %v470, 5
      %v473 = vsel %vm389, %v468, %v472
      %v475 = vshrl.u32 %v369, 16
      %v477 = vrot.slane %v475, 4
      %v478 = vshll.u32 %v369, 16
      %v480 = vrot.slane %v478, 5
      %v481 = vor.u32 %v477, %v480
      %v482 = vrot.slane %v481, 4
      %v484 = vshll.u32 %v385, 16
      %v486 = vrot.slane %v484, 5
      %v487 = vsel %vm389, %v482, %v486
      %v489 = vshrl.u32 %v370, 16
      %v491 = vrot.slane %v489, 4
      %v492 = vshll.u32 %v370, 16
      %v494 = vrot.slane %v492, 5
      %v495 = vor.u32 %v491, %v494
      %v496 = vrot.slane %v495, 4
      %v498 = vshll.u32 %v386, 16
      %v500 = vrot.slane %v498, 5
      %v501 = vsel %vm389, %v496, %v500
      %s502 = scalar_lea.vmem %s2, 32
      %v503 = vld [vmem:[%s502] sm:$0xf]
      %v504 = vld [vmem:[%s502 + $0x4] sm:$0xf]
      %v505 = vld [vmem:[%s502 + $0x8] sm:$0xf]
      %v506 = vld [vmem:[%s502 + $0xc] sm:$0xf]
      %v507 = vld [vmem:[%s502 + $0x10] sm:$0xf]
      %v508 = vld [vmem:[%s502 + $0x14] sm:$0xf]
      %v509 = vld [vmem:[%s502 + $0x18] sm:$0xf]
      %v510 = vld [vmem:[%s502 + $0x1c] sm:$0xf]
      %v511 = vunpack.c.l.b16 %v403
      %v512 = vunpack.c.l.b16 %v417
      %v513 = vunpack.c.l.b16 %v431
      %v514 = vunpack.c.l.b16 %v445
      %v515 = vunpack.c.l.b16 %v459
      %v516 = vunpack.c.l.b16 %v473
      %v517 = vunpack.c.l.b16 %v487
      %v518 = vunpack.c.l.b16 %v501
      %v519 = vpack.c.b16 %v512, %v511
      %v520 = vpack.c.b16 %v514, %v513
      %v521 = vpack.c.b16 %v516, %v515
      %v522 = vpack.c.b16 %v518, %v517
      %v531 = vunpack.c.l.b16 %v503
      %v532 = vunpack.c.l.b16 %v504
      %v533 = vunpack.c.l.b16 %v505
      %v534 = vunpack.c.l.b16 %v506
      %v535 = vunpack.c.l.b16 %v507
      %v536 = vunpack.c.l.b16 %v508
      %v537 = vunpack.c.l.b16 %v509
      %v538 = vunpack.c.l.b16 %v510
      %v539 = vpack.c.b16 %v532, %v531
      %v540 = vpack.c.b16 %v534, %v533
      %v541 = vpack.c.b16 %v536, %v535
      %v542 = vpack.c.b16 %v538, %v537
      %vm547 = vcmask 523264
      %v549 = vsel %vm547, %v519, 0
      %v552 = vsel %vm547, %v520, 0
      %v555 = vsel %vm547, %v521, 0
      %v558 = vsel %vm547, %v522, 0
      %560 = vmatpush.bf16.msra.mxu0 0
      %561 = vmatpush.bf16.msra.mxu0 0
      %562 = vmatpush.bf16.msra.mxu0 0
      %563 = vmatpush.bf16.msra.mxu0 0
      %564 = vmatpush.bf16.msra.mxu0 %v542
      %565 = vmatpush.bf16.msra.mxu0 %v541
      %566 = vmatpush.bf16.msra.mxu0 %v540
      %567 = vmatpush.bf16.msra.mxu0 %v539
      %568 = vmatmul.bf16.gmra.mxu0 %v549
      %v569 = vpop.f32.mrf.mxu0
      %v570 = vadd.f32 0.0, %v569
      %v571 = vpop.f32.mrf.mxu0
      %v572 = vadd.f32 0.0, %v571
      %573 = vmatmul.bf16.gmra.mxu0 %v552
      %v574 = vpop.f32.mrf.mxu0
      %v575 = vadd.f32 0.0, %v574
      %v576 = vpop.f32.mrf.mxu0
      %v577 = vadd.f32 0.0, %v576
      %578 = vmatmul.bf16.gmra.mxu0 %v555
      %v579 = vpop.f32.mrf.mxu0
      %v580 = vadd.f32 0.0, %v579
      %v581 = vpop.f32.mrf.mxu0
      %v582 = vadd.f32 0.0, %v581
      %583 = vmatmul.bf16.gmra.mxu0 %v558
      %v584 = vpop.f32.mrf.mxu0
      %v585 = vadd.f32 0.0, %v584
      %v586 = vpop.f32.mrf.mxu0
      %v587 = vadd.f32 0.0, %v586
      %588 = vdwg.mxu0
      %v597 = vunpack.c.l.b16 %v363
      %v598 = vunpack.c.l.b16 %v364
      %v599 = vunpack.c.l.b16 %v365
      %v600 = vunpack.c.l.b16 %v366
      %v601 = vunpack.c.l.b16 %v367
      %v602 = vunpack.c.l.b16 %v368
      %v603 = vunpack.c.l.b16 %v369
      %v604 = vunpack.c.l.b16 %v370
      %v605 = vpack.c.b16 %v598, %v597
      %v606 = vpack.c.b16 %v600, %v599
      %v607 = vpack.c.b16 %v602, %v601
      %v608 = vpack.c.b16 %v604, %v603
      %v617 = vunpack.c.l.b16 %v371
      %v618 = vunpack.c.l.b16 %v372
      %v619 = vunpack.c.l.b16 %v373
      %v620 = vunpack.c.l.b16 %v374
      %v621 = vunpack.c.l.b16 %v375
      %v622 = vunpack.c.l.b16 %v376
      %v623 = vunpack.c.l.b16 %v377
      %v624 = vunpack.c.l.b16 %v378
      %v625 = vpack.c.b16 %v618, %v617
      %v626 = vpack.c.b16 %v620, %v619
      %v627 = vpack.c.b16 %v622, %v621
      %v628 = vpack.c.b16 %v624, %v623
      %v634 = vsel %vm547, %v605, 0
      %v637 = vsel %vm547, %v606, 0
      %v640 = vsel %vm547, %v607, 0
      %v643 = vsel %vm547, %v608, 0
      %645 = vmatpush.bf16.msra.mxu0 0
      %646 = vmatpush.bf16.msra.mxu0 0
      %647 = vmatpush.bf16.msra.mxu0 0
      %648 = vmatpush.bf16.msra.mxu0 0
      %649 = vmatpush.bf16.msra.mxu0 %v628
      %650 = vmatpush.bf16.msra.mxu0 %v627
      %651 = vmatpush.bf16.msra.mxu0 %v626
      %652 = vmatpush.bf16.msra.mxu0 %v625
      %653 = vmatmul.bf16.gmra.mxu0 %v634
      %v654 = vpop.f32.mrf.mxu0
      %v655 = vadd.f32 %v570, %v654
      %v656 = vpop.f32.mrf.mxu0
      %v657 = vadd.f32 %v572, %v656
      %658 = vmatmul.bf16.gmra.mxu0 %v637
      %v659 = vpop.f32.mrf.mxu0
      %v660 = vadd.f32 %v575, %v659
      %v661 = vpop.f32.mrf.mxu0
      %v662 = vadd.f32 %v577, %v661
      %663 = vmatmul.bf16.gmra.mxu0 %v640
      %v664 = vpop.f32.mrf.mxu0
      %v665 = vadd.f32 %v580, %v664
      %v666 = vpop.f32.mrf.mxu0
      %v667 = vadd.f32 %v582, %v666
      %668 = vmatmul.bf16.gmra.mxu0 %v643
      %v669 = vpop.f32.mrf.mxu0
      %v670 = vadd.f32 %v585, %v669
      %v671 = vpop.f32.mrf.mxu0
      %v672 = vadd.f32 %v587, %v671
      %673 = vdwg.mxu0
      %v674 = vld [vmem:[#allocation2] sm:$0xe]
      %v675 = vld [vmem:[#allocation2 + $0x8] sm:$0xe]
      %v676 = vld [vmem:[#allocation2 + $0x10] sm:$0xe]
      %v677 = vld [vmem:[#allocation2 + $0x18] sm:$0xe]
      %v678 = vld [vmem:[#allocation2 + $0x20] sm:$0xe]
      %v679 = vld [vmem:[#allocation2 + $0x28] sm:$0xe]
      %v680 = vld [vmem:[#allocation2 + $0x30] sm:$0xe]
      %v681 = vld [vmem:[#allocation2 + $0x38] sm:$0xe]
      %vm698 = vcmask 1042432
      %vm699 = vcmask 1046532
      %vm700 = vmor %vm698, %vm699
      %v701 = vrot.slane %v674, 5
      %v702 = vrot.slane %v701, 4
      %v703 = vrot.slane %v379, 5
      %v704 = vsel %vm700, %v702, %v703
      %v705 = vrot.slane %v675, 5
      %v706 = vrot.slane %v705, 4
      %v707 = vrot.slane %v380, 5
      %v708 = vsel %vm700, %v706, %v707
      %v709 = vrot.slane %v676, 5
      %v710 = vrot.slane %v709, 4
      %v711 = vrot.slane %v381, 5
      %v712 = vsel %vm700, %v710, %v711
      %v713 = vrot.slane %v677, 5
      %v714 = vrot.slane %v713, 4
      %v715 = vrot.slane %v382, 5
      %v716 = vsel %vm700, %v714, %v715
      %v717 = vrot.slane %v678, 5
      %v718 = vrot.slane %v717, 4
      %v719 = vrot.slane %v383, 5
      %v720 = vsel %vm700, %v718, %v719
      %v721 = vrot.slane %v679, 5
      %v722 = vrot.slane %v721, 4
      %v723 = vrot.slane %v384, 5
      %v724 = vsel %vm700, %v722, %v723
      %v725 = vrot.slane %v680, 5
      %v726 = vrot.slane %v725, 4
      %v727 = vrot.slane %v385, 5
      %v728 = vsel %vm700, %v726, %v727
      %v729 = vrot.slane %v681, 5
      %v730 = vrot.slane %v729, 4
      %v731 = vrot.slane %v386, 5
      %v732 = vsel %vm700, %v730, %v731
      %s733 = scalar_lea.vmem %s2, 64
      %v734 = vld [vmem:[%s733] sm:$0xf]
      %v735 = vld [vmem:[%s733 + $0x4] sm:$0xf]
      %v736 = vld [vmem:[%s733 + $0x8] sm:$0xf]
      %v737 = vld [vmem:[%s733 + $0xc] sm:$0xf]
      %v738 = vld [vmem:[%s733 + $0x10] sm:$0xf]
      %v739 = vld [vmem:[%s733 + $0x14] sm:$0xf]
      %v740 = vld [vmem:[%s733 + $0x18] sm:$0xf]
      %v741 = vld [vmem:[%s733 + $0x1c] sm:$0xf]
      %v742 = vunpack.c.l.b16 %v704
      %v743 = vunpack.c.l.b16 %v708
      %v744 = vunpack.c.l.b16 %v712
      %v745 = vunpack.c.l.b16 %v716
      %v746 = vunpack.c.l.b16 %v720
      %v747 = vunpack.c.l.b16 %v724
      %v748 = vunpack.c.l.b16 %v728
      %v749 = vunpack.c.l.b16 %v732
      %v750 = vpack.c.b16 %v743, %v742
      %v751 = vpack.c.b16 %v745, %v744
      %v752 = vpack.c.b16 %v747, %v746
      %v753 = vpack.c.b16 %v749, %v748
      %v762 = vunpack.c.l.b16 %v734
      %v763 = vunpack.c.l.b16 %v735
      %v764 = vunpack.c.l.b16 %v736
      %v765 = vunpack.c.l.b16 %v737
      %v766 = vunpack.c.l.b16 %v738
      %v767 = vunpack.c.l.b16 %v739
      %v768 = vunpack.c.l.b16 %v740
      %v769 = vunpack.c.l.b16 %v741
      %v770 = vpack.c.b16 %v763, %v762
      %v771 = vpack.c.b16 %v765, %v764
      %v772 = vpack.c.b16 %v767, %v766
      %v773 = vpack.c.b16 %v769, %v768
      %v779 = vsel %vm547, %v750, 0
      %v782 = vsel %vm547, %v751, 0
      %v785 = vsel %vm547, %v752, 0
      %v788 = vsel %vm547, %v753, 0
      %790 = vmatpush.bf16.msra.mxu0 0
      %791 = vmatpush.bf16.msra.mxu0 0
      %792 = vmatpush.bf16.msra.mxu0 0
      %793 = vmatpush.bf16.msra.mxu0 0
      %794 = vmatpush.bf16.msra.mxu0 %v773
      %795 = vmatpush.bf16.msra.mxu0 %v772
      %796 = vmatpush.bf16.msra.mxu0 %v771
      %797 = vmatpush.bf16.msra.mxu0 %v770
      %798 = vmatmul.bf16.gmra.mxu0 %v779
      %v799 = vpop.f32.mrf.mxu0
      %v800 = vadd.f32 0.0, %v799
      %v801 = vpop.f32.mrf.mxu0
      %v802 = vadd.f32 0.0, %v801
      %803 = vmatmul.bf16.gmra.mxu0 %v782
      %v804 = vpop.f32.mrf.mxu0
      %v805 = vadd.f32 0.0, %v804
      %v806 = vpop.f32.mrf.mxu0
      %v807 = vadd.f32 0.0, %v806
      %808 = vmatmul.bf16.gmra.mxu0 %v785
      %v809 = vpop.f32.mrf.mxu0
      %v810 = vadd.f32 0.0, %v809
      %v811 = vpop.f32.mrf.mxu0
      %v812 = vadd.f32 0.0, %v811
      %813 = vmatmul.bf16.gmra.mxu0 %v788
      %v814 = vpop.f32.mrf.mxu0
      %v815 = vadd.f32 0.0, %v814
      %v816 = vpop.f32.mrf.mxu0
      %v817 = vadd.f32 0.0, %v816
      %818 = vdwg.mxu0
      %v819 = vadd.f32 %v655, %v800
      %v820 = vadd.f32 %v657, %v802
      %v821 = vadd.f32 %v660, %v805
      %v822 = vadd.f32 %v662, %v807
      %v823 = vadd.f32 %v665, %v810
      %v824 = vadd.f32 %v667, %v812
      %v825 = vadd.f32 %v670, %v815
      %v826 = vadd.f32 %v672, %v817
      %s827 = scalar_lea.vmem [#allocation2], 8
      %v828 = vld [vmem:[%s827] sm:$0xf]
      %v829 = vld [vmem:[%s827 + $0x8] sm:$0xf]
      %v830 = vld [vmem:[%s827 + $0x10] sm:$0xf]
      %v831 = vld [vmem:[%s827 + $0x18] sm:$0xf]
      %v832 = vld [vmem:[%s827 + $0x20] sm:$0xf]
      %v833 = vld [vmem:[%s827 + $0x28] sm:$0xf]
      %v834 = vld [vmem:[%s827 + $0x30] sm:$0xf]
      %v835 = vld [vmem:[%s827 + $0x38] sm:$0xf]
      %s836 = scalar_lea.vmem %s2, 96
      %v837 = vld [vmem:[%s836] sm:$0xf]
      %v838 = vld [vmem:[%s836 + $0x4] sm:$0xf]
      %v839 = vld [vmem:[%s836 + $0x8] sm:$0xf]
      %v840 = vld [vmem:[%s836 + $0xc] sm:$0xf]
      %v841 = vld [vmem:[%s836 + $0x10] sm:$0xf]
      %v842 = vld [vmem:[%s836 + $0x14] sm:$0xf]
      %v843 = vld [vmem:[%s836 + $0x18] sm:$0xf]
      %v844 = vld [vmem:[%s836 + $0x1c] sm:$0xf]
      %v853 = vunpack.c.l.b16 %v828
      %v854 = vunpack.c.l.b16 %v829
      %v855 = vunpack.c.l.b16 %v830
      %v856 = vunpack.c.l.b16 %v831
      %v857 = vunpack.c.l.b16 %v832
      %v858 = vunpack.c.l.b16 %v833
      %v859 = vunpack.c.l.b16 %v834
      %v860 = vunpack.c.l.b16 %v835
      %v861 = vpack.c.b16 %v854, %v853
      %v862 = vpack.c.b16 %v856, %v855
      %v863 = vpack.c.b16 %v858, %v857
      %v864 = vpack.c.b16 %v860, %v859
      %v873 = vunpack.c.l.b16 %v837
      %v874 = vunpack.c.l.b16 %v838
      %v875 = vunpack.c.l.b16 %v839
      %v876 = vunpack.c.l.b16 %v840
      %v877 = vunpack.c.l.b16 %v841
      %v878 = vunpack.c.l.b16 %v842
      %v879 = vunpack.c.l.b16 %v843
      %v880 = vunpack.c.l.b16 %v844
      %v881 = vpack.c.b16 %v874, %v873
      %v882 = vpack.c.b16 %v876, %v875
      %v883 = vpack.c.b16 %v878, %v877
      %v884 = vpack.c.b16 %v880, %v879
      %v890 = vsel %vm547, %v861, 0
      %v893 = vsel %vm547, %v862, 0
      %v896 = vsel %vm547, %v863, 0
      %v899 = vsel %vm547, %v864, 0
      %901 = vmatpush.bf16.msra.mxu0 0
      %902 = vmatpush.bf16.msra.mxu0 0
      %903 = vmatpush.bf16.msra.mxu0 0
      %904 = vmatpush.bf16.msra.mxu0 0
      %905 = vmatpush.bf16.msra.mxu0 %v884
      %906 = vmatpush.bf16.msra.mxu0 %v883
      %907 = vmatpush.bf16.msra.mxu0 %v882
      %908 = vmatpush.bf16.msra.mxu0 %v881
      %909 = vmatmul.bf16.gmra.mxu0 %v890
      %v910 = vpop.f32.mrf.mxu0
      %v911 = vadd.f32 0.0, %v910
      %v912 = vpop.f32.mrf.mxu0
      %v913 = vadd.f32 0.0, %v912
      %914 = vmatmul.bf16.gmra.mxu0 %v893
      %v915 = vpop.f32.mrf.mxu0
      %v916 = vadd.f32 0.0, %v915
      %v917 = vpop.f32.mrf.mxu0
      %v918 = vadd.f32 0.0, %v917
      %919 = vmatmul.bf16.gmra.mxu0 %v896
      %v920 = vpop.f32.mrf.mxu0
      %v921 = vadd.f32 0.0, %v920
      %v922 = vpop.f32.mrf.mxu0
      %v923 = vadd.f32 0.0, %v922
      %924 = vmatmul.bf16.gmra.mxu0 %v899
      %v925 = vpop.f32.mrf.mxu0
      %v926 = vadd.f32 0.0, %v925
      %v927 = vpop.f32.mrf.mxu0
      %v928 = vadd.f32 0.0, %v927
      %929 = vdwg.mxu0
      %v930 = vadd.f32 %v819, %v911
      %v931 = vadd.f32 %v820, %v913
      %v932 = vadd.f32 %v821, %v916
      %v933 = vadd.f32 %v822, %v918
      %v934 = vadd.f32 %v823, %v921
      %v935 = vadd.f32 %v824, %v923
      %v936 = vadd.f32 %v825, %v926
      %v937 = vadd.f32 %v826, %v928
      %v938 = vld [vmem:[%s827] sm:$0xf]
      %v939 = vld [vmem:[%s827 + $0x4] sm:$0x1]
      %v940 = vld [vmem:[%s827 + $0x8] sm:$0xf]
      %v941 = vld [vmem:[%s827 + $0xc] sm:$0x1]
      %v942 = vld [vmem:[%s827 + $0x10] sm:$0xf]
      %v943 = vld [vmem:[%s827 + $0x14] sm:$0x1]
      %v944 = vld [vmem:[%s827 + $0x18] sm:$0xf]
      %v945 = vld [vmem:[%s827 + $0x1c] sm:$0x1]
      %v946 = vld [vmem:[%s827 + $0x20] sm:$0xf]
      %v947 = vld [vmem:[%s827 + $0x24] sm:$0x1]
      %v948 = vld [vmem:[%s827 + $0x28] sm:$0xf]
      %v949 = vld [vmem:[%s827 + $0x2c] sm:$0x1]
      %v950 = vld [vmem:[%s827 + $0x30] sm:$0xf]
      %v951 = vld [vmem:[%s827 + $0x34] sm:$0x1]
      %v952 = vld [vmem:[%s827 + $0x38] sm:$0xf]
      %v953 = vld [vmem:[%s827 + $0x3c] sm:$0x1]
      %v955 = vshrl.u32 %v938, 16
      %v957 = vrot.slane %v955, 4
      %v958 = vshll.u32 %v938, 16
      %v960 = vrot.slane %v958, 5
      %v961 = vor.u32 %v957, %v960
      %v962 = vrot.slane %v961, 4
      %v964 = vshll.u32 %v939, 16
      %v966 = vrot.slane %v964, 5
      %v967 = vsel %vm389, %v962, %v966
      %v969 = vshrl.u32 %v940, 16
      %v971 = vrot.slane %v969, 4
      %v972 = vshll.u32 %v940, 16
      %v974 = vrot.slane %v972, 5
      %v975 = vor.u32 %v971, %v974
      %v976 = vrot.slane %v975, 4
      %v978 = vshll.u32 %v941, 16
      %v980 = vrot.slane %v978, 5
      %v981 = vsel %vm389, %v976, %v980
      %v983 = vshrl.u32 %v942, 16
      %v985 = vrot.slane %v983, 4
      %v986 = vshll.u32 %v942, 16
      %v988 = vrot.slane %v986, 5
      %v989 = vor.u32 %v985, %v988
      %v990 = vrot.slane %v989, 4
      %v992 = vshll.u32 %v943, 16
      %v994 = vrot.slane %v992, 5
      %v995 = vsel %vm389, %v990, %v994
      %v997 = vshrl.u32 %v944, 16
      %v999 = vrot.slane %v997, 4
      %v1000 = vshll.u32 %v944, 16
      %v1002 = vrot.slane %v1000, 5
      %v1003 = vor.u32 %v999, %v1002
      %v1004 = vrot.slane %v1003, 4
      %v1006 = vshll.u32 %v945, 16
      %v1008 = vrot.slane %v1006, 5
      %v1009 = vsel %vm389, %v1004, %v1008
      %v1011 = vshrl.u32 %v946, 16
      %v1013 = vrot.slane %v1011, 4
      %v1014 = vshll.u32 %v946, 16
      %v1016 = vrot.slane %v1014, 5
      %v1017 = vor.u32 %v1013, %v1016
      %v1018 = vrot.slane %v1017, 4
      %v1020 = vshll.u32 %v947, 16
      %v1022 = vrot.slane %v1020, 5
      %v1023 = vsel %vm389, %v1018, %v1022
      %v1025 = vshrl.u32 %v948, 16
      %v1027 = vrot.slane %v1025, 4
      %v1028 = vshll.u32 %v948, 16
      %v1030 = vrot.slane %v1028, 5
      %v1031 = vor.u32 %v1027, %v1030
      %v1032 = vrot.slane %v1031, 4
      %v1034 = vshll.u32 %v949, 16
      %v1036 = vrot.slane %v1034, 5
      %v1037 = vsel %vm389, %v1032, %v1036
      %v1039 = vshrl.u32 %v950, 16
      %v1041 = vrot.slane %v1039, 4
      %v1042 = vshll.u32 %v950, 16
      %v1044 = vrot.slane %v1042, 5
      %v1045 = vor.u32 %v1041, %v1044
      %v1046 = vrot.slane %v1045, 4
      %v1048 = vshll.u32 %v951, 16
      %v1050 = vrot.slane %v1048, 5
      %v1051 = vsel %vm389, %v1046, %v1050
      %v1053 = vshrl.u32 %v952, 16
      %v1055 = vrot.slane %v1053, 4
      %v1056 = vshll.u32 %v952, 16
      %v1058 = vrot.slane %v1056, 5
      %v1059 = vor.u32 %v1055, %v1058
      %v1060 = vrot.slane %v1059, 4
      %v1062 = vshll.u32 %v953, 16
      %v1064 = vrot.slane %v1062, 5
      %v1065 = vsel %vm389, %v1060, %v1064
      %s1066 = scalar_lea.vmem %s2, 128
      %v1067 = vld [vmem:[%s1066] sm:$0xf]
      %v1068 = vld [vmem:[%s1066 + $0x4] sm:$0xf]
      %v1069 = vld [vmem:[%s1066 + $0x8] sm:$0xf]
      %v1070 = vld [vmem:[%s1066 + $0xc] sm:$0xf]
      %v1071 = vld [vmem:[%s1066 + $0x10] sm:$0xf]
      %v1072 = vld [vmem:[%s1066 + $0x14] sm:$0xf]
      %v1073 = vld [vmem:[%s1066 + $0x18] sm:$0xf]
      %v1074 = vld [vmem:[%s1066 + $0x1c] sm:$0xf]
      %v1075 = vunpack.c.l.b16 %v967
      %v1076 = vunpack.c.l.b16 %v981
      %v1077 = vunpack.c.l.b16 %v995
      %v1078 = vunpack.c.l.b16 %v1009
      %v1079 = vunpack.c.l.b16 %v1023
      %v1080 = vunpack.c.l.b16 %v1037
      %v1081 = vunpack.c.l.b16 %v1051
      %v1082 = vunpack.c.l.b16 %v1065
      %v1083 = vpack.c.b16 %v1076, %v1075
      %v1084 = vpack.c.b16 %v1078, %v1077
      %v1085 = vpack.c.b16 %v1080, %v1079
      %v1086 = vpack.c.b16 %v1082, %v1081
      %v1095 = vunpack.c.l.b16 %v1067
      %v1096 = vunpack.c.l.b16 %v1068
      %v1097 = vunpack.c.l.b16 %v1069
      %v1098 = vunpack.c.l.b16 %v1070
      %v1099 = vunpack.c.l.b16 %v1071
      %v1100 = vunpack.c.l.b16 %v1072
      %v1101 = vunpack.c.l.b16 %v1073
      %v1102 = vunpack.c.l.b16 %v1074
      %v1103 = vpack.c.b16 %v1096, %v1095
      %v1104 = vpack.c.b16 %v1098, %v1097
      %v1105 = vpack.c.b16 %v1100, %v1099
      %v1106 = vpack.c.b16 %v1102, %v1101
      %v1112 = vsel %vm547, %v1083, 0
      %v1115 = vsel %vm547, %v1084, 0
      %v1118 = vsel %vm547, %v1085, 0
      %v1121 = vsel %vm547, %v1086, 0
      %1123 = vmatpush.bf16.msra.mxu0 0
      %1124 = vmatpush.bf16.msra.mxu0 0
      %1125 = vmatpush.bf16.msra.mxu0 0
      %1126 = vmatpush.bf16.msra.mxu0 0
      %1127 = vmatpush.bf16.msra.mxu0 %v1106
      %1128 = vmatpush.bf16.msra.mxu0 %v1105
      %1129 = vmatpush.bf16.msra.mxu0 %v1104
      %1130 = vmatpush.bf16.msra.mxu0 %v1103
      %1131 = vmatmul.bf16.gmra.mxu0 %v1112
      %v1132 = vpop.f32.mrf.mxu0
      %v1133 = vadd.f32 0.0, %v1132
      %v1134 = vpop.f32.mrf.mxu0
      %v1135 = vadd.f32 0.0, %v1134
      %1136 = vmatmul.bf16.gmra.mxu0 %v1115
      %v1137 = vpop.f32.mrf.mxu0
      %v1138 = vadd.f32 0.0, %v1137
      %v1139 = vpop.f32.mrf.mxu0
      %v1140 = vadd.f32 0.0, %v1139
      %1141 = vmatmul.bf16.gmra.mxu0 %v1118
      %v1142 = vpop.f32.mrf.mxu0
      %v1143 = vadd.f32 0.0, %v1142
      %v1144 = vpop.f32.mrf.mxu0
      %v1145 = vadd.f32 0.0, %v1144
      %1146 = vmatmul.bf16.gmra.mxu0 %v1121
      %v1147 = vpop.f32.mrf.mxu0
      %v1148 = vadd.f32 0.0, %v1147
      %v1149 = vpop.f32.mrf.mxu0
      %v1150 = vadd.f32 0.0, %v1149
      %1151 = vdwg.mxu0
      %v1152 = vadd.f32 %v930, %v1133
      %v1153 = vadd.f32 %v931, %v1135
      %v1154 = vadd.f32 %v932, %v1138
      %v1155 = vadd.f32 %v933, %v1140
      %v1156 = vadd.f32 %v934, %v1143
      %v1157 = vadd.f32 %v935, %v1145
      %v1158 = vadd.f32 %v936, %v1148
      %v1159 = vadd.f32 %v937, %v1150
      %v1160 = vld [vmem:[%s827] sm:$0xe]
      %v1161 = vld [vmem:[%s827 + $0x8] sm:$0xe]
      %v1162 = vld [vmem:[%s827 + $0x10] sm:$0xe]
      %v1163 = vld [vmem:[%s827 + $0x18] sm:$0xe]
      %v1164 = vld [vmem:[%s827 + $0x20] sm:$0xe]
      %v1165 = vld [vmem:[%s827 + $0x28] sm:$0xe]
      %v1166 = vld [vmem:[%s827 + $0x30] sm:$0xe]
      %v1167 = vld [vmem:[%s827 + $0x38] sm:$0xe]
      %v1184 = vrot.slane %v1160, 5
      %v1185 = vrot.slane %v1184, 4
      %v1186 = vrot.slane %v939, 5
      %v1187 = vsel %vm700, %v1185, %v1186
      %v1188 = vrot.slane %v1161, 5
      %v1189 = vrot.slane %v1188, 4
      %v1190 = vrot.slane %v941, 5
      %v1191 = vsel %vm700, %v1189, %v1190
      %v1192 = vrot.slane %v1162, 5
      %v1193 = vrot.slane %v1192, 4
      %v1194 = vrot.slane %v943, 5
      %v1195 = vsel %vm700, %v1193, %v1194
      %v1196 = vrot.slane %v1163, 5
      %v1197 = vrot.slane %v1196, 4
      %v1198 = vrot.slane %v945, 5
      %v1199 = vsel %vm700, %v1197, %v1198
      %v1200 = vrot.slane %v1164, 5
      %v1201 = vrot.slane %v1200, 4
      %v1202 = vrot.slane %v947, 5
      %v1203 = vsel %vm700, %v1201, %v1202
      %v1204 = vrot.slane %v1165, 5
      %v1205 = vrot.slane %v1204, 4
      %v1206 = vrot.slane %v949, 5
      %v1207 = vsel %vm700, %v1205, %v1206
      %v1208 = vrot.slane %v1166, 5
      %v1209 = vrot.slane %v1208, 4
      %v1210 = vrot.slane %v951, 5
      %v1211 = vsel %vm700, %v1209, %v1210
      %v1212 = vrot.slane %v1167, 5
      %v1213 = vrot.slane %v1212, 4
      %v1214 = vrot.slane %v953, 5
      %v1215 = vsel %vm700, %v1213, %v1214
      %s1216 = scalar_lea.vmem %s2, 160
      %v1217 = vld [vmem:[%s1216] sm:$0xf]
      %v1218 = vld [vmem:[%s1216 + $0x4] sm:$0xf]
      %v1219 = vld [vmem:[%s1216 + $0x8] sm:$0xf]
      %v1220 = vld [vmem:[%s1216 + $0xc] sm:$0xf]
      %v1221 = vld [vmem:[%s1216 + $0x10] sm:$0xf]
      %v1222 = vld [vmem:[%s1216 + $0x14] sm:$0xf]
      %v1223 = vld [vmem:[%s1216 + $0x18] sm:$0xf]
      %v1224 = vld [vmem:[%s1216 + $0x1c] sm:$0xf]
      %v1225 = vunpack.c.l.b16 %v1187
      %v1226 = vunpack.c.l.b16 %v1191
      %v1227 = vunpack.c.l.b16 %v1195
      %v1228 = vunpack.c.l.b16 %v1199
      %v1229 = vunpack.c.l.b16 %v1203
      %v1230 = vunpack.c.l.b16 %v1207
      %v1231 = vunpack.c.l.b16 %v1211
      %v1232 = vunpack.c.l.b16 %v1215
      %v1233 = vpack.c.b16 %v1226, %v1225
      %v1234 = vpack.c.b16 %v1228, %v1227
      %v1235 = vpack.c.b16 %v1230, %v1229
      %v1236 = vpack.c.b16 %v1232, %v1231
      %v1245 = vunpack.c.l.b16 %v1217
      %v1246 = vunpack.c.l.b16 %v1218
      %v1247 = vunpack.c.l.b16 %v1219
      %v1248 = vunpack.c.l.b16 %v1220
      %v1249 = vunpack.c.l.b16 %v1221
      %v1250 = vunpack.c.l.b16 %v1222
      %v1251 = vunpack.c.l.b16 %v1223
      %v1252 = vunpack.c.l.b16 %v1224
      %v1253 = vpack.c.b16 %v1246, %v1245
      %v1254 = vpack.c.b16 %v1248, %v1247
      %v1255 = vpack.c.b16 %v1250, %v1249
      %v1256 = vpack.c.b16 %v1252, %v1251
      %v1262 = vsel %vm547, %v1233, 0
      %v1265 = vsel %vm547, %v1234, 0
      %v1268 = vsel %vm547, %v1235, 0
      %v1271 = vsel %vm547, %v1236, 0
      %1273 = vmatpush.bf16.msra.mxu0 0
      %1274 = vmatpush.bf16.msra.mxu0 0
      %1275 = vmatpush.bf16.msra.mxu0 0
      %1276 = vmatpush.bf16.msra.mxu0 0
      %1277 = vmatpush.bf16.msra.mxu0 %v1256
      %1278 = vmatpush.bf16.msra.mxu0 %v1255
      %1279 = vmatpush.bf16.msra.mxu0 %v1254
      %1280 = vmatpush.bf16.msra.mxu0 %v1253
      %1281 = vmatmul.bf16.gmra.mxu0 %v1262
      %v1282 = vpop.f32.mrf.mxu0
      %v1283 = vadd.f32 0.0, %v1282
      %v1284 = vpop.f32.mrf.mxu0
      %v1285 = vadd.f32 0.0, %v1284
      %1286 = vmatmul.bf16.gmra.mxu0 %v1265
      %v1287 = vpop.f32.mrf.mxu0
      %v1288 = vadd.f32 0.0, %v1287
      %v1289 = vpop.f32.mrf.mxu0
      %v1290 = vadd.f32 0.0, %v1289
      %1291 = vmatmul.bf16.gmra.mxu0 %v1268
      %v1292 = vpop.f32.mrf.mxu0
      %v1293 = vadd.f32 0.0, %v1292
      %v1294 = vpop.f32.mrf.mxu0
      %v1295 = vadd.f32 0.0, %v1294
      %1296 = vmatmul.bf16.gmra.mxu0 %v1271
      %v1297 = vpop.f32.mrf.mxu0
      %v1298 = vadd.f32 0.0, %v1297
      %v1299 = vpop.f32.mrf.mxu0
      %v1300 = vadd.f32 0.0, %v1299
      %1301 = vdwg.mxu0
      %v1302 = vadd.f32 %v1152, %v1283
      %v1303 = vadd.f32 %v1153, %v1285
      %v1304 = vadd.f32 %v1154, %v1288
      %v1305 = vadd.f32 %v1155, %v1290
      %v1306 = vadd.f32 %v1156, %v1293
      %v1307 = vadd.f32 %v1157, %v1295
      %v1308 = vadd.f32 %v1158, %v1298
      %v1309 = vadd.f32 %v1159, %v1300
      %s1310 = scalar_lea.vmem [#allocation2], 16
      %v1311 = vld [vmem:[%s1310] sm:$0xf]
      %v1312 = vld [vmem:[%s1310 + $0x8] sm:$0xf]
      %v1313 = vld [vmem:[%s1310 + $0x10] sm:$0xf]
      %v1314 = vld [vmem:[%s1310 + $0x18] sm:$0xf]
      %v1315 = vld [vmem:[%s1310 + $0x20] sm:$0xf]
      %v1316 = vld [vmem:[%s1310 + $0x28] sm:$0xf]
      %v1317 = vld [vmem:[%s1310 + $0x30] sm:$0xf]
      %v1318 = vld [vmem:[%s1310 + $0x38] sm:$0xf]
      %s1319 = scalar_lea.vmem %s2, 192
      %v1320 = vld [vmem:[%s1319] sm:$0xf]
      %v1321 = vld [vmem:[%s1319 + $0x4] sm:$0xf]
      %v1322 = vld [vmem:[%s1319 + $0x8] sm:$0xf]
      %v1323 = vld [vmem:[%s1319 + $0xc] sm:$0xf]
      %v1324 = vld [vmem:[%s1319 + $0x10] sm:$0xf]
      %v1325 = vld [vmem:[%s1319 + $0x14] sm:$0xf]
      %v1326 = vld [vmem:[%s1319 + $0x18] sm:$0xf]
      %v1327 = vld [vmem:[%s1319 + $0x1c] sm:$0xf]
      %v1336 = vunpack.c.l.b16 %v1311
      %v1337 = vunpack.c.l.b16 %v1312
      %v1338 = vunpack.c.l.b16 %v1313
      %v1339 = vunpack.c.l.b16 %v1314
      %v1340 = vunpack.c.l.b16 %v1315
      %v1341 = vunpack.c.l.b16 %v1316
      %v1342 = vunpack.c.l.b16 %v1317
      %v1343 = vunpack.c.l.b16 %v1318
      %v1344 = vpack.c.b16 %v1337, %v1336
      %v1345 = vpack.c.b16 %v1339, %v1338
      %v1346 = vpack.c.b16 %v1341, %v1340
      %v1347 = vpack.c.b16 %v1343, %v1342
      %v1356 = vunpack.c.l.b16 %v1320
      %v1357 = vunpack.c.l.b16 %v1321
      %v1358 = vunpack.c.l.b16 %v1322
      %v1359 = vunpack.c.l.b16 %v1323
      %v1360 = vunpack.c.l.b16 %v1324
      %v1361 = vunpack.c.l.b16 %v1325
      %v1362 = vunpack.c.l.b16 %v1326
      %v1363 = vunpack.c.l.b16 %v1327
      %v1364 = vpack.c.b16 %v1357, %v1356
      %v1365 = vpack.c.b16 %v1359, %v1358
      %v1366 = vpack.c.b16 %v1361, %v1360
      %v1367 = vpack.c.b16 %v1363, %v1362
      %v1373 = vsel %vm547, %v1344, 0
      %v1376 = vsel %vm547, %v1345, 0
      %v1379 = vsel %vm547, %v1346, 0
      %v1382 = vsel %vm547, %v1347, 0
      %1384 = vmatpush.bf16.msra.mxu0 0
      %1385 = vmatpush.bf16.msra.mxu0 0
      %1386 = vmatpush.bf16.msra.mxu0 0
      %1387 = vmatpush.bf16.msra.mxu0 0
      %1388 = vmatpush.bf16.msra.mxu0 %v1367
      %1389 = vmatpush.bf16.msra.mxu0 %v1366
      %1390 = vmatpush.bf16.msra.mxu0 %v1365
      %1391 = vmatpush.bf16.msra.mxu0 %v1364
      %1392 = vmatmul.bf16.gmra.mxu0 %v1373
      %v1393 = vpop.f32.mrf.mxu0
      %v1394 = vadd.f32 0.0, %v1393
      %v1395 = vpop.f32.mrf.mxu0
      %v1396 = vadd.f32 0.0, %v1395
      %1397 = vmatmul.bf16.gmra.mxu0 %v1376
      %v1398 = vpop.f32.mrf.mxu0
      %v1399 = vadd.f32 0.0, %v1398
      %v1400 = vpop.f32.mrf.mxu0
      %v1401 = vadd.f32 0.0, %v1400
      %1402 = vmatmul.bf16.gmra.mxu0 %v1379
      %v1403 = vpop.f32.mrf.mxu0
      %v1404 = vadd.f32 0.0, %v1403
      %v1405 = vpop.f32.mrf.mxu0
      %v1406 = vadd.f32 0.0, %v1405
      %1407 = vmatmul.bf16.gmra.mxu0 %v1382
      %v1408 = vpop.f32.mrf.mxu0
      %v1409 = vadd.f32 0.0, %v1408
      %v1410 = vpop.f32.mrf.mxu0
      %v1411 = vadd.f32 0.0, %v1410
      %1412 = vdwg.mxu0
      %v1413 = vadd.f32 %v1302, %v1394
      %v1414 = vadd.f32 %v1303, %v1396
      %v1415 = vadd.f32 %v1304, %v1399
      %v1416 = vadd.f32 %v1305, %v1401
      %v1417 = vadd.f32 %v1306, %v1404
      %v1418 = vadd.f32 %v1307, %v1406
      %v1419 = vadd.f32 %v1308, %v1409
      %v1420 = vadd.f32 %v1309, %v1411
      %v1421 = vld [vmem:[%s1310] sm:$0xf]
      %v1422 = vld [vmem:[%s1310 + $0x4] sm:$0x1]
      %v1423 = vld [vmem:[%s1310 + $0x8] sm:$0xf]
      %v1424 = vld [vmem:[%s1310 + $0xc] sm:$0x1]
      %v1425 = vld [vmem:[%s1310 + $0x10] sm:$0xf]
      %v1426 = vld [vmem:[%s1310 + $0x14] sm:$0x1]
      %v1427 = vld [vmem:[%s1310 + $0x18] sm:$0xf]
      %v1428 = vld [vmem:[%s1310 + $0x1c] sm:$0x1]
      %v1429 = vld [vmem:[%s1310 + $0x20] sm:$0xf]
      %v1430 = vld [vmem:[%s1310 + $0x24] sm:$0x1]
      %v1431 = vld [vmem:[%s1310 + $0x28] sm:$0xf]
      %v1432 = vld [vmem:[%s1310 + $0x2c] sm:$0x1]
      %v1433 = vld [vmem:[%s1310 + $0x30] sm:$0xf]
      %v1434 = vld [vmem:[%s1310 + $0x34] sm:$0x1]
      %v1435 = vld [vmem:[%s1310 + $0x38] sm:$0xf]
      %v1436 = vld [vmem:[%s1310 + $0x3c] sm:$0x1]
      %v1438 = vshrl.u32 %v1421, 16
      %v1440 = vrot.slane %v1438, 4
      %v1441 = vshll.u32 %v1421, 16
      %v1443 = vrot.slane %v1441, 5
      %v1444 = vor.u32 %v1440, %v1443
      %v1445 = vrot.slane %v1444, 4
      %v1447 = vshll.u32 %v1422, 16
      %v1449 = vrot.slane %v1447, 5
      %v1450 = vsel %vm389, %v1445, %v1449
      %v1452 = vshrl.u32 %v1423, 16
      %v1454 = vrot.slane %v1452, 4
      %v1455 = vshll.u32 %v1423, 16
      %v1457 = vrot.slane %v1455, 5
      %v1458 = vor.u32 %v1454, %v1457
      %v1459 = vrot.slane %v1458, 4
      %v1461 = vshll.u32 %v1424, 16
      %v1463 = vrot.slane %v1461, 5
      %v1464 = vsel %vm389, %v1459, %v1463
      %v1466 = vshrl.u32 %v1425, 16
      %v1468 = vrot.slane %v1466, 4
      %v1469 = vshll.u32 %v1425, 16
      %v1471 = vrot.slane %v1469, 5
      %v1472 = vor.u32 %v1468, %v1471
      %v1473 = vrot.slane %v1472, 4
      %v1475 = vshll.u32 %v1426, 16
      %v1477 = vrot.slane %v1475, 5
      %v1478 = vsel %vm389, %v1473, %v1477
      %v1480 = vshrl.u32 %v1427, 16
      %v1482 = vrot.slane %v1480, 4
      %v1483 = vshll.u32 %v1427, 16
      %v1485 = vrot.slane %v1483, 5
      %v1486 = vor.u32 %v1482, %v1485
      %v1487 = vrot.slane %v1486, 4
      %v1489 = vshll.u32 %v1428, 16
      %v1491 = vrot.slane %v1489, 5
      %v1492 = vsel %vm389, %v1487, %v1491
      %v1494 = vshrl.u32 %v1429, 16
      %v1496 = vrot.slane %v1494, 4
      %v1497 = vshll.u32 %v1429, 16
      %v1499 = vrot.slane %v1497, 5
      %v1500 = vor.u32 %v1496, %v1499
      %v1501 = vrot.slane %v1500, 4
      %v1503 = vshll.u32 %v1430, 16
      %v1505 = vrot.slane %v1503, 5
      %v1506 = vsel %vm389, %v1501, %v1505
      %v1508 = vshrl.u32 %v1431, 16
      %v1510 = vrot.slane %v1508, 4
      %v1511 = vshll.u32 %v1431, 16
      %v1513 = vrot.slane %v1511, 5
      %v1514 = vor.u32 %v1510, %v1513
      %v1515 = vrot.slane %v1514, 4
      %v1517 = vshll.u32 %v1432, 16
      %v1519 = vrot.slane %v1517, 5
      %v1520 = vsel %vm389, %v1515, %v1519
      %v1522 = vshrl.u32 %v1433, 16
      %v1524 = vrot.slane %v1522, 4
      %v1525 = vshll.u32 %v1433, 16
      %v1527 = vrot.slane %v1525, 5
      %v1528 = vor.u32 %v1524, %v1527
      %v1529 = vrot.slane %v1528, 4
      %v1531 = vshll.u32 %v1434, 16
      %v1533 = vrot.slane %v1531, 5
      %v1534 = vsel %vm389, %v1529, %v1533
      %v1536 = vshrl.u32 %v1435, 16
      %v1538 = vrot.slane %v1536, 4
      %v1539 = vshll.u32 %v1435, 16
      %v1541 = vrot.slane %v1539, 5
      %v1542 = vor.u32 %v1538, %v1541
      %v1543 = vrot.slane %v1542, 4
      %v1545 = vshll.u32 %v1436, 16
      %v1547 = vrot.slane %v1545, 5
      %v1548 = vsel %vm389, %v1543, %v1547
      %s1549 = scalar_lea.vmem %s2, 224
      %v1550 = vld [vmem:[%s1549] sm:$0xf]
      %v1551 = vld [vmem:[%s1549 + $0x4] sm:$0xf]
      %v1552 = vld [vmem:[%s1549 + $0x8] sm:$0xf]
      %v1553 = vld [vmem:[%s1549 + $0xc] sm:$0xf]
      %v1554 = vld [vmem:[%s1549 + $0x10] sm:$0xf]
      %v1555 = vld [vmem:[%s1549 + $0x14] sm:$0xf]
      %v1556 = vld [vmem:[%s1549 + $0x18] sm:$0xf]
      %v1557 = vld [vmem:[%s1549 + $0x1c] sm:$0xf]
      %v1558 = vunpack.c.l.b16 %v1450
      %v1559 = vunpack.c.l.b16 %v1464
      %v1560 = vunpack.c.l.b16 %v1478
      %v1561 = vunpack.c.l.b16 %v1492
      %v1562 = vunpack.c.l.b16 %v1506
      %v1563 = vunpack.c.l.b16 %v1520
      %v1564 = vunpack.c.l.b16 %v1534
      %v1565 = vunpack.c.l.b16 %v1548
      %v1566 = vpack.c.b16 %v1559, %v1558
      %v1567 = vpack.c.b16 %v1561, %v1560
      %v1568 = vpack.c.b16 %v1563, %v1562
      %v1569 = vpack.c.b16 %v1565, %v1564
      %v1578 = vunpack.c.l.b16 %v1550
      %v1579 = vunpack.c.l.b16 %v1551
      %v1580 = vunpack.c.l.b16 %v1552
      %v1581 = vunpack.c.l.b16 %v1553
      %v1582 = vunpack.c.l.b16 %v1554
      %v1583 = vunpack.c.l.b16 %v1555
      %v1584 = vunpack.c.l.b16 %v1556
      %v1585 = vunpack.c.l.b16 %v1557
      %v1586 = vpack.c.b16 %v1579, %v1578
      %v1587 = vpack.c.b16 %v1581, %v1580
      %v1588 = vpack.c.b16 %v1583, %v1582
      %v1589 = vpack.c.b16 %v1585, %v1584
      %v1595 = vsel %vm547, %v1566, 0
      %v1598 = vsel %vm547, %v1567, 0
      %v1601 = vsel %vm547, %v1568, 0
      %v1604 = vsel %vm547, %v1569, 0
      %1606 = vmatpush.bf16.msra.mxu0 0
      %1607 = vmatpush.bf16.msra.mxu0 0
      %1608 = vmatpush.bf16.msra.mxu0 0
      %1609 = vmatpush.bf16.msra.mxu0 0
      %1610 = vmatpush.bf16.msra.mxu0 %v1589
      %1611 = vmatpush.bf16.msra.mxu0 %v1588
      %1612 = vmatpush.bf16.msra.mxu0 %v1587
      %1613 = vmatpush.bf16.msra.mxu0 %v1586
      %1614 = vmatmul.bf16.gmra.mxu0 %v1595
      %v1615 = vpop.f32.mrf.mxu0
      %v1616 = vadd.f32 0.0, %v1615
      %v1617 = vpop.f32.mrf.mxu0
      %v1618 = vadd.f32 0.0, %v1617
      %1619 = vmatmul.bf16.gmra.mxu0 %v1598
      %v1620 = vpop.f32.mrf.mxu0
      %v1621 = vadd.f32 0.0, %v1620
      %v1622 = vpop.f32.mrf.mxu0
      %v1623 = vadd.f32 0.0, %v1622
      %1624 = vmatmul.bf16.gmra.mxu0 %v1601
      %v1625 = vpop.f32.mrf.mxu0
      %v1626 = vadd.f32 0.0, %v1625
      %v1627 = vpop.f32.mrf.mxu0
      %v1628 = vadd.f32 0.0, %v1627
      %1629 = vmatmul.bf16.gmra.mxu0 %v1604
      %v1630 = vpop.f32.mrf.mxu0
      %v1631 = vadd.f32 0.0, %v1630
      %v1632 = vpop.f32.mrf.mxu0
      %v1633 = vadd.f32 0.0, %v1632
      %1634 = vdwg.mxu0
      %v1635 = vadd.f32 %v1413, %v1616
      %v1636 = vadd.f32 %v1414, %v1618
      %v1637 = vadd.f32 %v1415, %v1621
      %v1638 = vadd.f32 %v1416, %v1623
      %v1639 = vadd.f32 %v1417, %v1626
      %v1640 = vadd.f32 %v1418, %v1628
      %v1641 = vadd.f32 %v1419, %v1631
      %v1642 = vadd.f32 %v1420, %v1633
      %v1643 = vld [vmem:[%s1310] sm:$0xe]
      %v1644 = vld [vmem:[%s1310 + $0x8] sm:$0xe]
      %v1645 = vld [vmem:[%s1310 + $0x10] sm:$0xe]
      %v1646 = vld [vmem:[%s1310 + $0x18] sm:$0xe]
      %v1647 = vld [vmem:[%s1310 + $0x20] sm:$0xe]
      %v1648 = vld [vmem:[%s1310 + $0x28] sm:$0xe]
      %v1649 = vld [vmem:[%s1310 + $0x30] sm:$0xe]
      %v1650 = vld [vmem:[%s1310 + $0x38] sm:$0xe]
      %v1667 = vrot.slane %v1643, 5
      %v1668 = vrot.slane %v1667, 4
      %v1669 = vrot.slane %v1422, 5
      %v1670 = vsel %vm700, %v1668, %v1669
      %v1671 = vrot.slane %v1644, 5
      %v1672 = vrot.slane %v1671, 4
      %v1673 = vrot.slane %v1424, 5
      %v1674 = vsel %vm700, %v1672, %v1673
      %v1675 = vrot.slane %v1645, 5
      %v1676 = vrot.slane %v1675, 4
      %v1677 = vrot.slane %v1426, 5
      %v1678 = vsel %vm700, %v1676, %v1677
      %v1679 = vrot.slane %v1646, 5
      %v1680 = vrot.slane %v1679, 4
      %v1681 = vrot.slane %v1428, 5
      %v1682 = vsel %vm700, %v1680, %v1681
      %v1683 = vrot.slane %v1647, 5
      %v1684 = vrot.slane %v1683, 4
      %v1685 = vrot.slane %v1430, 5
      %v1686 = vsel %vm700, %v1684, %v1685
      %v1687 = vrot.slane %v1648, 5
      %v1688 = vrot.slane %v1687, 4
      %v1689 = vrot.slane %v1432, 5
      %v1690 = vsel %vm700, %v1688, %v1689
      %v1691 = vrot.slane %v1649, 5
      %v1692 = vrot.slane %v1691, 4
      %v1693 = vrot.slane %v1434, 5
      %v1694 = vsel %vm700, %v1692, %v1693
      %v1695 = vrot.slane %v1650, 5
      %v1696 = vrot.slane %v1695, 4
      %v1697 = vrot.slane %v1436, 5
      %v1698 = vsel %vm700, %v1696, %v1697
      %s1699 = scalar_lea.vmem %s2, 256
      %v1700 = vld [vmem:[%s1699] sm:$0xf]
      %v1701 = vld [vmem:[%s1699 + $0x4] sm:$0xf]
      %v1702 = vld [vmem:[%s1699 + $0x8] sm:$0xf]
      %v1703 = vld [vmem:[%s1699 + $0xc] sm:$0xf]
      %v1704 = vld [vmem:[%s1699 + $0x10] sm:$0xf]
      %v1705 = vld [vmem:[%s1699 + $0x14] sm:$0xf]
      %v1706 = vld [vmem:[%s1699 + $0x18] sm:$0xf]
      %v1707 = vld [vmem:[%s1699 + $0x1c] sm:$0xf]
      %v1708 = vunpack.c.l.b16 %v1670
      %v1709 = vunpack.c.l.b16 %v1674
      %v1710 = vunpack.c.l.b16 %v1678
      %v1711 = vunpack.c.l.b16 %v1682
      %v1712 = vunpack.c.l.b16 %v1686
      %v1713 = vunpack.c.l.b16 %v1690
      %v1714 = vunpack.c.l.b16 %v1694
      %v1715 = vunpack.c.l.b16 %v1698
      %v1716 = vpack.c.b16 %v1709, %v1708
      %v1717 = vpack.c.b16 %v1711, %v1710
      %v1718 = vpack.c.b16 %v1713, %v1712
      %v1719 = vpack.c.b16 %v1715, %v1714
      %v1728 = vunpack.c.l.b16 %v1700
      %v1729 = vunpack.c.l.b16 %v1701
      %v1730 = vunpack.c.l.b16 %v1702
      %v1731 = vunpack.c.l.b16 %v1703
      %v1732 = vunpack.c.l.b16 %v1704
      %v1733 = vunpack.c.l.b16 %v1705
      %v1734 = vunpack.c.l.b16 %v1706
      %v1735 = vunpack.c.l.b16 %v1707
      %v1736 = vpack.c.b16 %v1729, %v1728
      %v1737 = vpack.c.b16 %v1731, %v1730
      %v1738 = vpack.c.b16 %v1733, %v1732
      %v1739 = vpack.c.b16 %v1735, %v1734
      %v1745 = vsel %vm547, %v1716, 0
      %v1748 = vsel %vm547, %v1717, 0
      %v1751 = vsel %vm547, %v1718, 0
      %v1754 = vsel %vm547, %v1719, 0
      %1756 = vmatpush.bf16.msra.mxu0 0
      %1757 = vmatpush.bf16.msra.mxu0 0
      %1758 = vmatpush.bf16.msra.mxu0 0
      %1759 = vmatpush.bf16.msra.mxu0 0
      %1760 = vmatpush.bf16.msra.mxu0 %v1739
      %1761 = vmatpush.bf16.msra.mxu0 %v1738
      %1762 = vmatpush.bf16.msra.mxu0 %v1737
      %1763 = vmatpush.bf16.msra.mxu0 %v1736
      %1764 = vmatmul.bf16.gmra.mxu0 %v1745
      %v1765 = vpop.f32.mrf.mxu0
      %v1766 = vadd.f32 0.0, %v1765
      %v1767 = vpop.f32.mrf.mxu0
      %v1768 = vadd.f32 0.0, %v1767
      %1769 = vmatmul.bf16.gmra.mxu0 %v1748
      %v1770 = vpop.f32.mrf.mxu0
      %v1771 = vadd.f32 0.0, %v1770
      %v1772 = vpop.f32.mrf.mxu0
      %v1773 = vadd.f32 0.0, %v1772
      %1774 = vmatmul.bf16.gmra.mxu0 %v1751
      %v1775 = vpop.f32.mrf.mxu0
      %v1776 = vadd.f32 0.0, %v1775
      %v1777 = vpop.f32.mrf.mxu0
      %v1778 = vadd.f32 0.0, %v1777
      %1779 = vmatmul.bf16.gmra.mxu0 %v1754
      %v1780 = vpop.f32.mrf.mxu0
      %v1781 = vadd.f32 0.0, %v1780
      %v1782 = vpop.f32.mrf.mxu0
      %v1783 = vadd.f32 0.0, %v1782
      %1784 = vdwg.mxu0
      %v1785 = vadd.f32 %v1635, %v1766
      %v1786 = vadd.f32 %v1636, %v1768
      %v1787 = vadd.f32 %v1637, %v1771
      %v1788 = vadd.f32 %v1638, %v1773
      %v1789 = vadd.f32 %v1639, %v1776
      %v1790 = vadd.f32 %v1640, %v1778
      %v1791 = vadd.f32 %v1641, %v1781
      %v1792 = vadd.f32 %v1642, %v1783
      %v1794 = vperm.slane %v362, 0
      %v1796 = vadd.f32 %v1785, %v1794
      %v1797 = vadd.f32 %v1786, %v1794
      %v1798 = vadd.f32 %v1787, %v1794
      %v1799 = vadd.f32 %v1788, %v1794
      %v1800 = vadd.f32 %v1789, %v1794
      %v1801 = vadd.f32 %v1790, %v1794
      %v1802 = vadd.f32 %v1791, %v1794
      %v1803 = vadd.f32 %v1792, %v1794
      %v1804 = vmax.f32 %v1796, 0.0
      %v1805 = vmax.f32 %v1797, 0.0
      %v1806 = vmax.f32 %v1798, 0.0
      %v1807 = vmax.f32 %v1799, 0.0
      %v1808 = vmax.f32 %v1800, 0.0
      %v1809 = vmax.f32 %v1801, 0.0
      %v1810 = vmax.f32 %v1802, 0.0
      %v1811 = vmax.f32 %v1803, 0.0
      %v1812 = vpack.c.bf16 %v1804, %v1804
      %v1813 = vpack.c.bf16 %v1805, %v1805
      %v1814 = vpack.c.bf16 %v1806, %v1806
      %v1815 = vpack.c.bf16 %v1807, %v1807
      %v1816 = vpack.c.bf16 %v1808, %v1808
      %v1817 = vpack.c.bf16 %v1809, %v1809
      %v1818 = vpack.c.bf16 %v1810, %v1810
      %v1819 = vpack.c.bf16 %v1811, %v1811
      %1820 = vst [vmem:[%s316] sm:$0xf] %v1812
      %1821 = vst [vmem:[%s316 + $0x4] sm:$0xf] %v1813
      %1822 = vst [vmem:[%s316 + $0x8] sm:$0xf] %v1814
      %1823 = vst [vmem:[%s316 + $0xc] sm:$0xf] %v1815
      %1824 = vst [vmem:[%s316 + $0x10] sm:$0xf] %v1816
      %1825 = vst [vmem:[%s316 + $0x14] sm:$0xf] %v1817
      %1826 = vst [vmem:[%s316 + $0x18] sm:$0xf] %v1818
      %1827 = vst [vmem:[%s316 + $0x1c] sm:$0xf] %v1819
      %s1828 = smul.u32 8, %s20
      %p1829 = scmp.lt.s32.totalorder %s19, 3
      %s1830 = scalar_select %p1829, %s19, 3
      %p1831 = scmp.lt.s32.totalorder %s1828, 7
      %s1832 = scalar_select %p1831, %s1828, 7
      %s1833 = smul.addr %s1830, 8
      %s1834 = sadd.s32 %s1832, %s1833
      %s1835 = smul.addr %s1834, 4
      %s1836 = scalar_lea.vmem %s4, %s1835
      // Predicated region
      $region37: #{_lambda_.8} parent=35 // pred_check
        %p1837 = pneg %p149
      $region38: #{_lambda_.8} parent=35 // pred_check_branch
        %1839 = sbr.rel (%p1837) target = $region40
      $region39: #{_lambda_.8} parent=35 // pred_region
        %s1840 = smul.u32 8, %s20
      $region40: #{_lambda_.8} parent=35 // pred_fallthru
        _
    $region36: #{_lambda_.8} parent=5 // pred_fallthru
      _
    %p1841 = scmp.le.s32.totalorder 2, %s10
    // Predicated region
    $region41: #{_lambda_.8} parent=5 // pred_check
      %p1842 = pneg %p1841
    $region42: #{_lambda_.8} parent=5 // pred_check_branch
      %1844 = sbr.rel (%p1842) target = $region44
    $region43: #{_lambda_.8} parent=5 // pred_region
      %s1845 = ssub.s32 %s10, 2
      // Predicated region
      $region45: #{_lambda_.8} parent=43 // pred_check
        %p1846 = pneg %p155
      $region46: #{_lambda_.8} parent=43 // pred_check_branch
        %1848 = sbr.rel (%p1846) target = $region48
      $region47: #{_lambda_.8} parent=43 // pred_region
        %s1849 = smul.u32 8, %s22
        %p1850 = scmp.lt.s32.totalorder %s21, 3
        %s1851 = scalar_select %p1850, %s21, 3
        %p1852 = scmp.lt.s32.totalorder %s1849, 7
        %s1853 = scalar_select %p1852, %s1849, 7
        %s1854 = smul.addr %s1851, 8
        %s1855 = sadd.s32 %s1853, %s1854
        %s1856 = smul.addr %s1855, 4
        %s1857 = scalar_lea.vmem %s4, %s1856
      $region48: #{_lambda_.8} parent=43 // pred_fallthru
        _
    $region44: #{_lambda_.8} parent=5 // pred_fallthru
      _
  $region6: #{_lambda_.8} parent=0 // loop_footer
    %s14 = sadd.s32 1, %s10
  $region7: #{_lambda_.8} parent=0 // loop_footer_branch
    %9 = sbr.rel target = $region3
  $region8: #{_lambda_.8} parent=0 // loop_exit
    _

// kernel: _lambda_.11
$region0: #{_lambda_.11}
  #allocation0 [shape = 'u32[]', space=smem, size = 0x4, offset = 0x4, fixed_abs, tag = 'smem constant byte address 0x4 - core index']
  #allocation1 [shape = 'u32[72,128]{1,0:T(1,128)}', space=vmem, size = 0x9000, scoped, tag = 'internal scratch']
  #allocation2 [shape = 'f32[128,128]{1,0:T(8,128)}', space=vmem, size = 0x10000, scoped, tag = 'scratch operand']
  #allocation3 [shape = 'f32[128,128]{1,0:T(8,128)}', space=vmem, size = 0x10000, scoped, tag = 'scratch operand']
  #allocation4 [shape = 'f32[1,1]{1,0:T(1,128)}', space=vmem, size = 0x200, scoped, tag = 'scratch operand']
  %s0 = inlined_call_operand.vmem [shape: bf16[4,64,128], index: 0, kind: input, shape index: {}, may-alias: {0,1}]
  %s1 = inlined_call_operand.vmem [shape: bf16[4,64,128], index: 1, kind: input, shape index: {}, may-alias: {0,1}]
  %s2 = inlined_call_operand.vmem [shape: f32[2,128,128], index: 2, kind: output, shape index: {0}]
  %s3 = inlined_call_operand.vmem [shape: f32[2,128,128], index: 3, kind: output, shape index: {1}]
  %s4 = inlined_call_operand.hbm [shape: f32[2,1,1], index: 4, kind: output, shape index: {2}]
  %5 = xla_tuple %s2, %s3, %s4
  %s6 = sld [smem:[#allocation0]]
  $region65: #{_lambda_.11} parent=0
    _
  %s8 = ssub.s32 1, %s6
  %s9 = scalar_select 0, %s8, %s6
  $region1: #{_lambda_.11} parent=0
    #allocation5 [shape = 'u8[1024]{0}', space=vmem, size = 0x400, scoped, tag = 'output window, operand 2']
    #allocation6 [shape = 's32[2]{0}', space=sflag, size = 0x8, scoped, tag = 'scoped memory for _lambda_.11']
    %10 = vsyncpa [#allocation6], 0
    %s11 = scalar_lea.sflag [#allocation6], 1
    %12 = vsyncpa %s11, 0
    loop: start=0, step=1, limit=4
    $region2: #{_lambda_.11} parent=1 // loop_pre_header
      _
    $region3: #{_lambda_.11} parent=1 // loop_header
      %s14 = sphi 0, %s18
      %p15 = scmp.ge.s32.totalorder %s14, 4
      %s21 = sphi 0, %s33
      %s22 = sphi 0, %s29
      %s23 = sphi 0, %s21
      %s24 = sphi 0, %s22
      %s25 = sphi 0, %s23
      %s26 = sphi 0, %s24
      %s38 = sphi 0, %s40
      %s41 = sphi 0, %s38
      %s42 = sphi 0, %s41
      %s58 = sphi 0, %s42
      %s68 = sphi 0, %s70
      %s71 = sphi 0, %s68
      %s72 = sphi 0, %s71
      %s88 = sphi 0, %s72
      %s94 = sphi 0, %s96
      %s97 = sphi 0, %s94
      %s98 = sphi 0, %s97
      %s114 = sphi 0, %s98
      %s120 = sphi 0, %s122
      %s123 = sphi 0, %s120
      %s124 = sphi 0, %s123
      %s140 = sphi 0, %s124
      %s146 = sphi 0, %s148
      %s149 = sphi 0, %s146
      %s150 = sphi 0, %s149
      %s166 = sphi 0, %s150
    $region4: #{_lambda_.11} parent=1 // loop_header_branch
      %17 = sbr.rel (%p15) target = $region8
    $region5: #{_lambda_.11} parent=1 // loop_body
      %s19 = ssub.s32 %s14, 1
      %s20 = ssub.s32 %s14, 2
      %s27 = sadd.s32 1, %s22
      %p28 = scmp.ge.s32.totalorder %s27, 1
      %s29 = scalar_select %p28, 0, %s27
      %s30 = sadd.s32 1, %s21
      %s31 = scalar_select %p28, %s30, %s21
      %p32 = scmp.ge.s32.totalorder %s31, 2
      %s33 = scalar_select %p32, 0, %s31
      %s34 = ssub.s32 %s21, %s33
      %s35 = ssub.s32 %s22, %s29
      %s36 = sor.u32 %s34, %s35
      %p37 = scmp.eq.s32.totalorder %s36, 0
      %s39 = sadd.s32 %s38, 1
      %s40 = scalar_select %p37, %s38, %s39
      %p43 = pneg %p37
      %p44 = scmp.eq.s32.totalorder %s14, 1
      %p45 = por %p43, %p44
      %p46 = scmp.ne.s32.totalorder %s38, %s41
      %p47 = scmp.eq.s32.totalorder %s14, 0
      %p48 = por %p46, %p47
      %p49 = scmp.ne.s32.totalorder %s38, %s41
      %p50 = scmp.eq.s32.totalorder %s19, 1
      %p51 = por %p49, %p50
      %p52 = scmp.ne.s32.totalorder %s41, %s42
      %p53 = scmp.eq.s32.totalorder %s19, 0
      %p54 = por %p52, %p53
      %p55 = scmp.ne.s32.totalorder %s41, %s42
      %p56 = scmp.eq.s32.totalorder %s20, 1
      %p57 = por %p55, %p56
      %p59 = scmp.ne.s32.totalorder %s42, %s58
      %p60 = scmp.eq.s32.totalorder %s20, 0
      %p61 = por %p59, %p60
      %s62 = sadd.s32 %s21, 2
      %s63 = sadd.s32 %s33, 2
      %s64 = ssub.s32 %s62, %s63
      %s65 = ssub.s32 %s22, %s29
      %s66 = sor.u32 %s64, %s65
      %p67 = scmp.eq.s32.totalorder %s66, 0
      %s69 = sadd.s32 %s68, 1
      %s70 = scalar_select %p67, %s68, %s69
      %p73 = pneg %p67
      %p74 = scmp.eq.s32.totalorder %s14, 1
      %p75 = por %p73, %p74
      %p76 = scmp.ne.s32.totalorder %s68, %s71
      %p77 = scmp.eq.s32.totalorder %s14, 0
      %p78 = por %p76, %p77
      %p79 = scmp.ne.s32.totalorder %s68, %s71
      %p80 = scmp.eq.s32.totalorder %s19, 1
      %p81 = por %p79, %p80
      %p82 = scmp.ne.s32.totalorder %s71, %s72
      %p83 = scmp.eq.s32.totalorder %s19, 0
      %p84 = por %p82, %p83
      %p85 = scmp.ne.s32.totalorder %s71, %s72
      %p86 = scmp.eq.s32.totalorder %s20, 1
      %p87 = por %p85, %p86
      %p89 = scmp.ne.s32.totalorder %s72, %s88
      %p90 = scmp.eq.s32.totalorder %s20, 0
      %p91 = por %p89, %p90
      %s92 = ssub.s32 %s21, %s33
      %p93 = scmp.eq.s32.totalorder %s92, 0
      %s95 = sadd.s32 %s94, 1
      %s96 = scalar_select %p93, %s94, %s95
      %p99 = pneg %p93
      %p100 = scmp.eq.s32.totalorder %s14, 1
      %p101 = por %p99, %p100
      %p102 = scmp.ne.s32.totalorder %s94, %s97
      %p103 = scmp.eq.s32.totalorder %s14, 0
      %p104 = por %p102, %p103
      %p105 = scmp.ne.s32.totalorder %s94, %s97
      %p106 = scmp.eq.s32.totalorder %s19, 1
      %p107 = por %p105, %p106
      %p108 = scmp.ne.s32.totalorder %s97, %s98
      %p109 = scmp.eq.s32.totalorder %s19, 0
      %p110 = por %p108, %p109
      %p111 = scmp.ne.s32.totalorder %s97, %s98
      %p112 = scmp.eq.s32.totalorder %s20, 1
      %p113 = por %p111, %p112
      %p115 = scmp.ne.s32.totalorder %s98, %s114
      %p116 = scmp.eq.s32.totalorder %s20, 0
      %p117 = por %p115, %p116
      %s118 = ssub.s32 %s21, %s33
      %p119 = scmp.eq.s32.totalorder %s118, 0
      %s121 = sadd.s32 %s120, 1
      %s122 = scalar_select %p119, %s120, %s121
      %p125 = pneg %p119
      %p126 = scmp.eq.s32.totalorder %s14, 1
      %p127 = por %p125, %p126
      %p128 = scmp.ne.s32.totalorder %s120, %s123
      %p129 = scmp.eq.s32.totalorder %s14, 0
      %p130 = por %p128, %p129
      %p131 = scmp.ne.s32.totalorder %s120, %s123
      %p132 = scmp.eq.s32.totalorder %s19, 1
      %p133 = por %p131, %p132
      %p134 = scmp.ne.s32.totalorder %s123, %s124
      %p135 = scmp.eq.s32.totalorder %s19, 0
      %p136 = por %p134, %p135
      %p137 = scmp.ne.s32.totalorder %s123, %s124
      %p138 = scmp.eq.s32.totalorder %s20, 1
      %p139 = por %p137, %p138
      %p141 = scmp.ne.s32.totalorder %s124, %s140
      %p142 = scmp.eq.s32.totalorder %s20, 0
      %p143 = por %p141, %p142
      %s144 = ssub.s32 %s21, %s33
      %p145 = scmp.eq.s32.totalorder %s144, 0
      %s147 = sadd.s32 %s146, 1
      %s148 = scalar_select %p145, %s146, %s147
      %p151 = pneg %p145
      %p152 = scmp.eq.s32.totalorder %s14, 1
      %p153 = por %p151, %p152
      %p154 = scmp.ne.s32.totalorder %s146, %s149
      %p155 = scmp.eq.s32.totalorder %s14, 0
      %p156 = por %p154, %p155
      %p157 = scmp.ne.s32.totalorder %s146, %s149
      %p158 = scmp.eq.s32.totalorder %s19, 1
      %p159 = por %p157, %p158
      %p160 = scmp.ne.s32.totalorder %s149, %s150
      %p161 = scmp.eq.s32.totalorder %s19, 0
      %p162 = por %p160, %p161
      %p163 = scmp.ne.s32.totalorder %s149, %s150
      %p164 = scmp.eq.s32.totalorder %s20, 1
      %p165 = por %p163, %p164
      %p167 = scmp.ne.s32.totalorder %s150, %s166
      %p168 = scmp.eq.s32.totalorder %s20, 0
      %p169 = por %p167, %p168
      %p170 = scmp.le.s32.totalorder 1, %s14
      %p171 = scmp.lt.s32.totalorder %s14, 3
      %p172 = pnand %p170, %p171
      %p173 = pneg %p172
      // Predicated region
      $region9: #{_lambda_.11} parent=5 // pred_check
        _
      $region10: #{_lambda_.11} parent=5 // pred_check_branch
        %175 = sbr.rel (%p172) target = $region12
      $region11: #{_lambda_.11} parent=5 // pred_region
        %s176 = ssub.s32 %s14, 1
      $region12: #{_lambda_.11} parent=5 // pred_fallthru
        _
      %p177 = scmp.lt.s32.totalorder %s14, 2
      // Predicated region
      $region13: #{_lambda_.11} parent=5 // pred_check
        %p178 = pneg %p177
      $region14: #{_lambda_.11} parent=5 // pred_check_branch
        %180 = sbr.rel (%p178) target = $region16
      $region15: #{_lambda_.11} parent=5 // pred_region
        // Predicated region
        $region17: #{_lambda_.11} parent=15 // pred_check
          %p181 = pneg %p48
        $region18: #{_lambda_.11} parent=15 // pred_check_branch
          %183 = sbr.rel (%p181) target = $region20
        $region19: #{_lambda_.11} parent=15 // pred_region
          %s184 = smul.u32 8, %s22
          %p185 = scmp.lt.s32.totalorder %s21, 3
          %s186 = scalar_select %p185, %s21, 3
          %p187 = scmp.lt.s32.totalorder %s184, 7
          %s188 = scalar_select %p187, %s184, 7
          %s189 = smul.addr %s186, 8
          %s190 = sadd.s32 %s188, %s189
          %s191 = smul.addr %s190, 4
          %s192 = scalar_lea.vmem %s0, %s191
          %s193 = smul.u32 8, %s22
        $region20: #{_lambda_.11} parent=15 // pred_fallthru
          _
        // Predicated region
        $region21: #{_lambda_.11} parent=15 // pred_check
          %p194 = pneg %p78
        $region22: #{_lambda_.11} parent=15 // pred_check_branch
          %196 = sbr.rel (%p194) target = $region24
        $region23: #{_lambda_.11} parent=15 // pred_region
          %s197 = sadd.s32 %s21, 2
          %s198 = smul.u32 8, %s22
          %p199 = scmp.lt.s32.totalorder %s197, 3
          %s200 = scalar_select %p199, %s197, 3
          %p201 = scmp.lt.s32.totalorder %s198, 7
          %s202 = scalar_select %p201, %s198, 7
          %s203 = smul.addr %s200, 8
          %s204 = sadd.s32 %s202, %s203
          %s205 = smul.addr %s204, 4
          %s206 = scalar_lea.vmem %s1, %s205
          %s207 = sadd.s32 %s21, 2
          %s208 = smul.u32 8, %s22
        $region24: #{_lambda_.11} parent=15 // pred_fallthru
          _
      $region16: #{_lambda_.11} parent=5 // pred_fallthru
        _
      %p209 = scmp.le.s32.totalorder 1, %s14
      %p210 = scmp.lt.s32.totalorder %s14, 3
      %p211 = pnand %p209, %p210
      %p212 = pneg %p211
      // Predicated region
      $region25: #{_lambda_.11} parent=5 // pred_check
        _
      $region26: #{_lambda_.11} parent=5 // pred_check_branch
        %214 = sbr.rel (%p211) target = $region28
      $region27: #{_lambda_.11} parent=5 // pred_region
        %s215 = ssub.s32 %s14, 1
        %s216 = smul.u32 8, %s24
        %p217 = scmp.lt.s32.totalorder %s23, 3
        %s218 = scalar_select %p217, %s23, 3
        %p219 = scmp.lt.s32.totalorder %s216, 7
        %s220 = scalar_select %p219, %s216, 7
        %s221 = smul.addr %s218, 8
        %s222 = sadd.s32 %s220, %s221
        %s223 = smul.addr %s222, 4
        %s224 = scalar_lea.vmem %s0, %s223
        %p225 = pneg %p54
        %p226 = pneg %p51
        %s227 = sadd.s32 %s23, 2
        %s228 = smul.u32 8, %s24
        %p229 = scmp.lt.s32.totalorder %s227, 3
        %s230 = scalar_select %p229, %s227, 3
        %p231 = scmp.lt.s32.totalorder %s228, 7
        %s232 = scalar_select %p231, %s228, 7
        %s233 = smul.addr %s230, 8
        %s234 = sadd.s32 %s232, %s233
        %s235 = smul.addr %s234, 4
        %s236 = scalar_lea.vmem %s1, %s235
        %p237 = pneg %p84
        %p238 = pneg %p81
        %p239 = pneg %p110
        %p240 = pneg %p107
        %p241 = scmp.lt.s32.totalorder %s23, 1
        %s242 = scalar_select %p241, %s23, 1
        %s243 = smul.addr %s242, 16
        %s244 = smul.addr %s243, 8
        %s245 = scalar_lea.vmem %s2, %s244
        %p246 = pneg %p136
        %p247 = pneg %p133
        %p248 = scmp.lt.s32.totalorder %s23, 1
        %s249 = scalar_select %p248, %s23, 1
        %s250 = smul.addr %s249, 16
        %s251 = smul.addr %s250, 8
        %s252 = scalar_lea.vmem %s3, %s251
        %p253 = pneg %p162
        %p254 = pneg %p159
        %s255 = sand.u32 %s149, 1
        %s256 = scalar_lea.sflag [#allocation6], %s255
        %s257 = sand.u32 %s149, 1
        %s258 = scalar_lea.vmem [#allocation5], %s257
        %s259 = smul.u32 8, %s24
        %p260 = scmp.lt.s32.totalorder %s23, 3
        %s261 = scalar_select %p260, %s23, 3
        %p262 = scmp.lt.s32.totalorder %s259, 7
        %s263 = scalar_select %p262, %s259, 7
        %s264 = smul.addr %s261, 8
        %s265 = sadd.s32 %s263, %s264
        %s266 = smul.addr %s265, 4
        %s267 = scalar_lea.vmem %s0, %s266
        %s268 = smul.u32 8, %s24
        %s269 = sadd.s32 %s23, 2
        %s270 = smul.u32 8, %s24
        %p271 = scmp.lt.s32.totalorder %s269, 3
        %s272 = scalar_select %p271, %s269, 3
        %p273 = scmp.lt.s32.totalorder %s270, 7
        %s274 = scalar_select %p273, %s270, 7
        %s275 = smul.addr %s272, 8
        %s276 = sadd.s32 %s274, %s275
        %s277 = smul.addr %s276, 4
        %s278 = scalar_lea.vmem %s1, %s277
        %s279 = sadd.s32 %s23, 2
        %s280 = smul.u32 8, %s24
        %p281 = scmp.lt.s32.totalorder %s23, 1
        %s282 = scalar_select %p281, %s23, 1
        %s283 = smul.addr %s282, 16
        %s284 = smul.addr %s283, 8
        %s285 = scalar_lea.vmem %s2, %s284
        %p286 = scmp.lt.s32.totalorder %s23, 1
        %s287 = scalar_select %p286, %s23, 1
        %s288 = smul.addr %s287, 16
        %s289 = smul.addr %s288, 8
        %s290 = scalar_lea.vmem %s3, %s289
        %p292 = scmp.eq.s32.totalorder %s24, 0
        // Predicated region
        $region29: #{_lambda_.11} parent=27 // pred_check
          %p293 = pneg %p292
        $region30: #{_lambda_.11} parent=27 // pred_check_branch
          %295 = sbr.rel (%p293) target = $region32
        $region31: #{_lambda_.11} parent=27 // pred_region
          %296 = vst [vmem:[#allocation2] sm:$0xff] 0.0
          %297 = vst [vmem:[#allocation2 + $0x8] sm:$0xff] 0.0
          %298 = vst [vmem:[#allocation2 + $0x10] sm:$0xff] 0.0
          %299 = vst [vmem:[#allocation2 + $0x18] sm:$0xff] 0.0
          %300 = vst [vmem:[#allocation2 + $0x20] sm:$0xff] 0.0
          %301 = vst [vmem:[#allocation2 + $0x28] sm:$0xff] 0.0
          %302 = vst [vmem:[#allocation2 + $0x30] sm:$0xff] 0.0
          %303 = vst [vmem:[#allocation2 + $0x38] sm:$0xff] 0.0
          %304 = vst [vmem:[#allocation2 + $0x40] sm:$0xff] 0.0
          %305 = vst [vmem:[#allocation2 + $0x48] sm:$0xff] 0.0
          %306 = vst [vmem:[#allocation2 + $0x50] sm:$0xff] 0.0
          %307 = vst [vmem:[#allocation2 + $0x58] sm:$0xff] 0.0
          %308 = vst [vmem:[#allocation2 + $0x60] sm:$0xff] 0.0
          %309 = vst [vmem:[#allocation2 + $0x68] sm:$0xff] 0.0
          %310 = vst [vmem:[#allocation2 + $0x70] sm:$0xff] 0.0
          %311 = vst [vmem:[#allocation2 + $0x78] sm:$0xff] 0.0
          %312 = vst [vmem:[#allocation3] sm:$0xff] 0.0
          %313 = vst [vmem:[#allocation3 + $0x8] sm:$0xff] 0.0
          %314 = vst [vmem:[#allocation3 + $0x10] sm:$0xff] 0.0
          %315 = vst [vmem:[#allocation3 + $0x18] sm:$0xff] 0.0
          %316 = vst [vmem:[#allocation3 + $0x20] sm:$0xff] 0.0
          %317 = vst [vmem:[#allocation3 + $0x28] sm:$0xff] 0.0
          %318 = vst [vmem:[#allocation3 + $0x30] sm:$0xff] 0.0
          %319 = vst [vmem:[#allocation3 + $0x38] sm:$0xff] 0.0
          %320 = vst [vmem:[#allocation3 + $0x40] sm:$0xff] 0.0
          %321 = vst [vmem:[#allocation3 + $0x48] sm:$0xff] 0.0
          %322 = vst [vmem:[#allocation3 + $0x50] sm:$0xff] 0.0
          %323 = vst [vmem:[#allocation3 + $0x58] sm:$0xff] 0.0
          %324 = vst [vmem:[#allocation3 + $0x60] sm:$0xff] 0.0
          %325 = vst [vmem:[#allocation3 + $0x68] sm:$0xff] 0.0
          %326 = vst [vmem:[#allocation3 + $0x70] sm:$0xff] 0.0
          %327 = vst [vmem:[#allocation3 + $0x78] sm:$0xff] 0.0
          %vm328 = vcmask 0
          %329 = vst.msk [vmem:[#allocation4] sm:$0x1] %vm328, 0.0
        $region32: #{_lambda_.11} parent=27 // pred_fallthru
          _
        %v330 = vld [vmem:[%s267] sm:$0xf]
        %v331 = vld [vmem:[%s267 + $0x4] sm:$0xf]
        %v332 = vld [vmem:[%s267 + $0x8] sm:$0xf]
        %v333 = vld [vmem:[%s267 + $0xc] sm:$0xf]
        %v334 = vld [vmem:[%s267 + $0x10] sm:$0xf]
        %v335 = vld [vmem:[%s267 + $0x14] sm:$0xf]
        %v336 = vld [vmem:[%s267 + $0x18] sm:$0xf]
        %v337 = vld [vmem:[%s267 + $0x1c] sm:$0xf]
        %v338 = vld [vmem:[%s278] sm:$0xf]
        %v339 = vld [vmem:[%s278 + $0x4] sm:$0xf]
        %v340 = vld [vmem:[%s278 + $0x8] sm:$0xf]
        %v341 = vld [vmem:[%s278 + $0xc] sm:$0xf]
        %v342 = vld [vmem:[%s278 + $0x10] sm:$0xf]
        %v343 = vld [vmem:[%s278 + $0x14] sm:$0xf]
        %v344 = vld [vmem:[%s278 + $0x18] sm:$0xf]
        %v345 = vld [vmem:[%s278 + $0x1c] sm:$0xf]
        %v346 = vld [vmem:[#allocation2] sm:$0xff]
        %v347 = vld [vmem:[#allocation2 + $0x8] sm:$0xff]
        %v348 = vld [vmem:[#allocation2 + $0x10] sm:$0xff]
        %v349 = vld [vmem:[#allocation2 + $0x18] sm:$0xff]
        %v350 = vld [vmem:[#allocation2 + $0x20] sm:$0xff]
        %v351 = vld [vmem:[#allocation2 + $0x28] sm:$0xff]
        %v352 = vld [vmem:[#allocation2 + $0x30] sm:$0xff]
        %v353 = vld [vmem:[#allocation2 + $0x38] sm:$0xff]
        %v354 = vld [vmem:[#allocation2 + $0x40] sm:$0xff]
        %v355 = vld [vmem:[#allocation2 + $0x48] sm:$0xff]
        %v356 = vld [vmem:[#allocation2 + $0x50] sm:$0xff]
        %v357 = vld [vmem:[#allocation2 + $0x58] sm:$0xff]
        %v358 = vld [vmem:[#allocation2 + $0x60] sm:$0xff]
        %v359 = vld [vmem:[#allocation2 + $0x68] sm:$0xff]
        %v360 = vld [vmem:[#allocation2 + $0x70] sm:$0xff]
        %v361 = vld [vmem:[#allocation2 + $0x78] sm:$0xff]
        %v370 = vunpack.c.l.b16 %v330
        %v371 = vunpack.c.l.b16 %v331
        %v372 = vunpack.c.l.b16 %v332
        %v373 = vunpack.c.l.b16 %v333
        %v374 = vunpack.c.l.b16 %v334
        %v375 = vunpack.c.l.b16 %v335
        %v376 = vunpack.c.l.b16 %v336
        %v377 = vunpack.c.l.b16 %v337
        %v378 = vpack.c.b16 %v371, %v370
        %v379 = vpack.c.b16 %v373, %v372
        %v380 = vpack.c.b16 %v375, %v374
        %v381 = vpack.c.b16 %v377, %v376
        %386 = vxpose.xlu0.c.b16.start [1/8] %v378, 128
        %387 = vxpose.xlu0.c.b16.cont [2/8] %v379, 128
        %388 = vxpose.xlu0.c.b16.cont [3/8] %v380, 128
        %389 = vxpose.xlu0.c.b16.cont [4/8] %v381, 128
        %390 = vxpose.xlu0.c.b16.cont [5/8] 0, 128
        %391 = vxpose.xlu0.c.b16.cont [6/8] 0, 128
        %392 = vxpose.xlu0.c.b16.cont [7/8] 0, 128
        %393 = vxpose.xlu0.c.b16.end [8/8] 0, 128
        %v394 = vpop.trf.xlu0
        %v395 = vpop.trf.xlu0
        %v396 = vpop.trf.xlu0
        %v397 = vpop.trf.xlu0
        %v398 = vpop.trf.xlu0
        %v399 = vpop.trf.xlu0
        %v400 = vpop.trf.xlu0
        %v401 = vpop.trf.xlu0
        %vm402 = vcmask 523264
        %v404 = vsel %vm402, %v394, 0
        %v407 = vsel %vm402, %v395, 0
        %v410 = vsel %vm402, %v396, 0
        %v413 = vsel %vm402, %v397, 0
        %v416 = vsel %vm402, %v398, 0
        %v419 = vsel %vm402, %v399, 0
        %v422 = vsel %vm402, %v400, 0
        %v425 = vsel %vm402, %v401, 0
        %427 = vmatpush.bf16.msra.mxu0 0
        %428 = vmatpush.bf16.msra.mxu0 0
        %429 = vmatpush.bf16.msra.mxu0 0
        %430 = vmatpush.bf16.msra.mxu0 0
        %431 = vmatpush.bf16.msra.mxu0 %v381
        %432 = vmatpush.bf16.msra.mxu0 %v380
        %433 = vmatpush.bf16.msra.mxu0 %v379
        %434 = vmatpush.bf16.msra.mxu0 %v378
        %435 = vmatmul.bf16.gmra.mxu0 %v404
        %v436 = vpop.f32.mrf.mxu0
        %v437 = vadd.f32 0.0, %v436
        %v438 = vpop.f32.mrf.mxu0
        %v439 = vadd.f32 0.0, %v438
        %440 = vmatmul.bf16.gmra.mxu0 %v407
        %v441 = vpop.f32.mrf.mxu0
        %v442 = vadd.f32 0.0, %v441
        %v443 = vpop.f32.mrf.mxu0
        %v444 = vadd.f32 0.0, %v443
        %445 = vmatmul.bf16.gmra.mxu0 %v410
        %v446 = vpop.f32.mrf.mxu0
        %v447 = vadd.f32 0.0, %v446
        %v448 = vpop.f32.mrf.mxu0
        %v449 = vadd.f32 0.0, %v448
        %450 = vmatmul.bf16.gmra.mxu0 %v413
        %v451 = vpop.f32.mrf.mxu0
        %v452 = vadd.f32 0.0, %v451
        %v453 = vpop.f32.mrf.mxu0
        %v454 = vadd.f32 0.0, %v453
        %455 = vmatmul.bf16.gmra.mxu0 %v416
        %v456 = vpop.f32.mrf.mxu0
        %v457 = vadd.f32 0.0, %v456
        %v458 = vpop.f32.mrf.mxu0
        %v459 = vadd.f32 0.0, %v458
        %460 = vmatmul.bf16.gmra.mxu0 %v419
        %v461 = vpop.f32.mrf.mxu0
        %v462 = vadd.f32 0.0, %v461
        %v463 = vpop.f32.mrf.mxu0
        %v464 = vadd.f32 0.0, %v463
        %465 = vmatmul.bf16.gmra.mxu0 %v422
        %v466 = vpop.f32.mrf.mxu0
        %v467 = vadd.f32 0.0, %v466
        %v468 = vpop.f32.mrf.mxu0
        %v469 = vadd.f32 0.0, %v468
        %470 = vmatmul.bf16.gmra.mxu0 %v425
        %v471 = vpop.f32.mrf.mxu0
        %v472 = vadd.f32 0.0, %v471
        %v473 = vpop.f32.mrf.mxu0
        %v474 = vadd.f32 0.0, %v473
        %475 = vdwg.mxu0
        %v476 = vadd.f32 %v346, %v437
        %v477 = vadd.f32 %v347, %v439
        %v478 = vadd.f32 %v348, %v442
        %v479 = vadd.f32 %v349, %v444
        %v480 = vadd.f32 %v350, %v447
        %v481 = vadd.f32 %v351, %v449
        %v482 = vadd.f32 %v352, %v452
        %v483 = vadd.f32 %v353, %v454
        %v484 = vadd.f32 %v354, %v457
        %v485 = vadd.f32 %v355, %v459
        %v486 = vadd.f32 %v356, %v462
        %v487 = vadd.f32 %v357, %v464
        %v488 = vadd.f32 %v358, %v467
        %v489 = vadd.f32 %v359, %v469
        %v490 = vadd.f32 %v360, %v472
        %v491 = vadd.f32 %v361, %v474
        %492 = vst [vmem:[#allocation2] sm:$0xff] %v476
        %493 = vst [vmem:[#allocation2 + $0x8] sm:$0xff] %v477
        %494 = vst [vmem:[#allocation2 + $0x10] sm:$0xff] %v478
        %495 = vst [vmem:[#allocation2 + $0x18] sm:$0xff] %v479
        %496 = vst [vmem:[#allocation2 + $0x20] sm:$0xff] %v480
        %497 = vst [vmem:[#allocation2 + $0x28] sm:$0xff] %v481
        %498 = vst [vmem:[#allocation2 + $0x30] sm:$0xff] %v482
        %499 = vst [vmem:[#allocation2 + $0x38] sm:$0xff] %v483
        %500 = vst [vmem:[#allocation2 + $0x40] sm:$0xff] %v484
        %501 = vst [vmem:[#allocation2 + $0x48] sm:$0xff] %v485
        %502 = vst [vmem:[#allocation2 + $0x50] sm:$0xff] %v486
        %503 = vst [vmem:[#allocation2 + $0x58] sm:$0xff] %v487
        %504 = vst [vmem:[#allocation2 + $0x60] sm:$0xff] %v488
        %505 = vst [vmem:[#allocation2 + $0x68] sm:$0xff] %v489
        %506 = vst [vmem:[#allocation2 + $0x70] sm:$0xff] %v490
        %507 = vst [vmem:[#allocation2 + $0x78] sm:$0xff] %v491
        %v508 = vld [vmem:[#allocation3] sm:$0xff]
        %v509 = vld [vmem:[#allocation3 + $0x8] sm:$0xff]
        %v510 = vld [vmem:[#allocation3 + $0x10] sm:$0xff]
        %v511 = vld [vmem:[#allocation3 + $0x18] sm:$0xff]
        %v512 = vld [vmem:[#allocation3 + $0x20] sm:$0xff]
        %v513 = vld [vmem:[#allocation3 + $0x28] sm:$0xff]
        %v514 = vld [vmem:[#allocation3 + $0x30] sm:$0xff]
        %v515 = vld [vmem:[#allocation3 + $0x38] sm:$0xff]
        %v516 = vld [vmem:[#allocation3 + $0x40] sm:$0xff]
        %v517 = vld [vmem:[#allocation3 + $0x48] sm:$0xff]
        %v518 = vld [vmem:[#allocation3 + $0x50] sm:$0xff]
        %v519 = vld [vmem:[#allocation3 + $0x58] sm:$0xff]
        %v520 = vld [vmem:[#allocation3 + $0x60] sm:$0xff]
        %v521 = vld [vmem:[#allocation3 + $0x68] sm:$0xff]
        %v522 = vld [vmem:[#allocation3 + $0x70] sm:$0xff]
        %v523 = vld [vmem:[#allocation3 + $0x78] sm:$0xff]
        %v532 = vunpack.c.l.b16 %v338
        %v533 = vunpack.c.l.b16 %v339
        %v534 = vunpack.c.l.b16 %v340
        %v535 = vunpack.c.l.b16 %v341
        %v536 = vunpack.c.l.b16 %v342
        %v537 = vunpack.c.l.b16 %v343
        %v538 = vunpack.c.l.b16 %v344
        %v539 = vunpack.c.l.b16 %v345
        %v540 = vpack.c.b16 %v533, %v532
        %v541 = vpack.c.b16 %v535, %v534
        %v542 = vpack.c.b16 %v537, %v536
        %v543 = vpack.c.b16 %v539, %v538
        %548 = vxpose.xlu0.c.b16.start [1/8] %v540, 128
        %549 = vxpose.xlu0.c.b16.cont [2/8] %v541, 128
        %550 = vxpose.xlu0.c.b16.cont [3/8] %v542, 128
        %551 = vxpose.xlu0.c.b16.cont [4/8] %v543, 128
        %552 = vxpose.xlu0.c.b16.cont [5/8] 0, 128
        %553 = vxpose.xlu0.c.b16.cont [6/8] 0, 128
        %554 = vxpose.xlu0.c.b16.cont [7/8] 0, 128
        %555 = vxpose.xlu0.c.b16.end [8/8] 0, 128
        %v556 = vpop.trf.xlu0
        %v557 = vpop.trf.xlu0
        %v558 = vpop.trf.xlu0
        %v559 = vpop.trf.xlu0
        %v560 = vpop.trf.xlu0
        %v561 = vpop.trf.xlu0
        %v562 = vpop.trf.xlu0
        %v563 = vpop.trf.xlu0
        %v565 = vsel %vm402, %v556, 0
        %v568 = vsel %vm402, %v557, 0
        %v571 = vsel %vm402, %v558, 0
        %v574 = vsel %vm402, %v559, 0
        %v577 = vsel %vm402, %v560, 0
        %v580 = vsel %vm402, %v561, 0
        %v583 = vsel %vm402, %v562, 0
        %v586 = vsel %vm402, %v563, 0
        %588 = vmatpush.bf16.msra.mxu0 0
        %589 = vmatpush.bf16.msra.mxu0 0
        %590 = vmatpush.bf16.msra.mxu0 0
        %591 = vmatpush.bf16.msra.mxu0 0
        %592 = vmatpush.bf16.msra.mxu0 %v543
        %593 = vmatpush.bf16.msra.mxu0 %v542
        %594 = vmatpush.bf16.msra.mxu0 %v541
        %595 = vmatpush.bf16.msra.mxu0 %v540
        %596 = vmatmul.bf16.gmra.mxu0 %v565
        %v597 = vpop.f32.mrf.mxu0
        %v598 = vadd.f32 0.0, %v597
        %v599 = vpop.f32.mrf.mxu0
        %v600 = vadd.f32 0.0, %v599
        %601 = vmatmul.bf16.gmra.mxu0 %v568
        %v602 = vpop.f32.mrf.mxu0
        %v603 = vadd.f32 0.0, %v602
        %v604 = vpop.f32.mrf.mxu0
        %v605 = vadd.f32 0.0, %v604
        %606 = vmatmul.bf16.gmra.mxu0 %v571
        %v607 = vpop.f32.mrf.mxu0
        %v608 = vadd.f32 0.0, %v607
        %v609 = vpop.f32.mrf.mxu0
        %v610 = vadd.f32 0.0, %v609
        %611 = vmatmul.bf16.gmra.mxu0 %v574
        %v612 = vpop.f32.mrf.mxu0
        %v613 = vadd.f32 0.0, %v612
        %v614 = vpop.f32.mrf.mxu0
        %v615 = vadd.f32 0.0, %v614
        %616 = vmatmul.bf16.gmra.mxu0 %v577
        %v617 = vpop.f32.mrf.mxu0
        %v618 = vadd.f32 0.0, %v617
        %v619 = vpop.f32.mrf.mxu0
        %v620 = vadd.f32 0.0, %v619
        %621 = vmatmul.bf16.gmra.mxu0 %v580
        %v622 = vpop.f32.mrf.mxu0
        %v623 = vadd.f32 0.0, %v622
        %v624 = vpop.f32.mrf.mxu0
        %v625 = vadd.f32 0.0, %v624
        %626 = vmatmul.bf16.gmra.mxu0 %v583
        %v627 = vpop.f32.mrf.mxu0
        %v628 = vadd.f32 0.0, %v627
        %v629 = vpop.f32.mrf.mxu0
        %v630 = vadd.f32 0.0, %v629
        %631 = vmatmul.bf16.gmra.mxu0 %v586
        %v632 = vpop.f32.mrf.mxu0
        %v633 = vadd.f32 0.0, %v632
        %v634 = vpop.f32.mrf.mxu0
        %v635 = vadd.f32 0.0, %v634
        %636 = vdwg.mxu0
        %v637 = vadd.f32 %v508, %v598
        %v638 = vadd.f32 %v509, %v600
        %v639 = vadd.f32 %v510, %v603
        %v640 = vadd.f32 %v511, %v605
        %v641 = vadd.f32 %v512, %v608
        %v642 = vadd.f32 %v513, %v610
        %v643 = vadd.f32 %v514, %v613
        %v644 = vadd.f32 %v515, %v615
        %v645 = vadd.f32 %v516, %v618
        %v646 = vadd.f32 %v517, %v620
        %v647 = vadd.f32 %v518, %v623
        %v648 = vadd.f32 %v519, %v625
        %v649 = vadd.f32 %v520, %v628
        %v650 = vadd.f32 %v521, %v630
        %v651 = vadd.f32 %v522, %v633
        %v652 = vadd.f32 %v523, %v635
        %653 = vst [vmem:[#allocation3] sm:$0xff] %v637
        %654 = vst [vmem:[#allocation3 + $0x8] sm:$0xff] %v638
        %655 = vst [vmem:[#allocation3 + $0x10] sm:$0xff] %v639
        %656 = vst [vmem:[#allocation3 + $0x18] sm:$0xff] %v640
        %657 = vst [vmem:[#allocation3 + $0x20] sm:$0xff] %v641
        %658 = vst [vmem:[#allocation3 + $0x28] sm:$0xff] %v642
        %659 = vst [vmem:[#allocation3 + $0x30] sm:$0xff] %v643
        %660 = vst [vmem:[#allocation3 + $0x38] sm:$0xff] %v644
        %661 = vst [vmem:[#allocation3 + $0x40] sm:$0xff] %v645
        %662 = vst [vmem:[#allocation3 + $0x48] sm:$0xff] %v646
        %663 = vst [vmem:[#allocation3 + $0x50] sm:$0xff] %v647
        %664 = vst [vmem:[#allocation3 + $0x58] sm:$0xff] %v648
        %665 = vst [vmem:[#allocation3 + $0x60] sm:$0xff] %v649
        %666 = vst [vmem:[#allocation3 + $0x68] sm:$0xff] %v650
        %667 = vst [vmem:[#allocation3 + $0x70] sm:$0xff] %v651
        %668 = vst [vmem:[#allocation3 + $0x78] sm:$0xff] %v652
        %v669 = vunpack.c.l.bf16 %v330
        %v670 = vunpack.c.l.bf16 %v331
        %v671 = vunpack.c.l.bf16 %v332
        %v672 = vunpack.c.l.bf16 %v333
        %v673 = vunpack.c.l.bf16 %v334
        %v674 = vunpack.c.l.bf16 %v335
        %v675 = vunpack.c.l.bf16 %v336
        %v676 = vunpack.c.l.bf16 %v337
        %v677 = vunpack.c.l.bf16 %v338
        %v678 = vunpack.c.l.bf16 %v339
        %v679 = vunpack.c.l.bf16 %v340
        %v680 = vunpack.c.l.bf16 %v341
        %v681 = vunpack.c.l.bf16 %v342
        %v682 = vunpack.c.l.bf16 %v343
        %v683 = vunpack.c.l.bf16 %v344
        %v684 = vunpack.c.l.bf16 %v345
        %v685 = vsub.f32 %v669, %v677
        %v686 = vsub.f32 %v670, %v678
        %v687 = vsub.f32 %v671, %v679
        %v688 = vsub.f32 %v672, %v680
        %v689 = vsub.f32 %v673, %v681
        %v690 = vsub.f32 %v674, %v682
        %v691 = vsub.f32 %v675, %v683
        %v692 = vsub.f32 %v676, %v684
        %v693 = vld [vmem:[#allocation4] sm:$0x1]
        %v694 = vmul.f32 %v685, %v685
        %v695 = vmul.f32 %v686, %v686
        %v696 = vmul.f32 %v687, %v687
        %v697 = vmul.f32 %v688, %v688
        %v698 = vmul.f32 %v689, %v689
        %v699 = vmul.f32 %v690, %v690
        %v700 = vmul.f32 %v691, %v691
        %v701 = vmul.f32 %v692, %v692
        %v702 = vadd.f32 %v694, %v695
        %v703 = vadd.f32 %v702, %v696
        %v704 = vadd.f32 %v703, %v697
        %v705 = vadd.f32 %v704, %v698
        %v706 = vadd.f32 %v705, %v699
        %v707 = vadd.f32 %v706, %v700
        %v708 = vadd.f32 %v707, %v701
        %709 = vadd.xlane.f32.xlu0 %v708
        %v710 = vpop.xlane.xlu0 %709
        %v711 = vrot.slane %v710, 4
        %v712 = vadd.f32 %v710, %v711
        %v713 = vrot.slane %v712, 2
        %v714 = vadd.f32 %v712, %v713
        %v715 = vrot.slane %v714, 1
        %v716 = vadd.f32 %v714, %v715
        %s717 = vtos %v716
        %v718 = vstv %s717
        %v719 = vadd.f32 %v693, %v718
        %vm720 = vcmask 0
        %721 = vst.msk [vmem:[#allocation4] sm:$0x1] %vm720, %v719
        // Predicated region
        $region33: #{_lambda_.11} parent=27 // pred_check
          %p722 = pneg %p292
        $region34: #{_lambda_.11} parent=27 // pred_check_branch
          %724 = sbr.rel (%p722) target = $region36
        $region35: #{_lambda_.11} parent=27 // pred_region
          %v725 = vld [vmem:[#allocation2] sm:$0xff]
          %v726 = vld [vmem:[#allocation2 + $0x8] sm:$0xff]
          %v727 = vld [vmem:[#allocation2 + $0x10] sm:$0xff]
          %v728 = vld [vmem:[#allocation2 + $0x18] sm:$0xff]
          %v729 = vld [vmem:[#allocation2 + $0x20] sm:$0xff]
          %v730 = vld [vmem:[#allocation2 + $0x28] sm:$0xff]
          %v731 = vld [vmem:[#allocation2 + $0x30] sm:$0xff]
          %v732 = vld [vmem:[#allocation2 + $0x38] sm:$0xff]
          %v733 = vld [vmem:[#allocation2 + $0x40] sm:$0xff]
          %v734 = vld [vmem:[#allocation2 + $0x48] sm:$0xff]
          %v735 = vld [vmem:[#allocation2 + $0x50] sm:$0xff]
          %v736 = vld [vmem:[#allocation2 + $0x58] sm:$0xff]
          %v737 = vld [vmem:[#allocation2 + $0x60] sm:$0xff]
          %v738 = vld [vmem:[#allocation2 + $0x68] sm:$0xff]
          %v739 = vld [vmem:[#allocation2 + $0x70] sm:$0xff]
          %v740 = vld [vmem:[#allocation2 + $0x78] sm:$0xff]
          %v741 = vmul.f32 %v725, 0.00012207031
          %v742 = vmul.f32 %v726, 0.00012207031
          %v743 = vmul.f32 %v727, 0.00012207031
          %v744 = vmul.f32 %v728, 0.00012207031
          %v745 = vmul.f32 %v729, 0.00012207031
          %v746 = vmul.f32 %v730, 0.00012207031
          %v747 = vmul.f32 %v731, 0.00012207031
          %v748 = vmul.f32 %v732, 0.00012207031
          %v749 = vmul.f32 %v733, 0.00012207031
          %v750 = vmul.f32 %v734, 0.00012207031
          %v751 = vmul.f32 %v735, 0.00012207031
          %v752 = vmul.f32 %v736, 0.00012207031
          %v753 = vmul.f32 %v737, 0.00012207031
          %v754 = vmul.f32 %v738, 0.00012207031
          %v755 = vmul.f32 %v739, 0.00012207031
          %v756 = vmul.f32 %v740, 0.00012207031
          %757 = vst [vmem:[%s285] sm:$0xff] %v741
          %758 = vst [vmem:[%s285 + $0x8] sm:$0xff] %v742
          %759 = vst [vmem:[%s285 + $0x10] sm:$0xff] %v743
          %760 = vst [vmem:[%s285 + $0x18] sm:$0xff] %v744
          %761 = vst [vmem:[%s285 + $0x20] sm:$0xff] %v745
          %762 = vst [vmem:[%s285 + $0x28] sm:$0xff] %v746
          %763 = vst [vmem:[%s285 + $0x30] sm:$0xff] %v747
          %764 = vst [vmem:[%s285 + $0x38] sm:$0xff] %v748
          %765 = vst [vmem:[%s285 + $0x40] sm:$0xff] %v749
          %766 = vst [vmem:[%s285 + $0x48] sm:$0xff] %v750
          %767 = vst [vmem:[%s285 + $0x50] sm:$0xff] %v751
          %768 = vst [vmem:[%s285 + $0x58] sm:$0xff] %v752
          %769 = vst [vmem:[%s285 + $0x60] sm:$0xff] %v753
          %770 = vst [vmem:[%s285 + $0x68] sm:$0xff] %v754
          %771 = vst [vmem:[%s285 + $0x70] sm:$0xff] %v755
          %772 = vst [vmem:[%s285 + $0x78] sm:$0xff] %v756
          %v773 = vld [vmem:[#allocation3] sm:$0xff]
          %v774 = vld [vmem:[#allocation3 + $0x8] sm:$0xff]
          %v775 = vld [vmem:[#allocation3 + $0x10] sm:$0xff]
          %v776 = vld [vmem:[#allocation3 + $0x18] sm:$0xff]
          %v777 = vld [vmem:[#allocation3 + $0x20] sm:$0xff]
          %v778 = vld [vmem:[#allocation3 + $0x28] sm:$0xff]
          %v779 = vld [vmem:[#allocation3 + $0x30] sm:$0xff]
          %v780 = vld [vmem:[#allocation3 + $0x38] sm:$0xff]
          %v781 = vld [vmem:[#allocation3 + $0x40] sm:$0xff]
          %v782 = vld [vmem:[#allocation3 + $0x48] sm:$0xff]
          %v783 = vld [vmem:[#allocation3 + $0x50] sm:$0xff]
          %v784 = vld [vmem:[#allocation3 + $0x58] sm:$0xff]
          %v785 = vld [vmem:[#allocation3 + $0x60] sm:$0xff]
          %v786 = vld [vmem:[#allocation3 + $0x68] sm:$0xff]
          %v787 = vld [vmem:[#allocation3 + $0x70] sm:$0xff]
          %v788 = vld [vmem:[#allocation3 + $0x78] sm:$0xff]
          %v789 = vmul.f32 %v773, 0.00012207031
          %v790 = vmul.f32 %v774, 0.00012207031
          %v791 = vmul.f32 %v775, 0.00012207031
          %v792 = vmul.f32 %v776, 0.00012207031
          %v793 = vmul.f32 %v777, 0.00012207031
          %v794 = vmul.f32 %v778, 0.00012207031
          %v795 = vmul.f32 %v779, 0.00012207031
          %v796 = vmul.f32 %v780, 0.00012207031
          %v797 = vmul.f32 %v781, 0.00012207031
          %v798 = vmul.f32 %v782, 0.00012207031
          %v799 = vmul.f32 %v783, 0.00012207031
          %v800 = vmul.f32 %v784, 0.00012207031
          %v801 = vmul.f32 %v785, 0.00012207031
          %v802 = vmul.f32 %v786, 0.00012207031
          %v803 = vmul.f32 %v787, 0.00012207031
          %v804 = vmul.f32 %v788, 0.00012207031
          %805 = vst [vmem:[%s290] sm:$0xff] %v789
          %806 = vst [vmem:[%s290 + $0x8] sm:$0xff] %v790
          %807 = vst [vmem:[%s290 + $0x10] sm:$0xff] %v791
          %808 = vst [vmem:[%s290 + $0x18] sm:$0xff] %v792
          %809 = vst [vmem:[%s290 + $0x20] sm:$0xff] %v793
          %810 = vst [vmem:[%s290 + $0x28] sm:$0xff] %v794
          %811 = vst [vmem:[%s290 + $0x30] sm:$0xff] %v795
          %812 = vst [vmem:[%s290 + $0x38] sm:$0xff] %v796
          %813 = vst [vmem:[%s290 + $0x40] sm:$0xff] %v797
          %814 = vst [vmem:[%s290 + $0x48] sm:$0xff] %v798
          %815 = vst [vmem:[%s290 + $0x50] sm:$0xff] %v799
          %816 = vst [vmem:[%s290 + $0x58] sm:$0xff] %v800
          %817 = vst [vmem:[%s290 + $0x60] sm:$0xff] %v801
          %818 = vst [vmem:[%s290 + $0x68] sm:$0xff] %v802
          %819 = vst [vmem:[%s290 + $0x70] sm:$0xff] %v803
          %820 = vst [vmem:[%s290 + $0x78] sm:$0xff] %v804
          %v821 = vld [vmem:[#allocation4] sm:$0x1]
          %822 = vst.msk [vmem:[%s258] sm:$0x1] %vm720, %v821
        $region36: #{_lambda_.11} parent=27 // pred_fallthru
          _
        %p823 = scmp.lt.s32.totalorder %s23, 1
        %s824 = scalar_select %p823, %s23, 1
        %s825 = smul.addr %s824, 16
        %s826 = smul.addr %s825, 8
        %s827 = scalar_lea.vmem %s2, %s826
        %p828 = scmp.lt.s32.totalorder %s23, 1
        %s829 = scalar_select %p828, %s23, 1
        %s830 = smul.addr %s829, 16
        %s831 = smul.addr %s830, 8
        %s832 = scalar_lea.vmem %s3, %s831
        %s833 = sand.u32 %s149, 1
        %s834 = scalar_lea.sflag [#allocation6], %s833
        %s835 = sand.u32 %s149, 1
        %s836 = scalar_lea.vmem [#allocation5], %s835
        // Predicated region
        $region37: #{_lambda_.11} parent=27 // pred_check
          %p837 = pneg %p107
        $region38: #{_lambda_.11} parent=27 // pred_check_branch
          %839 = sbr.rel (%p837) target = $region40
        $region39: #{_lambda_.11} parent=27 // pred_region
          _
        $region40: #{_lambda_.11} parent=27 // pred_fallthru
          _
        // Predicated region
        $region41: #{_lambda_.11} parent=27 // pred_check
          %p840 = pneg %p133
        $region42: #{_lambda_.11} parent=27 // pred_check_branch
          %842 = sbr.rel (%p840) target = $region44
        $region43: #{_lambda_.11} parent=27 // pred_region
          _
        $region44: #{_lambda_.11} parent=27 // pred_fallthru
          _
        // Predicated region
        $region45: #{_lambda_.11} parent=27 // pred_check
          %p843 = pneg %p159
        $region46: #{_lambda_.11} parent=27 // pred_check_branch
          %845 = sbr.rel (%p843) target = $region48
        $region47: #{_lambda_.11} parent=27 // pred_region
          %847 = vsyncadd %s834, 0
          %s848 = scalar_lea.hbm %s4, %s23
          %s850 = sshll.u32 %s836, 4
          %s851 = int_to_ptr.vmem [resolvable:$true] %s850
          %s852 = sshll.u32 %s848, 4
          %s853 = int_to_ptr.hbm [resolvable:$true] %s852
          %855 = dma.vmem_to_hbm [thread:$0]  %s851, 16, %s853, %s834
        $region48: #{_lambda_.11} parent=27 // pred_fallthru
          _
      $region28: #{_lambda_.11} parent=5 // pred_fallthru
        _
      %p856 = scmp.le.s32.totalorder 2, %s14
      // Predicated region
      $region49: #{_lambda_.11} parent=5 // pred_check
        %p857 = pneg %p856
      $region50: #{_lambda_.11} parent=5 // pred_check_branch
        %859 = sbr.rel (%p857) target = $region52
      $region51: #{_lambda_.11} parent=5 // pred_region
        %s860 = ssub.s32 %s14, 2
        // Predicated region
        $region53: #{_lambda_.11} parent=51 // pred_check
          %p861 = pneg %p113
        $region54: #{_lambda_.11} parent=51 // pred_check_branch
          %863 = sbr.rel (%p861) target = $region56
        $region55: #{_lambda_.11} parent=51 // pred_region
          %p864 = scmp.lt.s32.totalorder %s25, 1
          %s865 = scalar_select %p864, %s25, 1
          %s866 = smul.addr %s865, 16
          %s867 = smul.addr %s866, 8
          %s868 = scalar_lea.vmem %s2, %s867
        $region56: #{_lambda_.11} parent=51 // pred_fallthru
          _
        // Predicated region
        $region57: #{_lambda_.11} parent=51 // pred_check
          %p869 = pneg %p139
        $region58: #{_lambda_.11} parent=51 // pred_check_branch
          %871 = sbr.rel (%p869) target = $region60
        $region59: #{_lambda_.11} parent=51 // pred_region
          %p872 = scmp.lt.s32.totalorder %s25, 1
          %s873 = scalar_select %p872, %s25, 1
          %s874 = smul.addr %s873, 16
          %s875 = smul.addr %s874, 8
          %s876 = scalar_lea.vmem %s3, %s875
        $region60: #{_lambda_.11} parent=51 // pred_fallthru
          _
        // Predicated region
        $region61: #{_lambda_.11} parent=51 // pred_check
          %p877 = pneg %p165
        $region62: #{_lambda_.11} parent=51 // pred_check_branch
          %879 = sbr.rel (%p877) target = $region64
        $region63: #{_lambda_.11} parent=51 // pred_region
          %s880 = sand.u32 %s150, 1
          %s881 = scalar_lea.sflag [#allocation6], %s880
          %s882 = sand.u32 %s150, 1
          %s883 = scalar_lea.vmem [#allocation5], %s882
          %885 = dma.done %s881, 16
        $region64: #{_lambda_.11} parent=51 // pred_fallthru
          _
      $region52: #{_lambda_.11} parent=5 // pred_fallthru
        _
    $region6: #{_lambda_.11} parent=1 // loop_footer
      %s18 = sadd.s32 1, %s14
    $region7: #{_lambda_.11} parent=1 // loop_footer_branch
      %13 = sbr.rel target = $region3
    $region8: #{_lambda_.11} parent=1 // loop_exit
      _
    %886 = vsyncpa [#allocation6], 1
    %s887 = scalar_lea.sflag [#allocation6], 1
    %888 = vsyncpa %s887, 1

// kernel: _lambda_.9
$region0: #{_lambda_.9}
  #allocation0 [shape = 'u32[]', space=smem, size = 0x4, offset = 0x4, fixed_abs, tag = 'smem constant byte address 0x4 - core index']
  #allocation1 [shape = 'u32[72,128]{1,0:T(1,128)}', space=vmem, size = 0x9000, scoped, tag = 'internal scratch']
  #allocation2 [shape = 'bf16[10,10,128]{2,1,0:T(8,128)(2,1)}', space=vmem, size = 0xa000, scoped, tag = 'scratch operand']
  %s0 = inlined_call_operand.vmem [shape: bf16[4,10,10,128], index: 0, kind: input, shape index: {}, may-alias: {0,1}]
  %s1 = inlined_call_operand.vmem [shape: bf16[4,10,10,128], index: 1, kind: input, shape index: {}, may-alias: {0,1}]
  %s2 = inlined_call_operand.vmem [shape: bf16[3,3,128,128], index: 2, kind: input, shape index: {}]
  %s3 = inlined_call_operand.vmem [shape: f32[1,128], index: 3, kind: input, shape index: {}]
  %s4 = inlined_call_operand.vmem [shape: bf16[4,8,8,128], index: 4, kind: output, shape index: {}]
  %s5 = sld [smem:[#allocation0]]
  $region49: #{_lambda_.9} parent=0
    _
  %s7 = ssub.s32 1, %s5
  %s8 = scalar_select 0, %s7, %s5
  loop: start=0, step=1, limit=6
  $region2: #{_lambda_.9} parent=0 // loop_pre_header
    _
  $region3: #{_lambda_.9} parent=0 // loop_header
    %s10 = sphi 0, %s14
    %p11 = scmp.ge.s32.totalorder %s10, 6
    %s17 = sphi 0, %s29
    %s18 = sphi 0, %s25
    %s19 = sphi 0, %s17
    %s20 = sphi 0, %s18
    %s21 = sphi 0, %s19
    %s22 = sphi 0, %s20
    %s34 = sphi 0, %s36
    %s37 = sphi 0, %s34
    %s38 = sphi 0, %s37
    %s54 = sphi 0, %s38
    %s66 = sphi 0, %s68
    %s69 = sphi 0, %s66
    %s70 = sphi 0, %s69
    %s86 = sphi 0, %s70
    %s90 = sphi 0, %s90
    %s92 = sphi 0, %s90
    %s93 = sphi 0, %s92
    %s107 = sphi 0, %s93
    %s111 = sphi 0, %s111
    %s113 = sphi 0, %s111
    %s114 = sphi 0, %s113
    %s128 = sphi 0, %s114
    %s136 = sphi 0, %s138
    %s139 = sphi 0, %s136
    %s140 = sphi 0, %s139
    %s156 = sphi 0, %s140
  $region4: #{_lambda_.9} parent=0 // loop_header_branch
    %13 = sbr.rel (%p11) target = $region8
  $region5: #{_lambda_.9} parent=0 // loop_body
    %s15 = ssub.s32 %s10, 1
    %s16 = ssub.s32 %s10, 2
    %s23 = sadd.s32 1, %s18
    %p24 = scmp.ge.s32.totalorder %s23, 1
    %s25 = scalar_select %p24, 0, %s23
    %s26 = sadd.s32 1, %s17
    %s27 = scalar_select %p24, %s26, %s17
    %p28 = scmp.ge.s32.totalorder %s27, 4
    %s29 = scalar_select %p28, 0, %s27
    %s30 = ssub.s32 %s17, %s29
    %s31 = ssub.s32 %s18, %s25
    %s32 = sor.u32 %s30, %s31
    %p33 = scmp.eq.s32.totalorder %s32, 0
    %s35 = sadd.s32 %s34, 1
    %s36 = scalar_select %p33, %s34, %s35
    %p39 = pneg %p33
    %p40 = scmp.eq.s32.totalorder %s10, 3
    %p41 = por %p39, %p40
    %p42 = scmp.ne.s32.totalorder %s34, %s37
    %p43 = scmp.eq.s32.totalorder %s10, 0
    %p44 = por %p42, %p43
    %p45 = scmp.ne.s32.totalorder %s34, %s37
    %p46 = scmp.eq.s32.totalorder %s15, 3
    %p47 = por %p45, %p46
    %p48 = scmp.ne.s32.totalorder %s37, %s38
    %p49 = scmp.eq.s32.totalorder %s15, 0
    %p50 = por %p48, %p49
    %p51 = scmp.ne.s32.totalorder %s37, %s38
    %p52 = scmp.eq.s32.totalorder %s16, 3
    %p53 = por %p51, %p52
    %p55 = scmp.ne.s32.totalorder %s38, %s54
    %p56 = scmp.eq.s32.totalorder %s16, 0
    %p57 = por %p55, %p56
    %s58 = sadd.s32 %s18, 1
    %s59 = smul.u32 %s58, 4
    %s60 = sadd.s32 %s25, 1
    %s61 = smul.u32 %s60, 4
    %s62 = ssub.s32 %s17, %s29
    %s63 = ssub.s32 %s59, %s61
    %s64 = sor.u32 %s62, %s63
    %p65 = scmp.eq.s32.totalorder %s64, 0
    %s67 = sadd.s32 %s66, 1
    %s68 = scalar_select %p65, %s66, %s67
    %p71 = pneg %p65
    %p72 = scmp.eq.s32.totalorder %s10, 3
    %p73 = por %p71, %p72
    %p74 = scmp.ne.s32.totalorder %s66, %s69
    %p75 = scmp.eq.s32.totalorder %s10, 0
    %p76 = por %p74, %p75
    %p77 = scmp.ne.s32.totalorder %s66, %s69
    %p78 = scmp.eq.s32.totalorder %s15, 3
    %p79 = por %p77, %p78
    %p80 = scmp.ne.s32.totalorder %s69, %s70
    %p81 = scmp.eq.s32.totalorder %s15, 0
    %p82 = por %p80, %p81
    %p83 = scmp.ne.s32.totalorder %s69, %s70
    %p84 = scmp.eq.s32.totalorder %s16, 3
    %p85 = por %p83, %p84
    %p87 = scmp.ne.s32.totalorder %s70, %s86
    %p88 = scmp.eq.s32.totalorder %s16, 0
    %p89 = por %p87, %p88
    %s91 = sadd.s32 %s90, 1
    %p94 = scmp.eq.s32.totalorder %s10, 3
    %p95 = scmp.ne.s32.totalorder %s90, %s92
    %p96 = scmp.eq.s32.totalorder %s10, 0
    %p97 = por %p95, %p96
    %p98 = scmp.ne.s32.totalorder %s90, %s92
    %p99 = scmp.eq.s32.totalorder %s15, 3
    %p100 = por %p98, %p99
    %p101 = scmp.ne.s32.totalorder %s92, %s93
    %p102 = scmp.eq.s32.totalorder %s15, 0
    %p103 = por %p101, %p102
    %p104 = scmp.ne.s32.totalorder %s92, %s93
    %p105 = scmp.eq.s32.totalorder %s16, 3
    %p106 = por %p104, %p105
    %p108 = scmp.ne.s32.totalorder %s93, %s107
    %p109 = scmp.eq.s32.totalorder %s16, 0
    %p110 = por %p108, %p109
    %s112 = sadd.s32 %s111, 1
    %p115 = scmp.eq.s32.totalorder %s10, 3
    %p116 = scmp.ne.s32.totalorder %s111, %s113
    %p117 = scmp.eq.s32.totalorder %s10, 0
    %p118 = por %p116, %p117
    %p119 = scmp.ne.s32.totalorder %s111, %s113
    %p120 = scmp.eq.s32.totalorder %s15, 3
    %p121 = por %p119, %p120
    %p122 = scmp.ne.s32.totalorder %s113, %s114
    %p123 = scmp.eq.s32.totalorder %s15, 0
    %p124 = por %p122, %p123
    %p125 = scmp.ne.s32.totalorder %s113, %s114
    %p126 = scmp.eq.s32.totalorder %s16, 3
    %p127 = por %p125, %p126
    %p129 = scmp.ne.s32.totalorder %s114, %s128
    %p130 = scmp.eq.s32.totalorder %s16, 0
    %p131 = por %p129, %p130
    %s132 = ssub.s32 %s17, %s29
    %s133 = ssub.s32 %s18, %s25
    %s134 = sor.u32 %s132, %s133
    %p135 = scmp.eq.s32.totalorder %s134, 0
    %s137 = sadd.s32 %s136, 1
    %s138 = scalar_select %p135, %s136, %s137
    %p141 = pneg %p135
    %p142 = scmp.eq.s32.totalorder %s10, 3
    %p143 = por %p141, %p142
    %p144 = scmp.ne.s32.totalorder %s136, %s139
    %p145 = scmp.eq.s32.totalorder %s10, 0
    %p146 = por %p144, %p145
    %p147 = scmp.ne.s32.totalorder %s136, %s139
    %p148 = scmp.eq.s32.totalorder %s15, 3
    %p149 = por %p147, %p148
    %p150 = scmp.ne.s32.totalorder %s139, %s140
    %p151 = scmp.eq.s32.totalorder %s15, 0
    %p152 = por %p150, %p151
    %p153 = scmp.ne.s32.totalorder %s139, %s140
    %p154 = scmp.eq.s32.totalorder %s16, 3
    %p155 = por %p153, %p154
    %p157 = scmp.ne.s32.totalorder %s140, %s156
    %p158 = scmp.eq.s32.totalorder %s16, 0
    %p159 = por %p157, %p158
    %p160 = scmp.le.s32.totalorder 1, %s10
    %p161 = scmp.lt.s32.totalorder %s10, 5
    %p162 = pnand %p160, %p161
    %p163 = pneg %p162
    // Predicated region
    $region9: #{_lambda_.9} parent=5 // pred_check
      _
    $region10: #{_lambda_.9} parent=5 // pred_check_branch
      %165 = sbr.rel (%p162) target = $region12
    $region11: #{_lambda_.9} parent=5 // pred_region
      %s166 = ssub.s32 %s10, 1
      // Predicated region
      $region13: #{_lambda_.9} parent=11 // pred_check
        %p167 = pneg %p103
      $region14: #{_lambda_.9} parent=11 // pred_check_branch
        %169 = sbr.rel (%p167) target = $region16
      $region15: #{_lambda_.9} parent=11 // pred_region
        _
      $region16: #{_lambda_.9} parent=11 // pred_fallthru
        _
      // Predicated region
      $region17: #{_lambda_.9} parent=11 // pred_check
        %p170 = pneg %p124
      $region18: #{_lambda_.9} parent=11 // pred_check_branch
        %172 = sbr.rel (%p170) target = $region20
      $region19: #{_lambda_.9} parent=11 // pred_region
        _
      $region20: #{_lambda_.9} parent=11 // pred_fallthru
        _
    $region12: #{_lambda_.9} parent=5 // pred_fallthru
      _
    %p173 = scmp.lt.s32.totalorder %s10, 4
    // Predicated region
    $region21: #{_lambda_.9} parent=5 // pred_check
      %p174 = pneg %p173
    $region22: #{_lambda_.9} parent=5 // pred_check_branch
      %176 = sbr.rel (%p174) target = $region24
    $region23: #{_lambda_.9} parent=5 // pred_region
      // Predicated region
      $region25: #{_lambda_.9} parent=23 // pred_check
        %p177 = pneg %p44
      $region26: #{_lambda_.9} parent=23 // pred_check_branch
        %179 = sbr.rel (%p177) target = $region28
      $region27: #{_lambda_.9} parent=23 // pred_region
        %s180 = smul.u32 8, %s18
        %s181 = ssub.s32 10, %s180
        %p182 = scmp.lt.s32.totalorder %s181, 8
        %s183 = scalar_select %p182, %s181, 8
        %s184 = smul.u32 4, %s183
        %s185 = smul.u32 %s184, 2
        %p186 = scmp.lt.s32.totalorder %s17, 3
        %s187 = scalar_select %p186, %s17, 3
        %p188 = scmp.lt.s32.totalorder %s180, 9
        %s189 = scalar_select %p188, %s180, 9
        %s190 = smul.addr %s189, 2
        %s191 = smul.addr %s187, 20
        %s192 = sadd.s32 %s190, %s191
        %s193 = smul.addr %s192, 4
        %s194 = scalar_lea.vmem %s0, %s193
        %s195 = smul.u32 8, %s18
        %s196 = ssub.s32 10, %s195
        %p197 = scmp.lt.s32.totalorder %s196, 8
        %s198 = scalar_select %p197, %s196, 8
        %s199 = smul.u32 4, %s198
        %s200 = smul.u32 %s199, 2
      $region28: #{_lambda_.9} parent=23 // pred_fallthru
        _
      // Predicated region
      $region29: #{_lambda_.9} parent=23 // pred_check
        %p201 = pneg %p76
      $region30: #{_lambda_.9} parent=23 // pred_check_branch
        %203 = sbr.rel (%p201) target = $region32
      $region31: #{_lambda_.9} parent=23 // pred_region
        %s204 = sadd.s32 %s18, 1
        %s205 = smul.u32 %s204, 4
        %s206 = smul.u32 2, %s205
        %p207 = scmp.lt.s32.totalorder %s17, 3
        %s208 = scalar_select %p207, %s17, 3
        %p209 = scmp.lt.s32.totalorder %s206, 9
        %s210 = scalar_select %p209, %s206, 9
        %s211 = smul.addr %s210, 2
        %s212 = smul.addr %s208, 20
        %s213 = sadd.s32 %s211, %s212
        %s214 = smul.addr %s213, 4
        %s215 = scalar_lea.vmem %s1, %s214
        %s216 = sadd.s32 %s18, 1
        %s217 = smul.u32 %s216, 4
        %s218 = smul.u32 2, %s217
      $region32: #{_lambda_.9} parent=23 // pred_fallthru
        _
    $region24: #{_lambda_.9} parent=5 // pred_fallthru
      _
    %p219 = scmp.le.s32.totalorder 1, %s10
    %p220 = scmp.lt.s32.totalorder %s10, 5
    %p221 = pnand %p219, %p220
    %p222 = pneg %p221
    // Predicated region
    $region33: #{_lambda_.9} parent=5 // pred_check
      _
    $region34: #{_lambda_.9} parent=5 // pred_check_branch
      %224 = sbr.rel (%p221) target = $region36
    $region35: #{_lambda_.9} parent=5 // pred_region
      %s225 = ssub.s32 %s10, 1
      %s226 = smul.u32 8, %s20
      %s227 = ssub.s32 10, %s226
      %p228 = scmp.lt.s32.totalorder %s227, 8
      %s229 = scalar_select %p228, %s227, 8
      %s230 = smul.u32 4, %s229
      %s231 = smul.u32 %s230, 2
      %p232 = scmp.lt.s32.totalorder %s19, 3
      %s233 = scalar_select %p232, %s19, 3
      %p234 = scmp.lt.s32.totalorder %s226, 9
      %s235 = scalar_select %p234, %s226, 9
      %s236 = smul.addr %s235, 2
      %s237 = smul.addr %s233, 20
      %s238 = sadd.s32 %s236, %s237
      %s239 = smul.addr %s238, 4
      %s240 = scalar_lea.vmem %s0, %s239
      %p241 = pneg %p50
      %p242 = pneg %p47
      %s243 = sadd.s32 %s20, 1
      %s244 = smul.u32 %s243, 4
      %s245 = smul.u32 2, %s244
      %p246 = scmp.lt.s32.totalorder %s19, 3
      %s247 = scalar_select %p246, %s19, 3
      %p248 = scmp.lt.s32.totalorder %s245, 9
      %s249 = scalar_select %p248, %s245, 9
      %s250 = smul.addr %s249, 2
      %s251 = smul.addr %s247, 20
      %s252 = sadd.s32 %s250, %s251
      %s253 = smul.addr %s252, 4
      %s254 = scalar_lea.vmem %s1, %s253
      %p255 = pneg %p82
      %p256 = pneg %p79
      %p257 = pneg %p103
      %p258 = pneg %p100
      %p259 = pneg %p124
      %p260 = pneg %p121
      %p261 = pneg %p152
      %p262 = pneg %p149
      %s263 = smul.u32 8, %s20
      %p264 = scmp.lt.s32.totalorder %s19, 3
      %s265 = scalar_select %p264, %s19, 3
      %p266 = scmp.lt.s32.totalorder %s263, 7
      %s267 = scalar_select %p266, %s263, 7
      %s268 = smul.addr %s265, 8
      %s269 = sadd.s32 %s267, %s268
      %s270 = smul.addr %s269, 4
      %s271 = scalar_lea.vmem %s4, %s270
      %s272 = smul.u32 8, %s20
      %s273 = ssub.s32 10, %s272
      %p274 = scmp.lt.s32.totalorder %s273, 8
      %s275 = scalar_select %p274, %s273, 8
      %s276 = smul.u32 4, %s275
      %s277 = smul.u32 %s276, 2
      %p278 = scmp.lt.s32.totalorder %s19, 3
      %s279 = scalar_select %p278, %s19, 3
      %p280 = scmp.lt.s32.totalorder %s272, 9
      %s281 = scalar_select %p280, %s272, 9
      %s282 = smul.addr %s281, 2
      %s283 = smul.addr %s279, 20
      %s284 = sadd.s32 %s282, %s283
      %s285 = smul.addr %s284, 4
      %s286 = scalar_lea.vmem %s0, %s285
      %s287 = smul.u32 8, %s20
      %s288 = ssub.s32 10, %s287
      %p289 = scmp.lt.s32.totalorder %s288, 8
      %s290 = scalar_select %p289, %s288, 8
      %s291 = smul.u32 4, %s290
      %s292 = smul.u32 %s291, 2
      %s293 = sadd.s32 %s20, 1
      %s294 = smul.u32 %s293, 4
      %s295 = smul.u32 2, %s294
      %p296 = scmp.lt.s32.totalorder %s19, 3
      %s297 = scalar_select %p296, %s19, 3
      %p298 = scmp.lt.s32.totalorder %s295, 9
      %s299 = scalar_select %p298, %s295, 9
      %s300 = smul.addr %s299, 2
      %s301 = smul.addr %s297, 20
      %s302 = sadd.s32 %s300, %s301
      %s303 = smul.addr %s302, 4
      %s304 = scalar_lea.vmem %s1, %s303
      %s305 = sadd.s32 %s20, 1
      %s306 = smul.u32 %s305, 4
      %s307 = smul.u32 2, %s306
      %s308 = smul.u32 8, %s20
      %p309 = scmp.lt.s32.totalorder %s19, 3
      %s310 = scalar_select %p309, %s19, 3
      %p311 = scmp.lt.s32.totalorder %s308, 7
      %s312 = scalar_select %p311, %s308, 7
      %s313 = smul.addr %s310, 8
      %s314 = sadd.s32 %s312, %s313
      %s315 = smul.addr %s314, 4
      %s316 = scalar_lea.vmem %s4, %s315
      %s317 = smul.u32 8, %s20
      %v318 = vld [vmem:[%s286] sm:$0xf]
      %v319 = vld [vmem:[%s286 + $0x4] sm:$0x1]
      %v320 = vld [vmem:[%s286 + $0x8] sm:$0xf]
      %v321 = vld [vmem:[%s286 + $0xc] sm:$0x1]
      %v322 = vld [vmem:[%s286 + $0x10] sm:$0xf]
      %v323 = vld [vmem:[%s286 + $0x14] sm:$0x1]
      %v324 = vld [vmem:[%s286 + $0x18] sm:$0xf]
      %v325 = vld [vmem:[%s286 + $0x1c] sm:$0x1]
      %v326 = vld [vmem:[%s286 + $0x20] sm:$0xf]
      %v327 = vld [vmem:[%s286 + $0x24] sm:$0x1]
      %v328 = vld [vmem:[%s286 + $0x28] sm:$0xf]
      %v329 = vld [vmem:[%s286 + $0x2c] sm:$0x1]
      %v330 = vld [vmem:[%s286 + $0x30] sm:$0xf]
      %v331 = vld [vmem:[%s286 + $0x34] sm:$0x1]
      %v332 = vld [vmem:[%s286 + $0x38] sm:$0xf]
      %v333 = vld [vmem:[%s286 + $0x3c] sm:$0x1]
      %334 = vst [vmem:[#allocation2] sm:$0xf] %v318
      %335 = vst [vmem:[#allocation2 + $0x4] sm:$0x1] %v319
      %336 = vst [vmem:[#allocation2 + $0x8] sm:$0xf] %v320
      %337 = vst [vmem:[#allocation2 + $0xc] sm:$0x1] %v321
      %338 = vst [vmem:[#allocation2 + $0x10] sm:$0xf] %v322
      %339 = vst [vmem:[#allocation2 + $0x14] sm:$0x1] %v323
      %340 = vst [vmem:[#allocation2 + $0x18] sm:$0xf] %v324
      %341 = vst [vmem:[#allocation2 + $0x1c] sm:$0x1] %v325
      %342 = vst [vmem:[#allocation2 + $0x20] sm:$0xf] %v326
      %343 = vst [vmem:[#allocation2 + $0x24] sm:$0x1] %v327
      %344 = vst [vmem:[#allocation2 + $0x28] sm:$0xf] %v328
      %345 = vst [vmem:[#allocation2 + $0x2c] sm:$0x1] %v329
      %346 = vst [vmem:[#allocation2 + $0x30] sm:$0xf] %v330
      %347 = vst [vmem:[#allocation2 + $0x34] sm:$0x1] %v331
      %348 = vst [vmem:[#allocation2 + $0x38] sm:$0xf] %v332
      %349 = vst [vmem:[#allocation2 + $0x3c] sm:$0x1] %v333
      %v350 = vld [vmem:[%s304] sm:$0xf]
      %v351 = vld [vmem:[%s304 + $0x4] sm:$0x1]
      %v352 = vld [vmem:[%s304 + $0x8] sm:$0xf]
      %v353 = vld [vmem:[%s304 + $0xc] sm:$0x1]
      %s354 = scalar_lea.vmem [#allocation2], 64
      %355 = vst [vmem:[%s354] sm:$0xf] %v350
      %356 = vst [vmem:[%s354 + $0x4] sm:$0x1] %v351
      %357 = vst [vmem:[%s354 + $0x8] sm:$0xf] %v352
      %358 = vst [vmem:[%s354 + $0xc] sm:$0x1] %v353
      %v359 = vld [vmem:[%s3] sm:$0x1]
      %v360 = vld [vmem:[#allocation2] sm:$0xf]
      %v361 = vld [vmem:[#allocation2 + $0x8] sm:$0xf]
      %v362 = vld [vmem:[#allocation2 + $0x10] sm:$0xf]
      %v363 = vld [vmem:[#allocation2 + $0x18] sm:$0xf]
      %v364 = vld [vmem:[#allocation2 + $0x20] sm:$0xf]
      %v365 = vld [vmem:[#allocation2 + $0x28] sm:$0xf]
      %v366 = vld [vmem:[#allocation2 + $0x30] sm:$0xf]
      %v367 = vld [vmem:[#allocation2 + $0x38] sm:$0xf]
      %v368 = vld [vmem:[%s2] sm:$0xf]
      %v369 = vld [vmem:[%s2 + $0x4] sm:$0xf]
      %v370 = vld [vmem:[%s2 + $0x8] sm:$0xf]
      %v371 = vld [vmem:[%s2 + $0xc] sm:$0xf]
      %v372 = vld [vmem:[%s2 + $0x10] sm:$0xf]
      %v373 = vld [vmem:[%s2 + $0x14] sm:$0xf]
      %v374 = vld [vmem:[%s2 + $0x18] sm:$0xf]
      %v375 = vld [vmem:[%s2 + $0x1c] sm:$0xf]
      %v376 = vld [vmem:[%s2 + $0x20] sm:$0xf]
      %v377 = vld [vmem:[%s2 + $0x24] sm:$0xf]
      %v378 = vld [vmem:[%s2 + $0x28] sm:$0xf]
      %v379 = vld [vmem:[%s2 + $0x2c] sm:$0xf]
      %v380 = vld [vmem:[%s2 + $0x30] sm:$0xf]
      %v381 = vld [vmem:[%s2 + $0x34] sm:$0xf]
      %v382 = vld [vmem:[%s2 + $0x38] sm:$0xf]
      %v383 = vld [vmem:[%s2 + $0x3c] sm:$0xf]
      %v384 = vld [vmem:[#allocation2 + $0x4] sm:$0x1]
      %v385 = vld [vmem:[#allocation2 + $0xc] sm:$0x1]
      %v386 = vld [vmem:[#allocation2 + $0x14] sm:$0x1]
      %v387 = vld [vmem:[#allocation2 + $0x1c] sm:$0x1]
      %v388 = vld [vmem:[#allocation2 + $0x24] sm:$0x1]
      %v389 = vld [vmem:[#allocation2 + $0x2c] sm:$0x1]
      %v390 = vld [vmem:[#allocation2 + $0x34] sm:$0x1]
      %v391 = vld [vmem:[#allocation2 + $0x3c] sm:$0x1]
      %vm392 = vsmask.f32 3328
      %vm393 = vsmask.f32 7440
      %vm394 = vmor %vm392, %vm393
      %v396 = vshrl.u32 %v360, 16
      %v398 = vrot.slane %v396, 4
      %v399 = vshll.u32 %v360, 16
      %v401 = vrot.slane %v399, 5
      %v402 = vor.u32 %v398, %v401
      %v403 = vrot.slane %v402, 4
      %v405 = vshll.u32 %v384, 16
      %v407 = vrot.slane %v405, 5
      %v408 = vsel %vm394, %v403, %v407
      %v410 = vshrl.u32 %v361, 16
      %v412 = vrot.slane %v410, 4
      %v413 = vshll.u32 %v361, 16
      %v415 = vrot.slane %v413, 5
      %v416 = vor.u32 %v412, %v415
      %v417 = vrot.slane %v416, 4
      %v419 = vshll.u32 %v385, 16
      %v421 = vrot.slane %v419, 5
      %v422 = vsel %vm394, %v417, %v421
      %v424 = vshrl.u32 %v362, 16
      %v426 = vrot.slane %v424, 4
      %v427 = vshll.u32 %v362, 16
      %v429 = vrot.slane %v427, 5
      %v430 = vor.u32 %v426, %v429
      %v431 = vrot.slane %v430, 4
      %v433 = vshll.u32 %v386, 16
      %v435 = vrot.slane %v433, 5
      %v436 = vsel %vm394, %v431, %v435
      %v438 = vshrl.u32 %v363, 16
      %v440 = vrot.slane %v438, 4
      %v441 = vshll.u32 %v363, 16
      %v443 = vrot.slane %v441, 5
      %v444 = vor.u32 %v440, %v443
      %v445 = vrot.slane %v444, 4
      %v447 = vshll.u32 %v387, 16
      %v449 = vrot.slane %v447, 5
      %v450 = vsel %vm394, %v445, %v449
      %v452 = vshrl.u32 %v364, 16
      %v454 = vrot.slane %v452, 4
      %v455 = vshll.u32 %v364, 16
      %v457 = vrot.slane %v455, 5
      %v458 = vor.u32 %v454, %v457
      %v459 = vrot.slane %v458, 4
      %v461 = vshll.u32 %v388, 16
      %v463 = vrot.slane %v461, 5
      %v464 = vsel %vm394, %v459, %v463
      %v466 = vshrl.u32 %v365, 16
      %v468 = vrot.slane %v466, 4
      %v469 = vshll.u32 %v365, 16
      %v471 = vrot.slane %v469, 5
      %v472 = vor.u32 %v468, %v471
      %v473 = vrot.slane %v472, 4
      %v475 = vshll.u32 %v389, 16
      %v477 = vrot.slane %v475, 5
      %v478 = vsel %vm394, %v473, %v477
      %v480 = vshrl.u32 %v366, 16
      %v482 = vrot.slane %v480, 4
      %v483 = vshll.u32 %v366, 16
      %v485 = vrot.slane %v483, 5
      %v486 = vor.u32 %v482, %v485
      %v487 = vrot.slane %v486, 4
      %v489 = vshll.u32 %v390, 16
      %v491 = vrot.slane %v489, 5
      %v492 = vsel %vm394, %v487, %v491
      %v494 = vshrl.u32 %v367, 16
      %v496 = vrot.slane %v494, 4
      %v497 = vshll.u32 %v367, 16
      %v499 = vrot.slane %v497, 5
      %v500 = vor.u32 %v496, %v499
      %v501 = vrot.slane %v500, 4
      %v503 = vshll.u32 %v391, 16
      %v505 = vrot.slane %v503, 5
      %v506 = vsel %vm394, %v501, %v505
      %s507 = scalar_lea.vmem %s2, 64
      %v508 = vld [vmem:[%s507] sm:$0xf]
      %v509 = vld [vmem:[%s507 + $0x4] sm:$0xf]
      %v510 = vld [vmem:[%s507 + $0x8] sm:$0xf]
      %v511 = vld [vmem:[%s507 + $0xc] sm:$0xf]
      %v512 = vld [vmem:[%s507 + $0x10] sm:$0xf]
      %v513 = vld [vmem:[%s507 + $0x14] sm:$0xf]
      %v514 = vld [vmem:[%s507 + $0x18] sm:$0xf]
      %v515 = vld [vmem:[%s507 + $0x1c] sm:$0xf]
      %v516 = vld [vmem:[%s507 + $0x20] sm:$0xf]
      %v517 = vld [vmem:[%s507 + $0x24] sm:$0xf]
      %v518 = vld [vmem:[%s507 + $0x28] sm:$0xf]
      %v519 = vld [vmem:[%s507 + $0x2c] sm:$0xf]
      %v520 = vld [vmem:[%s507 + $0x30] sm:$0xf]
      %v521 = vld [vmem:[%s507 + $0x34] sm:$0xf]
      %v522 = vld [vmem:[%s507 + $0x38] sm:$0xf]
      %v523 = vld [vmem:[%s507 + $0x3c] sm:$0xf]
      %v524 = vunpack.c.l.b16 %v408
      %v525 = vunpack.c.l.b16 %v422
      %v526 = vunpack.c.l.b16 %v436
      %v527 = vunpack.c.l.b16 %v450
      %v528 = vunpack.c.l.b16 %v464
      %v529 = vunpack.c.l.b16 %v478
      %v530 = vunpack.c.l.b16 %v492
      %v531 = vunpack.c.l.b16 %v506
      %v532 = vpack.c.b16 %v525, %v524
      %v533 = vpack.c.b16 %v527, %v526
      %v534 = vpack.c.b16 %v529, %v528
      %v535 = vpack.c.b16 %v531, %v530
      %v556 = vunpack.c.l.b16 %v508
      %v557 = vunpack.c.l.b16 %v509
      %v558 = vunpack.c.l.b16 %v510
      %v559 = vunpack.c.l.b16 %v511
      %v560 = vunpack.c.l.b16 %v512
      %v561 = vunpack.c.l.b16 %v513
      %v562 = vunpack.c.l.b16 %v514
      %v563 = vunpack.c.l.b16 %v515
      %v564 = vunpack.c.l.b16 %v516
      %v565 = vunpack.c.l.b16 %v517
      %v566 = vunpack.c.l.b16 %v518
      %v567 = vunpack.c.l.b16 %v519
      %v568 = vunpack.c.l.b16 %v520
      %v569 = vunpack.c.l.b16 %v521
      %v570 = vunpack.c.l.b16 %v522
      %v571 = vunpack.c.l.b16 %v523
      %v572 = vpack.c.b16 %v557, %v556
      %v573 = vpack.c.b16 %v559, %v558
      %v574 = vpack.c.b16 %v561, %v560
      %v575 = vpack.c.b16 %v563, %v562
      %v576 = vpack.c.b16 %v565, %v564
      %v577 = vpack.c.b16 %v567, %v566
      %v578 = vpack.c.b16 %v569, %v568
      %v579 = vpack.c.b16 %v571, %v570
      %588 = vmatpush.bf16.msra.mxu0 %v579
      %589 = vmatpush.bf16.msra.mxu0 %v578
      %590 = vmatpush.bf16.msra.mxu0 %v577
      %591 = vmatpush.bf16.msra.mxu0 %v576
      %592 = vmatpush.bf16.msra.mxu0 %v575
      %593 = vmatpush.bf16.msra.mxu0 %v574
      %594 = vmatpush.bf16.msra.mxu0 %v573
      %595 = vmatpush.bf16.msra.mxu0 %v572
      %596 = vmatmul.bf16.gmra.mxu0 %v532
      %v597 = vpop.f32.mrf.mxu0
      %v598 = vadd.f32 0.0, %v597
      %v599 = vpop.f32.mrf.mxu0
      %v600 = vadd.f32 0.0, %v599
      %601 = vmatmul.bf16.gmra.mxu0 %v533
      %v602 = vpop.f32.mrf.mxu0
      %v603 = vadd.f32 0.0, %v602
      %v604 = vpop.f32.mrf.mxu0
      %v605 = vadd.f32 0.0, %v604
      %606 = vmatmul.bf16.gmra.mxu0 %v534
      %v607 = vpop.f32.mrf.mxu0
      %v608 = vadd.f32 0.0, %v607
      %v609 = vpop.f32.mrf.mxu0
      %v610 = vadd.f32 0.0, %v609
      %611 = vmatmul.bf16.gmra.mxu0 %v535
      %v612 = vpop.f32.mrf.mxu0
      %v613 = vadd.f32 0.0, %v612
      %v614 = vpop.f32.mrf.mxu0
      %v615 = vadd.f32 0.0, %v614
      %616 = vdwg.mxu0
      %v625 = vunpack.c.l.b16 %v360
      %v626 = vunpack.c.l.b16 %v361
      %v627 = vunpack.c.l.b16 %v362
      %v628 = vunpack.c.l.b16 %v363
      %v629 = vunpack.c.l.b16 %v364
      %v630 = vunpack.c.l.b16 %v365
      %v631 = vunpack.c.l.b16 %v366
      %v632 = vunpack.c.l.b16 %v367
      %v633 = vpack.c.b16 %v626, %v625
      %v634 = vpack.c.b16 %v628, %v627
      %v635 = vpack.c.b16 %v630, %v629
      %v636 = vpack.c.b16 %v632, %v631
      %v657 = vunpack.c.l.b16 %v368
      %v658 = vunpack.c.l.b16 %v369
      %v659 = vunpack.c.l.b16 %v370
      %v660 = vunpack.c.l.b16 %v371
      %v661 = vunpack.c.l.b16 %v372
      %v662 = vunpack.c.l.b16 %v373
      %v663 = vunpack.c.l.b16 %v374
      %v664 = vunpack.c.l.b16 %v375
      %v665 = vunpack.c.l.b16 %v376
      %v666 = vunpack.c.l.b16 %v377
      %v667 = vunpack.c.l.b16 %v378
      %v668 = vunpack.c.l.b16 %v379
      %v669 = vunpack.c.l.b16 %v380
      %v670 = vunpack.c.l.b16 %v381
      %v671 = vunpack.c.l.b16 %v382
      %v672 = vunpack.c.l.b16 %v383
      %v673 = vpack.c.b16 %v658, %v657
      %v674 = vpack.c.b16 %v660, %v659
      %v675 = vpack.c.b16 %v662, %v661
      %v676 = vpack.c.b16 %v664, %v663
      %v677 = vpack.c.b16 %v666, %v665
      %v678 = vpack.c.b16 %v668, %v667
      %v679 = vpack.c.b16 %v670, %v669
      %v680 = vpack.c.b16 %v672, %v671
      %689 = vmatpush.bf16.msra.mxu0 %v680
      %690 = vmatpush.bf16.msra.mxu0 %v679
      %691 = vmatpush.bf16.msra.mxu0 %v678
      %692 = vmatpush.bf16.msra.mxu0 %v677
      %693 = vmatpush.bf16.msra.mxu0 %v676
      %694 = vmatpush.bf16.msra.mxu0 %v675
      %695 = vmatpush.bf16.msra.mxu0 %v674
      %696 = vmatpush.bf16.msra.mxu0 %v673
      %697 = vmatmul.bf16.gmra.mxu0 %v633
      %v698 = vpop.f32.mrf.mxu0
      %v699 = vadd.f32 %v598, %v698
      %v700 = vpop.f32.mrf.mxu0
      %v701 = vadd.f32 %v600, %v700
      %702 = vmatmul.bf16.gmra.mxu0 %v634
      %v703 = vpop.f32.mrf.mxu0
      %v704 = vadd.f32 %v603, %v703
      %v705 = vpop.f32.mrf.mxu0
      %v706 = vadd.f32 %v605, %v705
      %707 = vmatmul.bf16.gmra.mxu0 %v635
      %v708 = vpop.f32.mrf.mxu0
      %v709 = vadd.f32 %v608, %v708
      %v710 = vpop.f32.mrf.mxu0
      %v711 = vadd.f32 %v610, %v710
      %712 = vmatmul.bf16.gmra.mxu0 %v636
      %v713 = vpop.f32.mrf.mxu0
      %v714 = vadd.f32 %v613, %v713
      %v715 = vpop.f32.mrf.mxu0
      %v716 = vadd.f32 %v615, %v715
      %717 = vdwg.mxu0
      %v718 = vld [vmem:[#allocation2] sm:$0xe]
      %v719 = vld [vmem:[#allocation2 + $0x8] sm:$0xe]
      %v720 = vld [vmem:[#allocation2 + $0x10] sm:$0xe]
      %v721 = vld [vmem:[#allocation2 + $0x18] sm:$0xe]
      %v722 = vld [vmem:[#allocation2 + $0x20] sm:$0xe]
      %v723 = vld [vmem:[#allocation2 + $0x28] sm:$0xe]
      %v724 = vld [vmem:[#allocation2 + $0x30] sm:$0xe]
      %v725 = vld [vmem:[#allocation2 + $0x38] sm:$0xe]
      %vm742 = vcmask 1042432
      %vm743 = vcmask 1046532
      %vm744 = vmor %vm742, %vm743
      %v745 = vrot.slane %v718, 5
      %v746 = vrot.slane %v745, 4
      %v747 = vrot.slane %v384, 5
      %v748 = vsel %vm744, %v746, %v747
      %v749 = vrot.slane %v719, 5
      %v750 = vrot.slane %v749, 4
      %v751 = vrot.slane %v385, 5
      %v752 = vsel %vm744, %v750, %v751
      %v753 = vrot.slane %v720, 5
      %v754 = vrot.slane %v753, 4
      %v755 = vrot.slane %v386, 5
      %v756 = vsel %vm744, %v754, %v755
      %v757 = vrot.slane %v721, 5
      %v758 = vrot.slane %v757, 4
      %v759 = vrot.slane %v387, 5
      %v760 = vsel %vm744, %v758, %v759
      %v761 = vrot.slane %v722, 5
      %v762 = vrot.slane %v761, 4
      %v763 = vrot.slane %v388, 5
      %v764 = vsel %vm744, %v762, %v763
      %v765 = vrot.slane %v723, 5
      %v766 = vrot.slane %v765, 4
      %v767 = vrot.slane %v389, 5
      %v768 = vsel %vm744, %v766, %v767
      %v769 = vrot.slane %v724, 5
      %v770 = vrot.slane %v769, 4
      %v771 = vrot.slane %v390, 5
      %v772 = vsel %vm744, %v770, %v771
      %v773 = vrot.slane %v725, 5
      %v774 = vrot.slane %v773, 4
      %v775 = vrot.slane %v391, 5
      %v776 = vsel %vm744, %v774, %v775
      %s777 = scalar_lea.vmem %s2, 128
      %v778 = vld [vmem:[%s777] sm:$0xf]
      %v779 = vld [vmem:[%s777 + $0x4] sm:$0xf]
      %v780 = vld [vmem:[%s777 + $0x8] sm:$0xf]
      %v781 = vld [vmem:[%s777 + $0xc] sm:$0xf]
      %v782 = vld [vmem:[%s777 + $0x10] sm:$0xf]
      %v783 = vld [vmem:[%s777 + $0x14] sm:$0xf]
      %v784 = vld [vmem:[%s777 + $0x18] sm:$0xf]
      %v785 = vld [vmem:[%s777 + $0x1c] sm:$0xf]
      %v786 = vld [vmem:[%s777 + $0x20] sm:$0xf]
      %v787 = vld [vmem:[%s777 + $0x24] sm:$0xf]
      %v788 = vld [vmem:[%s777 + $0x28] sm:$0xf]
      %v789 = vld [vmem:[%s777 + $0x2c] sm:$0xf]
      %v790 = vld [vmem:[%s777 + $0x30] sm:$0xf]
      %v791 = vld [vmem:[%s777 + $0x34] sm:$0xf]
      %v792 = vld [vmem:[%s777 + $0x38] sm:$0xf]
      %v793 = vld [vmem:[%s777 + $0x3c] sm:$0xf]
      %v794 = vunpack.c.l.b16 %v748
      %v795 = vunpack.c.l.b16 %v752
      %v796 = vunpack.c.l.b16 %v756
      %v797 = vunpack.c.l.b16 %v760
      %v798 = vunpack.c.l.b16 %v764
      %v799 = vunpack.c.l.b16 %v768
      %v800 = vunpack.c.l.b16 %v772
      %v801 = vunpack.c.l.b16 %v776
      %v802 = vpack.c.b16 %v795, %v794
      %v803 = vpack.c.b16 %v797, %v796
      %v804 = vpack.c.b16 %v799, %v798
      %v805 = vpack.c.b16 %v801, %v800
      %v826 = vunpack.c.l.b16 %v778
      %v827 = vunpack.c.l.b16 %v779
      %v828 = vunpack.c.l.b16 %v780
      %v829 = vunpack.c.l.b16 %v781
      %v830 = vunpack.c.l.b16 %v782
      %v831 = vunpack.c.l.b16 %v783
      %v832 = vunpack.c.l.b16 %v784
      %v833 = vunpack.c.l.b16 %v785
      %v834 = vunpack.c.l.b16 %v786
      %v835 = vunpack.c.l.b16 %v787
      %v836 = vunpack.c.l.b16 %v788
      %v837 = vunpack.c.l.b16 %v789
      %v838 = vunpack.c.l.b16 %v790
      %v839 = vunpack.c.l.b16 %v791
      %v840 = vunpack.c.l.b16 %v792
      %v841 = vunpack.c.l.b16 %v793
      %v842 = vpack.c.b16 %v827, %v826
      %v843 = vpack.c.b16 %v829, %v828
      %v844 = vpack.c.b16 %v831, %v830
      %v845 = vpack.c.b16 %v833, %v832
      %v846 = vpack.c.b16 %v835, %v834
      %v847 = vpack.c.b16 %v837, %v836
      %v848 = vpack.c.b16 %v839, %v838
      %v849 = vpack.c.b16 %v841, %v840
      %858 = vmatpush.bf16.msra.mxu0 %v849
      %859 = vmatpush.bf16.msra.mxu0 %v848
      %860 = vmatpush.bf16.msra.mxu0 %v847
      %861 = vmatpush.bf16.msra.mxu0 %v846
      %862 = vmatpush.bf16.msra.mxu0 %v845
      %863 = vmatpush.bf16.msra.mxu0 %v844
      %864 = vmatpush.bf16.msra.mxu0 %v843
      %865 = vmatpush.bf16.msra.mxu0 %v842
      %866 = vmatmul.bf16.gmra.mxu0 %v802
      %v867 = vpop.f32.mrf.mxu0
      %v868 = vadd.f32 0.0, %v867
      %v869 = vpop.f32.mrf.mxu0
      %v870 = vadd.f32 0.0, %v869
      %871 = vmatmul.bf16.gmra.mxu0 %v803
      %v872 = vpop.f32.mrf.mxu0
      %v873 = vadd.f32 0.0, %v872
      %v874 = vpop.f32.mrf.mxu0
      %v875 = vadd.f32 0.0, %v874
      %876 = vmatmul.bf16.gmra.mxu0 %v804
      %v877 = vpop.f32.mrf.mxu0
      %v878 = vadd.f32 0.0, %v877
      %v879 = vpop.f32.mrf.mxu0
      %v880 = vadd.f32 0.0, %v879
      %881 = vmatmul.bf16.gmra.mxu0 %v805
      %v882 = vpop.f32.mrf.mxu0
      %v883 = vadd.f32 0.0, %v882
      %v884 = vpop.f32.mrf.mxu0
      %v885 = vadd.f32 0.0, %v884
      %886 = vdwg.mxu0
      %v887 = vadd.f32 %v699, %v868
      %v888 = vadd.f32 %v701, %v870
      %v889 = vadd.f32 %v704, %v873
      %v890 = vadd.f32 %v706, %v875
      %v891 = vadd.f32 %v709, %v878
      %v892 = vadd.f32 %v711, %v880
      %v893 = vadd.f32 %v714, %v883
      %v894 = vadd.f32 %v716, %v885
      %s895 = scalar_lea.vmem [#allocation2], 8
      %v896 = vld [vmem:[%s895] sm:$0xf]
      %v897 = vld [vmem:[%s895 + $0x8] sm:$0xf]
      %v898 = vld [vmem:[%s895 + $0x10] sm:$0xf]
      %v899 = vld [vmem:[%s895 + $0x18] sm:$0xf]
      %v900 = vld [vmem:[%s895 + $0x20] sm:$0xf]
      %v901 = vld [vmem:[%s895 + $0x28] sm:$0xf]
      %v902 = vld [vmem:[%s895 + $0x30] sm:$0xf]
      %v903 = vld [vmem:[%s895 + $0x38] sm:$0xf]
      %s904 = scalar_lea.vmem %s2, 192
      %v905 = vld [vmem:[%s904] sm:$0xf]
      %v906 = vld [vmem:[%s904 + $0x4] sm:$0xf]
      %v907 = vld [vmem:[%s904 + $0x8] sm:$0xf]
      %v908 = vld [vmem:[%s904 + $0xc] sm:$0xf]
      %v909 = vld [vmem:[%s904 + $0x10] sm:$0xf]
      %v910 = vld [vmem:[%s904 + $0x14] sm:$0xf]
      %v911 = vld [vmem:[%s904 + $0x18] sm:$0xf]
      %v912 = vld [vmem:[%s904 + $0x1c] sm:$0xf]
      %v913 = vld [vmem:[%s904 + $0x20] sm:$0xf]
      %v914 = vld [vmem:[%s904 + $0x24] sm:$0xf]
      %v915 = vld [vmem:[%s904 + $0x28] sm:$0xf]
      %v916 = vld [vmem:[%s904 + $0x2c] sm:$0xf]
      %v917 = vld [vmem:[%s904 + $0x30] sm:$0xf]
      %v918 = vld [vmem:[%s904 + $0x34] sm:$0xf]
      %v919 = vld [vmem:[%s904 + $0x38] sm:$0xf]
      %v920 = vld [vmem:[%s904 + $0x3c] sm:$0xf]
      %v929 = vunpack.c.l.b16 %v896
      %v930 = vunpack.c.l.b16 %v897
      %v931 = vunpack.c.l.b16 %v898
      %v932 = vunpack.c.l.b16 %v899
      %v933 = vunpack.c.l.b16 %v900
      %v934 = vunpack.c.l.b16 %v901
      %v935 = vunpack.c.l.b16 %v902
      %v936 = vunpack.c.l.b16 %v903
      %v937 = vpack.c.b16 %v930, %v929
      %v938 = vpack.c.b16 %v932, %v931
      %v939 = vpack.c.b16 %v934, %v933
      %v940 = vpack.c.b16 %v936, %v935
      %v961 = vunpack.c.l.b16 %v905
      %v962 = vunpack.c.l.b16 %v906
      %v963 = vunpack.c.l.b16 %v907
      %v964 = vunpack.c.l.b16 %v908
      %v965 = vunpack.c.l.b16 %v909
      %v966 = vunpack.c.l.b16 %v910
      %v967 = vunpack.c.l.b16 %v911
      %v968 = vunpack.c.l.b16 %v912
      %v969 = vunpack.c.l.b16 %v913
      %v970 = vunpack.c.l.b16 %v914
      %v971 = vunpack.c.l.b16 %v915
      %v972 = vunpack.c.l.b16 %v916
      %v973 = vunpack.c.l.b16 %v917
      %v974 = vunpack.c.l.b16 %v918
      %v975 = vunpack.c.l.b16 %v919
      %v976 = vunpack.c.l.b16 %v920
      %v977 = vpack.c.b16 %v962, %v961
      %v978 = vpack.c.b16 %v964, %v963
      %v979 = vpack.c.b16 %v966, %v965
      %v980 = vpack.c.b16 %v968, %v967
      %v981 = vpack.c.b16 %v970, %v969
      %v982 = vpack.c.b16 %v972, %v971
      %v983 = vpack.c.b16 %v974, %v973
      %v984 = vpack.c.b16 %v976, %v975
      %993 = vmatpush.bf16.msra.mxu0 %v984
      %994 = vmatpush.bf16.msra.mxu0 %v983
      %995 = vmatpush.bf16.msra.mxu0 %v982
      %996 = vmatpush.bf16.msra.mxu0 %v981
      %997 = vmatpush.bf16.msra.mxu0 %v980
      %998 = vmatpush.bf16.msra.mxu0 %v979
      %999 = vmatpush.bf16.msra.mxu0 %v978
      %1000 = vmatpush.bf16.msra.mxu0 %v977
      %1001 = vmatmul.bf16.gmra.mxu0 %v937
      %v1002 = vpop.f32.mrf.mxu0
      %v1003 = vadd.f32 0.0, %v1002
      %v1004 = vpop.f32.mrf.mxu0
      %v1005 = vadd.f32 0.0, %v1004
      %1006 = vmatmul.bf16.gmra.mxu0 %v938
      %v1007 = vpop.f32.mrf.mxu0
      %v1008 = vadd.f32 0.0, %v1007
      %v1009 = vpop.f32.mrf.mxu0
      %v1010 = vadd.f32 0.0, %v1009
      %1011 = vmatmul.bf16.gmra.mxu0 %v939
      %v1012 = vpop.f32.mrf.mxu0
      %v1013 = vadd.f32 0.0, %v1012
      %v1014 = vpop.f32.mrf.mxu0
      %v1015 = vadd.f32 0.0, %v1014
      %1016 = vmatmul.bf16.gmra.mxu0 %v940
      %v1017 = vpop.f32.mrf.mxu0
      %v1018 = vadd.f32 0.0, %v1017
      %v1019 = vpop.f32.mrf.mxu0
      %v1020 = vadd.f32 0.0, %v1019
      %1021 = vdwg.mxu0
      %v1022 = vadd.f32 %v887, %v1003
      %v1023 = vadd.f32 %v888, %v1005
      %v1024 = vadd.f32 %v889, %v1008
      %v1025 = vadd.f32 %v890, %v1010
      %v1026 = vadd.f32 %v891, %v1013
      %v1027 = vadd.f32 %v892, %v1015
      %v1028 = vadd.f32 %v893, %v1018
      %v1029 = vadd.f32 %v894, %v1020
      %v1030 = vld [vmem:[%s895] sm:$0xf]
      %v1031 = vld [vmem:[%s895 + $0x4] sm:$0x1]
      %v1032 = vld [vmem:[%s895 + $0x8] sm:$0xf]
      %v1033 = vld [vmem:[%s895 + $0xc] sm:$0x1]
      %v1034 = vld [vmem:[%s895 + $0x10] sm:$0xf]
      %v1035 = vld [vmem:[%s895 + $0x14] sm:$0x1]
      %v1036 = vld [vmem:[%s895 + $0x18] sm:$0xf]
      %v1037 = vld [vmem:[%s895 + $0x1c] sm:$0x1]
      %v1038 = vld [vmem:[%s895 + $0x20] sm:$0xf]
      %v1039 = vld [vmem:[%s895 + $0x24] sm:$0x1]
      %v1040 = vld [vmem:[%s895 + $0x28] sm:$0xf]
      %v1041 = vld [vmem:[%s895 + $0x2c] sm:$0x1]
      %v1042 = vld [vmem:[%s895 + $0x30] sm:$0xf]
      %v1043 = vld [vmem:[%s895 + $0x34] sm:$0x1]
      %v1044 = vld [vmem:[%s895 + $0x38] sm:$0xf]
      %v1045 = vld [vmem:[%s895 + $0x3c] sm:$0x1]
      %v1047 = vshrl.u32 %v1030, 16
      %v1049 = vrot.slane %v1047, 4
      %v1050 = vshll.u32 %v1030, 16
      %v1052 = vrot.slane %v1050, 5
      %v1053 = vor.u32 %v1049, %v1052
      %v1054 = vrot.slane %v1053, 4
      %v1056 = vshll.u32 %v1031, 16
      %v1058 = vrot.slane %v1056, 5
      %v1059 = vsel %vm394, %v1054, %v1058
      %v1061 = vshrl.u32 %v1032, 16
      %v1063 = vrot.slane %v1061, 4
      %v1064 = vshll.u32 %v1032, 16
      %v1066 = vrot.slane %v1064, 5
      %v1067 = vor.u32 %v1063, %v1066
      %v1068 = vrot.slane %v1067, 4
      %v1070 = vshll.u32 %v1033, 16
      %v1072 = vrot.slane %v1070, 5
      %v1073 = vsel %vm394, %v1068, %v1072
      %v1075 = vshrl.u32 %v1034, 16
      %v1077 = vrot.slane %v1075, 4
      %v1078 = vshll.u32 %v1034, 16
      %v1080 = vrot.slane %v1078, 5
      %v1081 = vor.u32 %v1077, %v1080
      %v1082 = vrot.slane %v1081, 4
      %v1084 = vshll.u32 %v1035, 16
      %v1086 = vrot.slane %v1084, 5
      %v1087 = vsel %vm394, %v1082, %v1086
      %v1089 = vshrl.u32 %v1036, 16
      %v1091 = vrot.slane %v1089, 4
      %v1092 = vshll.u32 %v1036, 16
      %v1094 = vrot.slane %v1092, 5
      %v1095 = vor.u32 %v1091, %v1094
      %v1096 = vrot.slane %v1095, 4
      %v1098 = vshll.u32 %v1037, 16
      %v1100 = vrot.slane %v1098, 5
      %v1101 = vsel %vm394, %v1096, %v1100
      %v1103 = vshrl.u32 %v1038, 16
      %v1105 = vrot.slane %v1103, 4
      %v1106 = vshll.u32 %v1038, 16
      %v1108 = vrot.slane %v1106, 5
      %v1109 = vor.u32 %v1105, %v1108
      %v1110 = vrot.slane %v1109, 4
      %v1112 = vshll.u32 %v1039, 16
      %v1114 = vrot.slane %v1112, 5
      %v1115 = vsel %vm394, %v1110, %v1114
      %v1117 = vshrl.u32 %v1040, 16
      %v1119 = vrot.slane %v1117, 4
      %v1120 = vshll.u32 %v1040, 16
      %v1122 = vrot.slane %v1120, 5
      %v1123 = vor.u32 %v1119, %v1122
      %v1124 = vrot.slane %v1123, 4
      %v1126 = vshll.u32 %v1041, 16
      %v1128 = vrot.slane %v1126, 5
      %v1129 = vsel %vm394, %v1124, %v1128
      %v1131 = vshrl.u32 %v1042, 16
      %v1133 = vrot.slane %v1131, 4
      %v1134 = vshll.u32 %v1042, 16
      %v1136 = vrot.slane %v1134, 5
      %v1137 = vor.u32 %v1133, %v1136
      %v1138 = vrot.slane %v1137, 4
      %v1140 = vshll.u32 %v1043, 16
      %v1142 = vrot.slane %v1140, 5
      %v1143 = vsel %vm394, %v1138, %v1142
      %v1145 = vshrl.u32 %v1044, 16
      %v1147 = vrot.slane %v1145, 4
      %v1148 = vshll.u32 %v1044, 16
      %v1150 = vrot.slane %v1148, 5
      %v1151 = vor.u32 %v1147, %v1150
      %v1152 = vrot.slane %v1151, 4
      %v1154 = vshll.u32 %v1045, 16
      %v1156 = vrot.slane %v1154, 5
      %v1157 = vsel %vm394, %v1152, %v1156
      %s1158 = scalar_lea.vmem %s2, 256
      %v1159 = vld [vmem:[%s1158] sm:$0xf]
      %v1160 = vld [vmem:[%s1158 + $0x4] sm:$0xf]
      %v1161 = vld [vmem:[%s1158 + $0x8] sm:$0xf]
      %v1162 = vld [vmem:[%s1158 + $0xc] sm:$0xf]
      %v1163 = vld [vmem:[%s1158 + $0x10] sm:$0xf]
      %v1164 = vld [vmem:[%s1158 + $0x14] sm:$0xf]
      %v1165 = vld [vmem:[%s1158 + $0x18] sm:$0xf]
      %v1166 = vld [vmem:[%s1158 + $0x1c] sm:$0xf]
      %v1167 = vld [vmem:[%s1158 + $0x20] sm:$0xf]
      %v1168 = vld [vmem:[%s1158 + $0x24] sm:$0xf]
      %v1169 = vld [vmem:[%s1158 + $0x28] sm:$0xf]
      %v1170 = vld [vmem:[%s1158 + $0x2c] sm:$0xf]
      %v1171 = vld [vmem:[%s1158 + $0x30] sm:$0xf]
      %v1172 = vld [vmem:[%s1158 + $0x34] sm:$0xf]
      %v1173 = vld [vmem:[%s1158 + $0x38] sm:$0xf]
      %v1174 = vld [vmem:[%s1158 + $0x3c] sm:$0xf]
      %v1175 = vunpack.c.l.b16 %v1059
      %v1176 = vunpack.c.l.b16 %v1073
      %v1177 = vunpack.c.l.b16 %v1087
      %v1178 = vunpack.c.l.b16 %v1101
      %v1179 = vunpack.c.l.b16 %v1115
      %v1180 = vunpack.c.l.b16 %v1129
      %v1181 = vunpack.c.l.b16 %v1143
      %v1182 = vunpack.c.l.b16 %v1157
      %v1183 = vpack.c.b16 %v1176, %v1175
      %v1184 = vpack.c.b16 %v1178, %v1177
      %v1185 = vpack.c.b16 %v1180, %v1179
      %v1186 = vpack.c.b16 %v1182, %v1181
      %v1207 = vunpack.c.l.b16 %v1159
      %v1208 = vunpack.c.l.b16 %v1160
      %v1209 = vunpack.c.l.b16 %v1161
      %v1210 = vunpack.c.l.b16 %v1162
      %v1211 = vunpack.c.l.b16 %v1163
      %v1212 = vunpack.c.l.b16 %v1164
      %v1213 = vunpack.c.l.b16 %v1165
      %v1214 = vunpack.c.l.b16 %v1166
      %v1215 = vunpack.c.l.b16 %v1167
      %v1216 = vunpack.c.l.b16 %v1168
      %v1217 = vunpack.c.l.b16 %v1169
      %v1218 = vunpack.c.l.b16 %v1170
      %v1219 = vunpack.c.l.b16 %v1171
      %v1220 = vunpack.c.l.b16 %v1172
      %v1221 = vunpack.c.l.b16 %v1173
      %v1222 = vunpack.c.l.b16 %v1174
      %v1223 = vpack.c.b16 %v1208, %v1207
      %v1224 = vpack.c.b16 %v1210, %v1209
      %v1225 = vpack.c.b16 %v1212, %v1211
      %v1226 = vpack.c.b16 %v1214, %v1213
      %v1227 = vpack.c.b16 %v1216, %v1215
      %v1228 = vpack.c.b16 %v1218, %v1217
      %v1229 = vpack.c.b16 %v1220, %v1219
      %v1230 = vpack.c.b16 %v1222, %v1221
      %1239 = vmatpush.bf16.msra.mxu0 %v1230
      %1240 = vmatpush.bf16.msra.mxu0 %v1229
      %1241 = vmatpush.bf16.msra.mxu0 %v1228
      %1242 = vmatpush.bf16.msra.mxu0 %v1227
      %1243 = vmatpush.bf16.msra.mxu0 %v1226
      %1244 = vmatpush.bf16.msra.mxu0 %v1225
      %1245 = vmatpush.bf16.msra.mxu0 %v1224
      %1246 = vmatpush.bf16.msra.mxu0 %v1223
      %1247 = vmatmul.bf16.gmra.mxu0 %v1183
      %v1248 = vpop.f32.mrf.mxu0
      %v1249 = vadd.f32 0.0, %v1248
      %v1250 = vpop.f32.mrf.mxu0
      %v1251 = vadd.f32 0.0, %v1250
      %1252 = vmatmul.bf16.gmra.mxu0 %v1184
      %v1253 = vpop.f32.mrf.mxu0
      %v1254 = vadd.f32 0.0, %v1253
      %v1255 = vpop.f32.mrf.mxu0
      %v1256 = vadd.f32 0.0, %v1255
      %1257 = vmatmul.bf16.gmra.mxu0 %v1185
      %v1258 = vpop.f32.mrf.mxu0
      %v1259 = vadd.f32 0.0, %v1258
      %v1260 = vpop.f32.mrf.mxu0
      %v1261 = vadd.f32 0.0, %v1260
      %1262 = vmatmul.bf16.gmra.mxu0 %v1186
      %v1263 = vpop.f32.mrf.mxu0
      %v1264 = vadd.f32 0.0, %v1263
      %v1265 = vpop.f32.mrf.mxu0
      %v1266 = vadd.f32 0.0, %v1265
      %1267 = vdwg.mxu0
      %v1268 = vadd.f32 %v1022, %v1249
      %v1269 = vadd.f32 %v1023, %v1251
      %v1270 = vadd.f32 %v1024, %v1254
      %v1271 = vadd.f32 %v1025, %v1256
      %v1272 = vadd.f32 %v1026, %v1259
      %v1273 = vadd.f32 %v1027, %v1261
      %v1274 = vadd.f32 %v1028, %v1264
      %v1275 = vadd.f32 %v1029, %v1266
      %v1276 = vld [vmem:[%s895] sm:$0xe]
      %v1277 = vld [vmem:[%s895 + $0x8] sm:$0xe]
      %v1278 = vld [vmem:[%s895 + $0x10] sm:$0xe]
      %v1279 = vld [vmem:[%s895 + $0x18] sm:$0xe]
      %v1280 = vld [vmem:[%s895 + $0x20] sm:$0xe]
      %v1281 = vld [vmem:[%s895 + $0x28] sm:$0xe]
      %v1282 = vld [vmem:[%s895 + $0x30] sm:$0xe]
      %v1283 = vld [vmem:[%s895 + $0x38] sm:$0xe]
      %v1300 = vrot.slane %v1276, 5
      %v1301 = vrot.slane %v1300, 4
      %v1302 = vrot.slane %v1031, 5
      %v1303 = vsel %vm744, %v1301, %v1302
      %v1304 = vrot.slane %v1277, 5
      %v1305 = vrot.slane %v1304, 4
      %v1306 = vrot.slane %v1033, 5
      %v1307 = vsel %vm744, %v1305, %v1306
      %v1308 = vrot.slane %v1278, 5
      %v1309 = vrot.slane %v1308, 4
      %v1310 = vrot.slane %v1035, 5
      %v1311 = vsel %vm744, %v1309, %v1310
      %v1312 = vrot.slane %v1279, 5
      %v1313 = vrot.slane %v1312, 4
      %v1314 = vrot.slane %v1037, 5
      %v1315 = vsel %vm744, %v1313, %v1314
      %v1316 = vrot.slane %v1280, 5
      %v1317 = vrot.slane %v1316, 4
      %v1318 = vrot.slane %v1039, 5
      %v1319 = vsel %vm744, %v1317, %v1318
      %v1320 = vrot.slane %v1281, 5
      %v1321 = vrot.slane %v1320, 4
      %v1322 = vrot.slane %v1041, 5
      %v1323 = vsel %vm744, %v1321, %v1322
      %v1324 = vrot.slane %v1282, 5
      %v1325 = vrot.slane %v1324, 4
      %v1326 = vrot.slane %v1043, 5
      %v1327 = vsel %vm744, %v1325, %v1326
      %v1328 = vrot.slane %v1283, 5
      %v1329 = vrot.slane %v1328, 4
      %v1330 = vrot.slane %v1045, 5
      %v1331 = vsel %vm744, %v1329, %v1330
      %s1332 = scalar_lea.vmem %s2, 320
      %v1333 = vld [vmem:[%s1332] sm:$0xf]
      %v1334 = vld [vmem:[%s1332 + $0x4] sm:$0xf]
      %v1335 = vld [vmem:[%s1332 + $0x8] sm:$0xf]
      %v1336 = vld [vmem:[%s1332 + $0xc] sm:$0xf]
      %v1337 = vld [vmem:[%s1332 + $0x10] sm:$0xf]
      %v1338 = vld [vmem:[%s1332 + $0x14] sm:$0xf]
      %v1339 = vld [vmem:[%s1332 + $0x18] sm:$0xf]
      %v1340 = vld [vmem:[%s1332 + $0x1c] sm:$0xf]
      %v1341 = vld [vmem:[%s1332 + $0x20] sm:$0xf]
      %v1342 = vld [vmem:[%s1332 + $0x24] sm:$0xf]
      %v1343 = vld [vmem:[%s1332 + $0x28] sm:$0xf]
      %v1344 = vld [vmem:[%s1332 + $0x2c] sm:$0xf]
      %v1345 = vld [vmem:[%s1332 + $0x30] sm:$0xf]
      %v1346 = vld [vmem:[%s1332 + $0x34] sm:$0xf]
      %v1347 = vld [vmem:[%s1332 + $0x38] sm:$0xf]
      %v1348 = vld [vmem:[%s1332 + $0x3c] sm:$0xf]
      %v1349 = vunpack.c.l.b16 %v1303
      %v1350 = vunpack.c.l.b16 %v1307
      %v1351 = vunpack.c.l.b16 %v1311
      %v1352 = vunpack.c.l.b16 %v1315
      %v1353 = vunpack.c.l.b16 %v1319
      %v1354 = vunpack.c.l.b16 %v1323
      %v1355 = vunpack.c.l.b16 %v1327
      %v1356 = vunpack.c.l.b16 %v1331
      %v1357 = vpack.c.b16 %v1350, %v1349
      %v1358 = vpack.c.b16 %v1352, %v1351
      %v1359 = vpack.c.b16 %v1354, %v1353
      %v1360 = vpack.c.b16 %v1356, %v1355
      %v1381 = vunpack.c.l.b16 %v1333
      %v1382 = vunpack.c.l.b16 %v1334
      %v1383 = vunpack.c.l.b16 %v1335
      %v1384 = vunpack.c.l.b16 %v1336
      %v1385 = vunpack.c.l.b16 %v1337
      %v1386 = vunpack.c.l.b16 %v1338
      %v1387 = vunpack.c.l.b16 %v1339
      %v1388 = vunpack.c.l.b16 %v1340
      %v1389 = vunpack.c.l.b16 %v1341
      %v1390 = vunpack.c.l.b16 %v1342
      %v1391 = vunpack.c.l.b16 %v1343
      %v1392 = vunpack.c.l.b16 %v1344
      %v1393 = vunpack.c.l.b16 %v1345
      %v1394 = vunpack.c.l.b16 %v1346
      %v1395 = vunpack.c.l.b16 %v1347
      %v1396 = vunpack.c.l.b16 %v1348
      %v1397 = vpack.c.b16 %v1382, %v1381
      %v1398 = vpack.c.b16 %v1384, %v1383
      %v1399 = vpack.c.b16 %v1386, %v1385
      %v1400 = vpack.c.b16 %v1388, %v1387
      %v1401 = vpack.c.b16 %v1390, %v1389
      %v1402 = vpack.c.b16 %v1392, %v1391
      %v1403 = vpack.c.b16 %v1394, %v1393
      %v1404 = vpack.c.b16 %v1396, %v1395
      %1413 = vmatpush.bf16.msra.mxu0 %v1404
      %1414 = vmatpush.bf16.msra.mxu0 %v1403
      %1415 = vmatpush.bf16.msra.mxu0 %v1402
      %1416 = vmatpush.bf16.msra.mxu0 %v1401
      %1417 = vmatpush.bf16.msra.mxu0 %v1400
      %1418 = vmatpush.bf16.msra.mxu0 %v1399
      %1419 = vmatpush.bf16.msra.mxu0 %v1398
      %1420 = vmatpush.bf16.msra.mxu0 %v1397
      %1421 = vmatmul.bf16.gmra.mxu0 %v1357
      %v1422 = vpop.f32.mrf.mxu0
      %v1423 = vadd.f32 0.0, %v1422
      %v1424 = vpop.f32.mrf.mxu0
      %v1425 = vadd.f32 0.0, %v1424
      %1426 = vmatmul.bf16.gmra.mxu0 %v1358
      %v1427 = vpop.f32.mrf.mxu0
      %v1428 = vadd.f32 0.0, %v1427
      %v1429 = vpop.f32.mrf.mxu0
      %v1430 = vadd.f32 0.0, %v1429
      %1431 = vmatmul.bf16.gmra.mxu0 %v1359
      %v1432 = vpop.f32.mrf.mxu0
      %v1433 = vadd.f32 0.0, %v1432
      %v1434 = vpop.f32.mrf.mxu0
      %v1435 = vadd.f32 0.0, %v1434
      %1436 = vmatmul.bf16.gmra.mxu0 %v1360
      %v1437 = vpop.f32.mrf.mxu0
      %v1438 = vadd.f32 0.0, %v1437
      %v1439 = vpop.f32.mrf.mxu0
      %v1440 = vadd.f32 0.0, %v1439
      %1441 = vdwg.mxu0
      %v1442 = vadd.f32 %v1268, %v1423
      %v1443 = vadd.f32 %v1269, %v1425
      %v1444 = vadd.f32 %v1270, %v1428
      %v1445 = vadd.f32 %v1271, %v1430
      %v1446 = vadd.f32 %v1272, %v1433
      %v1447 = vadd.f32 %v1273, %v1435
      %v1448 = vadd.f32 %v1274, %v1438
      %v1449 = vadd.f32 %v1275, %v1440
      %s1450 = scalar_lea.vmem [#allocation2], 16
      %v1451 = vld [vmem:[%s1450] sm:$0xf]
      %v1452 = vld [vmem:[%s1450 + $0x8] sm:$0xf]
      %v1453 = vld [vmem:[%s1450 + $0x10] sm:$0xf]
      %v1454 = vld [vmem:[%s1450 + $0x18] sm:$0xf]
      %v1455 = vld [vmem:[%s1450 + $0x20] sm:$0xf]
      %v1456 = vld [vmem:[%s1450 + $0x28] sm:$0xf]
      %v1457 = vld [vmem:[%s1450 + $0x30] sm:$0xf]
      %v1458 = vld [vmem:[%s1450 + $0x38] sm:$0xf]
      %s1459 = scalar_lea.vmem %s2, 384
      %v1460 = vld [vmem:[%s1459] sm:$0xf]
      %v1461 = vld [vmem:[%s1459 + $0x4] sm:$0xf]
      %v1462 = vld [vmem:[%s1459 + $0x8] sm:$0xf]
      %v1463 = vld [vmem:[%s1459 + $0xc] sm:$0xf]
      %v1464 = vld [vmem:[%s1459 + $0x10] sm:$0xf]
      %v1465 = vld [vmem:[%s1459 + $0x14] sm:$0xf]
      %v1466 = vld [vmem:[%s1459 + $0x18] sm:$0xf]
      %v1467 = vld [vmem:[%s1459 + $0x1c] sm:$0xf]
      %v1468 = vld [vmem:[%s1459 + $0x20] sm:$0xf]
      %v1469 = vld [vmem:[%s1459 + $0x24] sm:$0xf]
      %v1470 = vld [vmem:[%s1459 + $0x28] sm:$0xf]
      %v1471 = vld [vmem:[%s1459 + $0x2c] sm:$0xf]
      %v1472 = vld [vmem:[%s1459 + $0x30] sm:$0xf]
      %v1473 = vld [vmem:[%s1459 + $0x34] sm:$0xf]
      %v1474 = vld [vmem:[%s1459 + $0x38] sm:$0xf]
      %v1475 = vld [vmem:[%s1459 + $0x3c] sm:$0xf]
      %v1484 = vunpack.c.l.b16 %v1451
      %v1485 = vunpack.c.l.b16 %v1452
      %v1486 = vunpack.c.l.b16 %v1453
      %v1487 = vunpack.c.l.b16 %v1454
      %v1488 = vunpack.c.l.b16 %v1455
      %v1489 = vunpack.c.l.b16 %v1456
      %v1490 = vunpack.c.l.b16 %v1457
      %v1491 = vunpack.c.l.b16 %v1458
      %v1492 = vpack.c.b16 %v1485, %v1484
      %v1493 = vpack.c.b16 %v1487, %v1486
      %v1494 = vpack.c.b16 %v1489, %v1488
      %v1495 = vpack.c.b16 %v1491, %v1490
      %v1516 = vunpack.c.l.b16 %v1460
      %v1517 = vunpack.c.l.b16 %v1461
      %v1518 = vunpack.c.l.b16 %v1462
      %v1519 = vunpack.c.l.b16 %v1463
      %v1520 = vunpack.c.l.b16 %v1464
      %v1521 = vunpack.c.l.b16 %v1465
      %v1522 = vunpack.c.l.b16 %v1466
      %v1523 = vunpack.c.l.b16 %v1467
      %v1524 = vunpack.c.l.b16 %v1468
      %v1525 = vunpack.c.l.b16 %v1469
      %v1526 = vunpack.c.l.b16 %v1470
      %v1527 = vunpack.c.l.b16 %v1471
      %v1528 = vunpack.c.l.b16 %v1472
      %v1529 = vunpack.c.l.b16 %v1473
      %v1530 = vunpack.c.l.b16 %v1474
      %v1531 = vunpack.c.l.b16 %v1475
      %v1532 = vpack.c.b16 %v1517, %v1516
      %v1533 = vpack.c.b16 %v1519, %v1518
      %v1534 = vpack.c.b16 %v1521, %v1520
      %v1535 = vpack.c.b16 %v1523, %v1522
      %v1536 = vpack.c.b16 %v1525, %v1524
      %v1537 = vpack.c.b16 %v1527, %v1526
      %v1538 = vpack.c.b16 %v1529, %v1528
      %v1539 = vpack.c.b16 %v1531, %v1530
      %1548 = vmatpush.bf16.msra.mxu0 %v1539
      %1549 = vmatpush.bf16.msra.mxu0 %v1538
      %1550 = vmatpush.bf16.msra.mxu0 %v1537
      %1551 = vmatpush.bf16.msra.mxu0 %v1536
      %1552 = vmatpush.bf16.msra.mxu0 %v1535
      %1553 = vmatpush.bf16.msra.mxu0 %v1534
      %1554 = vmatpush.bf16.msra.mxu0 %v1533
      %1555 = vmatpush.bf16.msra.mxu0 %v1532
      %1556 = vmatmul.bf16.gmra.mxu0 %v1492
      %v1557 = vpop.f32.mrf.mxu0
      %v1558 = vadd.f32 0.0, %v1557
      %v1559 = vpop.f32.mrf.mxu0
      %v1560 = vadd.f32 0.0, %v1559
      %1561 = vmatmul.bf16.gmra.mxu0 %v1493
      %v1562 = vpop.f32.mrf.mxu0
      %v1563 = vadd.f32 0.0, %v1562
      %v1564 = vpop.f32.mrf.mxu0
      %v1565 = vadd.f32 0.0, %v1564
      %1566 = vmatmul.bf16.gmra.mxu0 %v1494
      %v1567 = vpop.f32.mrf.mxu0
      %v1568 = vadd.f32 0.0, %v1567
      %v1569 = vpop.f32.mrf.mxu0
      %v1570 = vadd.f32 0.0, %v1569
      %1571 = vmatmul.bf16.gmra.mxu0 %v1495
      %v1572 = vpop.f32.mrf.mxu0
      %v1573 = vadd.f32 0.0, %v1572
      %v1574 = vpop.f32.mrf.mxu0
      %v1575 = vadd.f32 0.0, %v1574
      %1576 = vdwg.mxu0
      %v1577 = vadd.f32 %v1442, %v1558
      %v1578 = vadd.f32 %v1443, %v1560
      %v1579 = vadd.f32 %v1444, %v1563
      %v1580 = vadd.f32 %v1445, %v1565
      %v1581 = vadd.f32 %v1446, %v1568
      %v1582 = vadd.f32 %v1447, %v1570
      %v1583 = vadd.f32 %v1448, %v1573
      %v1584 = vadd.f32 %v1449, %v1575
      %v1585 = vld [vmem:[%s1450] sm:$0xf]
      %v1586 = vld [vmem:[%s1450 + $0x4] sm:$0x1]
      %v1587 = vld [vmem:[%s1450 + $0x8] sm:$0xf]
      %v1588 = vld [vmem:[%s1450 + $0xc] sm:$0x1]
      %v1589 = vld [vmem:[%s1450 + $0x10] sm:$0xf]
      %v1590 = vld [vmem:[%s1450 + $0x14] sm:$0x1]
      %v1591 = vld [vmem:[%s1450 + $0x18] sm:$0xf]
      %v1592 = vld [vmem:[%s1450 + $0x1c] sm:$0x1]
      %v1593 = vld [vmem:[%s1450 + $0x20] sm:$0xf]
      %v1594 = vld [vmem:[%s1450 + $0x24] sm:$0x1]
      %v1595 = vld [vmem:[%s1450 + $0x28] sm:$0xf]
      %v1596 = vld [vmem:[%s1450 + $0x2c] sm:$0x1]
      %v1597 = vld [vmem:[%s1450 + $0x30] sm:$0xf]
      %v1598 = vld [vmem:[%s1450 + $0x34] sm:$0x1]
      %v1599 = vld [vmem:[%s1450 + $0x38] sm:$0xf]
      %v1600 = vld [vmem:[%s1450 + $0x3c] sm:$0x1]
      %v1602 = vshrl.u32 %v1585, 16
      %v1604 = vrot.slane %v1602, 4
      %v1605 = vshll.u32 %v1585, 16
      %v1607 = vrot.slane %v1605, 5
      %v1608 = vor.u32 %v1604, %v1607
      %v1609 = vrot.slane %v1608, 4
      %v1611 = vshll.u32 %v1586, 16
      %v1613 = vrot.slane %v1611, 5
      %v1614 = vsel %vm394, %v1609, %v1613
      %v1616 = vshrl.u32 %v1587, 16
      %v1618 = vrot.slane %v1616, 4
      %v1619 = vshll.u32 %v1587, 16
      %v1621 = vrot.slane %v1619, 5
      %v1622 = vor.u32 %v1618, %v1621
      %v1623 = vrot.slane %v1622, 4
      %v1625 = vshll.u32 %v1588, 16
      %v1627 = vrot.slane %v1625, 5
      %v1628 = vsel %vm394, %v1623, %v1627
      %v1630 = vshrl.u32 %v1589, 16
      %v1632 = vrot.slane %v1630, 4
      %v1633 = vshll.u32 %v1589, 16
      %v1635 = vrot.slane %v1633, 5
      %v1636 = vor.u32 %v1632, %v1635
      %v1637 = vrot.slane %v1636, 4
      %v1639 = vshll.u32 %v1590, 16
      %v1641 = vrot.slane %v1639, 5
      %v1642 = vsel %vm394, %v1637, %v1641
      %v1644 = vshrl.u32 %v1591, 16
      %v1646 = vrot.slane %v1644, 4
      %v1647 = vshll.u32 %v1591, 16
      %v1649 = vrot.slane %v1647, 5
      %v1650 = vor.u32 %v1646, %v1649
      %v1651 = vrot.slane %v1650, 4
      %v1653 = vshll.u32 %v1592, 16
      %v1655 = vrot.slane %v1653, 5
      %v1656 = vsel %vm394, %v1651, %v1655
      %v1658 = vshrl.u32 %v1593, 16
      %v1660 = vrot.slane %v1658, 4
      %v1661 = vshll.u32 %v1593, 16
      %v1663 = vrot.slane %v1661, 5
      %v1664 = vor.u32 %v1660, %v1663
      %v1665 = vrot.slane %v1664, 4
      %v1667 = vshll.u32 %v1594, 16
      %v1669 = vrot.slane %v1667, 5
      %v1670 = vsel %vm394, %v1665, %v1669
      %v1672 = vshrl.u32 %v1595, 16
      %v1674 = vrot.slane %v1672, 4
      %v1675 = vshll.u32 %v1595, 16
      %v1677 = vrot.slane %v1675, 5
      %v1678 = vor.u32 %v1674, %v1677
      %v1679 = vrot.slane %v1678, 4
      %v1681 = vshll.u32 %v1596, 16
      %v1683 = vrot.slane %v1681, 5
      %v1684 = vsel %vm394, %v1679, %v1683
      %v1686 = vshrl.u32 %v1597, 16
      %v1688 = vrot.slane %v1686, 4
      %v1689 = vshll.u32 %v1597, 16
      %v1691 = vrot.slane %v1689, 5
      %v1692 = vor.u32 %v1688, %v1691
      %v1693 = vrot.slane %v1692, 4
      %v1695 = vshll.u32 %v1598, 16
      %v1697 = vrot.slane %v1695, 5
      %v1698 = vsel %vm394, %v1693, %v1697
      %v1700 = vshrl.u32 %v1599, 16
      %v1702 = vrot.slane %v1700, 4
      %v1703 = vshll.u32 %v1599, 16
      %v1705 = vrot.slane %v1703, 5
      %v1706 = vor.u32 %v1702, %v1705
      %v1707 = vrot.slane %v1706, 4
      %v1709 = vshll.u32 %v1600, 16
      %v1711 = vrot.slane %v1709, 5
      %v1712 = vsel %vm394, %v1707, %v1711
      %s1713 = scalar_lea.vmem %s2, 448
      %v1714 = vld [vmem:[%s1713] sm:$0xf]
      %v1715 = vld [vmem:[%s1713 + $0x4] sm:$0xf]
      %v1716 = vld [vmem:[%s1713 + $0x8] sm:$0xf]
      %v1717 = vld [vmem:[%s1713 + $0xc] sm:$0xf]
      %v1718 = vld [vmem:[%s1713 + $0x10] sm:$0xf]
      %v1719 = vld [vmem:[%s1713 + $0x14] sm:$0xf]
      %v1720 = vld [vmem:[%s1713 + $0x18] sm:$0xf]
      %v1721 = vld [vmem:[%s1713 + $0x1c] sm:$0xf]
      %v1722 = vld [vmem:[%s1713 + $0x20] sm:$0xf]
      %v1723 = vld [vmem:[%s1713 + $0x24] sm:$0xf]
      %v1724 = vld [vmem:[%s1713 + $0x28] sm:$0xf]
      %v1725 = vld [vmem:[%s1713 + $0x2c] sm:$0xf]
      %v1726 = vld [vmem:[%s1713 + $0x30] sm:$0xf]
      %v1727 = vld [vmem:[%s1713 + $0x34] sm:$0xf]
      %v1728 = vld [vmem:[%s1713 + $0x38] sm:$0xf]
      %v1729 = vld [vmem:[%s1713 + $0x3c] sm:$0xf]
      %v1730 = vunpack.c.l.b16 %v1614
      %v1731 = vunpack.c.l.b16 %v1628
      %v1732 = vunpack.c.l.b16 %v1642
      %v1733 = vunpack.c.l.b16 %v1656
      %v1734 = vunpack.c.l.b16 %v1670
      %v1735 = vunpack.c.l.b16 %v1684
      %v1736 = vunpack.c.l.b16 %v1698
      %v1737 = vunpack.c.l.b16 %v1712
      %v1738 = vpack.c.b16 %v1731, %v1730
      %v1739 = vpack.c.b16 %v1733, %v1732
      %v1740 = vpack.c.b16 %v1735, %v1734
      %v1741 = vpack.c.b16 %v1737, %v1736
      %v1762 = vunpack.c.l.b16 %v1714
      %v1763 = vunpack.c.l.b16 %v1715
      %v1764 = vunpack.c.l.b16 %v1716
      %v1765 = vunpack.c.l.b16 %v1717
      %v1766 = vunpack.c.l.b16 %v1718
      %v1767 = vunpack.c.l.b16 %v1719
      %v1768 = vunpack.c.l.b16 %v1720
      %v1769 = vunpack.c.l.b16 %v1721
      %v1770 = vunpack.c.l.b16 %v1722
      %v1771 = vunpack.c.l.b16 %v1723
      %v1772 = vunpack.c.l.b16 %v1724
      %v1773 = vunpack.c.l.b16 %v1725
      %v1774 = vunpack.c.l.b16 %v1726
      %v1775 = vunpack.c.l.b16 %v1727
      %v1776 = vunpack.c.l.b16 %v1728
      %v1777 = vunpack.c.l.b16 %v1729
      %v1778 = vpack.c.b16 %v1763, %v1762
      %v1779 = vpack.c.b16 %v1765, %v1764
      %v1780 = vpack.c.b16 %v1767, %v1766
      %v1781 = vpack.c.b16 %v1769, %v1768
      %v1782 = vpack.c.b16 %v1771, %v1770
      %v1783 = vpack.c.b16 %v1773, %v1772
      %v1784 = vpack.c.b16 %v1775, %v1774
      %v1785 = vpack.c.b16 %v1777, %v1776
      %1794 = vmatpush.bf16.msra.mxu0 %v1785
      %1795 = vmatpush.bf16.msra.mxu0 %v1784
      %1796 = vmatpush.bf16.msra.mxu0 %v1783
      %1797 = vmatpush.bf16.msra.mxu0 %v1782
      %1798 = vmatpush.bf16.msra.mxu0 %v1781
      %1799 = vmatpush.bf16.msra.mxu0 %v1780
      %1800 = vmatpush.bf16.msra.mxu0 %v1779
      %1801 = vmatpush.bf16.msra.mxu0 %v1778
      %1802 = vmatmul.bf16.gmra.mxu0 %v1738
      %v1803 = vpop.f32.mrf.mxu0
      %v1804 = vadd.f32 0.0, %v1803
      %v1805 = vpop.f32.mrf.mxu0
      %v1806 = vadd.f32 0.0, %v1805
      %1807 = vmatmul.bf16.gmra.mxu0 %v1739
      %v1808 = vpop.f32.mrf.mxu0
      %v1809 = vadd.f32 0.0, %v1808
      %v1810 = vpop.f32.mrf.mxu0
      %v1811 = vadd.f32 0.0, %v1810
      %1812 = vmatmul.bf16.gmra.mxu0 %v1740
      %v1813 = vpop.f32.mrf.mxu0
      %v1814 = vadd.f32 0.0, %v1813
      %v1815 = vpop.f32.mrf.mxu0
      %v1816 = vadd.f32 0.0, %v1815
      %1817 = vmatmul.bf16.gmra.mxu0 %v1741
      %v1818 = vpop.f32.mrf.mxu0
      %v1819 = vadd.f32 0.0, %v1818
      %v1820 = vpop.f32.mrf.mxu0
      %v1821 = vadd.f32 0.0, %v1820
      %1822 = vdwg.mxu0
      %v1823 = vadd.f32 %v1577, %v1804
      %v1824 = vadd.f32 %v1578, %v1806
      %v1825 = vadd.f32 %v1579, %v1809
      %v1826 = vadd.f32 %v1580, %v1811
      %v1827 = vadd.f32 %v1581, %v1814
      %v1828 = vadd.f32 %v1582, %v1816
      %v1829 = vadd.f32 %v1583, %v1819
      %v1830 = vadd.f32 %v1584, %v1821
      %v1831 = vld [vmem:[%s1450] sm:$0xe]
      %v1832 = vld [vmem:[%s1450 + $0x8] sm:$0xe]
      %v1833 = vld [vmem:[%s1450 + $0x10] sm:$0xe]
      %v1834 = vld [vmem:[%s1450 + $0x18] sm:$0xe]
      %v1835 = vld [vmem:[%s1450 + $0x20] sm:$0xe]
      %v1836 = vld [vmem:[%s1450 + $0x28] sm:$0xe]
      %v1837 = vld [vmem:[%s1450 + $0x30] sm:$0xe]
      %v1838 = vld [vmem:[%s1450 + $0x38] sm:$0xe]
      %v1855 = vrot.slane %v1831, 5
      %v1856 = vrot.slane %v1855, 4
      %v1857 = vrot.slane %v1586, 5
      %v1858 = vsel %vm744, %v1856, %v1857
      %v1859 = vrot.slane %v1832, 5
      %v1860 = vrot.slane %v1859, 4
      %v1861 = vrot.slane %v1588, 5
      %v1862 = vsel %vm744, %v1860, %v1861
      %v1863 = vrot.slane %v1833, 5
      %v1864 = vrot.slane %v1863, 4
      %v1865 = vrot.slane %v1590, 5
      %v1866 = vsel %vm744, %v1864, %v1865
      %v1867 = vrot.slane %v1834, 5
      %v1868 = vrot.slane %v1867, 4
      %v1869 = vrot.slane %v1592, 5
      %v1870 = vsel %vm744, %v1868, %v1869
      %v1871 = vrot.slane %v1835, 5
      %v1872 = vrot.slane %v1871, 4
      %v1873 = vrot.slane %v1594, 5
      %v1874 = vsel %vm744, %v1872, %v1873
      %v1875 = vrot.slane %v1836, 5
      %v1876 = vrot.slane %v1875, 4
      %v1877 = vrot.slane %v1596, 5
      %v1878 = vsel %vm744, %v1876, %v1877
      %v1879 = vrot.slane %v1837, 5
      %v1880 = vrot.slane %v1879, 4
      %v1881 = vrot.slane %v1598, 5
      %v1882 = vsel %vm744, %v1880, %v1881
      %v1883 = vrot.slane %v1838, 5
      %v1884 = vrot.slane %v1883, 4
      %v1885 = vrot.slane %v1600, 5
      %v1886 = vsel %vm744, %v1884, %v1885
      %s1887 = scalar_lea.vmem %s2, 512
      %v1888 = vld [vmem:[%s1887] sm:$0xf]
      %v1889 = vld [vmem:[%s1887 + $0x4] sm:$0xf]
      %v1890 = vld [vmem:[%s1887 + $0x8] sm:$0xf]
      %v1891 = vld [vmem:[%s1887 + $0xc] sm:$0xf]
      %v1892 = vld [vmem:[%s1887 + $0x10] sm:$0xf]
      %v1893 = vld [vmem:[%s1887 + $0x14] sm:$0xf]
      %v1894 = vld [vmem:[%s1887 + $0x18] sm:$0xf]
      %v1895 = vld [vmem:[%s1887 + $0x1c] sm:$0xf]
      %v1896 = vld [vmem:[%s1887 + $0x20] sm:$0xf]
      %v1897 = vld [vmem:[%s1887 + $0x24] sm:$0xf]
      %v1898 = vld [vmem:[%s1887 + $0x28] sm:$0xf]
      %v1899 = vld [vmem:[%s1887 + $0x2c] sm:$0xf]
      %v1900 = vld [vmem:[%s1887 + $0x30] sm:$0xf]
      %v1901 = vld [vmem:[%s1887 + $0x34] sm:$0xf]
      %v1902 = vld [vmem:[%s1887 + $0x38] sm:$0xf]
      %v1903 = vld [vmem:[%s1887 + $0x3c] sm:$0xf]
      %v1904 = vunpack.c.l.b16 %v1858
      %v1905 = vunpack.c.l.b16 %v1862
      %v1906 = vunpack.c.l.b16 %v1866
      %v1907 = vunpack.c.l.b16 %v1870
      %v1908 = vunpack.c.l.b16 %v1874
      %v1909 = vunpack.c.l.b16 %v1878
      %v1910 = vunpack.c.l.b16 %v1882
      %v1911 = vunpack.c.l.b16 %v1886
      %v1912 = vpack.c.b16 %v1905, %v1904
      %v1913 = vpack.c.b16 %v1907, %v1906
      %v1914 = vpack.c.b16 %v1909, %v1908
      %v1915 = vpack.c.b16 %v1911, %v1910
      %v1936 = vunpack.c.l.b16 %v1888
      %v1937 = vunpack.c.l.b16 %v1889
      %v1938 = vunpack.c.l.b16 %v1890
      %v1939 = vunpack.c.l.b16 %v1891
      %v1940 = vunpack.c.l.b16 %v1892
      %v1941 = vunpack.c.l.b16 %v1893
      %v1942 = vunpack.c.l.b16 %v1894
      %v1943 = vunpack.c.l.b16 %v1895
      %v1944 = vunpack.c.l.b16 %v1896
      %v1945 = vunpack.c.l.b16 %v1897
      %v1946 = vunpack.c.l.b16 %v1898
      %v1947 = vunpack.c.l.b16 %v1899
      %v1948 = vunpack.c.l.b16 %v1900
      %v1949 = vunpack.c.l.b16 %v1901
      %v1950 = vunpack.c.l.b16 %v1902
      %v1951 = vunpack.c.l.b16 %v1903
      %v1952 = vpack.c.b16 %v1937, %v1936
      %v1953 = vpack.c.b16 %v1939, %v1938
      %v1954 = vpack.c.b16 %v1941, %v1940
      %v1955 = vpack.c.b16 %v1943, %v1942
      %v1956 = vpack.c.b16 %v1945, %v1944
      %v1957 = vpack.c.b16 %v1947, %v1946
      %v1958 = vpack.c.b16 %v1949, %v1948
      %v1959 = vpack.c.b16 %v1951, %v1950
      %1968 = vmatpush.bf16.msra.mxu0 %v1959
      %1969 = vmatpush.bf16.msra.mxu0 %v1958
      %1970 = vmatpush.bf16.msra.mxu0 %v1957
      %1971 = vmatpush.bf16.msra.mxu0 %v1956
      %1972 = vmatpush.bf16.msra.mxu0 %v1955
      %1973 = vmatpush.bf16.msra.mxu0 %v1954
      %1974 = vmatpush.bf16.msra.mxu0 %v1953
      %1975 = vmatpush.bf16.msra.mxu0 %v1952
      %1976 = vmatmul.bf16.gmra.mxu0 %v1912
      %v1977 = vpop.f32.mrf.mxu0
      %v1978 = vadd.f32 0.0, %v1977
      %v1979 = vpop.f32.mrf.mxu0
      %v1980 = vadd.f32 0.0, %v1979
      %1981 = vmatmul.bf16.gmra.mxu0 %v1913
      %v1982 = vpop.f32.mrf.mxu0
      %v1983 = vadd.f32 0.0, %v1982
      %v1984 = vpop.f32.mrf.mxu0
      %v1985 = vadd.f32 0.0, %v1984
      %1986 = vmatmul.bf16.gmra.mxu0 %v1914
      %v1987 = vpop.f32.mrf.mxu0
      %v1988 = vadd.f32 0.0, %v1987
      %v1989 = vpop.f32.mrf.mxu0
      %v1990 = vadd.f32 0.0, %v1989
      %1991 = vmatmul.bf16.gmra.mxu0 %v1915
      %v1992 = vpop.f32.mrf.mxu0
      %v1993 = vadd.f32 0.0, %v1992
      %v1994 = vpop.f32.mrf.mxu0
      %v1995 = vadd.f32 0.0, %v1994
      %1996 = vdwg.mxu0
      %v1997 = vadd.f32 %v1823, %v1978
      %v1998 = vadd.f32 %v1824, %v1980
      %v1999 = vadd.f32 %v1825, %v1983
      %v2000 = vadd.f32 %v1826, %v1985
      %v2001 = vadd.f32 %v1827, %v1988
      %v2002 = vadd.f32 %v1828, %v1990
      %v2003 = vadd.f32 %v1829, %v1993
      %v2004 = vadd.f32 %v1830, %v1995
      %v2006 = vperm.slane %v359, 0
      %v2008 = vadd.f32 %v1997, %v2006
      %v2009 = vadd.f32 %v1998, %v2006
      %v2010 = vadd.f32 %v1999, %v2006
      %v2011 = vadd.f32 %v2000, %v2006
      %v2012 = vadd.f32 %v2001, %v2006
      %v2013 = vadd.f32 %v2002, %v2006
      %v2014 = vadd.f32 %v2003, %v2006
      %v2015 = vadd.f32 %v2004, %v2006
      %v2016 = vmax.f32 %v2008, 0.0
      %v2017 = vmax.f32 %v2009, 0.0
      %v2018 = vmax.f32 %v2010, 0.0
      %v2019 = vmax.f32 %v2011, 0.0
      %v2020 = vmax.f32 %v2012, 0.0
      %v2021 = vmax.f32 %v2013, 0.0
      %v2022 = vmax.f32 %v2014, 0.0
      %v2023 = vmax.f32 %v2015, 0.0
      %v2024 = vpack.c.bf16 %v2016, %v2016
      %v2025 = vpack.c.bf16 %v2017, %v2017
      %v2026 = vpack.c.bf16 %v2018, %v2018
      %v2027 = vpack.c.bf16 %v2019, %v2019
      %v2028 = vpack.c.bf16 %v2020, %v2020
      %v2029 = vpack.c.bf16 %v2021, %v2021
      %v2030 = vpack.c.bf16 %v2022, %v2022
      %v2031 = vpack.c.bf16 %v2023, %v2023
      %2032 = vst [vmem:[%s316] sm:$0xf] %v2024
      %2033 = vst [vmem:[%s316 + $0x4] sm:$0xf] %v2025
      %2034 = vst [vmem:[%s316 + $0x8] sm:$0xf] %v2026
      %2035 = vst [vmem:[%s316 + $0xc] sm:$0xf] %v2027
      %2036 = vst [vmem:[%s316 + $0x10] sm:$0xf] %v2028
      %2037 = vst [vmem:[%s316 + $0x14] sm:$0xf] %v2029
      %2038 = vst [vmem:[%s316 + $0x18] sm:$0xf] %v2030
      %2039 = vst [vmem:[%s316 + $0x1c] sm:$0xf] %v2031
      %s2040 = smul.u32 8, %s20
      %p2041 = scmp.lt.s32.totalorder %s19, 3
      %s2042 = scalar_select %p2041, %s19, 3
      %p2043 = scmp.lt.s32.totalorder %s2040, 7
      %s2044 = scalar_select %p2043, %s2040, 7
      %s2045 = smul.addr %s2042, 8
      %s2046 = sadd.s32 %s2044, %s2045
      %s2047 = smul.addr %s2046, 4
      %s2048 = scalar_lea.vmem %s4, %s2047
      // Predicated region
      $region37: #{_lambda_.9} parent=35 // pred_check
        %p2049 = pneg %p149
      $region38: #{_lambda_.9} parent=35 // pred_check_branch
        %2051 = sbr.rel (%p2049) target = $region40
      $region39: #{_lambda_.9} parent=35 // pred_region
        %s2052 = smul.u32 8, %s20
      $region40: #{_lambda_.9} parent=35 // pred_fallthru
        _
    $region36: #{_lambda_.9} parent=5 // pred_fallthru
      _
    %p2053 = scmp.le.s32.totalorder 2, %s10
    // Predicated region
    $region41: #{_lambda_.9} parent=5 // pred_check
      %p2054 = pneg %p2053
    $region42: #{_lambda_.9} parent=5 // pred_check_branch
      %2056 = sbr.rel (%p2054) target = $region44
    $region43: #{_lambda_.9} parent=5 // pred_region
      %s2057 = ssub.s32 %s10, 2
      // Predicated region
      $region45: #{_lambda_.9} parent=43 // pred_check
        %p2058 = pneg %p155
      $region46: #{_lambda_.9} parent=43 // pred_check_branch
        %2060 = sbr.rel (%p2058) target = $region48
      $region47: #{_lambda_.9} parent=43 // pred_region
        %s2061 = smul.u32 8, %s22
        %p2062 = scmp.lt.s32.totalorder %s21, 3
        %s2063 = scalar_select %p2062, %s21, 3
        %p2064 = scmp.lt.s32.totalorder %s2061, 7
        %s2065 = scalar_select %p2064, %s2061, 7
        %s2066 = smul.addr %s2063, 8
        %s2067 = sadd.s32 %s2065, %s2066
        %s2068 = smul.addr %s2067, 4
        %s2069 = scalar_lea.vmem %s4, %s2068
      $region48: #{_lambda_.9} parent=43 // pred_fallthru
        _
    $region44: #{_lambda_.9} parent=5 // pred_fallthru
      _
  $region6: #{_lambda_.9} parent=0 // loop_footer
    %s14 = sadd.s32 1, %s10
  $region7: #{_lambda_.9} parent=0 // loop_footer_branch
    %9 = sbr.rel target = $region3
  $region8: #{_lambda_.9} parent=0 // loop_exit
    _

// kernel: _lambda_.10
$region0: #{_lambda_.10}
  #allocation0 [shape = 'u32[]', space=smem, size = 0x4, offset = 0x4, fixed_abs, tag = 'smem constant byte address 0x4 - core index']
  #allocation1 [shape = 'u32[72,128]{1,0:T(1,128)}', space=vmem, size = 0x9000, scoped, tag = 'internal scratch']
  #allocation2 [shape = 'f32[64,64]{1,0:T(8,128)}', space=vmem, size = 0x8000, scoped, tag = 'scratch operand']
  #allocation3 [shape = 'f32[64,64]{1,0:T(8,128)}', space=vmem, size = 0x8000, scoped, tag = 'scratch operand']
  #allocation4 [shape = 'f32[1,1]{1,0:T(1,128)}', space=vmem, size = 0x200, scoped, tag = 'scratch operand']
  %s0 = inlined_call_operand.vmem [shape: bf16[4,256,64], index: 0, kind: input, shape index: {}, may-alias: {0,1}]
  %s1 = inlined_call_operand.vmem [shape: bf16[4,256,64], index: 1, kind: input, shape index: {}, may-alias: {0,1}]
  %s2 = inlined_call_operand.vmem [shape: f32[2,64,64], index: 2, kind: output, shape index: {0}]
  %s3 = inlined_call_operand.vmem [shape: f32[2,64,64], index: 3, kind: output, shape index: {1}]
  %s4 = inlined_call_operand.vmem [shape: f32[2,1,1], index: 4, kind: output, shape index: {2}]
  %5 = xla_tuple %s2, %s3, %s4
  %s6 = sld [smem:[#allocation0]]
  $region65: #{_lambda_.10} parent=0
    _
  %s8 = ssub.s32 1, %s6
  %s9 = scalar_select 0, %s8, %s6
  loop: start=0, step=1, limit=4
  $region2: #{_lambda_.10} parent=0 // loop_pre_header
    _
  $region3: #{_lambda_.10} parent=0 // loop_header
    %s11 = sphi 0, %s15
    %p12 = scmp.ge.s32.totalorder %s11, 4
    %s18 = sphi 0, %s30
    %s19 = sphi 0, %s26
    %s20 = sphi 0, %s18
    %s21 = sphi 0, %s19
    %s22 = sphi 0, %s20
    %s23 = sphi 0, %s21
    %s35 = sphi 0, %s37
    %s38 = sphi 0, %s35
    %s39 = sphi 0, %s38
    %s55 = sphi 0, %s39
    %s65 = sphi 0, %s67
    %s68 = sphi 0, %s65
    %s69 = sphi 0, %s68
    %s85 = sphi 0, %s69
    %s91 = sphi 0, %s93
    %s94 = sphi 0, %s91
    %s95 = sphi 0, %s94
    %s111 = sphi 0, %s95
    %s117 = sphi 0, %s119
    %s120 = sphi 0, %s117
    %s121 = sphi 0, %s120
    %s137 = sphi 0, %s121
    %s143 = sphi 0, %s145
    %s146 = sphi 0, %s143
    %s147 = sphi 0, %s146
    %s163 = sphi 0, %s147
  $region4: #{_lambda_.10} parent=0 // loop_header_branch
    %14 = sbr.rel (%p12) target = $region8
  $region5: #{_lambda_.10} parent=0 // loop_body
    %s16 = ssub.s32 %s11, 1
    %s17 = ssub.s32 %s11, 2
    %s24 = sadd.s32 1, %s19
    %p25 = scmp.ge.s32.totalorder %s24, 1
    %s26 = scalar_select %p25, 0, %s24
    %s27 = sadd.s32 1, %s18
    %s28 = scalar_select %p25, %s27, %s18
    %p29 = scmp.ge.s32.totalorder %s28, 2
    %s30 = scalar_select %p29, 0, %s28
    %s31 = ssub.s32 %s18, %s30
    %s32 = ssub.s32 %s19, %s26
    %s33 = sor.u32 %s31, %s32
    %p34 = scmp.eq.s32.totalorder %s33, 0
    %s36 = sadd.s32 %s35, 1
    %s37 = scalar_select %p34, %s35, %s36
    %p40 = pneg %p34
    %p41 = scmp.eq.s32.totalorder %s11, 1
    %p42 = por %p40, %p41
    %p43 = scmp.ne.s32.totalorder %s35, %s38
    %p44 = scmp.eq.s32.totalorder %s11, 0
    %p45 = por %p43, %p44
    %p46 = scmp.ne.s32.totalorder %s35, %s38
    %p47 = scmp.eq.s32.totalorder %s16, 1
    %p48 = por %p46, %p47
    %p49 = scmp.ne.s32.totalorder %s38, %s39
    %p50 = scmp.eq.s32.totalorder %s16, 0
    %p51 = por %p49, %p50
    %p52 = scmp.ne.s32.totalorder %s38, %s39
    %p53 = scmp.eq.s32.totalorder %s17, 1
    %p54 = por %p52, %p53
    %p56 = scmp.ne.s32.totalorder %s39, %s55
    %p57 = scmp.eq.s32.totalorder %s17, 0
    %p58 = por %p56, %p57
    %s59 = sadd.s32 %s18, 2
    %s60 = sadd.s32 %s30, 2
    %s61 = ssub.s32 %s59, %s60
    %s62 = ssub.s32 %s19, %s26
    %s63 = sor.u32 %s61, %s62
    %p64 = scmp.eq.s32.totalorder %s63, 0
    %s66 = sadd.s32 %s65, 1
    %s67 = scalar_select %p64, %s65, %s66
    %p70 = pneg %p64
    %p71 = scmp.eq.s32.totalorder %s11, 1
    %p72 = por %p70, %p71
    %p73 = scmp.ne.s32.totalorder %s65, %s68
    %p74 = scmp.eq.s32.totalorder %s11, 0
    %p75 = por %p73, %p74
    %p76 = scmp.ne.s32.totalorder %s65, %s68
    %p77 = scmp.eq.s32.totalorder %s16, 1
    %p78 = por %p76, %p77
    %p79 = scmp.ne.s32.totalorder %s68, %s69
    %p80 = scmp.eq.s32.totalorder %s16, 0
    %p81 = por %p79, %p80
    %p82 = scmp.ne.s32.totalorder %s68, %s69
    %p83 = scmp.eq.s32.totalorder %s17, 1
    %p84 = por %p82, %p83
    %p86 = scmp.ne.s32.totalorder %s69, %s85
    %p87 = scmp.eq.s32.totalorder %s17, 0
    %p88 = por %p86, %p87
    %s89 = ssub.s32 %s18, %s30
    %p90 = scmp.eq.s32.totalorder %s89, 0
    %s92 = sadd.s32 %s91, 1
    %s93 = scalar_select %p90, %s91, %s92
    %p96 = pneg %p90
    %p97 = scmp.eq.s32.totalorder %s11, 1
    %p98 = por %p96, %p97
    %p99 = scmp.ne.s32.totalorder %s91, %s94
    %p100 = scmp.eq.s32.totalorder %s11, 0
    %p101 = por %p99, %p100
    %p102 = scmp.ne.s32.totalorder %s91, %s94
    %p103 = scmp.eq.s32.totalorder %s16, 1
    %p104 = por %p102, %p103
    %p105 = scmp.ne.s32.totalorder %s94, %s95
    %p106 = scmp.eq.s32.totalorder %s16, 0
    %p107 = por %p105, %p106
    %p108 = scmp.ne.s32.totalorder %s94, %s95
    %p109 = scmp.eq.s32.totalorder %s17, 1
    %p110 = por %p108, %p109
    %p112 = scmp.ne.s32.totalorder %s95, %s111
    %p113 = scmp.eq.s32.totalorder %s17, 0
    %p114 = por %p112, %p113
    %s115 = ssub.s32 %s18, %s30
    %p116 = scmp.eq.s32.totalorder %s115, 0
    %s118 = sadd.s32 %s117, 1
    %s119 = scalar_select %p116, %s117, %s118
    %p122 = pneg %p116
    %p123 = scmp.eq.s32.totalorder %s11, 1
    %p124 = por %p122, %p123
    %p125 = scmp.ne.s32.totalorder %s117, %s120
    %p126 = scmp.eq.s32.totalorder %s11, 0
    %p127 = por %p125, %p126
    %p128 = scmp.ne.s32.totalorder %s117, %s120
    %p129 = scmp.eq.s32.totalorder %s16, 1
    %p130 = por %p128, %p129
    %p131 = scmp.ne.s32.totalorder %s120, %s121
    %p132 = scmp.eq.s32.totalorder %s16, 0
    %p133 = por %p131, %p132
    %p134 = scmp.ne.s32.totalorder %s120, %s121
    %p135 = scmp.eq.s32.totalorder %s17, 1
    %p136 = por %p134, %p135
    %p138 = scmp.ne.s32.totalorder %s121, %s137
    %p139 = scmp.eq.s32.totalorder %s17, 0
    %p140 = por %p138, %p139
    %s141 = ssub.s32 %s18, %s30
    %p142 = scmp.eq.s32.totalorder %s141, 0
    %s144 = sadd.s32 %s143, 1
    %s145 = scalar_select %p142, %s143, %s144
    %p148 = pneg %p142
    %p149 = scmp.eq.s32.totalorder %s11, 1
    %p150 = por %p148, %p149
    %p151 = scmp.ne.s32.totalorder %s143, %s146
    %p152 = scmp.eq.s32.totalorder %s11, 0
    %p153 = por %p151, %p152
    %p154 = scmp.ne.s32.totalorder %s143, %s146
    %p155 = scmp.eq.s32.totalorder %s16, 1
    %p156 = por %p154, %p155
    %p157 = scmp.ne.s32.totalorder %s146, %s147
    %p158 = scmp.eq.s32.totalorder %s16, 0
    %p159 = por %p157, %p158
    %p160 = scmp.ne.s32.totalorder %s146, %s147
    %p161 = scmp.eq.s32.totalorder %s17, 1
    %p162 = por %p160, %p161
    %p164 = scmp.ne.s32.totalorder %s147, %s163
    %p165 = scmp.eq.s32.totalorder %s17, 0
    %p166 = por %p164, %p165
    %p167 = scmp.le.s32.totalorder 1, %s11
    %p168 = scmp.lt.s32.totalorder %s11, 3
    %p169 = pnand %p167, %p168
    %p170 = pneg %p169
    // Predicated region
    $region9: #{_lambda_.10} parent=5 // pred_check
      _
    $region10: #{_lambda_.10} parent=5 // pred_check_branch
      %172 = sbr.rel (%p169) target = $region12
    $region11: #{_lambda_.10} parent=5 // pred_region
      %s173 = ssub.s32 %s11, 1
    $region12: #{_lambda_.10} parent=5 // pred_fallthru
      _
    %p174 = scmp.lt.s32.totalorder %s11, 2
    // Predicated region
    $region13: #{_lambda_.10} parent=5 // pred_check
      %p175 = pneg %p174
    $region14: #{_lambda_.10} parent=5 // pred_check_branch
      %177 = sbr.rel (%p175) target = $region16
    $region15: #{_lambda_.10} parent=5 // pred_region
      // Predicated region
      $region17: #{_lambda_.10} parent=15 // pred_check
        %p178 = pneg %p45
      $region18: #{_lambda_.10} parent=15 // pred_check_branch
        %180 = sbr.rel (%p178) target = $region20
      $region19: #{_lambda_.10} parent=15 // pred_region
        %s181 = smul.u32 32, %s19
        %p182 = scmp.lt.s32.totalorder %s18, 3
        %s183 = scalar_select %p182, %s18, 3
        %p184 = scmp.lt.s32.totalorder %s181, 31
        %s185 = scalar_select %p184, %s181, 31
        %s186 = smul.addr %s183, 32
        %s187 = sadd.s32 %s185, %s186
        %s188 = smul.addr %s187, 4
        %s189 = scalar_lea.vmem %s0, %s188
        %s190 = smul.u32 32, %s19
      $region20: #{_lambda_.10} parent=15 // pred_fallthru
        _
      // Predicated region
      $region21: #{_lambda_.10} parent=15 // pred_check
        %p191 = pneg %p75
      $region22: #{_lambda_.10} parent=15 // pred_check_branch
        %193 = sbr.rel (%p191) target = $region24
      $region23: #{_lambda_.10} parent=15 // pred_region
        %s194 = sadd.s32 %s18, 2
        %s195 = smul.u32 32, %s19
        %p196 = scmp.lt.s32.totalorder %s194, 3
        %s197 = scalar_select %p196, %s194, 3
        %p198 = scmp.lt.s32.totalorder %s195, 31
        %s199 = scalar_select %p198, %s195, 31
        %s200 = smul.addr %s197, 32
        %s201 = sadd.s32 %s199, %s200
        %s202 = smul.addr %s201, 4
        %s203 = scalar_lea.vmem %s1, %s202
        %s204 = sadd.s32 %s18, 2
        %s205 = smul.u32 32, %s19
      $region24: #{_lambda_.10} parent=15 // pred_fallthru
        _
    $region16: #{_lambda_.10} parent=5 // pred_fallthru
      _
    %p206 = scmp.le.s32.totalorder 1, %s11
    %p207 = scmp.lt.s32.totalorder %s11, 3
    %p208 = pnand %p206, %p207
    %p209 = pneg %p208
    // Predicated region
    $region25: #{_lambda_.10} parent=5 // pred_check
      _
    $region26: #{_lambda_.10} parent=5 // pred_check_branch
      %211 = sbr.rel (%p208) target = $region28
    $region27: #{_lambda_.10} parent=5 // pred_region
      %s212 = ssub.s32 %s11, 1
      %s213 = smul.u32 32, %s21
      %p214 = scmp.lt.s32.totalorder %s20, 3
      %s215 = scalar_select %p214, %s20, 3
      %p216 = scmp.lt.s32.totalorder %s213, 31
      %s217 = scalar_select %p216, %s213, 31
      %s218 = smul.addr %s215, 32
      %s219 = sadd.s32 %s217, %s218
      %s220 = smul.addr %s219, 4
      %s221 = scalar_lea.vmem %s0, %s220
      %p222 = pneg %p51
      %p223 = pneg %p48
      %s224 = sadd.s32 %s20, 2
      %s225 = smul.u32 32, %s21
      %p226 = scmp.lt.s32.totalorder %s224, 3
      %s227 = scalar_select %p226, %s224, 3
      %p228 = scmp.lt.s32.totalorder %s225, 31
      %s229 = scalar_select %p228, %s225, 31
      %s230 = smul.addr %s227, 32
      %s231 = sadd.s32 %s229, %s230
      %s232 = smul.addr %s231, 4
      %s233 = scalar_lea.vmem %s1, %s232
      %p234 = pneg %p81
      %p235 = pneg %p78
      %p236 = pneg %p107
      %p237 = pneg %p104
      %p238 = scmp.lt.s32.totalorder %s20, 1
      %s239 = scalar_select %p238, %s20, 1
      %s240 = smul.addr %s239, 8
      %s241 = smul.addr %s240, 8
      %s242 = scalar_lea.vmem %s2, %s241
      %p243 = pneg %p133
      %p244 = pneg %p130
      %p245 = scmp.lt.s32.totalorder %s20, 1
      %s246 = scalar_select %p245, %s20, 1
      %s247 = smul.addr %s246, 8
      %s248 = smul.addr %s247, 8
      %s249 = scalar_lea.vmem %s3, %s248
      %p250 = pneg %p159
      %p251 = pneg %p156
      %p252 = scmp.lt.s32.totalorder %s20, 1
      %s253 = scalar_select %p252, %s20, 1
      %s254 = scalar_lea.vmem %s4, %s253
      %s255 = smul.u32 32, %s21
      %p256 = scmp.lt.s32.totalorder %s20, 3
      %s257 = scalar_select %p256, %s20, 3
      %p258 = scmp.lt.s32.totalorder %s255, 31
      %s259 = scalar_select %p258, %s255, 31
      %s260 = smul.addr %s257, 32
      %s261 = sadd.s32 %s259, %s260
      %s262 = smul.addr %s261, 4
      %s263 = scalar_lea.vmem %s0, %s262
      %s264 = smul.u32 32, %s21
      %s265 = sadd.s32 %s20, 2
      %s266 = smul.u32 32, %s21
      %p267 = scmp.lt.s32.totalorder %s265, 3
      %s268 = scalar_select %p267, %s265, 3
      %p269 = scmp.lt.s32.totalorder %s266, 31
      %s270 = scalar_select %p269, %s266, 31
      %s271 = smul.addr %s268, 32
      %s272 = sadd.s32 %s270, %s271
      %s273 = smul.addr %s272, 4
      %s274 = scalar_lea.vmem %s1, %s273
      %s275 = sadd.s32 %s20, 2
      %s276 = smul.u32 32, %s21
      %p277 = scmp.lt.s32.totalorder %s20, 1
      %s278 = scalar_select %p277, %s20, 1
      %s279 = smul.addr %s278, 8
      %s280 = smul.addr %s279, 8
      %s281 = scalar_lea.vmem %s2, %s280
      %p282 = scmp.lt.s32.totalorder %s20, 1
      %s283 = scalar_select %p282, %s20, 1
      %s284 = smul.addr %s283, 8
      %s285 = smul.addr %s284, 8
      %s286 = scalar_lea.vmem %s3, %s285
      %p287 = scmp.lt.s32.totalorder %s20, 1
      %s288 = scalar_select %p287, %s20, 1
      %s289 = scalar_lea.vmem %s4, %s288
      %p290 = scmp.eq.s32.totalorder %s21, 0
      // Predicated region
      $region29: #{_lambda_.10} parent=27 // pred_check
        %p291 = pneg %p290
      $region30: #{_lambda_.10} parent=27 // pred_check_branch
        %293 = sbr.rel (%p291) target = $region32
      $region31: #{_lambda_.10} parent=27 // pred_region
        %vm294 = vcmask 523264
        %295 = vst.msk [vmem:[#allocation2] sm:$0xff] %vm294, 0.0
        %296 = vst.msk [vmem:[#allocation2 + $0x8] sm:$0xff] %vm294, 0.0
        %297 = vst.msk [vmem:[#allocation2 + $0x10] sm:$0xff] %vm294, 0.0
        %298 = vst.msk [vmem:[#allocation2 + $0x18] sm:$0xff] %vm294, 0.0
        %299 = vst.msk [vmem:[#allocation2 + $0x20] sm:$0xff] %vm294, 0.0
        %300 = vst.msk [vmem:[#allocation2 + $0x28] sm:$0xff] %vm294, 0.0
        %301 = vst.msk [vmem:[#allocation2 + $0x30] sm:$0xff] %vm294, 0.0
        %302 = vst.msk [vmem:[#allocation2 + $0x38] sm:$0xff] %vm294, 0.0
        %303 = vst.msk [vmem:[#allocation3] sm:$0xff] %vm294, 0.0
        %304 = vst.msk [vmem:[#allocation3 + $0x8] sm:$0xff] %vm294, 0.0
        %305 = vst.msk [vmem:[#allocation3 + $0x10] sm:$0xff] %vm294, 0.0
        %306 = vst.msk [vmem:[#allocation3 + $0x18] sm:$0xff] %vm294, 0.0
        %307 = vst.msk [vmem:[#allocation3 + $0x20] sm:$0xff] %vm294, 0.0
        %308 = vst.msk [vmem:[#allocation3 + $0x28] sm:$0xff] %vm294, 0.0
        %309 = vst.msk [vmem:[#allocation3 + $0x30] sm:$0xff] %vm294, 0.0
        %310 = vst.msk [vmem:[#allocation3 + $0x38] sm:$0xff] %vm294, 0.0
        %vm311 = vcmask 0
        %312 = vst.msk [vmem:[#allocation4] sm:$0x1] %vm311, 0.0
      $region32: #{_lambda_.10} parent=27 // pred_fallthru
        _
      %v313 = vld [vmem:[%s263] sm:$0xf]
      %v314 = vld [vmem:[%s263 + $0x4] sm:$0xf]
      %v315 = vld [vmem:[%s263 + $0x8] sm:$0xf]
      %v316 = vld [vmem:[%s263 + $0xc] sm:$0xf]
      %v317 = vld [vmem:[%s263 + $0x10] sm:$0xf]
      %v318 = vld [vmem:[%s263 + $0x14] sm:$0xf]
      %v319 = vld [vmem:[%s263 + $0x18] sm:$0xf]
      %v320 = vld [vmem:[%s263 + $0x1c] sm:$0xf]
      %v321 = vld [vmem:[%s263 + $0x20] sm:$0xf]
      %v322 = vld [vmem:[%s263 + $0x24] sm:$0xf]
      %v323 = vld [vmem:[%s263 + $0x28] sm:$0xf]
      %v324 = vld [vmem:[%s263 + $0x2c] sm:$0xf]
      %v325 = vld [vmem:[%s263 + $0x30] sm:$0xf]
      %v326 = vld [vmem:[%s263 + $0x34] sm:$0xf]
      %v327 = vld [vmem:[%s263 + $0x38] sm:$0xf]
      %v328 = vld [vmem:[%s263 + $0x3c] sm:$0xf]
      %v329 = vld [vmem:[%s263 + $0x40] sm:$0xf]
      %v330 = vld [vmem:[%s263 + $0x44] sm:$0xf]
      %v331 = vld [vmem:[%s263 + $0x48] sm:$0xf]
      %v332 = vld [vmem:[%s263 + $0x4c] sm:$0xf]
      %v333 = vld [vmem:[%s263 + $0x50] sm:$0xf]
      %v334 = vld [vmem:[%s263 + $0x54] sm:$0xf]
      %v335 = vld [vmem:[%s263 + $0x58] sm:$0xf]
      %v336 = vld [vmem:[%s263 + $0x5c] sm:$0xf]
      %v337 = vld [vmem:[%s263 + $0x60] sm:$0xf]
      %v338 = vld [vmem:[%s263 + $0x64] sm:$0xf]
      %v339 = vld [vmem:[%s263 + $0x68] sm:$0xf]
      %v340 = vld [vmem:[%s263 + $0x6c] sm:$0xf]
      %v341 = vld [vmem:[%s263 + $0x70] sm:$0xf]
      %v342 = vld [vmem:[%s263 + $0x74] sm:$0xf]
      %v343 = vld [vmem:[%s263 + $0x78] sm:$0xf]
      %v344 = vld [vmem:[%s263 + $0x7c] sm:$0xf]
      %v345 = vld [vmem:[%s274] sm:$0xf]
      %v346 = vld [vmem:[%s274 + $0x4] sm:$0xf]
      %v347 = vld [vmem:[%s274 + $0x8] sm:$0xf]
      %v348 = vld [vmem:[%s274 + $0xc] sm:$0xf]
      %v349 = vld [vmem:[%s274 + $0x10] sm:$0xf]
      %v350 = vld [vmem:[%s274 + $0x14] sm:$0xf]
      %v351 = vld [vmem:[%s274 + $0x18] sm:$0xf]
      %v352 = vld [vmem:[%s274 + $0x1c] sm:$0xf]
      %v353 = vld [vmem:[%s274 + $0x20] sm:$0xf]
      %v354 = vld [vmem:[%s274 + $0x24] sm:$0xf]
      %v355 = vld [vmem:[%s274 + $0x28] sm:$0xf]
      %v356 = vld [vmem:[%s274 + $0x2c] sm:$0xf]
      %v357 = vld [vmem:[%s274 + $0x30] sm:$0xf]
      %v358 = vld [vmem:[%s274 + $0x34] sm:$0xf]
      %v359 = vld [vmem:[%s274 + $0x38] sm:$0xf]
      %v360 = vld [vmem:[%s274 + $0x3c] sm:$0xf]
      %v361 = vld [vmem:[%s274 + $0x40] sm:$0xf]
      %v362 = vld [vmem:[%s274 + $0x44] sm:$0xf]
      %v363 = vld [vmem:[%s274 + $0x48] sm:$0xf]
      %v364 = vld [vmem:[%s274 + $0x4c] sm:$0xf]
      %v365 = vld [vmem:[%s274 + $0x50] sm:$0xf]
      %v366 = vld [vmem:[%s274 + $0x54] sm:$0xf]
      %v367 = vld [vmem:[%s274 + $0x58] sm:$0xf]
      %v368 = vld [vmem:[%s274 + $0x5c] sm:$0xf]
      %v369 = vld [vmem:[%s274 + $0x60] sm:$0xf]
      %v370 = vld [vmem:[%s274 + $0x64] sm:$0xf]
      %v371 = vld [vmem:[%s274 + $0x68] sm:$0xf]
      %v372 = vld [vmem:[%s274 + $0x6c] sm:$0xf]
      %v373 = vld [vmem:[%s274 + $0x70] sm:$0xf]
      %v374 = vld [vmem:[%s274 + $0x74] sm:$0xf]
      %v375 = vld [vmem:[%s274 + $0x78] sm:$0xf]
      %v376 = vld [vmem:[%s274 + $0x7c] sm:$0xf]
      %v377 = vld [vmem:[#allocation2] sm:$0xff]
      %v378 = vld [vmem:[#allocation2 + $0x8] sm:$0xff]
      %v379 = vld [vmem:[#allocation2 + $0x10] sm:$0xff]
      %v380 = vld [vmem:[#allocation2 + $0x18] sm:$0xff]
      %v381 = vld [vmem:[#allocation2 + $0x20] sm:$0xff]
      %v382 = vld [vmem:[#allocation2 + $0x28] sm:$0xff]
      %v383 = vld [vmem:[#allocation2 + $0x30] sm:$0xff]
      %v384 = vld [vmem:[#allocation2 + $0x38] sm:$0xff]
      %v417 = vunpack.c.l.b16 %v313
      %v418 = vunpack.c.l.b16 %v314
      %v419 = vunpack.c.l.b16 %v315
      %v420 = vunpack.c.l.b16 %v316
      %v421 = vunpack.c.l.b16 %v317
      %v422 = vunpack.c.l.b16 %v318
      %v423 = vunpack.c.l.b16 %v319
      %v424 = vunpack.c.l.b16 %v320
      %v425 = vunpack.c.l.b16 %v321
      %v426 = vunpack.c.l.b16 %v322
      %v427 = vunpack.c.l.b16 %v323
      %v428 = vunpack.c.l.b16 %v324
      %v429 = vunpack.c.l.b16 %v325
      %v430 = vunpack.c.l.b16 %v326
      %v431 = vunpack.c.l.b16 %v327
      %v432 = vunpack.c.l.b16 %v328
      %v433 = vunpack.c.l.b16 %v329
      %v434 = vunpack.c.l.b16 %v330
      %v435 = vunpack.c.l.b16 %v331
      %v436 = vunpack.c.l.b16 %v332
      %v437 = vunpack.c.l.b16 %v333
      %v438 = vunpack.c.l.b16 %v334
      %v439 = vunpack.c.l.b16 %v335
      %v440 = vunpack.c.l.b16 %v336
      %v441 = vunpack.c.l.b16 %v337
      %v442 = vunpack.c.l.b16 %v338
      %v443 = vunpack.c.l.b16 %v339
      %v444 = vunpack.c.l.b16 %v340
      %v445 = vunpack.c.l.b16 %v341
      %v446 = vunpack.c.l.b16 %v342
      %v447 = vunpack.c.l.b16 %v343
      %v448 = vunpack.c.l.b16 %v344
      %v449 = vpack.c.b16 %v418, %v417
      %v450 = vpack.c.b16 %v420, %v419
      %v451 = vpack.c.b16 %v422, %v421
      %v452 = vpack.c.b16 %v424, %v423
      %v453 = vpack.c.b16 %v426, %v425
      %v454 = vpack.c.b16 %v428, %v427
      %v455 = vpack.c.b16 %v430, %v429
      %v456 = vpack.c.b16 %v432, %v431
      %v457 = vpack.c.b16 %v434, %v433
      %v458 = vpack.c.b16 %v436, %v435
      %v459 = vpack.c.b16 %v438, %v437
      %v460 = vpack.c.b16 %v440, %v439
      %v461 = vpack.c.b16 %v442, %v441
      %v462 = vpack.c.b16 %v444, %v443
      %v463 = vpack.c.b16 %v446, %v445
      %v464 = vpack.c.b16 %v448, %v447
      %481 = vxpose.xlu0.c.b16.start [1/8] %v449, 128
      %482 = vxpose.xlu0.c.b16.cont [2/8] %v450, 128
      %483 = vxpose.xlu0.c.b16.cont [3/8] %v451, 128
      %484 = vxpose.xlu0.c.b16.cont [4/8] %v452, 128
      %485 = vxpose.xlu0.c.b16.cont [5/8] %v453, 128
      %486 = vxpose.xlu0.c.b16.cont [6/8] %v454, 128
      %487 = vxpose.xlu0.c.b16.cont [7/8] %v455, 128
      %488 = vxpose.xlu0.c.b16.end [8/8] %v456, 128
      %v489 = vpop.trf.xlu0
      %v490 = vpop.trf.xlu0
      %v491 = vpop.trf.xlu0
      %v492 = vpop.trf.xlu0
      %v493 = vpop.trf.xlu0
      %v494 = vpop.trf.xlu0
      %v495 = vpop.trf.xlu0
      %v496 = vpop.trf.xlu0
      %497 = vxpose.xlu0.c.b16.start [1/8] %v457, 128
      %498 = vxpose.xlu0.c.b16.cont [2/8] %v458, 128
      %499 = vxpose.xlu0.c.b16.cont [3/8] %v459, 128
      %500 = vxpose.xlu0.c.b16.cont [4/8] %v460, 128
      %501 = vxpose.xlu0.c.b16.cont [5/8] %v461, 128
      %502 = vxpose.xlu0.c.b16.cont [6/8] %v462, 128
      %503 = vxpose.xlu0.c.b16.cont [7/8] %v463, 128
      %504 = vxpose.xlu0.c.b16.end [8/8] %v464, 128
      %v505 = vpop.trf.xlu0
      %v506 = vpop.trf.xlu0
      %v507 = vpop.trf.xlu0
      %v508 = vpop.trf.xlu0
      %v509 = vpop.trf.xlu0
      %v510 = vpop.trf.xlu0
      %v511 = vpop.trf.xlu0
      %v512 = vpop.trf.xlu0
      %513 = vmatpush.bf16.msra.mxu0 %v456
      %514 = vmatpush.bf16.msra.mxu0 %v455
      %515 = vmatpush.bf16.msra.mxu0 %v454
      %516 = vmatpush.bf16.msra.mxu0 %v453
      %517 = vmatpush.bf16.msra.mxu0 %v452
      %518 = vmatpush.bf16.msra.mxu0 %v451
      %519 = vmatpush.bf16.msra.mxu0 %v450
      %520 = vmatpush.bf16.msra.mxu0 %v449
      %521 = vmatmul.bf16.gmra.mxu0 %v489
      %v522 = vpop.f32.mrf.mxu0
      %v523 = vadd.f32 0.0, %v522
      %v524 = vpop.f32.mrf.mxu0
      %v525 = vadd.f32 0.0, %v524
      %526 = vmatmul.bf16.gmra.mxu0 %v490
      %v527 = vpop.f32.mrf.mxu0
      %v528 = vadd.f32 0.0, %v527
      %v529 = vpop.f32.mrf.mxu0
      %v530 = vadd.f32 0.0, %v529
      %531 = vmatmul.bf16.gmra.mxu0 %v491
      %v532 = vpop.f32.mrf.mxu0
      %v533 = vadd.f32 0.0, %v532
      %v534 = vpop.f32.mrf.mxu0
      %v535 = vadd.f32 0.0, %v534
      %536 = vmatmul.bf16.gmra.mxu0 %v492
      %v537 = vpop.f32.mrf.mxu0
      %v538 = vadd.f32 0.0, %v537
      %v539 = vpop.f32.mrf.mxu0
      %v540 = vadd.f32 0.0, %v539
      %541 = vdwg.mxu0
      %542 = vmatpush.bf16.msra.mxu0 %v464
      %543 = vmatpush.bf16.msra.mxu0 %v463
      %544 = vmatpush.bf16.msra.mxu0 %v462
      %545 = vmatpush.bf16.msra.mxu0 %v461
      %546 = vmatpush.bf16.msra.mxu0 %v460
      %547 = vmatpush.bf16.msra.mxu0 %v459
      %548 = vmatpush.bf16.msra.mxu0 %v458
      %549 = vmatpush.bf16.msra.mxu0 %v457
      %550 = vmatmul.bf16.gmra.mxu0 %v505
      %v551 = vpop.f32.mrf.mxu0
      %v552 = vadd.f32 %v523, %v551
      %v553 = vpop.f32.mrf.mxu0
      %v554 = vadd.f32 %v525, %v553
      %555 = vmatmul.bf16.gmra.mxu0 %v506
      %v556 = vpop.f32.mrf.mxu0
      %v557 = vadd.f32 %v528, %v556
      %v558 = vpop.f32.mrf.mxu0
      %v559 = vadd.f32 %v530, %v558
      %560 = vmatmul.bf16.gmra.mxu0 %v507
      %v561 = vpop.f32.mrf.mxu0
      %v562 = vadd.f32 %v533, %v561
      %v563 = vpop.f32.mrf.mxu0
      %v564 = vadd.f32 %v535, %v563
      %565 = vmatmul.bf16.gmra.mxu0 %v508
      %v566 = vpop.f32.mrf.mxu0
      %v567 = vadd.f32 %v538, %v566
      %v568 = vpop.f32.mrf.mxu0
      %v569 = vadd.f32 %v540, %v568
      %570 = vdwg.mxu0
      %v571 = vadd.f32 %v377, %v552
      %v572 = vadd.f32 %v378, %v554
      %v573 = vadd.f32 %v379, %v557
      %v574 = vadd.f32 %v380, %v559
      %v575 = vadd.f32 %v381, %v562
      %v576 = vadd.f32 %v382, %v564
      %v577 = vadd.f32 %v383, %v567
      %v578 = vadd.f32 %v384, %v569
      %vm579 = vcmask 523264
      %580 = vst.msk [vmem:[#allocation2] sm:$0xff] %vm579, %v571
      %581 = vst.msk [vmem:[#allocation2 + $0x8] sm:$0xff] %vm579, %v572
      %582 = vst.msk [vmem:[#allocation2 + $0x10] sm:$0xff] %vm579, %v573
      %583 = vst.msk [vmem:[#allocation2 + $0x18] sm:$0xff] %vm579, %v574
      %584 = vst.msk [vmem:[#allocation2 + $0x20] sm:$0xff] %vm579, %v575
      %585 = vst.msk [vmem:[#allocation2 + $0x28] sm:$0xff] %vm579, %v576
      %586 = vst.msk [vmem:[#allocation2 + $0x30] sm:$0xff] %vm579, %v577
      %587 = vst.msk [vmem:[#allocation2 + $0x38] sm:$0xff] %vm579, %v578
      %v588 = vld [vmem:[#allocation3] sm:$0xff]
      %v589 = vld [vmem:[#allocation3 + $0x8] sm:$0xff]
      %v590 = vld [vmem:[#allocation3 + $0x10] sm:$0xff]
      %v591 = vld [vmem:[#allocation3 + $0x18] sm:$0xff]
      %v592 = vld [vmem:[#allocation3 + $0x20] sm:$0xff]
      %v593 = vld [vmem:[#allocation3 + $0x28] sm:$0xff]
      %v594 = vld [vmem:[#allocation3 + $0x30] sm:$0xff]
      %v595 = vld [vmem:[#allocation3 + $0x38] sm:$0xff]
      %v628 = vunpack.c.l.b16 %v345
      %v629 = vunpack.c.l.b16 %v346
      %v630 = vunpack.c.l.b16 %v347
      %v631 = vunpack.c.l.b16 %v348
      %v632 = vunpack.c.l.b16 %v349
      %v633 = vunpack.c.l.b16 %v350
      %v634 = vunpack.c.l.b16 %v351
      %v635 = vunpack.c.l.b16 %v352
      %v636 = vunpack.c.l.b16 %v353
      %v637 = vunpack.c.l.b16 %v354
      %v638 = vunpack.c.l.b16 %v355
      %v639 = vunpack.c.l.b16 %v356
      %v640 = vunpack.c.l.b16 %v357
      %v641 = vunpack.c.l.b16 %v358
      %v642 = vunpack.c.l.b16 %v359
      %v643 = vunpack.c.l.b16 %v360
      %v644 = vunpack.c.l.b16 %v361
      %v645 = vunpack.c.l.b16 %v362
      %v646 = vunpack.c.l.b16 %v363
      %v647 = vunpack.c.l.b16 %v364
      %v648 = vunpack.c.l.b16 %v365
      %v649 = vunpack.c.l.b16 %v366
      %v650 = vunpack.c.l.b16 %v367
      %v651 = vunpack.c.l.b16 %v368
      %v652 = vunpack.c.l.b16 %v369
      %v653 = vunpack.c.l.b16 %v370
      %v654 = vunpack.c.l.b16 %v371
      %v655 = vunpack.c.l.b16 %v372
      %v656 = vunpack.c.l.b16 %v373
      %v657 = vunpack.c.l.b16 %v374
      %v658 = vunpack.c.l.b16 %v375
      %v659 = vunpack.c.l.b16 %v376
      %v660 = vpack.c.b16 %v629, %v628
      %v661 = vpack.c.b16 %v631, %v630
      %v662 = vpack.c.b16 %v633, %v632
      %v663 = vpack.c.b16 %v635, %v634
      %v664 = vpack.c.b16 %v637, %v636
      %v665 = vpack.c.b16 %v639, %v638
      %v666 = vpack.c.b16 %v641, %v640
      %v667 = vpack.c.b16 %v643, %v642
      %v668 = vpack.c.b16 %v645, %v644
      %v669 = vpack.c.b16 %v647, %v646
      %v670 = vpack.c.b16 %v649, %v648
      %v671 = vpack.c.b16 %v651, %v650
      %v672 = vpack.c.b16 %v653, %v652
      %v673 = vpack.c.b16 %v655, %v654
      %v674 = vpack.c.b16 %v657, %v656
      %v675 = vpack.c.b16 %v659, %v658
      %692 = vxpose.xlu0.c.b16.start [1/8] %v660, 128
      %693 = vxpose.xlu0.c.b16.cont [2/8] %v661, 128
      %694 = vxpose.xlu0.c.b16.cont [3/8] %v662, 128
      %695 = vxpose.xlu0.c.b16.cont [4/8] %v663, 128
      %696 = vxpose.xlu0.c.b16.cont [5/8] %v664, 128
      %697 = vxpose.xlu0.c.b16.cont [6/8] %v665, 128
      %698 = vxpose.xlu0.c.b16.cont [7/8] %v666, 128
      %699 = vxpose.xlu0.c.b16.end [8/8] %v667, 128
      %v700 = vpop.trf.xlu0
      %v701 = vpop.trf.xlu0
      %v702 = vpop.trf.xlu0
      %v703 = vpop.trf.xlu0
      %v704 = vpop.trf.xlu0
      %v705 = vpop.trf.xlu0
      %v706 = vpop.trf.xlu0
      %v707 = vpop.trf.xlu0
      %708 = vxpose.xlu0.c.b16.start [1/8] %v668, 128
      %709 = vxpose.xlu0.c.b16.cont [2/8] %v669, 128
      %710 = vxpose.xlu0.c.b16.cont [3/8] %v670, 128
      %711 = vxpose.xlu0.c.b16.cont [4/8] %v671, 128
      %712 = vxpose.xlu0.c.b16.cont [5/8] %v672, 128
      %713 = vxpose.xlu0.c.b16.cont [6/8] %v673, 128
      %714 = vxpose.xlu0.c.b16.cont [7/8] %v674, 128
      %715 = vxpose.xlu0.c.b16.end [8/8] %v675, 128
      %v716 = vpop.trf.xlu0
      %v717 = vpop.trf.xlu0
      %v718 = vpop.trf.xlu0
      %v719 = vpop.trf.xlu0
      %v720 = vpop.trf.xlu0
      %v721 = vpop.trf.xlu0
      %v722 = vpop.trf.xlu0
      %v723 = vpop.trf.xlu0
      %724 = vmatpush.bf16.msra.mxu0 %v667
      %725 = vmatpush.bf16.msra.mxu0 %v666
      %726 = vmatpush.bf16.msra.mxu0 %v665
      %727 = vmatpush.bf16.msra.mxu0 %v664
      %728 = vmatpush.bf16.msra.mxu0 %v663
      %729 = vmatpush.bf16.msra.mxu0 %v662
      %730 = vmatpush.bf16.msra.mxu0 %v661
      %731 = vmatpush.bf16.msra.mxu0 %v660
      %732 = vmatmul.bf16.gmra.mxu0 %v700
      %v733 = vpop.f32.mrf.mxu0
      %v734 = vadd.f32 0.0, %v733
      %v735 = vpop.f32.mrf.mxu0
      %v736 = vadd.f32 0.0, %v735
      %737 = vmatmul.bf16.gmra.mxu0 %v701
      %v738 = vpop.f32.mrf.mxu0
      %v739 = vadd.f32 0.0, %v738
      %v740 = vpop.f32.mrf.mxu0
      %v741 = vadd.f32 0.0, %v740
      %742 = vmatmul.bf16.gmra.mxu0 %v702
      %v743 = vpop.f32.mrf.mxu0
      %v744 = vadd.f32 0.0, %v743
      %v745 = vpop.f32.mrf.mxu0
      %v746 = vadd.f32 0.0, %v745
      %747 = vmatmul.bf16.gmra.mxu0 %v703
      %v748 = vpop.f32.mrf.mxu0
      %v749 = vadd.f32 0.0, %v748
      %v750 = vpop.f32.mrf.mxu0
      %v751 = vadd.f32 0.0, %v750
      %752 = vdwg.mxu0
      %753 = vmatpush.bf16.msra.mxu0 %v675
      %754 = vmatpush.bf16.msra.mxu0 %v674
      %755 = vmatpush.bf16.msra.mxu0 %v673
      %756 = vmatpush.bf16.msra.mxu0 %v672
      %757 = vmatpush.bf16.msra.mxu0 %v671
      %758 = vmatpush.bf16.msra.mxu0 %v670
      %759 = vmatpush.bf16.msra.mxu0 %v669
      %760 = vmatpush.bf16.msra.mxu0 %v668
      %761 = vmatmul.bf16.gmra.mxu0 %v716
      %v762 = vpop.f32.mrf.mxu0
      %v763 = vadd.f32 %v734, %v762
      %v764 = vpop.f32.mrf.mxu0
      %v765 = vadd.f32 %v736, %v764
      %766 = vmatmul.bf16.gmra.mxu0 %v717
      %v767 = vpop.f32.mrf.mxu0
      %v768 = vadd.f32 %v739, %v767
      %v769 = vpop.f32.mrf.mxu0
      %v770 = vadd.f32 %v741, %v769
      %771 = vmatmul.bf16.gmra.mxu0 %v718
      %v772 = vpop.f32.mrf.mxu0
      %v773 = vadd.f32 %v744, %v772
      %v774 = vpop.f32.mrf.mxu0
      %v775 = vadd.f32 %v746, %v774
      %776 = vmatmul.bf16.gmra.mxu0 %v719
      %v777 = vpop.f32.mrf.mxu0
      %v778 = vadd.f32 %v749, %v777
      %v779 = vpop.f32.mrf.mxu0
      %v780 = vadd.f32 %v751, %v779
      %781 = vdwg.mxu0
      %v782 = vadd.f32 %v588, %v763
      %v783 = vadd.f32 %v589, %v765
      %v784 = vadd.f32 %v590, %v768
      %v785 = vadd.f32 %v591, %v770
      %v786 = vadd.f32 %v592, %v773
      %v787 = vadd.f32 %v593, %v775
      %v788 = vadd.f32 %v594, %v778
      %v789 = vadd.f32 %v595, %v780
      %790 = vst.msk [vmem:[#allocation3] sm:$0xff] %vm579, %v782
      %791 = vst.msk [vmem:[#allocation3 + $0x8] sm:$0xff] %vm579, %v783
      %792 = vst.msk [vmem:[#allocation3 + $0x10] sm:$0xff] %vm579, %v784
      %793 = vst.msk [vmem:[#allocation3 + $0x18] sm:$0xff] %vm579, %v785
      %794 = vst.msk [vmem:[#allocation3 + $0x20] sm:$0xff] %vm579, %v786
      %795 = vst.msk [vmem:[#allocation3 + $0x28] sm:$0xff] %vm579, %v787
      %796 = vst.msk [vmem:[#allocation3 + $0x30] sm:$0xff] %vm579, %v788
      %797 = vst.msk [vmem:[#allocation3 + $0x38] sm:$0xff] %vm579, %v789
      %v798 = vunpack.c.l.bf16 %v313
      %v799 = vunpack.c.l.bf16 %v314
      %v800 = vunpack.c.l.bf16 %v315
      %v801 = vunpack.c.l.bf16 %v316
      %v802 = vunpack.c.l.bf16 %v317
      %v803 = vunpack.c.l.bf16 %v318
      %v804 = vunpack.c.l.bf16 %v319
      %v805 = vunpack.c.l.bf16 %v320
      %v806 = vunpack.c.l.bf16 %v321
      %v807 = vunpack.c.l.bf16 %v322
      %v808 = vunpack.c.l.bf16 %v323
      %v809 = vunpack.c.l.bf16 %v324
      %v810 = vunpack.c.l.bf16 %v325
      %v811 = vunpack.c.l.bf16 %v326
      %v812 = vunpack.c.l.bf16 %v327
      %v813 = vunpack.c.l.bf16 %v328
      %v814 = vunpack.c.l.bf16 %v329
      %v815 = vunpack.c.l.bf16 %v330
      %v816 = vunpack.c.l.bf16 %v331
      %v817 = vunpack.c.l.bf16 %v332
      %v818 = vunpack.c.l.bf16 %v333
      %v819 = vunpack.c.l.bf16 %v334
      %v820 = vunpack.c.l.bf16 %v335
      %v821 = vunpack.c.l.bf16 %v336
      %v822 = vunpack.c.l.bf16 %v337
      %v823 = vunpack.c.l.bf16 %v338
      %v824 = vunpack.c.l.bf16 %v339
      %v825 = vunpack.c.l.bf16 %v340
      %v826 = vunpack.c.l.bf16 %v341
      %v827 = vunpack.c.l.bf16 %v342
      %v828 = vunpack.c.l.bf16 %v343
      %v829 = vunpack.c.l.bf16 %v344
      %v830 = vunpack.c.l.bf16 %v345
      %v831 = vunpack.c.l.bf16 %v346
      %v832 = vunpack.c.l.bf16 %v347
      %v833 = vunpack.c.l.bf16 %v348
      %v834 = vunpack.c.l.bf16 %v349
      %v835 = vunpack.c.l.bf16 %v350
      %v836 = vunpack.c.l.bf16 %v351
      %v837 = vunpack.c.l.bf16 %v352
      %v838 = vunpack.c.l.bf16 %v353
      %v839 = vunpack.c.l.bf16 %v354
      %v840 = vunpack.c.l.bf16 %v355
      %v841 = vunpack.c.l.bf16 %v356
      %v842 = vunpack.c.l.bf16 %v357
      %v843 = vunpack.c.l.bf16 %v358
      %v844 = vunpack.c.l.bf16 %v359
      %v845 = vunpack.c.l.bf16 %v360
      %v846 = vunpack.c.l.bf16 %v361
      %v847 = vunpack.c.l.bf16 %v362
      %v848 = vunpack.c.l.bf16 %v363
      %v849 = vunpack.c.l.bf16 %v364
      %v850 = vunpack.c.l.bf16 %v365
      %v851 = vunpack.c.l.bf16 %v366
      %v852 = vunpack.c.l.bf16 %v367
      %v853 = vunpack.c.l.bf16 %v368
      %v854 = vunpack.c.l.bf16 %v369
      %v855 = vunpack.c.l.bf16 %v370
      %v856 = vunpack.c.l.bf16 %v371
      %v857 = vunpack.c.l.bf16 %v372
      %v858 = vunpack.c.l.bf16 %v373
      %v859 = vunpack.c.l.bf16 %v374
      %v860 = vunpack.c.l.bf16 %v375
      %v861 = vunpack.c.l.bf16 %v376
      %v862 = vsub.f32 %v798, %v830
      %v863 = vsub.f32 %v799, %v831
      %v864 = vsub.f32 %v800, %v832
      %v865 = vsub.f32 %v801, %v833
      %v866 = vsub.f32 %v802, %v834
      %v867 = vsub.f32 %v803, %v835
      %v868 = vsub.f32 %v804, %v836
      %v869 = vsub.f32 %v805, %v837
      %v870 = vsub.f32 %v806, %v838
      %v871 = vsub.f32 %v807, %v839
      %v872 = vsub.f32 %v808, %v840
      %v873 = vsub.f32 %v809, %v841
      %v874 = vsub.f32 %v810, %v842
      %v875 = vsub.f32 %v811, %v843
      %v876 = vsub.f32 %v812, %v844
      %v877 = vsub.f32 %v813, %v845
      %v878 = vsub.f32 %v814, %v846
      %v879 = vsub.f32 %v815, %v847
      %v880 = vsub.f32 %v816, %v848
      %v881 = vsub.f32 %v817, %v849
      %v882 = vsub.f32 %v818, %v850
      %v883 = vsub.f32 %v819, %v851
      %v884 = vsub.f32 %v820, %v852
      %v885 = vsub.f32 %v821, %v853
      %v886 = vsub.f32 %v822, %v854
      %v887 = vsub.f32 %v823, %v855
      %v888 = vsub.f32 %v824, %v856
      %v889 = vsub.f32 %v825, %v857
      %v890 = vsub.f32 %v826, %v858
      %v891 = vsub.f32 %v827, %v859
      %v892 = vsub.f32 %v828, %v860
      %v893 = vsub.f32 %v829, %v861
      %v894 = vld [vmem:[#allocation4] sm:$0x1]
      %v895 = vmul.f32 %v862, %v862
      %v896 = vmul.f32 %v863, %v863
      %v897 = vmul.f32 %v864, %v864
      %v898 = vmul.f32 %v865, %v865
      %v899 = vmul.f32 %v866, %v866
      %v900 = vmul.f32 %v867, %v867
      %v901 = vmul.f32 %v868, %v868
      %v902 = vmul.f32 %v869, %v869
      %v903 = vmul.f32 %v870, %v870
      %v904 = vmul.f32 %v871, %v871
      %v905 = vmul.f32 %v872, %v872
      %v906 = vmul.f32 %v873, %v873
      %v907 = vmul.f32 %v874, %v874
      %v908 = vmul.f32 %v875, %v875
      %v909 = vmul.f32 %v876, %v876
      %v910 = vmul.f32 %v877, %v877
      %v911 = vmul.f32 %v878, %v878
      %v912 = vmul.f32 %v879, %v879
      %v913 = vmul.f32 %v880, %v880
      %v914 = vmul.f32 %v881, %v881
      %v915 = vmul.f32 %v882, %v882
      %v916 = vmul.f32 %v883, %v883
      %v917 = vmul.f32 %v884, %v884
      %v918 = vmul.f32 %v885, %v885
      %v919 = vmul.f32 %v886, %v886
      %v920 = vmul.f32 %v887, %v887
      %v921 = vmul.f32 %v888, %v888
      %v922 = vmul.f32 %v889, %v889
      %v923 = vmul.f32 %v890, %v890
      %v924 = vmul.f32 %v891, %v891
      %v925 = vmul.f32 %v892, %v892
      %v926 = vmul.f32 %v893, %v893
      %v927 = vsel %vm579, %v895, 0.0
      %v928 = vsel %vm579, %v896, 0.0
      %v929 = vadd.f32 %v927, %v928
      %v930 = vsel %vm579, %v897, 0.0
      %v931 = vadd.f32 %v929, %v930
      %v932 = vsel %vm579, %v898, 0.0
      %v933 = vadd.f32 %v931, %v932
      %v934 = vsel %vm579, %v899, 0.0
      %v935 = vadd.f32 %v933, %v934
      %v936 = vsel %vm579, %v900, 0.0
      %v937 = vadd.f32 %v935, %v936
      %v938 = vsel %vm579, %v901, 0.0
      %v939 = vadd.f32 %v937, %v938
      %v940 = vsel %vm579, %v902, 0.0
      %v941 = vadd.f32 %v939, %v940
      %v942 = vsel %vm579, %v903, 0.0
      %v943 = vadd.f32 %v941, %v942
      %v944 = vsel %vm579, %v904, 0.0
      %v945 = vadd.f32 %v943, %v944
      %v946 = vsel %vm579, %v905, 0.0
      %v947 = vadd.f32 %v945, %v946
      %v948 = vsel %vm579, %v906, 0.0
      %v949 = vadd.f32 %v947, %v948
      %v950 = vsel %vm579, %v907, 0.0
      %v951 = vadd.f32 %v949, %v950
      %v952 = vsel %vm579, %v908, 0.0
      %v953 = vadd.f32 %v951, %v952
      %v954 = vsel %vm579, %v909, 0.0
      %v955 = vadd.f32 %v953, %v954
      %v956 = vsel %vm579, %v910, 0.0
      %v957 = vadd.f32 %v955, %v956
      %v958 = vsel %vm579, %v911, 0.0
      %v959 = vadd.f32 %v957, %v958
      %v960 = vsel %vm579, %v912, 0.0
      %v961 = vadd.f32 %v959, %v960
      %v962 = vsel %vm579, %v913, 0.0
      %v963 = vadd.f32 %v961, %v962
      %v964 = vsel %vm579, %v914, 0.0
      %v965 = vadd.f32 %v963, %v964
      %v966 = vsel %vm579, %v915, 0.0
      %v967 = vadd.f32 %v965, %v966
      %v968 = vsel %vm579, %v916, 0.0
      %v969 = vadd.f32 %v967, %v968
      %v970 = vsel %vm579, %v917, 0.0
      %v971 = vadd.f32 %v969, %v970
      %v972 = vsel %vm579, %v918, 0.0
      %v973 = vadd.f32 %v971, %v972
      %v974 = vsel %vm579, %v919, 0.0
      %v975 = vadd.f32 %v973, %v974
      %v976 = vsel %vm579, %v920, 0.0
      %v977 = vadd.f32 %v975, %v976
      %v978 = vsel %vm579, %v921, 0.0
      %v979 = vadd.f32 %v977, %v978
      %v980 = vsel %vm579, %v922, 0.0
      %v981 = vadd.f32 %v979, %v980
      %v982 = vsel %vm579, %v923, 0.0
      %v983 = vadd.f32 %v981, %v982
      %v984 = vsel %vm579, %v924, 0.0
      %v985 = vadd.f32 %v983, %v984
      %v986 = vsel %vm579, %v925, 0.0
      %v987 = vadd.f32 %v985, %v986
      %v988 = vsel %vm579, %v926, 0.0
      %v989 = vadd.f32 %v987, %v988
      %990 = vadd.xlane.f32.xlu0 %v989
      %v991 = vpop.xlane.xlu0 %990
      %v992 = vrot.slane %v991, 4
      %v993 = vadd.f32 %v991, %v992
      %v994 = vrot.slane %v993, 2
      %v995 = vadd.f32 %v993, %v994
      %v996 = vrot.slane %v995, 1
      %v997 = vadd.f32 %v995, %v996
      %s998 = vtos %v997
      %v999 = vstv %s998
      %v1000 = vadd.f32 %v894, %v999
      %vm1001 = vcmask 0
      %1002 = vst.msk [vmem:[#allocation4] sm:$0x1] %vm1001, %v1000
      // Predicated region
      $region33: #{_lambda_.10} parent=27 // pred_check
        %p1003 = pneg %p290
      $region34: #{_lambda_.10} parent=27 // pred_check_branch
        %1005 = sbr.rel (%p1003) target = $region36
      $region35: #{_lambda_.10} parent=27 // pred_region
        %v1006 = vld [vmem:[#allocation2] sm:$0xff]
        %v1007 = vld [vmem:[#allocation2 + $0x8] sm:$0xff]
        %v1008 = vld [vmem:[#allocation2 + $0x10] sm:$0xff]
        %v1009 = vld [vmem:[#allocation2 + $0x18] sm:$0xff]
        %v1010 = vld [vmem:[#allocation2 + $0x20] sm:$0xff]
        %v1011 = vld [vmem:[#allocation2 + $0x28] sm:$0xff]
        %v1012 = vld [vmem:[#allocation2 + $0x30] sm:$0xff]
        %v1013 = vld [vmem:[#allocation2 + $0x38] sm:$0xff]
        %v1014 = vmul.f32 %v1006, 6.1035156e-05
        %v1015 = vmul.f32 %v1007, 6.1035156e-05
        %v1016 = vmul.f32 %v1008, 6.1035156e-05
        %v1017 = vmul.f32 %v1009, 6.1035156e-05
        %v1018 = vmul.f32 %v1010, 6.1035156e-05
        %v1019 = vmul.f32 %v1011, 6.1035156e-05
        %v1020 = vmul.f32 %v1012, 6.1035156e-05
        %v1021 = vmul.f32 %v1013, 6.1035156e-05
        %1022 = vst.msk [vmem:[%s281] sm:$0xff] %vm579, %v1014
        %1023 = vst.msk [vmem:[%s281 + $0x8] sm:$0xff] %vm579, %v1015
        %1024 = vst.msk [vmem:[%s281 + $0x10] sm:$0xff] %vm579, %v1016
        %1025 = vst.msk [vmem:[%s281 + $0x18] sm:$0xff] %vm579, %v1017
        %1026 = vst.msk [vmem:[%s281 + $0x20] sm:$0xff] %vm579, %v1018
        %1027 = vst.msk [vmem:[%s281 + $0x28] sm:$0xff] %vm579, %v1019
        %1028 = vst.msk [vmem:[%s281 + $0x30] sm:$0xff] %vm579, %v1020
        %1029 = vst.msk [vmem:[%s281 + $0x38] sm:$0xff] %vm579, %v1021
        %v1030 = vld [vmem:[#allocation3] sm:$0xff]
        %v1031 = vld [vmem:[#allocation3 + $0x8] sm:$0xff]
        %v1032 = vld [vmem:[#allocation3 + $0x10] sm:$0xff]
        %v1033 = vld [vmem:[#allocation3 + $0x18] sm:$0xff]
        %v1034 = vld [vmem:[#allocation3 + $0x20] sm:$0xff]
        %v1035 = vld [vmem:[#allocation3 + $0x28] sm:$0xff]
        %v1036 = vld [vmem:[#allocation3 + $0x30] sm:$0xff]
        %v1037 = vld [vmem:[#allocation3 + $0x38] sm:$0xff]
        %v1038 = vmul.f32 %v1030, 6.1035156e-05
        %v1039 = vmul.f32 %v1031, 6.1035156e-05
        %v1040 = vmul.f32 %v1032, 6.1035156e-05
        %v1041 = vmul.f32 %v1033, 6.1035156e-05
        %v1042 = vmul.f32 %v1034, 6.1035156e-05
        %v1043 = vmul.f32 %v1035, 6.1035156e-05
        %v1044 = vmul.f32 %v1036, 6.1035156e-05
        %v1045 = vmul.f32 %v1037, 6.1035156e-05
        %1046 = vst.msk [vmem:[%s286] sm:$0xff] %vm579, %v1038
        %1047 = vst.msk [vmem:[%s286 + $0x8] sm:$0xff] %vm579, %v1039
        %1048 = vst.msk [vmem:[%s286 + $0x10] sm:$0xff] %vm579, %v1040
        %1049 = vst.msk [vmem:[%s286 + $0x18] sm:$0xff] %vm579, %v1041
        %1050 = vst.msk [vmem:[%s286 + $0x20] sm:$0xff] %vm579, %v1042
        %1051 = vst.msk [vmem:[%s286 + $0x28] sm:$0xff] %vm579, %v1043
        %1052 = vst.msk [vmem:[%s286 + $0x30] sm:$0xff] %vm579, %v1044
        %1053 = vst.msk [vmem:[%s286 + $0x38] sm:$0xff] %vm579, %v1045
        %v1054 = vld [vmem:[#allocation4] sm:$0x1]
        %1055 = vst.msk [vmem:[%s289] sm:$0x1] %vm1001, %v1054
      $region36: #{_lambda_.10} parent=27 // pred_fallthru
        _
      %p1056 = scmp.lt.s32.totalorder %s20, 1
      %s1057 = scalar_select %p1056, %s20, 1
      %s1058 = smul.addr %s1057, 8
      %s1059 = smul.addr %s1058, 8
      %s1060 = scalar_lea.vmem %s2, %s1059
      %p1061 = scmp.lt.s32.totalorder %s20, 1
      %s1062 = scalar_select %p1061, %s20, 1
      %s1063 = smul.addr %s1062, 8
      %s1064 = smul.addr %s1063, 8
      %s1065 = scalar_lea.vmem %s3, %s1064
      %p1066 = scmp.lt.s32.totalorder %s20, 1
      %s1067 = scalar_select %p1066, %s20, 1
      %s1068 = scalar_lea.vmem %s4, %s1067
      // Predicated region
      $region37: #{_lambda_.10} parent=27 // pred_check
        %p1069 = pneg %p104
      $region38: #{_lambda_.10} parent=27 // pred_check_branch
        %1071 = sbr.rel (%p1069) target = $region40
      $region39: #{_lambda_.10} parent=27 // pred_region
        _
      $region40: #{_lambda_.10} parent=27 // pred_fallthru
        _
      // Predicated region
      $region41: #{_lambda_.10} parent=27 // pred_check
        %p1072 = pneg %p130
      $region42: #{_lambda_.10} parent=27 // pred_check_branch
        %1074 = sbr.rel (%p1072) target = $region44
      $region43: #{_lambda_.10} parent=27 // pred_region
        _
      $region44: #{_lambda_.10} parent=27 // pred_fallthru
        _
      // Predicated region
      $region45: #{_lambda_.10} parent=27 // pred_check
        %p1075 = pneg %p156
      $region46: #{_lambda_.10} parent=27 // pred_check_branch
        %1077 = sbr.rel (%p1075) target = $region48
      $region47: #{_lambda_.10} parent=27 // pred_region
        _
      $region48: #{_lambda_.10} parent=27 // pred_fallthru
        _
    $region28: #{_lambda_.10} parent=5 // pred_fallthru
      _
    %p1078 = scmp.le.s32.totalorder 2, %s11
    // Predicated region
    $region49: #{_lambda_.10} parent=5 // pred_check
      %p1079 = pneg %p1078
    $region50: #{_lambda_.10} parent=5 // pred_check_branch
      %1081 = sbr.rel (%p1079) target = $region52
    $region51: #{_lambda_.10} parent=5 // pred_region
      %s1082 = ssub.s32 %s11, 2
      // Predicated region
      $region53: #{_lambda_.10} parent=51 // pred_check
        %p1083 = pneg %p110
      $region54: #{_lambda_.10} parent=51 // pred_check_branch
        %1085 = sbr.rel (%p1083) target = $region56
      $region55: #{_lambda_.10} parent=51 // pred_region
        %p1086 = scmp.lt.s32.totalorder %s22, 1
        %s1087 = scalar_select %p1086, %s22, 1
        %s1088 = smul.addr %s1087, 8
        %s1089 = smul.addr %s1088, 8
        %s1090 = scalar_lea.vmem %s2, %s1089
      $region56: #{_lambda_.10} parent=51 // pred_fallthru
        _
      // Predicated region
      $region57: #{_lambda_.10} parent=51 // pred_check
        %p1091 = pneg %p136
      $region58: #{_lambda_.10} parent=51 // pred_check_branch
        %1093 = sbr.rel (%p1091) target = $region60
      $region59: #{_lambda_.10} parent=51 // pred_region
        %p1094 = scmp.lt.s32.totalorder %s22, 1
        %s1095 = scalar_select %p1094, %s22, 1
        %s1096 = smul.addr %s1095, 8
        %s1097 = smul.addr %s1096, 8
        %s1098 = scalar_lea.vmem %s3, %s1097
      $region60: #{_lambda_.10} parent=51 // pred_fallthru
        _
      // Predicated region
      $region61: #{_lambda_.10} parent=51 // pred_check
        %p1099 = pneg %p162
      $region62: #{_lambda_.10} parent=51 // pred_check_branch
        %1101 = sbr.rel (%p1099) target = $region64
      $region63: #{_lambda_.10} parent=51 // pred_region
        %p1102 = scmp.lt.s32.totalorder %s22, 1
        %s1103 = scalar_select %p1102, %s22, 1
        %s1104 = scalar_lea.vmem %s4, %s1103
      $region64: #{_lambda_.10} parent=51 // pred_fallthru
        _
    $region52: #{_lambda_.10} parent=5 // pred_fallthru
      _
  $region6: #{_lambda_.10} parent=0 // loop_footer
    %s15 = sadd.s32 1, %s11
  $region7: #{_lambda_.10} parent=0 // loop_footer_branch
    %10 = sbr.rel target = $region3
  $region8: #{_lambda_.10} parent=0 // loop_exit
    _

</llo_original>
